<compile_context>
chip_gen: v6e
topology: v6e:2x2x1
jax: 0.10.0
libtpu: 0.0.40
codegen_flags: <defaults>
</compile_context>

<pallas_src>
import functools

import jax
import jax.numpy as jnp
from jax import lax
from jax.experimental import pallas as pl
from jax.experimental.pallas import tpu as pltpu


# ----------------------------------------------------------------------------
# Kernel 1: transpose conv (kernel == stride == 2x2, no bias) of the encoder
# bottleneck as a single batch-collapsed matmul [N*H*W, Cin] @ [Cin, 4*Cout]
# (tap column order kh, kw, co).  Later stages get this matmul fused into the
# tail of the previous stage's fused kernel.
# ----------------------------------------------------------------------------
def _tu_matmul_kernel(x_ref, w_ref, o_ref):
    o_ref[...] = jnp.dot(x_ref[...], w_ref[...],
                         preferred_element_type=jnp.float32)


def conv_transpose_taps(x2d, w_mat):
    M, Cin = x2d.shape
    C4 = w_mat.shape[1]
    return pl.pallas_call(
        _tu_matmul_kernel,
        out_shape=jax.ShapeDtypeStruct((M, C4), jnp.float32),
        grid=(1,),
        in_specs=[pl.BlockSpec((M, Cin), lambda i: (0, 0)),
                  pl.BlockSpec((Cin, C4), lambda i: (0, 0))],
        out_specs=pl.BlockSpec((M, C4), lambda i: (0, 0)),
    )(x2d, w_mat)


def interleave_taps(taps, N, H, W, C):
    """Taps with (kh, kw, c) column order -> (N, 2H, 2W, C).  Reshapes are free;
    only a small 6-D transpose is a real XLA op (see TODO above)."""
    t = taps.reshape(N, H, W, 2, 2, C)
    t = jnp.transpose(t, (0, 1, 3, 2, 4, 5))
    return t.reshape(N, 2 * H, 2 * W, C)


# ----------------------------------------------------------------------------
# Kernel 2: fully fused decoder stage.
# ----------------------------------------------------------------------------
def _stage_kernel(*refs, H2, W2, Cu, Cs, Co, K, neg_slope, has_next):
    if has_next:
        (up_ref, skip_ref, w1_ref, s1_ref, b1_ref, w2_ref, s2_ref, b2_ref,
         wsegT_ref, wtun_ref, seg_ref, taps_ref,
         up_pad, skip_pad, x1_pad, col_ref) = refs
    else:
        (up_ref, skip_ref, w1_ref, s1_ref, b1_ref, w2_ref, s2_ref, b2_ref,
         wsegT_ref, seg_ref, up_pad, skip_pad, x1_pad, col_ref) = refs
        wtun_ref = taps_ref = None

    HW2 = H2 * W2
    f32 = jnp.float32

    # 1-pixel zero halo: only the thin borders are zeroed (every step, so it is
    # correct even if a "parallel" batch axis is sharded across TensorCores);
    # interiors are fully rewritten below.
    def zero_border(pad_ref, C):
        pad_ref[0, :, :] = jnp.zeros((W2 + 2, C), f32)
        pad_ref[H2 + 1, :, :] = jnp.zeros((W2 + 2, C), f32)
        pad_ref[:, 0, :] = jnp.zeros((H2 + 2, C), f32)
        pad_ref[:, W2 + 1, :] = jnp.zeros((H2 + 2, C), f32)

    zero_border(up_pad, Cu)
    zero_border(skip_pad, Cs)
    zero_border(x1_pad, Co)

    up_pad[pl.ds(1, H2), pl.ds(1, W2), :] = up_ref[0]
    skip_pad[pl.ds(1, H2), pl.ds(1, W2), :] = skip_ref[0]

    def im2col_into(pad_ref, C, base):
        # Each 3x3 tap window is written exactly once, at its final lane offset
        # inside the col scratch (column order kh, kw, c matches the weight rows).
        for g, (kh, kw) in enumerate([(a, b) for a in range(3) for b in range(3)]):
            col_ref[:, pl.ds(base + g * C, C)] = (
                pad_ref[pl.ds(kh, H2), pl.ds(kw, W2), :].reshape(HW2, C))

    # conv1 on [up ; skip] without materializing the channel concat:
    # one deep-K matmul  [HW2, 9*(Cu+Cs)] @ [9*(Cu+Cs), Co].
    im2col_into(up_pad, Cu, 0)
    im2col_into(skip_pad, Cs, 9 * Cu)
    y1 = jnp.dot(col_ref[...], w1_ref[...], preferred_element_type=f32)
    y1 = y1 * s1_ref[...] + b1_ref[...]                    # folded bias + BatchNorm
    # fused BN + LeakyReLU, stored straight into the x1 halo buffer interior.
    x1_pad[pl.ds(1, H2), pl.ds(1, W2), :] = (
        jnp.maximum(y1, neg_slope * y1).reshape(H2, W2, Co))

    # conv2 + folded bias/BatchNorm (no nonlinearity), reusing the col scratch.
    im2col_into(x1_pad, Co, 0)
    y2 = jnp.dot(col_ref[:, pl.ds(0, 9 * Co)], w2_ref[...],
                 preferred_element_type=f32)
    y2 = y2 * s2_ref[...] + b2_ref[...]

    # seg head: 1x1 conv (no bias) + EXACT channel softmax, computed lane-dense
    # as (K, HW2): the reduction runs over the (tiny) sublane axis and the store
    # is lane-dense instead of a K/128 masked store.
    logits = lax.dot_general(wsegT_ref[...], y2, (((1,), (1,)), ((), ())),
                             preferred_element_type=f32)
    m = jnp.max(logits, axis=0, keepdims=True)
    p = jnp.exp(logits - m)
    seg_ref[0] = p / jnp.sum(p, axis=0, keepdims=True)

    # transpose-conv taps of the NEXT stage, fused so y2 never goes to HBM.
    if has_next:
        taps_ref[0] = jnp.dot(y2, wtun_ref[...], preferred_element_type=f32)


def fused_stage(up, skip, sp, wtu_next):
    """up: (N,H2,W2,Cu) upsampled decoder features; skip: (N,H2,W2,Cs)."""
    N, H2, W2, Cu = up.shape
    Cs = skip.shape[-1]
    Co = sp["conv1_scale"].shape[-1]
    K = sp["seg_w_t"].shape[0]
    HW2 = H2 * W2
    col_w = 9 * (Cu + Cs)
    assert 9 * Co <= col_w, "col scratch reused for conv2 must be wide enough"
    has_next = wtu_next is not None

    kernel = functools.partial(_stage_kernel, H2=H2, W2=W2, Cu=Cu, Cs=Cs, Co=Co,
                               K=K, neg_slope=0.01, has_next=has_next)

    in_arrays = [up, skip, sp["conv1_w_flat"], sp["conv1_scale"], sp["conv1_shift"],
                 sp["conv2_w_flat"], sp["conv2_scale"], sp["conv2_shift"],
                 sp["seg_w_t"]]
    # TODO(synk): constant-index weight blocks could use pipeline_mode=pl.Buffered(1)
    #             to avoid useless double-buffer VMEM once tiles are image-sized.
    in_specs = [
        pl.BlockSpec((1, H2, W2, Cu), lambda n: (n, 0, 0, 0)),
        pl.BlockSpec((1, H2, W2, Cs), lambda n: (n, 0, 0, 0)),
        pl.BlockSpec((col_w, Co), lambda n: (0, 0)),
        pl.BlockSpec((1, Co), lambda n: (0, 0)),
        pl.BlockSpec((1, Co), lambda n: (0, 0)),
        pl.BlockSpec((9 * Co, Co), lambda n: (0, 0)),
        pl.BlockSpec((1, Co), lambda n: (0, 0)),
        pl.BlockSpec((1, Co), lambda n: (0, 0)),
        pl.BlockSpec((K, Co), lambda n: (0, 0)),
    ]

    flops = 2 * HW2 * col_w * Co + 2 * HW2 * 9 * Co * Co + 2 * HW2 * Co * K
    out_elems = HW2 * K
    weight_elems = col_w * Co + 9 * Co * Co + K * Co + 4 * Co

    if has_next:
        C4n = wtu_next.shape[1]
        in_arrays.append(wtu_next)
        in_specs.append(pl.BlockSpec((Co, C4n), lambda n: (0, 0)))
        out_shape = (jax.ShapeDtypeStruct((N, K, HW2), jnp.float32),
                     jax.ShapeDtypeStruct((N, HW2, C4n), jnp.float32))
        out_specs = (pl.BlockSpec((1, K, HW2), lambda n: (n, 0, 0)),
                     pl.BlockSpec((1, HW2, C4n), lambda n: (n, 0, 0)))
        flops += 2 * HW2 * Co * C4n
        out_elems += HW2 * C4n
        weight_elems += Co * C4n
    else:
        out_shape = jax.ShapeDtypeStruct((N, K, HW2), jnp.float32)
        out_specs = pl.BlockSpec((1, K, HW2), lambda n: (n, 0, 0))

    in_elems = HW2 * (Cu + Cs)
    cost = pl.CostEstimate(
        flops=int(N * flops),
        transcendentals=int(N * HW2 * K),
        bytes_accessed=int(4 * (N * (in_elems + out_elems) + weight_elems)))

    scratch_elems = (H2 + 2) * (W2 + 2) * (Cu + Cs + Co) + HW2 * col_w
    work_bytes = 4 * (2 * (in_elems + out_elems + weight_elems) + scratch_elems)
    vmem_limit = int(min(64 * 2**20, max(32 * 2**20, 2 * work_bytes)))

    result = pl.pallas_call(
        kernel,
        out_shape=out_shape,
        grid=(N,),
        in_specs=in_specs,
        out_specs=out_specs,
        scratch_shapes=[
            pltpu.VMEM((H2 + 2, W2 + 2, Cu), jnp.float32),
            pltpu.VMEM((H2 + 2, W2 + 2, Cs), jnp.float32),
            pltpu.VMEM((H2 + 2, W2 + 2, Co), jnp.float32),
            pltpu.VMEM((HW2, col_w), jnp.float32),
        ],
        compiler_params=pltpu.CompilerParams(
            dimension_semantics=("parallel",),
            vmem_limit_bytes=vmem_limit),
        cost_estimate=cost,
    )(*in_arrays)

    if has_next:
        return result[0], result[1]
    return result, None


# ----------------------------------------------------------------------------
# Glue (free / tiny XLA ops) + full decoder forward.
# ----------------------------------------------------------------------------
def center_crop_pair(x, skip):
    H = min(x.shape[1], skip.shape[1])
    W = min(x.shape[2], skip.shape[2])

    def crop(t):
        h0 = (t.shape[1] - H) // 2
        w0 = (t.shape[2] - W) // 2
        return t[:, h0:h0 + H, w0:w0 + W, :]

    return crop(x), crop(skip)


def decoder_forward(params, skips, x):
    stages = params["stages"]
    num_pool = len(stages)
    N, H, W, Cin = x.shape

    # stage-0 transpose conv on the bottleneck (one batch-collapsed matmul)
    taps = conv_transpose_taps(x.reshape(N * H * W, Cin), stages[0]["tu_w_mat"])
    up = interleave_taps(taps, N, H, W, stages[0]["tu_w"].shape[-1])

    seg_outputs = []
    for u, sp in enumerate(stages):
        skip = skips[-(u + 1)]
        up_c, skip_c = center_crop_pair(up, skip)
        wtu_next = stages[u + 1]["tu_w_mat"] if u + 1 < num_pool else None
        seg_kd, next_taps = fused_stage(up_c, skip_c, sp, wtu_next)
        Nb, H2, W2, _ = up_c.shape
        K = seg_kd.shape[1]
        # lane-dense (N, K, H*W) kernel output -> NHWC
        seg_outputs.append(seg_kd.reshape(Nb, K, H2, W2).transpose(0, 2, 3, 1))
        if next_taps is not None:
            up = interleave_taps(next_taps, Nb, H2, W2,
                                 stages[u + 1]["tu_w"].shape[-1])

    # deep supervision with identity upscale_logits_ops (upscale_logits=False)
    return tuple([seg_outputs[-1]] + seg_outputs[:-1][::-1])


# ----------------------------------------------------------------------------
# Deterministic synthetic parameters (InitWeights_He(0.01)-style normals).
# Layout conversion + bias/BatchNorm folding done ONCE here (hoisted out of the
# forward pass).
# ----------------------------------------------------------------------------
def init_params(key, stage_cfg, num_classes):
    """stage_cfg: list of (cin_tu, cout_decoder, cskip) per decoder stage."""
    keys = iter(jax.random.split(key, len(stage_cfg) * 16))

    def he(shape, fan_in):
        std = (2.0 / ((1.0 + 0.01 ** 2) * fan_in)) ** 0.5
        return std * jax.random.normal(next(keys), shape, jnp.float32)

    def bn_fold(cout, conv_bias):
        eps = 1e-5
        gamma = 1.0 + 0.1 * jax.random.normal(next(keys), (1, cout), jnp.float32)
        beta = 0.1 * jax.random.normal(next(keys), (1, cout), jnp.float32)
        mean = 0.1 * jax.random.normal(next(keys), (1, cout), jnp.float32)
        var = 1.0 + 0.05 * jnp.abs(jax.random.normal(next(keys), (1, cout), jnp.float32))
        scale = gamma / jnp.sqrt(var + eps)
        shift = beta + (conv_bias - mean) * scale
        return scale, shift

    stages = []
    for (cin_tu, cout, cskip) in stage_cfg:
        tu_w = he((cin_tu, 2, 2, cout), fan_in=cin_tu * 4)         # (Cin, kh, kw, Cout)
        cin_cat = cout + cskip
        conv1_w = he((3, 3, cin_cat, cout), fan_in=cin_cat * 9)    # HWIO, [up ; skip]
        b1 = 0.01 * jax.random.normal(next(keys), (1, cout), jnp.float32)
        s1, sh1 = bn_fold(cout, b1)
        conv2_w = he((3, 3, cout, cout), fan_in=cout * 9)
        b2 = 0.01 * jax.random.normal(next(keys), (1, cout), jnp.float32)
        s2, sh2 = bn_fold(cout, b2)
        seg_w = he((cout, num_classes), fan_in=cout)               # 1x1 conv, no bias

        # ---- kernel-ready layouts (computed once, not in the forward pass) ----
        tu_w_mat = tu_w.reshape(cin_tu, 4 * cout)                  # cols = (kh, kw, co)
        w1_up = conv1_w[:, :, :cout, :].reshape(9 * cout, cout)    # rows = (kh, kw, c_up)
        w1_sk = conv1_w[:, :, cout:, :].reshape(9 * cskip, cout)   # rows = (kh, kw, c_skip)
        conv1_w_flat = jnp.concatenate([w1_up, w1_sk], axis=0)
        conv2_w_flat = conv2_w.reshape(9 * cout, cout)
        seg_w_t = seg_w.T                                          # (K, Cout) lane-dense head

        stages.append(dict(
            tu_w=tu_w, tu_w_mat=tu_w_mat,
            conv1_w=conv1_w, conv1_w_flat=conv1_w_flat,
            conv1_scale=s1, conv1_shift=sh1,
            conv2_w=conv2_w, conv2_w_flat=conv2_w_flat,
            conv2_scale=s2, conv2_shift=sh2,
            seg_w=seg_w, seg_w_t=seg_w_t))
    return {"stages": stages}


# ----------------------------------------------------------------------------
# Pure-JAX/XLA reference (same folded parameters, no Pallas).
# ----------------------------------------------------------------------------
def reference_forward(params, skips, x):
    hi = lax.Precision.HIGHEST
    segs = []
    cur = x
    for u, sp in enumerate(params["stages"]):
        N, H, W, _ = cur.shape
        Co = sp["tu_w"].shape[-1]
        up = jnp.einsum("nhwi,iabo->nhawbo", cur, sp["tu_w"],
                        precision=hi).reshape(N, 2 * H, 2 * W, Co)
        up, skip = center_crop_pair(up, skips[-(u + 1)])
        xc = jnp.concatenate([up, skip], axis=-1)
        y = lax.conv_general_dilated(xc, sp["conv1_w"], (1, 1), "SAME",
                                     dimension_numbers=("NHWC", "HWIO", "NHWC"),
                                     precision=hi)
        y = y * sp["conv1_scale"][0] + sp["conv1_shift"][0]
        y = jnp.where(y >= 0, y, 0.01 * y)
        y = lax.conv_general_dilated(y, sp["conv2_w"], (1, 1), "SAME",
                                     dimension_numbers=("NHWC", "HWIO", "NHWC"),
                                     precision=hi)
        y = y * sp["conv2_scale"][0] + sp["conv2_shift"][0]
        logits = jnp.einsum("nhwc,ck->nhwk", y, sp["seg_w"], precision=hi)
        segs.append(jax.nn.softmax(logits, axis=-1))
        cur = y
    return tuple([segs[-1]] + segs[:-1][::-1])


if __name__ == "__main__":
    # Synthetic config: 2D UNet decoder, num_pool = num_level = 2.
    # Bottleneck 4x4x32; skip channels deepest->shallowest = [16, 8]; 3 classes.
    key = jax.random.PRNGKey(0)
    kx, kd, ks, kp = jax.random.split(key, 4)

    N = 2
    num_classes = 3
    x = jax.random.normal(kx, (N, 4, 4, 32), jnp.float32)              # bottleneck (NHWC)
    skip_deep = jax.random.normal(kd, (N, 8, 8, 16), jnp.float32)      # used at u=0
    skip_shallow = jax.random.normal(ks, (N, 16, 16, 8), jnp.float32)  # used at u=1
    skips = [skip_shallow, skip_deep]                                  # forward uses skips[-(u+1)]

    stage_cfg = [(32, 32, 16), (32, 16, 8)]   # (cin_tu, cout_decoder, cskip) per stage
    params = init_params(kp, stage_cfg, num_classes)

    fwd = jax.jit(decoder_forward)
    outs = jax.block_until_ready(fwd(params, skips, x))

    assert outs[0].shape == (N, 16, 16, num_classes)
    assert outs[1].shape == (N, 8, 8, num_classes)
    # softmax sanity: exact normalization -> channel probabilities sum to 1
    assert bool(jnp.allclose(jnp.sum(outs[0], axis=-1), 1.0, atol=1e-3))
    assert bool(jnp.allclose(jnp.sum(outs[1], axis=-1), 1.0, atol=1e-3))

    # pure-JAX reference comparison (same folded params, XLA convs)
    refs = jax.block_until_ready(jax.jit(reference_forward)(params, skips, x))
    for got, want in zip(outs, refs):
        assert got.shape == want.shape
        assert bool(jnp.allclose(got, want, atol=3e-2, rtol=3e-2)), \
            float(jnp.max(jnp.abs(got - want)))

    print("KERNEL_OK")
</pallas_src>

<mosaic_0001>
module attributes {stable_mosaic.version = 11 : i64} {
  func.func @_tu_matmul_kernel(%arg0: i32, %arg1: memref<32x32xf32, #tpu.memory_space<vmem>>, %arg2: memref<32x128xf32, #tpu.memory_space<vmem>>, %arg3: memref<32x128xf32, #tpu.memory_space<vmem>>) attributes {dimension_semantics = [#tpu.dimension_semantics<arbitrary>], iteration_bounds = array<i64: 1>, scalar_prefetch = 0 : i64, scratch_operands = 0 : i64, tpu.core_type = #tpu.core_type<tc>, window_params = [{pipeline_mode = #tpu.pipeline_mode<synchronous>, transform_indices = @transform_0, window_bounds = array<i64: 32, 32>}, {pipeline_mode = #tpu.pipeline_mode<synchronous>, transform_indices = @transform_1, window_bounds = array<i64: 32, 128>}, {pipeline_mode = #tpu.pipeline_mode<synchronous>, transform_indices = @transform_2, window_bounds = array<i64: 32, 128>}]} {
    %c0 = arith.constant 0 : index
    %c0_0 = arith.constant 0 : index
    %0 = vector.load %arg1[%c0, %c0_0] : memref<32x32xf32, #tpu.memory_space<vmem>>, vector<32x32xf32>
    %c0_1 = arith.constant 0 : index
    %c0_2 = arith.constant 0 : index
    %1 = vector.load %arg2[%c0_1, %c0_2] : memref<32x128xf32, #tpu.memory_space<vmem>>, vector<32x128xf32>
    %cst = arith.constant dense<0.000000e+00> : vector<32x128xf32>
    %2 = tpu.matmul %0, %1, %cst {dimension_numbers = #tpu.dot_dimension_numbers<[1], [0], [0], [1], [0, 0, 1, 1], [], []>} : vector<32x32xf32>, vector<32x128xf32>, vector<32x128xf32> -> vector<32x128xf32>
    %c0_3 = arith.constant 0 : index
    %c0_4 = arith.constant 0 : index
    %3 = vector.load %arg3[%c0_3, %c0_4] : memref<32x128xf32, #tpu.memory_space<vmem>>, vector<32x128xf32>
    tpu.vector_store %arg3[%c0_3, %c0_4], %2 {strides = array<i32>} : memref<32x128xf32, #tpu.memory_space<vmem>>, vector<32x128xf32>,
    return
  }
  func.func @transform_0(%arg0: i32) -> (i32, i32) {
    %c0_i32 = arith.constant 0 : i32
    %c0_i32_0 = arith.constant 0 : i32
    %c0_i32_1 = arith.constant 0 : i32
    return %c0_i32, %c0_i32_0 : i32, i32
  }
  func.func @transform_1(%arg0: i32) -> (i32, i32) {
    %c0_i32 = arith.constant 0 : i32
    %c0_i32_0 = arith.constant 0 : i32
    %c0_i32_1 = arith.constant 0 : i32
    return %c0_i32, %c0_i32_0 : i32, i32
  }
  func.func @transform_2(%arg0: i32) -> (i32, i32) {
    %c0_i32 = arith.constant 0 : i32
    %c0_i32_0 = arith.constant 0 : i32
    %c0_i32_1 = arith.constant 0 : i32
    return %c0_i32, %c0_i32_0 : i32, i32
  }
}

module attributes {stable_mosaic.version = 11 : i64} {
  func.func @_stage_kernel(%arg0: i32, %arg1: memref<1x8x8x32xf32, #tpu.memory_space<vmem>>, %arg2: memref<1x8x8x16xf32, #tpu.memory_space<vmem>>, %arg3: memref<432x32xf32, #tpu.memory_space<vmem>>, %arg4: memref<1x32xf32, #tpu.memory_space<vmem>>, %arg5: memref<1x32xf32, #tpu.memory_space<vmem>>, %arg6: memref<288x32xf32, #tpu.memory_space<vmem>>, %arg7: memref<1x32xf32, #tpu.memory_space<vmem>>, %arg8: memref<1x32xf32, #tpu.memory_space<vmem>>, %arg9: memref<3x32xf32, #tpu.memory_space<vmem>>, %arg10: memref<32x64xf32, #tpu.memory_space<vmem>>, %arg11: memref<1x3x64xf32, #tpu.memory_space<vmem>>, %arg12: memref<1x64x64xf32, #tpu.memory_space<vmem>>, %arg13: memref<10x10x32xf32, #tpu.memory_space<vmem>>, %arg14: memref<10x10x16xf32, #tpu.memory_space<vmem>>, %arg15: memref<10x10x32xf32, #tpu.memory_space<vmem>>, %arg16: memref<64x432xf32, #tpu.memory_space<vmem>>) attributes {dimension_semantics = [#tpu.dimension_semantics<parallel>], iteration_bounds = array<i64: 2>, scalar_prefetch = 0 : i64, scratch_operands = 4 : i64, tpu.core_type = #tpu.core_type<tc>, window_params = [{transform_indices = @transform_0, window_bounds = array<i64: 1, 8, 8, 32>}, {transform_indices = @transform_1, window_bounds = array<i64: 1, 8, 8, 16>}, {pipeline_mode = #tpu.pipeline_mode<synchronous>, transform_indices = @transform_2, window_bounds = array<i64: 432, 32>}, {pipeline_mode = #tpu.pipeline_mode<synchronous>, transform_indices = @transform_3, window_bounds = array<i64: 1, 32>}, {pipeline_mode = #tpu.pipeline_mode<synchronous>, transform_indices = @transform_4, window_bounds = array<i64: 1, 32>}, {pipeline_mode = #tpu.pipeline_mode<synchronous>, transform_indices = @transform_5, window_bounds = array<i64: 288, 32>}, {pipeline_mode = #tpu.pipeline_mode<synchronous>, transform_indices = @transform_6, window_bounds = array<i64: 1, 32>}, {pipeline_mode = #tpu.pipeline_mode<synchronous>, transform_indices = @transform_7, window_bounds = array<i64: 1, 32>}, {pipeline_mode = #tpu.pipeline_mode<synchronous>, transform_indices = @transform_8, window_bounds = array<i64: 3, 32>}, {pipeline_mode = #tpu.pipeline_mode<synchronous>, transform_indices = @transform_9, window_bounds = array<i64: 32, 64>}, {transform_indices = @transform_10, window_bounds = array<i64: 1, 3, 64>}, {transform_indices = @transform_11, window_bounds = array<i64: 1, 64, 64>}]} {
    %cst = arith.constant 0.000000e+00 : f32
    %0 = vector.broadcast %cst : f32 to vector<10x32xf32>
    %c0 = arith.constant 0 : index
    %c0_0 = arith.constant 0 : index
    %c0_1 = arith.constant 0 : index
    %1 = vector.load %arg13[%c0, %c0_0, %c0_1] : memref<10x10x32xf32, #tpu.memory_space<vmem>>, vector<1x10x32xf32>
    %2 = vector.shape_cast %1 : vector<1x10x32xf32> to vector<10x32xf32>
    %3 = vector.shape_cast %0 : vector<10x32xf32> to vector<1x10x32xf32>
    tpu.vector_store %arg13[%c0, %c0_0, %c0_1], %3 {strides = array<i32>} : memref<10x10x32xf32, #tpu.memory_space<vmem>>, vector<1x10x32xf32>,
    %cst_2 = arith.constant 0.000000e+00 : f32
    %4 = vector.broadcast %cst_2 : f32 to vector<10x32xf32>
    %c9 = arith.constant 9 : index
    %c0_3 = arith.constant 0 : index
    %c0_4 = arith.constant 0 : index
    %5 = vector.load %arg13[%c9, %c0_3, %c0_4] : memref<10x10x32xf32, #tpu.memory_space<vmem>>, vector<1x10x32xf32>
    %6 = vector.shape_cast %5 : vector<1x10x32xf32> to vector<10x32xf32>
    %7 = vector.shape_cast %4 : vector<10x32xf32> to vector<1x10x32xf32>
    tpu.vector_store %arg13[%c9, %c0_3, %c0_4], %7 {strides = array<i32>} : memref<10x10x32xf32, #tpu.memory_space<vmem>>, vector<1x10x32xf32>,
    %cst_5 = arith.constant 0.000000e+00 : f32
    %8 = vector.broadcast %cst_5 : f32 to vector<10x32xf32>
    %c0_6 = arith.constant 0 : index
    %c0_7 = arith.constant 0 : index
    %c0_8 = arith.constant 0 : index
    %9 = vector.load %arg13[%c0_6, %c0_7, %c0_8] : memref<10x10x32xf32, #tpu.memory_space<vmem>>, vector<10x1x32xf32>
    %10 = vector.shape_cast %9 : vector<10x1x32xf32> to vector<10x32xf32>
    %11 = vector.shape_cast %8 : vector<10x32xf32> to vector<10x1x32xf32>
    tpu.vector_store %arg13[%c0_6, %c0_7, %c0_8], %11 {strides = array<i32>} : memref<10x10x32xf32, #tpu.memory_space<vmem>>, vector<10x1x32xf32>,
    %cst_9 = arith.constant 0.000000e+00 : f32
    %12 = vector.broadcast %cst_9 : f32 to vector<10x32xf32>
    %c0_10 = arith.constant 0 : index
    %c9_11 = arith.constant 9 : index
    %c0_12 = arith.constant 0 : index
    %13 = vector.load %arg13[%c0_10, %c9_11, %c0_12] : memref<10x10x32xf32, #tpu.memory_space<vmem>>, vector<10x1x32xf32>
    %14 = vector.shape_cast %13 : vector<10x1x32xf32> to vector<10x32xf32>
    %15 = vector.shape_cast %12 : vector<10x32xf32> to vector<10x1x32xf32>
    tpu.vector_store %arg13[%c0_10, %c9_11, %c0_12], %15 {strides = array<i32>} : memref<10x10x32xf32, #tpu.memory_space<vmem>>, vector<10x1x32xf32>,
    %cst_13 = arith.constant 0.000000e+00 : f32
    %16 = vector.broadcast %cst_13 : f32 to vector<10x16xf32>
    %c0_14 = arith.constant 0 : index
    %c0_15 = arith.constant 0 : index
    %c0_16 = arith.constant 0 : index
    %17 = vector.load %arg14[%c0_14, %c0_15, %c0_16] : memref<10x10x16xf32, #tpu.memory_space<vmem>>, vector<1x10x16xf32>
    %18 = vector.shape_cast %17 : vector<1x10x16xf32> to vector<10x16xf32>
    %19 = vector.shape_cast %16 : vector<10x16xf32> to vector<1x10x16xf32>
    tpu.vector_store %arg14[%c0_14, %c0_15, %c0_16], %19 {strides = array<i32>} : memref<10x10x16xf32, #tpu.memory_space<vmem>>, vector<1x10x16xf32>,
    %cst_17 = arith.constant 0.000000e+00 : f32
    %20 = vector.broadcast %cst_17 : f32 to vector<10x16xf32>
    %c9_18 = arith.constant 9 : index
    %c0_19 = arith.constant 0 : index
    %c0_20 = arith.constant 0 : index
    %21 = vector.load %arg14[%c9_18, %c0_19, %c0_20] : memref<10x10x16xf32, #tpu.memory_space<vmem>>, vector<1x10x16xf32>
    %22 = vector.shape_cast %21 : vector<1x10x16xf32> to vector<10x16xf32>
    %23 = vector.shape_cast %20 : vector<10x16xf32> to vector<1x10x16xf32>
    tpu.vector_store %arg14[%c9_18, %c0_19, %c0_20], %23 {strides = array<i32>} : memref<10x10x16xf32, #tpu.memory_space<vmem>>, vector<1x10x16xf32>,
    %cst_21 = arith.constant 0.000000e+00 : f32
    %24 = vector.broadcast %cst_21 : f32 to vector<10x16xf32>
    %c0_22 = arith.constant 0 : index
    %c0_23 = arith.constant 0 : index
    %c0_24 = arith.constant 0 : index
    %25 = vector.load %arg14[%c0_22, %c0_23, %c0_24] : memref<10x10x16xf32, #tpu.memory_space<vmem>>, vector<10x1x16xf32>
    %26 = vector.shape_cast %25 : vector<10x1x16xf32> to vector<10x16xf32>
    %27 = vector.shape_cast %24 : vector<10x16xf32> to vector<10x1x16xf32>
    tpu.vector_store %arg14[%c0_22, %c0_23, %c0_24], %27 {strides = array<i32>} : memref<10x10x16xf32, #tpu.memory_space<vmem>>, vector<10x1x16xf32>,
    %cst_25 = arith.constant 0.000000e+00 : f32
    %28 = vector.broadcast %cst_25 : f32 to vector<10x16xf32>
    %c0_26 = arith.constant 0 : index
    %c9_27 = arith.constant 9 : index
    %c0_28 = arith.constant 0 : index
    %29 = vector.load %arg14[%c0_26, %c9_27, %c0_28] : memref<10x10x16xf32, #tpu.memory_space<vmem>>, vector<10x1x16xf32>
    %30 = vector.shape_cast %29 : vector<10x1x16xf32> to vector<10x16xf32>
    %31 = vector.shape_cast %28 : vector<10x16xf32> to vector<10x1x16xf32>
    tpu.vector_store %arg14[%c0_26, %c9_27, %c0_28], %31 {strides = array<i32>} : memref<10x10x16xf32, #tpu.memory_space<vmem>>, vector<10x1x16xf32>,
    %cst_29 = arith.constant 0.000000e+00 : f32
    %32 = vector.broadcast %cst_29 : f32 to vector<10x32xf32>
    %c0_30 = arith.constant 0 : index
    %c0_31 = arith.constant 0 : index
    %c0_32 = arith.constant 0 : index
    %33 = vector.load %arg15[%c0_30, %c0_31, %c0_32] : memref<10x10x32xf32, #tpu.memory_space<vmem>>, vector<1x10x32xf32>
    %34 = vector.shape_cast %33 : vector<1x10x32xf32> to vector<10x32xf32>
    %35 = vector.shape_cast %32 : vector<10x32xf32> to vector<1x10x32xf32>
    tpu.vector_store %arg15[%c0_30, %c0_31, %c0_32], %35 {strides = array<i32>} : memref<10x10x32xf32, #tpu.memory_space<vmem>>, vector<1x10x32xf32>,
    %cst_33 = arith.constant 0.000000e+00 : f32
    %36 = vector.broadcast %cst_33 : f32 to vector<10x32xf32>
    %c9_34 = arith.constant 9 : index
    %c0_35 = arith.constant 0 : index
    %c0_36 = arith.constant 0 : index
    %37 = vector.load %arg15[%c9_34, %c0_35, %c0_36] : memref<10x10x32xf32, #tpu.memory_space<vmem>>, vector<1x10x32xf32>
    %38 = vector.shape_cast %37 : vector<1x10x32xf32> to vector<10x32xf32>
    %39 = vector.shape_cast %36 : vector<10x32xf32> to vector<1x10x32xf32>
    tpu.vector_store %arg15[%c9_34, %c0_35, %c0_36], %39 {strides = array<i32>} : memref<10x10x32xf32, #tpu.memory_space<vmem>>, vector<1x10x32xf32>,
    %cst_37 = arith.constant 0.000000e+00 : f32
    %40 = vector.broadcast %cst_37 : f32 to vector<10x32xf32>
    %c0_38 = arith.constant 0 : index
    %c0_39 = arith.constant 0 : index
    %c0_40 = arith.constant 0 : index
    %41 = vector.load %arg15[%c0_38, %c0_39, %c0_40] : memref<10x10x32xf32, #tpu.memory_space<vmem>>, vector<10x1x32xf32>
    %42 = vector.shape_cast %41 : vector<10x1x32xf32> to vector<10x32xf32>
    %43 = vector.shape_cast %40 : vector<10x32xf32> to vector<10x1x32xf32>
    tpu.vector_store %arg15[%c0_38, %c0_39, %c0_40], %43 {strides = array<i32>} : memref<10x10x32xf32, #tpu.memory_space<vmem>>, vector<10x1x32xf32>,
    %cst_41 = arith.constant 0.000000e+00 : f32
    %44 = vector.broadcast %cst_41 : f32 to vector<10x32xf32>
    %c0_42 = arith.constant 0 : index
    %c9_43 = arith.constant 9 : index
    %c0_44 = arith.constant 0 : index
    %45 = vector.load %arg15[%c0_42, %c9_43, %c0_44] : memref<10x10x32xf32, #tpu.memory_space<vmem>>, vector<10x1x32xf32>
    %46 = vector.shape_cast %45 : vector<10x1x32xf32> to vector<10x32xf32>
    %47 = vector.shape_cast %44 : vector<10x32xf32> to vector<10x1x32xf32>
    tpu.vector_store %arg15[%c0_42, %c9_43, %c0_44], %47 {strides = array<i32>} : memref<10x10x32xf32, #tpu.memory_space<vmem>>, vector<10x1x32xf32>,
    %c0_45 = arith.constant 0 : index
    %c0_46 = arith.constant 0 : index
    %c0_47 = arith.constant 0 : index
    %c0_48 = arith.constant 0 : index
    %48 = vector.load %arg1[%c0_45, %c0_46, %c0_47, %c0_48] : memref<1x8x8x32xf32, #tpu.memory_space<vmem>>, vector<1x8x8x32xf32>
    %49 = vector.shape_cast %48 : vector<1x8x8x32xf32> to vector<8x8x32xf32>
    %c1 = arith.constant 1 : index
    %c1_49 = arith.constant 1 : index
    %c0_50 = arith.constant 0 : index
    %50 = vector.load %arg13[%c1, %c1_49, %c0_50] : memref<10x10x32xf32, #tpu.memory_space<vmem>>, vector<8x8x32xf32>
    tpu.vector_store %arg13[%c1, %c1_49, %c0_50], %49 {strides = array<i32>} : memref<10x10x32xf32, #tpu.memory_space<vmem>>, vector<8x8x32xf32>,
    %c0_51 = arith.constant 0 : index
    %c0_52 = arith.constant 0 : index
    %c0_53 = arith.constant 0 : index
    %c0_54 = arith.constant 0 : index
    %51 = vector.load %arg2[%c0_51, %c0_52, %c0_53, %c0_54] : memref<1x8x8x16xf32, #tpu.memory_space<vmem>>, vector<1x8x8x16xf32>
    %52 = vector.shape_cast %51 : vector<1x8x8x16xf32> to vector<8x8x16xf32>
    %c1_55 = arith.constant 1 : index
    %c1_56 = arith.constant 1 : index
    %c0_57 = arith.constant 0 : index
    %53 = vector.load %arg14[%c1_55, %c1_56, %c0_57] : memref<10x10x16xf32, #tpu.memory_space<vmem>>, vector<8x8x16xf32>
    tpu.vector_store %arg14[%c1_55, %c1_56, %c0_57], %52 {strides = array<i32>} : memref<10x10x16xf32, #tpu.memory_space<vmem>>, vector<8x8x16xf32>,
    %c0_58 = arith.constant 0 : index
    %c0_59 = arith.constant 0 : index
    %c0_60 = arith.constant 0 : index
    %54 = vector.load %arg13[%c0_58, %c0_59, %c0_60] : memref<10x10x32xf32, #tpu.memory_space<vmem>>, vector<8x8x32xf32>
    %55 = vector.shape_cast %54 : vector<8x8x32xf32> to vector<64x32xf32>
    %c0_61 = arith.constant 0 : index
    %c0_62 = arith.constant 0 : index
    %56 = vector.load %arg16[%c0_61, %c0_62] : memref<64x432xf32, #tpu.memory_space<vmem>>, vector<64x32xf32>
    tpu.vector_store %arg16[%c0_61, %c0_62], %55 {strides = array<i32>} : memref<64x432xf32, #tpu.memory_space<vmem>>, vector<64x32xf32>,
    %c0_63 = arith.constant 0 : index
    %c1_64 = arith.constant 1 : index
    %c0_65 = arith.constant 0 : index
    %57 = vector.load %arg13[%c0_63, %c1_64, %c0_65] : memref<10x10x32xf32, #tpu.memory_space<vmem>>, vector<8x8x32xf32>
    %58 = vector.shape_cast %57 : vector<8x8x32xf32> to vector<64x32xf32>
    %c0_66 = arith.constant 0 : index
    %c32 = arith.constant 32 : index
    %59 = vector.load %arg16[%c0_66, %c32] : memref<64x432xf32, #tpu.memory_space<vmem>>, vector<64x32xf32>
    tpu.vector_store %arg16[%c0_66, %c32], %58 {strides = array<i32>} : memref<64x432xf32, #tpu.memory_space<vmem>>, vector<64x32xf32>,
    %c0_67 = arith.constant 0 : index
    %c2 = arith.constant 2 : index
    %c0_68 = arith.constant 0 : index
    %60 = vector.load %arg13[%c0_67, %c2, %c0_68] : memref<10x10x32xf32, #tpu.memory_space<vmem>>, vector<8x8x32xf32>
    %61 = vector.shape_cast %60 : vector<8x8x32xf32> to vector<64x32xf32>
    %c0_69 = arith.constant 0 : index
    %c64 = arith.constant 64 : index
    %62 = vector.load %arg16[%c0_69, %c64] : memref<64x432xf32, #tpu.memory_space<vmem>>, vector<64x32xf32>
    tpu.vector_store %arg16[%c0_69, %c64], %61 {strides = array<i32>} : memref<64x432xf32, #tpu.memory_space<vmem>>, vector<64x32xf32>,
    %c1_70 = arith.constant 1 : index
    %c0_71 = arith.constant 0 : index
    %c0_72 = arith.constant 0 : index
    %63 = vector.load %arg13[%c1_70, %c0_71, %c0_72] : memref<10x10x32xf32, #tpu.memory_space<vmem>>, vector<8x8x32xf32>
    %64 = vector.shape_cast %63 : vector<8x8x32xf32> to vector<64x32xf32>
    %c0_73 = arith.constant 0 : index
    %c96 = arith.constant 96 : index
    %65 = vector.load %arg16[%c0_73, %c96] : memref<64x432xf32, #tpu.memory_space<vmem>>, vector<64x32xf32>
    tpu.vector_store %arg16[%c0_73, %c96], %64 {strides = array<i32>} : memref<64x432xf32, #tpu.memory_space<vmem>>, vector<64x32xf32>,
    %c1_74 = arith.constant 1 : index
    %c1_75 = arith.constant 1 : index
    %c0_76 = arith.constant 0 : index
    %66 = vector.load %arg13[%c1_74, %c1_75, %c0_76] : memref<10x10x32xf32, #tpu.memory_space<vmem>>, vector<8x8x32xf32>
    %67 = vector.shape_cast %66 : vector<8x8x32xf32> to vector<64x32xf32>
    %c0_77 = arith.constant 0 : index
    %c128 = arith.constant 128 : index
    %68 = vector.load %arg16[%c0_77, %c128] : memref<64x432xf32, #tpu.memory_space<vmem>>, vector<64x32xf32>
    tpu.vector_store %arg16[%c0_77, %c128], %67 {strides = array<i32>} : memref<64x432xf32, #tpu.memory_space<vmem>>, vector<64x32xf32>,
    %c1_78 = arith.constant 1 : index
    %c2_79 = arith.constant 2 : index
    %c0_80 = arith.constant 0 : index
    %69 = vector.load %arg13[%c1_78, %c2_79, %c0_80] : memref<10x10x32xf32, #tpu.memory_space<vmem>>, vector<8x8x32xf32>
    %70 = vector.shape_cast %69 : vector<8x8x32xf32> to vector<64x32xf32>
    %c0_81 = arith.constant 0 : index
    %c160 = arith.constant 160 : index
    %71 = vector.load %arg16[%c0_81, %c160] : memref<64x432xf32, #tpu.memory_space<vmem>>, vector<64x32xf32>
    tpu.vector_store %arg16[%c0_81, %c160], %70 {strides = array<i32>} : memref<64x432xf32, #tpu.memory_space<vmem>>, vector<64x32xf32>,
    %c2_82 = arith.constant 2 : index
    %c0_83 = arith.constant 0 : index
    %c0_84 = arith.constant 0 : index
    %72 = vector.load %arg13[%c2_82, %c0_83, %c0_84] : memref<10x10x32xf32, #tpu.memory_space<vmem>>, vector<8x8x32xf32>
    %73 = vector.shape_cast %72 : vector<8x8x32xf32> to vector<64x32xf32>
    %c0_85 = arith.constant 0 : index
    %c192 = arith.constant 192 : index
    %74 = vector.load %arg16[%c0_85, %c192] : memref<64x432xf32, #tpu.memory_space<vmem>>, vector<64x32xf32>
    tpu.vector_store %arg16[%c0_85, %c192], %73 {strides = array<i32>} : memref<64x432xf32, #tpu.memory_space<vmem>>, vector<64x32xf32>,
    %c2_86 = arith.constant 2 : index
    %c1_87 = arith.constant 1 : index
    %c0_88 = arith.constant 0 : index
    %75 = vector.load %arg13[%c2_86, %c1_87, %c0_88] : memref<10x10x32xf32, #tpu.memory_space<vmem>>, vector<8x8x32xf32>
    %76 = vector.shape_cast %75 : vector<8x8x32xf32> to vector<64x32xf32>
    %c0_89 = arith.constant 0 : index
    %c224 = arith.constant 224 : index
    %77 = vector.load %arg16[%c0_89, %c224] : memref<64x432xf32, #tpu.memory_space<vmem>>, vector<64x32xf32>
    tpu.vector_store %arg16[%c0_89, %c224], %76 {strides = array<i32>} : memref<64x432xf32, #tpu.memory_space<vmem>>, vector<64x32xf32>,
    %c2_90 = arith.constant 2 : index
    %c2_91 = arith.constant 2 : index
    %c0_92 = arith.constant 0 : index
    %78 = vector.load %arg13[%c2_90, %c2_91, %c0_92] : memref<10x10x32xf32, #tpu.memory_space<vmem>>, vector<8x8x32xf32>
    %79 = vector.shape_cast %78 : vector<8x8x32xf32> to vector<64x32xf32>
    %c0_93 = arith.constant 0 : index
    %c256 = arith.constant 256 : index
    %80 = vector.load %arg16[%c0_93, %c256] : memref<64x432xf32, #tpu.memory_space<vmem>>, vector<64x32xf32>
    tpu.vector_store %arg16[%c0_93, %c256], %79 {strides = array<i32>} : memref<64x432xf32, #tpu.memory_space<vmem>>, vector<64x32xf32>,
    %c0_94 = arith.constant 0 : index
    %c0_95 = arith.constant 0 : index
    %c0_96 = arith.constant 0 : index
    %81 = vector.load %arg14[%c0_94, %c0_95, %c0_96] : memref<10x10x16xf32, #tpu.memory_space<vmem>>, vector<8x8x16xf32>
    %82 = vector.shape_cast %81 : vector<8x8x16xf32> to vector<64x16xf32>
    %c0_97 = arith.constant 0 : index
    %c288 = arith.constant 288 : index
    %83 = vector.load %arg16[%c0_97, %c288] : memref<64x432xf32, #tpu.memory_space<vmem>>, vector<64x16xf32>
    tpu.vector_store %arg16[%c0_97, %c288], %82 {strides = array<i32>} : memref<64x432xf32, #tpu.memory_space<vmem>>, vector<64x16xf32>,
    %c0_98 = arith.constant 0 : index
    %c1_99 = arith.constant 1 : index
    %c0_100 = arith.constant 0 : index
    %84 = vector.load %arg14[%c0_98, %c1_99, %c0_100] : memref<10x10x16xf32, #tpu.memory_space<vmem>>, vector<8x8x16xf32>
    %85 = vector.shape_cast %84 : vector<8x8x16xf32> to vector<64x16xf32>
    %c0_101 = arith.constant 0 : index
    %c304 = arith.constant 304 : index
    %86 = vector.load %arg16[%c0_101, %c304] : memref<64x432xf32, #tpu.memory_space<vmem>>, vector<64x16xf32>
    tpu.vector_store %arg16[%c0_101, %c304], %85 {strides = array<i32>} : memref<64x432xf32, #tpu.memory_space<vmem>>, vector<64x16xf32>,
    %c0_102 = arith.constant 0 : index
    %c2_103 = arith.constant 2 : index
    %c0_104 = arith.constant 0 : index
    %87 = vector.load %arg14[%c0_102, %c2_103, %c0_104] : memref<10x10x16xf32, #tpu.memory_space<vmem>>, vector<8x8x16xf32>
    %88 = vector.shape_cast %87 : vector<8x8x16xf32> to vector<64x16xf32>
    %c0_105 = arith.constant 0 : index
    %c320 = arith.constant 320 : index
    %89 = vector.load %arg16[%c0_105, %c320] : memref<64x432xf32, #tpu.memory_space<vmem>>, vector<64x16xf32>
    tpu.vector_store %arg16[%c0_105, %c320], %88 {strides = array<i32>} : memref<64x432xf32, #tpu.memory_space<vmem>>, vector<64x16xf32>,
    %c1_106 = arith.constant 1 : index
    %c0_107 = arith.constant 0 : index
    %c0_108 = arith.constant 0 : index
    %90 = vector.load %arg14[%c1_106, %c0_107, %c0_108] : memref<10x10x16xf32, #tpu.memory_space<vmem>>, vector<8x8x16xf32>
    %91 = vector.shape_cast %90 : vector<8x8x16xf32> to vector<64x16xf32>
    %c0_109 = arith.constant 0 : index
    %c336 = arith.constant 336 : index
    %92 = vector.load %arg16[%c0_109, %c336] : memref<64x432xf32, #tpu.memory_space<vmem>>, vector<64x16xf32>
    tpu.vector_store %arg16[%c0_109, %c336], %91 {strides = array<i32>} : memref<64x432xf32, #tpu.memory_space<vmem>>, vector<64x16xf32>,
    %c1_110 = arith.constant 1 : index
    %c1_111 = arith.constant 1 : index
    %c0_112 = arith.constant 0 : index
    %93 = vector.load %arg14[%c1_110, %c1_111, %c0_112] : memref<10x10x16xf32, #tpu.memory_space<vmem>>, vector<8x8x16xf32>
    %94 = vector.shape_cast %93 : vector<8x8x16xf32> to vector<64x16xf32>
    %c0_113 = arith.constant 0 : index
    %c352 = arith.constant 352 : index
    %95 = vector.load %arg16[%c0_113, %c352] : memref<64x432xf32, #tpu.memory_space<vmem>>, vector<64x16xf32>
    tpu.vector_store %arg16[%c0_113, %c352], %94 {strides = array<i32>} : memref<64x432xf32, #tpu.memory_space<vmem>>, vector<64x16xf32>,
    %c1_114 = arith.constant 1 : index
    %c2_115 = arith.constant 2 : index
    %c0_116 = arith.constant 0 : index
    %96 = vector.load %arg14[%c1_114, %c2_115, %c0_116] : memref<10x10x16xf32, #tpu.memory_space<vmem>>, vector<8x8x16xf32>
    %97 = vector.shape_cast %96 : vector<8x8x16xf32> to vector<64x16xf32>
    %c0_117 = arith.constant 0 : index
    %c368 = arith.constant 368 : index
    %98 = vector.load %arg16[%c0_117, %c368] : memref<64x432xf32, #tpu.memory_space<vmem>>, vector<64x16xf32>
    tpu.vector_store %arg16[%c0_117, %c368], %97 {strides = array<i32>} : memref<64x432xf32, #tpu.memory_space<vmem>>, vector<64x16xf32>,
    %c2_118 = arith.constant 2 : index
    %c0_119 = arith.constant 0 : index
    %c0_120 = arith.constant 0 : index
    %99 = vector.load %arg14[%c2_118, %c0_119, %c0_120] : memref<10x10x16xf32, #tpu.memory_space<vmem>>, vector<8x8x16xf32>
    %100 = vector.shape_cast %99 : vector<8x8x16xf32> to vector<64x16xf32>
    %c0_121 = arith.constant 0 : index
    %c384 = arith.constant 384 : index
    %101 = vector.load %arg16[%c0_121, %c384] : memref<64x432xf32, #tpu.memory_space<vmem>>, vector<64x16xf32>
    tpu.vector_store %arg16[%c0_121, %c384], %100 {strides = array<i32>} : memref<64x432xf32, #tpu.memory_space<vmem>>, vector<64x16xf32>,
    %c2_122 = arith.constant 2 : index
    %c1_123 = arith.constant 1 : index
    %c0_124 = arith.constant 0 : index
    %102 = vector.load %arg14[%c2_122, %c1_123, %c0_124] : memref<10x10x16xf32, #tpu.memory_space<vmem>>, vector<8x8x16xf32>
    %103 = vector.shape_cast %102 : vector<8x8x16xf32> to vector<64x16xf32>
    %c0_125 = arith.constant 0 : index
    %c400 = arith.constant 400 : index
    %104 = vector.load %arg16[%c0_125, %c400] : memref<64x432xf32, #tpu.memory_space<vmem>>, vector<64x16xf32>
    tpu.vector_store %arg16[%c0_125, %c400], %103 {strides = array<i32>} : memref<64x432xf32, #tpu.memory_space<vmem>>, vector<64x16xf32>,
    %c2_126 = arith.constant 2 : index
    %c2_127 = arith.constant 2 : index
    %c0_128 = arith.constant 0 : index
    %105 = vector.load %arg14[%c2_126, %c2_127, %c0_128] : memref<10x10x16xf32, #tpu.memory_space<vmem>>, vector<8x8x16xf32>
    %106 = vector.shape_cast %105 : vector<8x8x16xf32> to vector<64x16xf32>
    %c0_129 = arith.constant 0 : index
    %c416 = arith.constant 416 : index
    %107 = vector.load %arg16[%c0_129, %c416] : memref<64x432xf32, #tpu.memory_space<vmem>>, vector<64x16xf32>
    tpu.vector_store %arg16[%c0_129, %c416], %106 {strides = array<i32>} : memref<64x432xf32, #tpu.memory_space<vmem>>, vector<64x16xf32>,
    %c0_130 = arith.constant 0 : index
    %c0_131 = arith.constant 0 : index
    %108 = vector.load %arg16[%c0_130, %c0_131] : memref<64x432xf32, #tpu.memory_space<vmem>>, vector<64x432xf32>
    %c0_132 = arith.constant 0 : index
    %c0_133 = arith.constant 0 : index
    %109 = vector.load %arg3[%c0_132, %c0_133] : memref<432x32xf32, #tpu.memory_space<vmem>>, vector<432x32xf32>
    %cst_134 = arith.constant dense<0.000000e+00> : vector<64x32xf32>
    %110 = tpu.matmul %108, %109, %cst_134 {dimension_numbers = #tpu.dot_dimension_numbers<[1], [0], [0], [1], [0, 0, 1, 1], [], []>} : vector<64x432xf32>, vector<432x32xf32>, vector<64x32xf32> -> vector<64x32xf32>
    %c0_135 = arith.constant 0 : index
    %c0_136 = arith.constant 0 : index
    %111 = vector.load %arg4[%c0_135, %c0_136] : memref<1x32xf32, #tpu.memory_space<vmem>>, vector<1x32xf32>
    %112 = vector.broadcast %111 : vector<1x32xf32> to vector<64x32xf32>
    %113 = arith.mulf %110, %112 : vector<64x32xf32>
    %c0_137 = arith.constant 0 : index
    %c0_138 = arith.constant 0 : index
    %114 = vector.load %arg5[%c0_137, %c0_138] : memref<1x32xf32, #tpu.memory_space<vmem>>, vector<1x32xf32>
    %115 = vector.broadcast %114 : vector<1x32xf32> to vector<64x32xf32>
    %116 = arith.addf %113, %115 : vector<64x32xf32>
    %cst_139 = arith.constant 0.00999999977 : f32
    %117 = vector.broadcast %cst_139 : f32 to vector<64x32xf32>
    %118 = arith.mulf %117, %116 : vector<64x32xf32>
    %119 = arith.maximumf %116, %118 : vector<64x32xf32>
    %120 = vector.shape_cast %119 : vector<64x32xf32> to vector<8x8x32xf32>
    %c1_140 = arith.constant 1 : index
    %c1_141 = arith.constant 1 : index
    %c0_142 = arith.constant 0 : index
    %121 = vector.load %arg15[%c1_140, %c1_141, %c0_142] : memref<10x10x32xf32, #tpu.memory_space<vmem>>, vector<8x8x32xf32>
    tpu.vector_store %arg15[%c1_140, %c1_141, %c0_142], %120 {strides = array<i32>} : memref<10x10x32xf32, #tpu.memory_space<vmem>>, vector<8x8x32xf32>,
    %c0_143 = arith.constant 0 : index
    %c0_144 = arith.constant 0 : index
    %c0_145 = arith.constant 0 : index
    %122 = vector.load %arg15[%c0_143, %c0_144, %c0_145] : memref<10x10x32xf32, #tpu.memory_space<vmem>>, vector<8x8x32xf32>
    %123 = vector.shape_cast %122 : vector<8x8x32xf32> to vector<64x32xf32>
    %c0_146 = arith.constant 0 : index
    %c0_147 = arith.constant 0 : index
    %124 = vector.load %arg16[%c0_146, %c0_147] : memref<64x432xf32, #tpu.memory_space<vmem>>, vector<64x32xf32>
    tpu.vector_store %arg16[%c0_146, %c0_147], %123 {strides = array<i32>} : memref<64x432xf32, #tpu.memory_space<vmem>>, vector<64x32xf32>,
    %c0_148 = arith.constant 0 : index
    %c1_149 = arith.constant 1 : index
    %c0_150 = arith.constant 0 : index
    %125 = vector.load %arg15[%c0_148, %c1_149, %c0_150] : memref<10x10x32xf32, #tpu.memory_space<vmem>>, vector<8x8x32xf32>
    %126 = vector.shape_cast %125 : vector<8x8x32xf32> to vector<64x32xf32>
    %c0_151 = arith.constant 0 : index
    %c32_152 = arith.constant 32 : index
    %127 = vector.load %arg16[%c0_151, %c32_152] : memref<64x432xf32, #tpu.memory_space<vmem>>, vector<64x32xf32>
    tpu.vector_store %arg16[%c0_151, %c32_152], %126 {strides = array<i32>} : memref<64x432xf32, #tpu.memory_space<vmem>>, vector<64x32xf32>,
    %c0_153 = arith.constant 0 : index
    %c2_154 = arith.constant 2 : index
    %c0_155 = arith.constant 0 : index
    %128 = vector.load %arg15[%c0_153, %c2_154, %c0_155] : memref<10x10x32xf32, #tpu.memory_space<vmem>>, vector<8x8x32xf32>
    %129 = vector.shape_cast %128 : vector<8x8x32xf32> to vector<64x32xf32>
    %c0_156 = arith.constant 0 : index
    %c64_157 = arith.constant 64 : index
    %130 = vector.load %arg16[%c0_156, %c64_157] : memref<64x432xf32, #tpu.memory_space<vmem>>, vector<64x32xf32>
    tpu.vector_store %arg16[%c0_156, %c64_157], %129 {strides = array<i32>} : memref<64x432xf32, #tpu.memory_space<vmem>>, vector<64x32xf32>,
    %c1_158 = arith.constant 1 : index
    %c0_159 = arith.constant 0 : index
    %c0_160 = arith.constant 0 : index
    %131 = vector.load %arg15[%c1_158, %c0_159, %c0_160] : memref<10x10x32xf32, #tpu.memory_space<vmem>>, vector<8x8x32xf32>
    %132 = vector.shape_cast %131 : vector<8x8x32xf32> to vector<64x32xf32>
    %c0_161 = arith.constant 0 : index
    %c96_162 = arith.constant 96 : index
    %133 = vector.load %arg16[%c0_161, %c96_162] : memref<64x432xf32, #tpu.memory_space<vmem>>, vector<64x32xf32>
    tpu.vector_store %arg16[%c0_161, %c96_162], %132 {strides = array<i32>} : memref<64x432xf32, #tpu.memory_space<vmem>>, vector<64x32xf32>,
    %c1_163 = arith.constant 1 : index
    %c1_164 = arith.constant 1 : index
    %c0_165 = arith.constant 0 : index
    %134 = vector.load %arg15[%c1_163, %c1_164, %c0_165] : memref<10x10x32xf32, #tpu.memory_space<vmem>>, vector<8x8x32xf32>
    %135 = vector.shape_cast %134 : vector<8x8x32xf32> to vector<64x32xf32>
    %c0_166 = arith.constant 0 : index
    %c128_167 = arith.constant 128 : index
    %136 = vector.load %arg16[%c0_166, %c128_167] : memref<64x432xf32, #tpu.memory_space<vmem>>, vector<64x32xf32>
    tpu.vector_store %arg16[%c0_166, %c128_167], %135 {strides = array<i32>} : memref<64x432xf32, #tpu.memory_space<vmem>>, vector<64x32xf32>,
    %c1_168 = arith.constant 1 : index
    %c2_169 = arith.constant 2 : index
    %c0_170 = arith.constant 0 : index
    %137 = vector.load %arg15[%c1_168, %c2_169, %c0_170] : memref<10x10x32xf32, #tpu.memory_space<vmem>>, vector<8x8x32xf32>
    %138 = vector.shape_cast %137 : vector<8x8x32xf32> to vector<64x32xf32>
    %c0_171 = arith.constant 0 : index
    %c160_172 = arith.constant 160 : index
    %139 = vector.load %arg16[%c0_171, %c160_172] : memref<64x432xf32, #tpu.memory_space<vmem>>, vector<64x32xf32>
    tpu.vector_store %arg16[%c0_171, %c160_172], %138 {strides = array<i32>} : memref<64x432xf32, #tpu.memory_space<vmem>>, vector<64x32xf32>,
    %c2_173 = arith.constant 2 : index
    %c0_174 = arith.constant 0 : index
    %c0_175 = arith.constant 0 : index
    %140 = vector.load %arg15[%c2_173, %c0_174, %c0_175] : memref<10x10x32xf32, #tpu.memory_space<vmem>>, vector<8x8x32xf32>
    %141 = vector.shape_cast %140 : vector<8x8x32xf32> to vector<64x32xf32>
    %c0_176 = arith.constant 0 : index
    %c192_177 = arith.constant 192 : index
    %142 = vector.load %arg16[%c0_176, %c192_177] : memref<64x432xf32, #tpu.memory_space<vmem>>, vector<64x32xf32>
    tpu.vector_store %arg16[%c0_176, %c192_177], %141 {strides = array<i32>} : memref<64x432xf32, #tpu.memory_space<vmem>>, vector<64x32xf32>,
    %c2_178 = arith.constant 2 : index
    %c1_179 = arith.constant 1 : index
    %c0_180 = arith.constant 0 : index
    %143 = vector.load %arg15[%c2_178, %c1_179, %c0_180] : memref<10x10x32xf32, #tpu.memory_space<vmem>>, vector<8x8x32xf32>
    %144 = vector.shape_cast %143 : vector<8x8x32xf32> to vector<64x32xf32>
    %c0_181 = arith.constant 0 : index
    %c224_182 = arith.constant 224 : index
    %145 = vector.load %arg16[%c0_181, %c224_182] : memref<64x432xf32, #tpu.memory_space<vmem>>, vector<64x32xf32>
    tpu.vector_store %arg16[%c0_181, %c224_182], %144 {strides = array<i32>} : memref<64x432xf32, #tpu.memory_space<vmem>>, vector<64x32xf32>,
    %c2_183 = arith.constant 2 : index
    %c2_184 = arith.constant 2 : index
    %c0_185 = arith.constant 0 : index
    %146 = vector.load %arg15[%c2_183, %c2_184, %c0_185] : memref<10x10x32xf32, #tpu.memory_space<vmem>>, vector<8x8x32xf32>
    %147 = vector.shape_cast %146 : vector<8x8x32xf32> to vector<64x32xf32>
    %c0_186 = arith.constant 0 : index
    %c256_187 = arith.constant 256 : index
    %148 = vector.load %arg16[%c0_186, %c256_187] : memref<64x432xf32, #tpu.memory_space<vmem>>, vector<64x32xf32>
    tpu.vector_store %arg16[%c0_186, %c256_187], %147 {strides = array<i32>} : memref<64x432xf32, #tpu.memory_space<vmem>>, vector<64x32xf32>,
    %c0_188 = arith.constant 0 : index
    %c0_189 = arith.constant 0 : index
    %149 = vector.load %arg16[%c0_188, %c0_189] : memref<64x432xf32, #tpu.memory_space<vmem>>, vector<64x288xf32>
    %c0_190 = arith.constant 0 : index
    %c0_191 = arith.constant 0 : index
    %150 = vector.load %arg6[%c0_190, %c0_191] : memref<288x32xf32, #tpu.memory_space<vmem>>, vector<288x32xf32>
    %cst_192 = arith.constant dense<0.000000e+00> : vector<64x32xf32>
    %151 = tpu.matmul %149, %150, %cst_192 {dimension_numbers = #tpu.dot_dimension_numbers<[1], [0], [0], [1], [0, 0, 1, 1], [], []>} : vector<64x288xf32>, vector<288x32xf32>, vector<64x32xf32> -> vector<64x32xf32>
    %c0_193 = arith.constant 0 : index
    %c0_194 = arith.constant 0 : index
    %152 = vector.load %arg7[%c0_193, %c0_194] : memref<1x32xf32, #tpu.memory_space<vmem>>, vector<1x32xf32>
    %153 = vector.broadcast %152 : vector<1x32xf32> to vector<64x32xf32>
    %154 = arith.mulf %151, %153 : vector<64x32xf32>
    %c0_195 = arith.constant 0 : index
    %c0_196 = arith.constant 0 : index
    %155 = vector.load %arg8[%c0_195, %c0_196] : memref<1x32xf32, #tpu.memory_space<vmem>>, vector<1x32xf32>
    %156 = vector.broadcast %155 : vector<1x32xf32> to vector<64x32xf32>
    %157 = arith.addf %154, %156 : vector<64x32xf32>
    %c0_197 = arith.constant 0 : index
    %c0_198 = arith.constant 0 : index
    %158 = vector.load %arg9[%c0_197, %c0_198] : memref<3x32xf32, #tpu.memory_space<vmem>>, vector<3x32xf32>
    %cst_199 = arith.constant dense<0.000000e+00> : vector<3x64xf32>
    %159 = tpu.matmul %158, %157, %cst_199 {dimension_numbers = #tpu.dot_dimension_numbers<[1], [1], [0], [0], [0, 0, 1, 0], [], []>} : vector<3x32xf32>, vector<64x32xf32>, vector<3x64xf32> -> vector<3x64xf32>
    %cst_200 = arith.constant dense<0xFF800000> : vector<64xf32>
    %160 = vector.multi_reduction <maximumf>, %159, %cst_200 [0] : vector<3x64xf32> to vector<64xf32>
    %161 = vector.shape_cast %160 : vector<64xf32> to vector<1x64xf32>
    %162 = vector.broadcast %161 : vector<1x64xf32> to vector<3x64xf32>
    %163 = arith.subf %159, %162 : vector<3x64xf32>
    %164 = math.exp %163 : vector<3x64xf32>
    %cst_201 = arith.constant dense<0.000000e+00> : vector<64xf32>
    %165 = vector.multi_reduction <add>, %164, %cst_201 [0] : vector<3x64xf32> to vector<64xf32>
    %166 = vector.shape_cast %165 : vector<64xf32> to vector<1x64xf32>
    %167 = vector.broadcast %166 : vector<1x64xf32> to vector<3x64xf32>
    %168 = arith.divf %164, %167 : vector<3x64xf32>
    %c0_202 = arith.constant 0 : index
    %c0_203 = arith.constant 0 : index
    %c0_204 = arith.constant 0 : index
    %169 = vector.load %arg11[%c0_202, %c0_203, %c0_204] : memref<1x3x64xf32, #tpu.memory_space<vmem>>, vector<1x3x64xf32>
    %170 = vector.shape_cast %169 : vector<1x3x64xf32> to vector<3x64xf32>
    %171 = vector.shape_cast %168 : vector<3x64xf32> to vector<1x3x64xf32>
    tpu.vector_store %arg11[%c0_202, %c0_203, %c0_204], %171 {strides = array<i32>} : memref<1x3x64xf32, #tpu.memory_space<vmem>>, vector<1x3x64xf32>,
    %c0_205 = arith.constant 0 : index
    %c0_206 = arith.constant 0 : index
    %172 = vector.load %arg10[%c0_205, %c0_206] : memref<32x64xf32, #tpu.memory_space<vmem>>, vector<32x64xf32>
    %cst_207 = arith.constant dense<0.000000e+00> : vector<64x64xf32>
    %173 = tpu.matmul %157, %172, %cst_207 {dimension_numbers = #tpu.dot_dimension_numbers<[1], [0], [0], [1], [0, 0, 1, 1], [], []>} : vector<64x32xf32>, vector<32x64xf32>, vector<64x64xf32> -> vector<64x64xf32>
    %c0_208 = arith.constant 0 : index
    %c0_209 = arith.constant 0 : index
    %c0_210 = arith.constant 0 : index
    %174 = vector.load %arg12[%c0_208, %c0_209, %c0_210] : memref<1x64x64xf32, #tpu.memory_space<vmem>>, vector<1x64x64xf32>
    %175 = vector.shape_cast %174 : vector<1x64x64xf32> to vector<64x64xf32>
    %176 = vector.shape_cast %173 : vector<64x64xf32> to vector<1x64x64xf32>
    tpu.vector_store %arg12[%c0_208, %c0_209, %c0_210], %176 {strides = array<i32>} : memref<1x64x64xf32, #tpu.memory_space<vmem>>, vector<1x64x64xf32>,
    return
  }
  func.func @transform_0(%arg0: i32) -> (i32, i32, i32, i32) {
    %c0_i32 = arith.constant 0 : i32
    %c0_i32_0 = arith.constant 0 : i32
    %c0_i32_1 = arith.constant 0 : i32
    %c0_i32_2 = arith.constant 0 : i32
    return %arg0, %c0_i32, %c0_i32_0, %c0_i32_1 : i32, i32, i32, i32
  }
  func.func @transform_1(%arg0: i32) -> (i32, i32, i32, i32) {
    %c0_i32 = arith.constant 0 : i32
    %c0_i32_0 = arith.constant 0 : i32
    %c0_i32_1 = arith.constant 0 : i32
    %c0_i32_2 = arith.constant 0 : i32
    return %arg0, %c0_i32, %c0_i32_0, %c0_i32_1 : i32, i32, i32, i32
  }
  func.func @transform_2(%arg0: i32) -> (i32, i32) {
    %c0_i32 = arith.constant 0 : i32
    %c0_i32_0 = arith.constant 0 : i32
    %c0_i32_1 = arith.constant 0 : i32
    return %c0_i32, %c0_i32_0 : i32, i32
  }
  func.func @transform_3(%arg0: i32) -> (i32, i32) {
    %c0_i32 = arith.constant 0 : i32
    %c0_i32_0 = arith.constant 0 : i32
    %c0_i32_1 = arith.constant 0 : i32
    return %c0_i32, %c0_i32_0 : i32, i32
  }
  func.func @transform_4(%arg0: i32) -> (i32, i32) {
    %c0_i32 = arith.constant 0 : i32
    %c0_i32_0 = arith.constant 0 : i32
    %c0_i32_1 = arith.constant 0 : i32
    return %c0_i32, %c0_i32_0 : i32, i32
  }
  func.func @transform_5(%arg0: i32) -> (i32, i32) {
    %c0_i32 = arith.constant 0 : i32
    %c0_i32_0 = arith.constant 0 : i32
    %c0_i32_1 = arith.constant 0 : i32
    return %c0_i32, %c0_i32_0 : i32, i32
  }
  func.func @transform_6(%arg0: i32) -> (i32, i32) {
    %c0_i32 = arith.constant 0 : i32
    %c0_i32_0 = arith.constant 0 : i32
    %c0_i32_1 = arith.constant 0 : i32
    return %c0_i32, %c0_i32_0 : i32, i32
  }
  func.func @transform_7(%arg0: i32) -> (i32, i32) {
    %c0_i32 = arith.constant 0 : i32
    %c0_i32_0 = arith.constant 0 : i32
    %c0_i32_1 = arith.constant 0 : i32
    return %c0_i32, %c0_i32_0 : i32, i32
  }
  func.func @transform_8(%arg0: i32) -> (i32, i32) {
    %c0_i32 = arith.constant 0 : i32
    %c0_i32_0 = arith.constant 0 : i32
    %c0_i32_1 = arith.constant 0 : i32
    return %c0_i32, %c0_i32_0 : i32, i32
  }
  func.func @transform_9(%arg0: i32) -> (i32, i32) {
    %c0_i32 = arith.constant 0 : i32
    %c0_i32_0 = arith.constant 0 : i32
    %c0_i32_1 = arith.constant 0 : i32
    return %c0_i32, %c0_i32_0 : i32, i32
  }
  func.func @transform_10(%arg0: i32) -> (i32, i32, i32) {
    %c0_i32 = arith.constant 0 : i32
    %c0_i32_0 = arith.constant 0 : i32
    %c0_i32_1 = arith.constant 0 : i32
    return %arg0, %c0_i32, %c0_i32_0 : i32, i32, i32
  }
  func.func @transform_11(%arg0: i32) -> (i32, i32, i32) {
    %c0_i32 = arith.constant 0 : i32
    %c0_i32_0 = arith.constant 0 : i32
    %c0_i32_1 = arith.constant 0 : i32
    return %arg0, %c0_i32, %c0_i32_0 : i32, i32, i32
  }
}

module attributes {stable_mosaic.version = 11 : i64} {
  func.func @_stage_kernel(%arg0: i32, %arg1: memref<1x16x16x16xf32, #tpu.memory_space<vmem>>, %arg2: memref<1x16x16x8xf32, #tpu.memory_space<vmem>>, %arg3: memref<216x16xf32, #tpu.memory_space<vmem>>, %arg4: memref<1x16xf32, #tpu.memory_space<vmem>>, %arg5: memref<1x16xf32, #tpu.memory_space<vmem>>, %arg6: memref<144x16xf32, #tpu.memory_space<vmem>>, %arg7: memref<1x16xf32, #tpu.memory_space<vmem>>, %arg8: memref<1x16xf32, #tpu.memory_space<vmem>>, %arg9: memref<3x16xf32, #tpu.memory_space<vmem>>, %arg10: memref<1x3x256xf32, #tpu.memory_space<vmem>>, %arg11: memref<18x18x16xf32, #tpu.memory_space<vmem>>, %arg12: memref<18x18x8xf32, #tpu.memory_space<vmem>>, %arg13: memref<18x18x16xf32, #tpu.memory_space<vmem>>, %arg14: memref<256x216xf32, #tpu.memory_space<vmem>>) attributes {dimension_semantics = [#tpu.dimension_semantics<parallel>], iteration_bounds = array<i64: 2>, scalar_prefetch = 0 : i64, scratch_operands = 4 : i64, tpu.core_type = #tpu.core_type<tc>, window_params = [{transform_indices = @transform_0, window_bounds = array<i64: 1, 16, 16, 16>}, {transform_indices = @transform_1, window_bounds = array<i64: 1, 16, 16, 8>}, {pipeline_mode = #tpu.pipeline_mode<synchronous>, transform_indices = @transform_2, window_bounds = array<i64: 216, 16>}, {pipeline_mode = #tpu.pipeline_mode<synchronous>, transform_indices = @transform_3, window_bounds = array<i64: 1, 16>}, {pipeline_mode = #tpu.pipeline_mode<synchronous>, transform_indices = @transform_4, window_bounds = array<i64: 1, 16>}, {pipeline_mode = #tpu.pipeline_mode<synchronous>, transform_indices = @transform_5, window_bounds = array<i64: 144, 16>}, {pipeline_mode = #tpu.pipeline_mode<synchronous>, transform_indices = @transform_6, window_bounds = array<i64: 1, 16>}, {pipeline_mode = #tpu.pipeline_mode<synchronous>, transform_indices = @transform_7, window_bounds = array<i64: 1, 16>}, {pipeline_mode = #tpu.pipeline_mode<synchronous>, transform_indices = @transform_8, window_bounds = array<i64: 3, 16>}, {transform_indices = @transform_9, window_bounds = array<i64: 1, 3, 256>}]} {
    %cst = arith.constant 0.000000e+00 : f32
    %0 = vector.broadcast %cst : f32 to vector<18x16xf32>
    %c0 = arith.constant 0 : index
    %c0_0 = arith.constant 0 : index
    %c0_1 = arith.constant 0 : index
    %1 = vector.load %arg11[%c0, %c0_0, %c0_1] : memref<18x18x16xf32, #tpu.memory_space<vmem>>, vector<1x18x16xf32>
    %2 = vector.shape_cast %1 : vector<1x18x16xf32> to vector<18x16xf32>
    %3 = vector.shape_cast %0 : vector<18x16xf32> to vector<1x18x16xf32>
    tpu.vector_store %arg11[%c0, %c0_0, %c0_1], %3 {strides = array<i32>} : memref<18x18x16xf32, #tpu.memory_space<vmem>>, vector<1x18x16xf32>,
    %cst_2 = arith.constant 0.000000e+00 : f32
    %4 = vector.broadcast %cst_2 : f32 to vector<18x16xf32>
    %c17 = arith.constant 17 : index
    %c0_3 = arith.constant 0 : index
    %c0_4 = arith.constant 0 : index
    %5 = vector.load %arg11[%c17, %c0_3, %c0_4] : memref<18x18x16xf32, #tpu.memory_space<vmem>>, vector<1x18x16xf32>
    %6 = vector.shape_cast %5 : vector<1x18x16xf32> to vector<18x16xf32>
    %7 = vector.shape_cast %4 : vector<18x16xf32> to vector<1x18x16xf32>
    tpu.vector_store %arg11[%c17, %c0_3, %c0_4], %7 {strides = array<i32>} : memref<18x18x16xf32, #tpu.memory_space<vmem>>, vector<1x18x16xf32>,
    %cst_5 = arith.constant 0.000000e+00 : f32
    %8 = vector.broadcast %cst_5 : f32 to vector<18x16xf32>
    %c0_6 = arith.constant 0 : index
    %c0_7 = arith.constant 0 : index
    %c0_8 = arith.constant 0 : index
    %9 = vector.load %arg11[%c0_6, %c0_7, %c0_8] : memref<18x18x16xf32, #tpu.memory_space<vmem>>, vector<18x1x16xf32>
    %10 = vector.shape_cast %9 : vector<18x1x16xf32> to vector<18x16xf32>
    %11 = vector.shape_cast %8 : vector<18x16xf32> to vector<18x1x16xf32>
    tpu.vector_store %arg11[%c0_6, %c0_7, %c0_8], %11 {strides = array<i32>} : memref<18x18x16xf32, #tpu.memory_space<vmem>>, vector<18x1x16xf32>,
    %cst_9 = arith.constant 0.000000e+00 : f32
    %12 = vector.broadcast %cst_9 : f32 to vector<18x16xf32>
    %c0_10 = arith.constant 0 : index
    %c17_11 = arith.constant 17 : index
    %c0_12 = arith.constant 0 : index
    %13 = vector.load %arg11[%c0_10, %c17_11, %c0_12] : memref<18x18x16xf32, #tpu.memory_space<vmem>>, vector<18x1x16xf32>
    %14 = vector.shape_cast %13 : vector<18x1x16xf32> to vector<18x16xf32>
    %15 = vector.shape_cast %12 : vector<18x16xf32> to vector<18x1x16xf32>
    tpu.vector_store %arg11[%c0_10, %c17_11, %c0_12], %15 {strides = array<i32>} : memref<18x18x16xf32, #tpu.memory_space<vmem>>, vector<18x1x16xf32>,
    %cst_13 = arith.constant 0.000000e+00 : f32
    %16 = vector.broadcast %cst_13 : f32 to vector<18x8xf32>
    %c0_14 = arith.constant 0 : index
    %c0_15 = arith.constant 0 : index
    %c0_16 = arith.constant 0 : index
    %17 = vector.load %arg12[%c0_14, %c0_15, %c0_16] : memref<18x18x8xf32, #tpu.memory_space<vmem>>, vector<1x18x8xf32>
    %18 = vector.shape_cast %17 : vector<1x18x8xf32> to vector<18x8xf32>
    %19 = vector.shape_cast %16 : vector<18x8xf32> to vector<1x18x8xf32>
    tpu.vector_store %arg12[%c0_14, %c0_15, %c0_16], %19 {strides = array<i32>} : memref<18x18x8xf32, #tpu.memory_space<vmem>>, vector<1x18x8xf32>,
    %cst_17 = arith.constant 0.000000e+00 : f32
    %20 = vector.broadcast %cst_17 : f32 to vector<18x8xf32>
    %c17_18 = arith.constant 17 : index
    %c0_19 = arith.constant 0 : index
    %c0_20 = arith.constant 0 : index
    %21 = vector.load %arg12[%c17_18, %c0_19, %c0_20] : memref<18x18x8xf32, #tpu.memory_space<vmem>>, vector<1x18x8xf32>
    %22 = vector.shape_cast %21 : vector<1x18x8xf32> to vector<18x8xf32>
    %23 = vector.shape_cast %20 : vector<18x8xf32> to vector<1x18x8xf32>
    tpu.vector_store %arg12[%c17_18, %c0_19, %c0_20], %23 {strides = array<i32>} : memref<18x18x8xf32, #tpu.memory_space<vmem>>, vector<1x18x8xf32>,
    %cst_21 = arith.constant 0.000000e+00 : f32
    %24 = vector.broadcast %cst_21 : f32 to vector<18x8xf32>
    %c0_22 = arith.constant 0 : index
    %c0_23 = arith.constant 0 : index
    %c0_24 = arith.constant 0 : index
    %25 = vector.load %arg12[%c0_22, %c0_23, %c0_24] : memref<18x18x8xf32, #tpu.memory_space<vmem>>, vector<18x1x8xf32>
    %26 = vector.shape_cast %25 : vector<18x1x8xf32> to vector<18x8xf32>
    %27 = vector.shape_cast %24 : vector<18x8xf32> to vector<18x1x8xf32>
    tpu.vector_store %arg12[%c0_22, %c0_23, %c0_24], %27 {strides = array<i32>} : memref<18x18x8xf32, #tpu.memory_space<vmem>>, vector<18x1x8xf32>,
    %cst_25 = arith.constant 0.000000e+00 : f32
    %28 = vector.broadcast %cst_25 : f32 to vector<18x8xf32>
    %c0_26 = arith.constant 0 : index
    %c17_27 = arith.constant 17 : index
    %c0_28 = arith.constant 0 : index
    %29 = vector.load %arg12[%c0_26, %c17_27, %c0_28] : memref<18x18x8xf32, #tpu.memory_space<vmem>>, vector<18x1x8xf32>
    %30 = vector.shape_cast %29 : vector<18x1x8xf32> to vector<18x8xf32>
    %31 = vector.shape_cast %28 : vector<18x8xf32> to vector<18x1x8xf32>
    tpu.vector_store %arg12[%c0_26, %c17_27, %c0_28], %31 {strides = array<i32>} : memref<18x18x8xf32, #tpu.memory_space<vmem>>, vector<18x1x8xf32>,
    %cst_29 = arith.constant 0.000000e+00 : f32
    %32 = vector.broadcast %cst_29 : f32 to vector<18x16xf32>
    %c0_30 = arith.constant 0 : index
    %c0_31 = arith.constant 0 : index
    %c0_32 = arith.constant 0 : index
    %33 = vector.load %arg13[%c0_30, %c0_31, %c0_32] : memref<18x18x16xf32, #tpu.memory_space<vmem>>, vector<1x18x16xf32>
    %34 = vector.shape_cast %33 : vector<1x18x16xf32> to vector<18x16xf32>
    %35 = vector.shape_cast %32 : vector<18x16xf32> to vector<1x18x16xf32>
    tpu.vector_store %arg13[%c0_30, %c0_31, %c0_32], %35 {strides = array<i32>} : memref<18x18x16xf32, #tpu.memory_space<vmem>>, vector<1x18x16xf32>,
    %cst_33 = arith.constant 0.000000e+00 : f32
    %36 = vector.broadcast %cst_33 : f32 to vector<18x16xf32>
    %c17_34 = arith.constant 17 : index
    %c0_35 = arith.constant 0 : index
    %c0_36 = arith.constant 0 : index
    %37 = vector.load %arg13[%c17_34, %c0_35, %c0_36] : memref<18x18x16xf32, #tpu.memory_space<vmem>>, vector<1x18x16xf32>
    %38 = vector.shape_cast %37 : vector<1x18x16xf32> to vector<18x16xf32>
    %39 = vector.shape_cast %36 : vector<18x16xf32> to vector<1x18x16xf32>
    tpu.vector_store %arg13[%c17_34, %c0_35, %c0_36], %39 {strides = array<i32>} : memref<18x18x16xf32, #tpu.memory_space<vmem>>, vector<1x18x16xf32>,
    %cst_37 = arith.constant 0.000000e+00 : f32
    %40 = vector.broadcast %cst_37 : f32 to vector<18x16xf32>
    %c0_38 = arith.constant 0 : index
    %c0_39 = arith.constant 0 : index
    %c0_40 = arith.constant 0 : index
    %41 = vector.load %arg13[%c0_38, %c0_39, %c0_40] : memref<18x18x16xf32, #tpu.memory_space<vmem>>, vector<18x1x16xf32>
    %42 = vector.shape_cast %41 : vector<18x1x16xf32> to vector<18x16xf32>
    %43 = vector.shape_cast %40 : vector<18x16xf32> to vector<18x1x16xf32>
    tpu.vector_store %arg13[%c0_38, %c0_39, %c0_40], %43 {strides = array<i32>} : memref<18x18x16xf32, #tpu.memory_space<vmem>>, vector<18x1x16xf32>,
    %cst_41 = arith.constant 0.000000e+00 : f32
    %44 = vector.broadcast %cst_41 : f32 to vector<18x16xf32>
    %c0_42 = arith.constant 0 : index
    %c17_43 = arith.constant 17 : index
    %c0_44 = arith.constant 0 : index
    %45 = vector.load %arg13[%c0_42, %c17_43, %c0_44] : memref<18x18x16xf32, #tpu.memory_space<vmem>>, vector<18x1x16xf32>
    %46 = vector.shape_cast %45 : vector<18x1x16xf32> to vector<18x16xf32>
    %47 = vector.shape_cast %44 : vector<18x16xf32> to vector<18x1x16xf32>
    tpu.vector_store %arg13[%c0_42, %c17_43, %c0_44], %47 {strides = array<i32>} : memref<18x18x16xf32, #tpu.memory_space<vmem>>, vector<18x1x16xf32>,
    %c0_45 = arith.constant 0 : index
    %c0_46 = arith.constant 0 : index
    %c0_47 = arith.constant 0 : index
    %c0_48 = arith.constant 0 : index
    %48 = vector.load %arg1[%c0_45, %c0_46, %c0_47, %c0_48] : memref<1x16x16x16xf32, #tpu.memory_space<vmem>>, vector<1x16x16x16xf32>
    %49 = vector.shape_cast %48 : vector<1x16x16x16xf32> to vector<16x16x16xf32>
    %c1 = arith.constant 1 : index
    %c1_49 = arith.constant 1 : index
    %c0_50 = arith.constant 0 : index
    %50 = vector.load %arg11[%c1, %c1_49, %c0_50] : memref<18x18x16xf32, #tpu.memory_space<vmem>>, vector<16x16x16xf32>
    tpu.vector_store %arg11[%c1, %c1_49, %c0_50], %49 {strides = array<i32>} : memref<18x18x16xf32, #tpu.memory_space<vmem>>, vector<16x16x16xf32>,
    %c0_51 = arith.constant 0 : index
    %c0_52 = arith.constant 0 : index
    %c0_53 = arith.constant 0 : index
    %c0_54 = arith.constant 0 : index
    %51 = vector.load %arg2[%c0_51, %c0_52, %c0_53, %c0_54] : memref<1x16x16x8xf32, #tpu.memory_space<vmem>>, vector<1x16x16x8xf32>
    %52 = vector.shape_cast %51 : vector<1x16x16x8xf32> to vector<16x16x8xf32>
    %c1_55 = arith.constant 1 : index
    %c1_56 = arith.constant 1 : index
    %c0_57 = arith.constant 0 : index
    %53 = vector.load %arg12[%c1_55, %c1_56, %c0_57] : memref<18x18x8xf32, #tpu.memory_space<vmem>>, vector<16x16x8xf32>
    tpu.vector_store %arg12[%c1_55, %c1_56, %c0_57], %52 {strides = array<i32>} : memref<18x18x8xf32, #tpu.memory_space<vmem>>, vector<16x16x8xf32>,
    %c0_58 = arith.constant 0 : index
    %c0_59 = arith.constant 0 : index
    %c0_60 = arith.constant 0 : index
    %54 = vector.load %arg11[%c0_58, %c0_59, %c0_60] : memref<18x18x16xf32, #tpu.memory_space<vmem>>, vector<16x16x16xf32>
    %55 = vector.shape_cast %54 : vector<16x16x16xf32> to vector<256x16xf32>
    %c0_61 = arith.constant 0 : index
    %c0_62 = arith.constant 0 : index
    %56 = vector.load %arg14[%c0_61, %c0_62] : memref<256x216xf32, #tpu.memory_space<vmem>>, vector<256x16xf32>
    tpu.vector_store %arg14[%c0_61, %c0_62], %55 {strides = array<i32>} : memref<256x216xf32, #tpu.memory_space<vmem>>, vector<256x16xf32>,
    %c0_63 = arith.constant 0 : index
    %c1_64 = arith.constant 1 : index
    %c0_65 = arith.constant 0 : index
    %57 = vector.load %arg11[%c0_63, %c1_64, %c0_65] : memref<18x18x16xf32, #tpu.memory_space<vmem>>, vector<16x16x16xf32>
    %58 = vector.shape_cast %57 : vector<16x16x16xf32> to vector<256x16xf32>
    %c0_66 = arith.constant 0 : index
    %c16 = arith.constant 16 : index
    %59 = vector.load %arg14[%c0_66, %c16] : memref<256x216xf32, #tpu.memory_space<vmem>>, vector<256x16xf32>
    tpu.vector_store %arg14[%c0_66, %c16], %58 {strides = array<i32>} : memref<256x216xf32, #tpu.memory_space<vmem>>, vector<256x16xf32>,
    %c0_67 = arith.constant 0 : index
    %c2 = arith.constant 2 : index
    %c0_68 = arith.constant 0 : index
    %60 = vector.load %arg11[%c0_67, %c2, %c0_68] : memref<18x18x16xf32, #tpu.memory_space<vmem>>, vector<16x16x16xf32>
    %61 = vector.shape_cast %60 : vector<16x16x16xf32> to vector<256x16xf32>
    %c0_69 = arith.constant 0 : index
    %c32 = arith.constant 32 : index
    %62 = vector.load %arg14[%c0_69, %c32] : memref<256x216xf32, #tpu.memory_space<vmem>>, vector<256x16xf32>
    tpu.vector_store %arg14[%c0_69, %c32], %61 {strides = array<i32>} : memref<256x216xf32, #tpu.memory_space<vmem>>, vector<256x16xf32>,
    %c1_70 = arith.constant 1 : index
    %c0_71 = arith.constant 0 : index
    %c0_72 = arith.constant 0 : index
    %63 = vector.load %arg11[%c1_70, %c0_71, %c0_72] : memref<18x18x16xf32, #tpu.memory_space<vmem>>, vector<16x16x16xf32>
    %64 = vector.shape_cast %63 : vector<16x16x16xf32> to vector<256x16xf32>
    %c0_73 = arith.constant 0 : index
    %c48 = arith.constant 48 : index
    %65 = vector.load %arg14[%c0_73, %c48] : memref<256x216xf32, #tpu.memory_space<vmem>>, vector<256x16xf32>
    tpu.vector_store %arg14[%c0_73, %c48], %64 {strides = array<i32>} : memref<256x216xf32, #tpu.memory_space<vmem>>, vector<256x16xf32>,
    %c1_74 = arith.constant 1 : index
    %c1_75 = arith.constant 1 : index
    %c0_76 = arith.constant 0 : index
    %66 = vector.load %arg11[%c1_74, %c1_75, %c0_76] : memref<18x18x16xf32, #tpu.memory_space<vmem>>, vector<16x16x16xf32>
    %67 = vector.shape_cast %66 : vector<16x16x16xf32> to vector<256x16xf32>
    %c0_77 = arith.constant 0 : index
    %c64 = arith.constant 64 : index
    %68 = vector.load %arg14[%c0_77, %c64] : memref<256x216xf32, #tpu.memory_space<vmem>>, vector<256x16xf32>
    tpu.vector_store %arg14[%c0_77, %c64], %67 {strides = array<i32>} : memref<256x216xf32, #tpu.memory_space<vmem>>, vector<256x16xf32>,
    %c1_78 = arith.constant 1 : index
    %c2_79 = arith.constant 2 : index
    %c0_80 = arith.constant 0 : index
    %69 = vector.load %arg11[%c1_78, %c2_79, %c0_80] : memref<18x18x16xf32, #tpu.memory_space<vmem>>, vector<16x16x16xf32>
    %70 = vector.shape_cast %69 : vector<16x16x16xf32> to vector<256x16xf32>
    %c0_81 = arith.constant 0 : index
    %c80 = arith.constant 80 : index
    %71 = vector.load %arg14[%c0_81, %c80] : memref<256x216xf32, #tpu.memory_space<vmem>>, vector<256x16xf32>
    tpu.vector_store %arg14[%c0_81, %c80], %70 {strides = array<i32>} : memref<256x216xf32, #tpu.memory_space<vmem>>, vector<256x16xf32>,
    %c2_82 = arith.constant 2 : index
    %c0_83 = arith.constant 0 : index
    %c0_84 = arith.constant 0 : index
    %72 = vector.load %arg11[%c2_82, %c0_83, %c0_84] : memref<18x18x16xf32, #tpu.memory_space<vmem>>, vector<16x16x16xf32>
    %73 = vector.shape_cast %72 : vector<16x16x16xf32> to vector<256x16xf32>
    %c0_85 = arith.constant 0 : index
    %c96 = arith.constant 96 : index
    %74 = vector.load %arg14[%c0_85, %c96] : memref<256x216xf32, #tpu.memory_space<vmem>>, vector<256x16xf32>
    tpu.vector_store %arg14[%c0_85, %c96], %73 {strides = array<i32>} : memref<256x216xf32, #tpu.memory_space<vmem>>, vector<256x16xf32>,
    %c2_86 = arith.constant 2 : index
    %c1_87 = arith.constant 1 : index
    %c0_88 = arith.constant 0 : index
    %75 = vector.load %arg11[%c2_86, %c1_87, %c0_88] : memref<18x18x16xf32, #tpu.memory_space<vmem>>, vector<16x16x16xf32>
    %76 = vector.shape_cast %75 : vector<16x16x16xf32> to vector<256x16xf32>
    %c0_89 = arith.constant 0 : index
    %c112 = arith.constant 112 : index
    %77 = vector.load %arg14[%c0_89, %c112] : memref<256x216xf32, #tpu.memory_space<vmem>>, vector<256x16xf32>
    tpu.vector_store %arg14[%c0_89, %c112], %76 {strides = array<i32>} : memref<256x216xf32, #tpu.memory_space<vmem>>, vector<256x16xf32>,
    %c2_90 = arith.constant 2 : index
    %c2_91 = arith.constant 2 : index
    %c0_92 = arith.constant 0 : index
    %78 = vector.load %arg11[%c2_90, %c2_91, %c0_92] : memref<18x18x16xf32, #tpu.memory_space<vmem>>, vector<16x16x16xf32>
    %79 = vector.shape_cast %78 : vector<16x16x16xf32> to vector<256x16xf32>
    %c0_93 = arith.constant 0 : index
    %c128 = arith.constant 128 : index
    %80 = vector.load %arg14[%c0_93, %c128] : memref<256x216xf32, #tpu.memory_space<vmem>>, vector<256x16xf32>
    tpu.vector_store %arg14[%c0_93, %c128], %79 {strides = array<i32>} : memref<256x216xf32, #tpu.memory_space<vmem>>, vector<256x16xf32>,
    %c0_94 = arith.constant 0 : index
    %c0_95 = arith.constant 0 : index
    %c0_96 = arith.constant 0 : index
    %81 = vector.load %arg12[%c0_94, %c0_95, %c0_96] : memref<18x18x8xf32, #tpu.memory_space<vmem>>, vector<16x16x8xf32>
    %82 = vector.shape_cast %81 : vector<16x16x8xf32> to vector<256x8xf32>
    %c0_97 = arith.constant 0 : index
    %c144 = arith.constant 144 : index
    %83 = vector.load %arg14[%c0_97, %c144] : memref<256x216xf32, #tpu.memory_space<vmem>>, vector<256x8xf32>
    tpu.vector_store %arg14[%c0_97, %c144], %82 {strides = array<i32>} : memref<256x216xf32, #tpu.memory_space<vmem>>, vector<256x8xf32>,
    %c0_98 = arith.constant 0 : index
    %c1_99 = arith.constant 1 : index
    %c0_100 = arith.constant 0 : index
    %84 = vector.load %arg12[%c0_98, %c1_99, %c0_100] : memref<18x18x8xf32, #tpu.memory_space<vmem>>, vector<16x16x8xf32>
    %85 = vector.shape_cast %84 : vector<16x16x8xf32> to vector<256x8xf32>
    %c0_101 = arith.constant 0 : index
    %c152 = arith.constant 152 : index
    %86 = vector.load %arg14[%c0_101, %c152] : memref<256x216xf32, #tpu.memory_space<vmem>>, vector<256x8xf32>
    tpu.vector_store %arg14[%c0_101, %c152], %85 {strides = array<i32>} : memref<256x216xf32, #tpu.memory_space<vmem>>, vector<256x8xf32>,
    %c0_102 = arith.constant 0 : index
    %c2_103 = arith.constant 2 : index
    %c0_104 = arith.constant 0 : index
    %87 = vector.load %arg12[%c0_102, %c2_103, %c0_104] : memref<18x18x8xf32, #tpu.memory_space<vmem>>, vector<16x16x8xf32>
    %88 = vector.shape_cast %87 : vector<16x16x8xf32> to vector<256x8xf32>
    %c0_105 = arith.constant 0 : index
    %c160 = arith.constant 160 : index
    %89 = vector.load %arg14[%c0_105, %c160] : memref<256x216xf32, #tpu.memory_space<vmem>>, vector<256x8xf32>
    tpu.vector_store %arg14[%c0_105, %c160], %88 {strides = array<i32>} : memref<256x216xf32, #tpu.memory_space<vmem>>, vector<256x8xf32>,
    %c1_106 = arith.constant 1 : index
    %c0_107 = arith.constant 0 : index
    %c0_108 = arith.constant 0 : index
    %90 = vector.load %arg12[%c1_106, %c0_107, %c0_108] : memref<18x18x8xf32, #tpu.memory_space<vmem>>, vector<16x16x8xf32>
    %91 = vector.shape_cast %90 : vector<16x16x8xf32> to vector<256x8xf32>
    %c0_109 = arith.constant 0 : index
    %c168 = arith.constant 168 : index
    %92 = vector.load %arg14[%c0_109, %c168] : memref<256x216xf32, #tpu.memory_space<vmem>>, vector<256x8xf32>
    tpu.vector_store %arg14[%c0_109, %c168], %91 {strides = array<i32>} : memref<256x216xf32, #tpu.memory_space<vmem>>, vector<256x8xf32>,
    %c1_110 = arith.constant 1 : index
    %c1_111 = arith.constant 1 : index
    %c0_112 = arith.constant 0 : index
    %93 = vector.load %arg12[%c1_110, %c1_111, %c0_112] : memref<18x18x8xf32, #tpu.memory_space<vmem>>, vector<16x16x8xf32>
    %94 = vector.shape_cast %93 : vector<16x16x8xf32> to vector<256x8xf32>
    %c0_113 = arith.constant 0 : index
    %c176 = arith.constant 176 : index
    %95 = vector.load %arg14[%c0_113, %c176] : memref<256x216xf32, #tpu.memory_space<vmem>>, vector<256x8xf32>
    tpu.vector_store %arg14[%c0_113, %c176], %94 {strides = array<i32>} : memref<256x216xf32, #tpu.memory_space<vmem>>, vector<256x8xf32>,
    %c1_114 = arith.constant 1 : index
    %c2_115 = arith.constant 2 : index
    %c0_116 = arith.constant 0 : index
    %96 = vector.load %arg12[%c1_114, %c2_115, %c0_116] : memref<18x18x8xf32, #tpu.memory_space<vmem>>, vector<16x16x8xf32>
    %97 = vector.shape_cast %96 : vector<16x16x8xf32> to vector<256x8xf32>
    %c0_117 = arith.constant 0 : index
    %c184 = arith.constant 184 : index
    %98 = vector.load %arg14[%c0_117, %c184] : memref<256x216xf32, #tpu.memory_space<vmem>>, vector<256x8xf32>
    tpu.vector_store %arg14[%c0_117, %c184], %97 {strides = array<i32>} : memref<256x216xf32, #tpu.memory_space<vmem>>, vector<256x8xf32>,
    %c2_118 = arith.constant 2 : index
    %c0_119 = arith.constant 0 : index
    %c0_120 = arith.constant 0 : index
    %99 = vector.load %arg12[%c2_118, %c0_119, %c0_120] : memref<18x18x8xf32, #tpu.memory_space<vmem>>, vector<16x16x8xf32>
    %100 = vector.shape_cast %99 : vector<16x16x8xf32> to vector<256x8xf32>
    %c0_121 = arith.constant 0 : index
    %c192 = arith.constant 192 : index
    %101 = vector.load %arg14[%c0_121, %c192] : memref<256x216xf32, #tpu.memory_space<vmem>>, vector<256x8xf32>
    tpu.vector_store %arg14[%c0_121, %c192], %100 {strides = array<i32>} : memref<256x216xf32, #tpu.memory_space<vmem>>, vector<256x8xf32>,
    %c2_122 = arith.constant 2 : index
    %c1_123 = arith.constant 1 : index
    %c0_124 = arith.constant 0 : index
    %102 = vector.load %arg12[%c2_122, %c1_123, %c0_124] : memref<18x18x8xf32, #tpu.memory_space<vmem>>, vector<16x16x8xf32>
    %103 = vector.shape_cast %102 : vector<16x16x8xf32> to vector<256x8xf32>
    %c0_125 = arith.constant 0 : index
    %c200 = arith.constant 200 : index
    %104 = vector.load %arg14[%c0_125, %c200] : memref<256x216xf32, #tpu.memory_space<vmem>>, vector<256x8xf32>
    tpu.vector_store %arg14[%c0_125, %c200], %103 {strides = array<i32>} : memref<256x216xf32, #tpu.memory_space<vmem>>, vector<256x8xf32>,
    %c2_126 = arith.constant 2 : index
    %c2_127 = arith.constant 2 : index
    %c0_128 = arith.constant 0 : index
    %105 = vector.load %arg12[%c2_126, %c2_127, %c0_128] : memref<18x18x8xf32, #tpu.memory_space<vmem>>, vector<16x16x8xf32>
    %106 = vector.shape_cast %105 : vector<16x16x8xf32> to vector<256x8xf32>
    %c0_129 = arith.constant 0 : index
    %c208 = arith.constant 208 : index
    %107 = vector.load %arg14[%c0_129, %c208] : memref<256x216xf32, #tpu.memory_space<vmem>>, vector<256x8xf32>
    tpu.vector_store %arg14[%c0_129, %c208], %106 {strides = array<i32>} : memref<256x216xf32, #tpu.memory_space<vmem>>, vector<256x8xf32>,
    %c0_130 = arith.constant 0 : index
    %c0_131 = arith.constant 0 : index
    %108 = vector.load %arg14[%c0_130, %c0_131] : memref<256x216xf32, #tpu.memory_space<vmem>>, vector<256x216xf32>
    %c0_132 = arith.constant 0 : index
    %c0_133 = arith.constant 0 : index
    %109 = vector.load %arg3[%c0_132, %c0_133] : memref<216x16xf32, #tpu.memory_space<vmem>>, vector<216x16xf32>
    %cst_134 = arith.constant dense<0.000000e+00> : vector<256x16xf32>
    %110 = tpu.matmul %108, %109, %cst_134 {dimension_numbers = #tpu.dot_dimension_numbers<[1], [0], [0], [1], [0, 0, 1, 1], [], []>} : vector<256x216xf32>, vector<216x16xf32>, vector<256x16xf32> -> vector<256x16xf32>
    %c0_135 = arith.constant 0 : index
    %c0_136 = arith.constant 0 : index
    %111 = vector.load %arg4[%c0_135, %c0_136] : memref<1x16xf32, #tpu.memory_space<vmem>>, vector<1x16xf32>
    %112 = vector.broadcast %111 : vector<1x16xf32> to vector<256x16xf32>
    %113 = arith.mulf %110, %112 : vector<256x16xf32>
    %c0_137 = arith.constant 0 : index
    %c0_138 = arith.constant 0 : index
    %114 = vector.load %arg5[%c0_137, %c0_138] : memref<1x16xf32, #tpu.memory_space<vmem>>, vector<1x16xf32>
    %115 = vector.broadcast %114 : vector<1x16xf32> to vector<256x16xf32>
    %116 = arith.addf %113, %115 : vector<256x16xf32>
    %cst_139 = arith.constant 0.00999999977 : f32
    %117 = vector.broadcast %cst_139 : f32 to vector<256x16xf32>
    %118 = arith.mulf %117, %116 : vector<256x16xf32>
    %119 = arith.maximumf %116, %118 : vector<256x16xf32>
    %120 = vector.shape_cast %119 : vector<256x16xf32> to vector<16x16x16xf32>
    %c1_140 = arith.constant 1 : index
    %c1_141 = arith.constant 1 : index
    %c0_142 = arith.constant 0 : index
    %121 = vector.load %arg13[%c1_140, %c1_141, %c0_142] : memref<18x18x16xf32, #tpu.memory_space<vmem>>, vector<16x16x16xf32>
    tpu.vector_store %arg13[%c1_140, %c1_141, %c0_142], %120 {strides = array<i32>} : memref<18x18x16xf32, #tpu.memory_space<vmem>>, vector<16x16x16xf32>,
    %c0_143 = arith.constant 0 : index
    %c0_144 = arith.constant 0 : index
    %c0_145 = arith.constant 0 : index
    %122 = vector.load %arg13[%c0_143, %c0_144, %c0_145] : memref<18x18x16xf32, #tpu.memory_space<vmem>>, vector<16x16x16xf32>
    %123 = vector.shape_cast %122 : vector<16x16x16xf32> to vector<256x16xf32>
    %c0_146 = arith.constant 0 : index
    %c0_147 = arith.constant 0 : index
    %124 = vector.load %arg14[%c0_146, %c0_147] : memref<256x216xf32, #tpu.memory_space<vmem>>, vector<256x16xf32>
    tpu.vector_store %arg14[%c0_146, %c0_147], %123 {strides = array<i32>} : memref<256x216xf32, #tpu.memory_space<vmem>>, vector<256x16xf32>,
    %c0_148 = arith.constant 0 : index
    %c1_149 = arith.constant 1 : index
    %c0_150 = arith.constant 0 : index
    %125 = vector.load %arg13[%c0_148, %c1_149, %c0_150] : memref<18x18x16xf32, #tpu.memory_space<vmem>>, vector<16x16x16xf32>
    %126 = vector.shape_cast %125 : vector<16x16x16xf32> to vector<256x16xf32>
    %c0_151 = arith.constant 0 : index
    %c16_152 = arith.constant 16 : index
    %127 = vector.load %arg14[%c0_151, %c16_152] : memref<256x216xf32, #tpu.memory_space<vmem>>, vector<256x16xf32>
    tpu.vector_store %arg14[%c0_151, %c16_152], %126 {strides = array<i32>} : memref<256x216xf32, #tpu.memory_space<vmem>>, vector<256x16xf32>,
    %c0_153 = arith.constant 0 : index
    %c2_154 = arith.constant 2 : index
    %c0_155 = arith.constant 0 : index
    %128 = vector.load %arg13[%c0_153, %c2_154, %c0_155] : memref<18x18x16xf32, #tpu.memory_space<vmem>>, vector<16x16x16xf32>
    %129 = vector.shape_cast %128 : vector<16x16x16xf32> to vector<256x16xf32>
    %c0_156 = arith.constant 0 : index
    %c32_157 = arith.constant 32 : index
    %130 = vector.load %arg14[%c0_156, %c32_157] : memref<256x216xf32, #tpu.memory_space<vmem>>, vector<256x16xf32>
    tpu.vector_store %arg14[%c0_156, %c32_157], %129 {strides = array<i32>} : memref<256x216xf32, #tpu.memory_space<vmem>>, vector<256x16xf32>,
    %c1_158 = arith.constant 1 : index
    %c0_159 = arith.constant 0 : index
    %c0_160 = arith.constant 0 : index
    %131 = vector.load %arg13[%c1_158, %c0_159, %c0_160] : memref<18x18x16xf32, #tpu.memory_space<vmem>>, vector<16x16x16xf32>
    %132 = vector.shape_cast %131 : vector<16x16x16xf32> to vector<256x16xf32>
    %c0_161 = arith.constant 0 : index
    %c48_162 = arith.constant 48 : index
    %133 = vector.load %arg14[%c0_161, %c48_162] : memref<256x216xf32, #tpu.memory_space<vmem>>, vector<256x16xf32>
    tpu.vector_store %arg14[%c0_161, %c48_162], %132 {strides = array<i32>} : memref<256x216xf32, #tpu.memory_space<vmem>>, vector<256x16xf32>,
    %c1_163 = arith.constant 1 : index
    %c1_164 = arith.constant 1 : index
    %c0_165 = arith.constant 0 : index
    %134 = vector.load %arg13[%c1_163, %c1_164, %c0_165] : memref<18x18x16xf32, #tpu.memory_space<vmem>>, vector<16x16x16xf32>
    %135 = vector.shape_cast %134 : vector<16x16x16xf32> to vector<256x16xf32>
    %c0_166 = arith.constant 0 : index
    %c64_167 = arith.constant 64 : index
    %136 = vector.load %arg14[%c0_166, %c64_167] : memref<256x216xf32, #tpu.memory_space<vmem>>, vector<256x16xf32>
    tpu.vector_store %arg14[%c0_166, %c64_167], %135 {strides = array<i32>} : memref<256x216xf32, #tpu.memory_space<vmem>>, vector<256x16xf32>,
    %c1_168 = arith.constant 1 : index
    %c2_169 = arith.constant 2 : index
    %c0_170 = arith.constant 0 : index
    %137 = vector.load %arg13[%c1_168, %c2_169, %c0_170] : memref<18x18x16xf32, #tpu.memory_space<vmem>>, vector<16x16x16xf32>
    %138 = vector.shape_cast %137 : vector<16x16x16xf32> to vector<256x16xf32>
    %c0_171 = arith.constant 0 : index
    %c80_172 = arith.constant 80 : index
    %139 = vector.load %arg14[%c0_171, %c80_172] : memref<256x216xf32, #tpu.memory_space<vmem>>, vector<256x16xf32>
    tpu.vector_store %arg14[%c0_171, %c80_172], %138 {strides = array<i32>} : memref<256x216xf32, #tpu.memory_space<vmem>>, vector<256x16xf32>,
    %c2_173 = arith.constant 2 : index
    %c0_174 = arith.constant 0 : index
    %c0_175 = arith.constant 0 : index
    %140 = vector.load %arg13[%c2_173, %c0_174, %c0_175] : memref<18x18x16xf32, #tpu.memory_space<vmem>>, vector<16x16x16xf32>
    %141 = vector.shape_cast %140 : vector<16x16x16xf32> to vector<256x16xf32>
    %c0_176 = arith.constant 0 : index
    %c96_177 = arith.constant 96 : index
    %142 = vector.load %arg14[%c0_176, %c96_177] : memref<256x216xf32, #tpu.memory_space<vmem>>, vector<256x16xf32>
    tpu.vector_store %arg14[%c0_176, %c96_177], %141 {strides = array<i32>} : memref<256x216xf32, #tpu.memory_space<vmem>>, vector<256x16xf32>,
    %c2_178 = arith.constant 2 : index
    %c1_179 = arith.constant 1 : index
    %c0_180 = arith.constant 0 : index
    %143 = vector.load %arg13[%c2_178, %c1_179, %c0_180] : memref<18x18x16xf32, #tpu.memory_space<vmem>>, vector<16x16x16xf32>
    %144 = vector.shape_cast %143 : vector<16x16x16xf32> to vector<256x16xf32>
    %c0_181 = arith.constant 0 : index
    %c112_182 = arith.constant 112 : index
    %145 = vector.load %arg14[%c0_181, %c112_182] : memref<256x216xf32, #tpu.memory_space<vmem>>, vector<256x16xf32>
    tpu.vector_store %arg14[%c0_181, %c112_182], %144 {strides = array<i32>} : memref<256x216xf32, #tpu.memory_space<vmem>>, vector<256x16xf32>,
    %c2_183 = arith.constant 2 : index
    %c2_184 = arith.constant 2 : index
    %c0_185 = arith.constant 0 : index
    %146 = vector.load %arg13[%c2_183, %c2_184, %c0_185] : memref<18x18x16xf32, #tpu.memory_space<vmem>>, vector<16x16x16xf32>
    %147 = vector.shape_cast %146 : vector<16x16x16xf32> to vector<256x16xf32>
    %c0_186 = arith.constant 0 : index
    %c128_187 = arith.constant 128 : index
    %148 = vector.load %arg14[%c0_186, %c128_187] : memref<256x216xf32, #tpu.memory_space<vmem>>, vector<256x16xf32>
    tpu.vector_store %arg14[%c0_186, %c128_187], %147 {strides = array<i32>} : memref<256x216xf32, #tpu.memory_space<vmem>>, vector<256x16xf32>,
    %c0_188 = arith.constant 0 : index
    %c0_189 = arith.constant 0 : index
    %149 = vector.load %arg14[%c0_188, %c0_189] : memref<256x216xf32, #tpu.memory_space<vmem>>, vector<256x144xf32>
    %c0_190 = arith.constant 0 : index
    %c0_191 = arith.constant 0 : index
    %150 = vector.load %arg6[%c0_190, %c0_191] : memref<144x16xf32, #tpu.memory_space<vmem>>, vector<144x16xf32>
    %cst_192 = arith.constant dense<0.000000e+00> : vector<256x16xf32>
    %151 = tpu.matmul %149, %150, %cst_192 {dimension_numbers = #tpu.dot_dimension_numbers<[1], [0], [0], [1], [0, 0, 1, 1], [], []>} : vector<256x144xf32>, vector<144x16xf32>, vector<256x16xf32> -> vector<256x16xf32>
    %c0_193 = arith.constant 0 : index
    %c0_194 = arith.constant 0 : index
    %152 = vector.load %arg7[%c0_193, %c0_194] : memref<1x16xf32, #tpu.memory_space<vmem>>, vector<1x16xf32>
    %153 = vector.broadcast %152 : vector<1x16xf32> to vector<256x16xf32>
    %154 = arith.mulf %151, %153 : vector<256x16xf32>
    %c0_195 = arith.constant 0 : index
    %c0_196 = arith.constant 0 : index
    %155 = vector.load %arg8[%c0_195, %c0_196] : memref<1x16xf32, #tpu.memory_space<vmem>>, vector<1x16xf32>
    %156 = vector.broadcast %155 : vector<1x16xf32> to vector<256x16xf32>
    %157 = arith.addf %154, %156 : vector<256x16xf32>
    %c0_197 = arith.constant 0 : index
    %c0_198 = arith.constant 0 : index
    %158 = vector.load %arg9[%c0_197, %c0_198] : memref<3x16xf32, #tpu.memory_space<vmem>>, vector<3x16xf32>
    %cst_199 = arith.constant dense<0.000000e+00> : vector<3x256xf32>
    %159 = tpu.matmul %158, %157, %cst_199 {dimension_numbers = #tpu.dot_dimension_numbers<[1], [1], [0], [0], [0, 0, 1, 0], [], []>} : vector<3x16xf32>, vector<256x16xf32>, vector<3x256xf32> -> vector<3x256xf32>
    %cst_200 = arith.constant dense<0xFF800000> : vector<256xf32>
    %160 = vector.multi_reduction <maximumf>, %159, %cst_200 [0] : vector<3x256xf32> to vector<256xf32>
    %161 = vector.shape_cast %160 : vector<256xf32> to vector<1x256xf32>
    %162 = vector.broadcast %161 : vector<1x256xf32> to vector<3x256xf32>
    %163 = arith.subf %159, %162 : vector<3x256xf32>
    %164 = math.exp %163 : vector<3x256xf32>
    %cst_201 = arith.constant dense<0.000000e+00> : vector<256xf32>
    %165 = vector.multi_reduction <add>, %164, %cst_201 [0] : vector<3x256xf32> to vector<256xf32>
    %166 = vector.shape_cast %165 : vector<256xf32> to vector<1x256xf32>
    %167 = vector.broadcast %166 : vector<1x256xf32> to vector<3x256xf32>
    %168 = arith.divf %164, %167 : vector<3x256xf32>
    %c0_202 = arith.constant 0 : index
    %c0_203 = arith.constant 0 : index
    %c0_204 = arith.constant 0 : index
    %169 = vector.load %arg10[%c0_202, %c0_203, %c0_204] : memref<1x3x256xf32, #tpu.memory_space<vmem>>, vector<1x3x256xf32>
    %170 = vector.shape_cast %169 : vector<1x3x256xf32> to vector<3x256xf32>
    %171 = vector.shape_cast %168 : vector<3x256xf32> to vector<1x3x256xf32>
    tpu.vector_store %arg10[%c0_202, %c0_203, %c0_204], %171 {strides = array<i32>} : memref<1x3x256xf32, #tpu.memory_space<vmem>>, vector<1x3x256xf32>,
    return
  }
  func.func @transform_0(%arg0: i32) -> (i32, i32, i32, i32) {
    %c0_i32 = arith.constant 0 : i32
    %c0_i32_0 = arith.constant 0 : i32
    %c0_i32_1 = arith.constant 0 : i32
    %c0_i32_2 = arith.constant 0 : i32
    return %arg0, %c0_i32, %c0_i32_0, %c0_i32_1 : i32, i32, i32, i32
  }
  func.func @transform_1(%arg0: i32) -> (i32, i32, i32, i32) {
    %c0_i32 = arith.constant 0 : i32
    %c0_i32_0 = arith.constant 0 : i32
    %c0_i32_1 = arith.constant 0 : i32
    %c0_i32_2 = arith.constant 0 : i32
    return %arg0, %c0_i32, %c0_i32_0, %c0_i32_1 : i32, i32, i32, i32
  }
  func.func @transform_2(%arg0: i32) -> (i32, i32) {
    %c0_i32 = arith.constant 0 : i32
    %c0_i32_0 = arith.constant 0 : i32
    %c0_i32_1 = arith.constant 0 : i32
    return %c0_i32, %c0_i32_0 : i32, i32
  }
  func.func @transform_3(%arg0: i32) -> (i32, i32) {
    %c0_i32 = arith.constant 0 : i32
    %c0_i32_0 = arith.constant 0 : i32
    %c0_i32_1 = arith.constant 0 : i32
    return %c0_i32, %c0_i32_0 : i32, i32
  }
  func.func @transform_4(%arg0: i32) -> (i32, i32) {
    %c0_i32 = arith.constant 0 : i32
    %c0_i32_0 = arith.constant 0 : i32
    %c0_i32_1 = arith.constant 0 : i32
    return %c0_i32, %c0_i32_0 : i32, i32
  }
  func.func @transform_5(%arg0: i32) -> (i32, i32) {
    %c0_i32 = arith.constant 0 : i32
    %c0_i32_0 = arith.constant 0 : i32
    %c0_i32_1 = arith.constant 0 : i32
    return %c0_i32, %c0_i32_0 : i32, i32
  }
  func.func @transform_6(%arg0: i32) -> (i32, i32) {
    %c0_i32 = arith.constant 0 : i32
    %c0_i32_0 = arith.constant 0 : i32
    %c0_i32_1 = arith.constant 0 : i32
    return %c0_i32, %c0_i32_0 : i32, i32
  }
  func.func @transform_7(%arg0: i32) -> (i32, i32) {
    %c0_i32 = arith.constant 0 : i32
    %c0_i32_0 = arith.constant 0 : i32
    %c0_i32_1 = arith.constant 0 : i32
    return %c0_i32, %c0_i32_0 : i32, i32
  }
  func.func @transform_8(%arg0: i32) -> (i32, i32) {
    %c0_i32 = arith.constant 0 : i32
    %c0_i32_0 = arith.constant 0 : i32
    %c0_i32_1 = arith.constant 0 : i32
    return %c0_i32, %c0_i32_0 : i32, i32
  }
  func.func @transform_9(%arg0: i32) -> (i32, i32, i32) {
    %c0_i32 = arith.constant 0 : i32
    %c0_i32_0 = arith.constant 0 : i32
    %c0_i32_1 = arith.constant 0 : i32
    return %arg0, %c0_i32, %c0_i32_0 : i32, i32, i32
  }
}

</mosaic_0001>

<llo_original>
// kernel: decoder_forward.3
$region0: #{decoder_forward.3}
  #allocation0 [shape = 'u32[]', space=smem, size = 0x4, offset = 0x4, fixed_abs, tag = 'smem constant byte address 0x4 - core index']
  #allocation1 [shape = 'u32[144,128]{1,0:T(1,128)}', space=vmem, size = 0x12000, scoped, tag = 'internal scratch']
  %s0 = inlined_call_operand.vmem [shape: f32[32,32], index: 0, kind: input, shape index: {}]
  %s1 = inlined_call_operand.vmem [shape: f32[32,128], index: 1, kind: input, shape index: {}]
  %s2 = inlined_call_operand.vmem [shape: f32[32,128], index: 2, kind: output, shape index: {}]
  %s3 = sld [smem:[#allocation0]]
  $region18: #{decoder_forward.3} parent=0
    _
  %s5 = ssub.s32 1, %s3
  %s6 = scalar_select 0, %s5, %s3
  // Predicated region
  $region2: #{decoder_forward.3} parent=0 // pred_check
    _
  $region3: #{decoder_forward.3} parent=0 // pred_check_branch
    %8 = sbr.rel (0) target = $region5
  $region4: #{decoder_forward.3} parent=0 // pred_region
    _
  $region5: #{decoder_forward.3} parent=0 // pred_fallthru
    _
  // Predicated region
  $region6: #{decoder_forward.3} parent=0 // pred_check
    _
  $region7: #{decoder_forward.3} parent=0 // pred_check_branch
    %10 = sbr.rel (0) target = $region9
  $region8: #{decoder_forward.3} parent=0 // pred_region
    _
  $region9: #{decoder_forward.3} parent=0 // pred_fallthru
    _
  %v11 = vld [vmem:[%s0] sm:$0xff]
  %v12 = vld [vmem:[%s0 + $0x8] sm:$0xff]
  %v13 = vld [vmem:[%s0 + $0x10] sm:$0xff]
  %v14 = vld [vmem:[%s0 + $0x18] sm:$0xff]
  %v15 = vld [vmem:[%s1] sm:$0xff]
  %v16 = vld [vmem:[%s1 + $0x8] sm:$0xff]
  %v17 = vld [vmem:[%s1 + $0x10] sm:$0xff]
  %v18 = vld [vmem:[%s1 + $0x18] sm:$0xff]
  %vm19 = vcmask 261120
  %v21 = vsel %vm19, %v11, 0
  %v24 = vsel %vm19, %v12, 0
  %v27 = vsel %vm19, %v13, 0
  %v30 = vsel %vm19, %v14, 0
  %32 = vmatprep.subr.mxu0 0.0
  %33 = vmatpush1.msra.mxu0 0.0
  %34 = vmatprep.subr.mxu0 0.0
  %35 = vmatpush1.msra.mxu0 0.0
  %36 = vmatprep.subr.mxu0 0.0
  %37 = vmatpush1.msra.mxu0 0.0
  %38 = vmatprep.subr.mxu0 0.0
  %39 = vmatpush1.msra.mxu0 0.0
  %40 = vmatprep.subr.mxu0 0.0
  %41 = vmatpush1.msra.mxu0 0.0
  %42 = vmatprep.subr.mxu0 0.0
  %43 = vmatpush1.msra.mxu0 0.0
  %44 = vmatprep.subr.mxu0 0.0
  %45 = vmatpush1.msra.mxu0 0.0
  %46 = vmatprep.subr.mxu0 0.0
  %47 = vmatpush1.msra.mxu0 0.0
  %48 = vmatprep.subr.mxu0 0.0
  %49 = vmatpush1.msra.mxu0 0.0
  %50 = vmatprep.subr.mxu0 0.0
  %51 = vmatpush1.msra.mxu0 0.0
  %52 = vmatprep.subr.mxu0 0.0
  %53 = vmatpush1.msra.mxu0 0.0
  %54 = vmatprep.subr.mxu0 0.0
  %55 = vmatpush1.msra.mxu0 0.0
  %56 = vmatprep.subr.mxu0 0.0
  %57 = vmatpush1.msra.mxu0 %v18
  %58 = vmatprep.subr.mxu0 0.0
  %59 = vmatpush1.msra.mxu0 %v17
  %60 = vmatprep.subr.mxu0 0.0
  %61 = vmatpush1.msra.mxu0 %v16
  %62 = vmatprep.subr.mxu0 0.0
  %63 = vmatpush1.msra.mxu0 %v15
  %64 = vmatprep.subr.mxu0 0.0
  %65 = vmatpush2.msra.mxu0 0.0
  %66 = vmatprep.subr.mxu0 0.0
  %67 = vmatpush2.msra.mxu0 0.0
  %68 = vmatprep.subr.mxu0 0.0
  %69 = vmatpush2.msra.mxu0 0.0
  %70 = vmatprep.subr.mxu0 0.0
  %71 = vmatpush2.msra.mxu0 0.0
  %72 = vmatprep.subr.mxu0 0.0
  %73 = vmatpush2.msra.mxu0 0.0
  %74 = vmatprep.subr.mxu0 0.0
  %75 = vmatpush2.msra.mxu0 0.0
  %76 = vmatprep.subr.mxu0 0.0
  %77 = vmatpush2.msra.mxu0 0.0
  %78 = vmatprep.subr.mxu0 0.0
  %79 = vmatpush2.msra.mxu0 0.0
  %80 = vmatprep.subr.mxu0 0.0
  %81 = vmatpush2.msra.mxu0 0.0
  %82 = vmatprep.subr.mxu0 0.0
  %83 = vmatpush2.msra.mxu0 0.0
  %84 = vmatprep.subr.mxu0 0.0
  %85 = vmatpush2.msra.mxu0 0.0
  %86 = vmatprep.subr.mxu0 0.0
  %87 = vmatpush2.msra.mxu0 0.0
  %88 = vmatprep.subr.mxu0 0.0
  %89 = vmatpush2.msra.mxu0 0.0
  %90 = vmatprep.subr.mxu0 0.0
  %91 = vmatpush2.msra.mxu0 0.0
  %92 = vmatprep.subr.mxu0 0.0
  %93 = vmatpush2.msra.mxu0 0.0
  %94 = vmatprep.subr.mxu0 0.0
  %95 = vmatpush2.msra.mxu0 0.0
  %96 = vmatprep.mubr.f32.mxu0 0.0
  %97 = vmatmul.mubr.f32.gmra.mxu0 %v21
  %v98 = vpop.f32.mrf.mxu0
  %v99 = vadd.f32 0.0, %v98
  %v100 = vpop.f32.mrf.mxu0
  %101 = vmatprep.mubr.f32.mxu0 0.0
  %102 = vmatmul.mubr.f32.gmra.mxu0 %v24
  %v103 = vpop.f32.mrf.mxu0
  %v104 = vadd.f32 0.0, %v103
  %v105 = vpop.f32.mrf.mxu0
  %106 = vmatprep.mubr.f32.mxu0 0.0
  %107 = vmatmul.mubr.f32.gmra.mxu0 %v27
  %v108 = vpop.f32.mrf.mxu0
  %v109 = vadd.f32 0.0, %v108
  %v110 = vpop.f32.mrf.mxu0
  %111 = vmatprep.mubr.f32.mxu0 0.0
  %112 = vmatmul.mubr.f32.gmra.mxu0 %v30
  %v113 = vpop.f32.mrf.mxu0
  %v114 = vadd.f32 0.0, %v113
  %v115 = vpop.f32.mrf.mxu0
  %116 = vdwg.mxu0
  %117 = vst [vmem:[%s2] sm:$0xff] %v99
  %118 = vst [vmem:[%s2 + $0x8] sm:$0xff] %v104
  %119 = vst [vmem:[%s2 + $0x10] sm:$0xff] %v109
  %120 = vst [vmem:[%s2 + $0x18] sm:$0xff] %v114
  // Predicated region
  $region10: #{decoder_forward.3} parent=0 // pred_check
    _
  $region11: #{decoder_forward.3} parent=0 // pred_check_branch
    %122 = sbr.rel (0) target = $region13
  $region12: #{decoder_forward.3} parent=0 // pred_region
    _
  $region13: #{decoder_forward.3} parent=0 // pred_fallthru
    _
  // Predicated region
  $region14: #{decoder_forward.3} parent=0 // pred_check
    _
  $region15: #{decoder_forward.3} parent=0 // pred_check_branch
    %124 = sbr.rel (0) target = $region17
  $region16: #{decoder_forward.3} parent=0 // pred_region
    _
  $region17: #{decoder_forward.3} parent=0 // pred_fallthru
    _

// kernel: decoder_forward.4
$region0: #{decoder_forward.4}
  #allocation0 [shape = 'u32[]', space=smem, size = 0x4, offset = 0x4, fixed_abs, tag = 'smem constant byte address 0x4 - core index']
  #allocation1 [shape = 'u32[144,128]{1,0:T(1,128)}', space=vmem, size = 0x12000, scoped, tag = 'internal scratch']
  #allocation2 [shape = 'f32[10,10,32]{2,1,0:T(8,128)}', space=vmem, size = 0x14000, scoped, tag = 'scratch operand']
  #allocation3 [shape = 'f32[10,10,16]{2,1,0:T(8,128)}', space=vmem, size = 0x14000, scoped, tag = 'scratch operand']
  #allocation4 [shape = 'f32[10,10,32]{2,1,0:T(8,128)}', space=vmem, size = 0x14000, scoped, tag = 'scratch operand']
  #allocation5 [shape = 'f32[64,432]{1,0:T(8,128)}', space=vmem, size = 0x20000, scoped, tag = 'scratch operand']
  %s0 = inlined_call_operand.vmem [shape: f32[2,8,8,32], index: 0, kind: input, shape index: {}]
  %s1 = inlined_call_operand.vmem [shape: f32[2,8,8,16], index: 1, kind: input, shape index: {}]
  %s2 = inlined_call_operand.vmem [shape: f32[432,32], index: 2, kind: input, shape index: {}]
  %s3 = inlined_call_operand.vmem [shape: f32[1,32], index: 3, kind: input, shape index: {}]
  %s4 = inlined_call_operand.vmem [shape: f32[1,32], index: 4, kind: input, shape index: {}]
  %s5 = inlined_call_operand.vmem [shape: f32[288,32], index: 5, kind: input, shape index: {}]
  %s6 = inlined_call_operand.vmem [shape: f32[1,32], index: 6, kind: input, shape index: {}]
  %s7 = inlined_call_operand.vmem [shape: f32[1,32], index: 7, kind: input, shape index: {}]
  %s8 = inlined_call_operand.vmem [shape: f32[3,32], index: 8, kind: input, shape index: {}]
  %s9 = inlined_call_operand.vmem [shape: f32[32,64], index: 9, kind: input, shape index: {}]
  %s10 = inlined_call_operand.vmem [shape: f32[2,3,64], index: 10, kind: output, shape index: {0}]
  %s11 = inlined_call_operand.vmem [shape: f32[2,64,64], index: 11, kind: output, shape index: {1}]
  %12 = xla_tuple %s10, %s11
  %s13 = sld [smem:[#allocation0]]
  $region81: #{decoder_forward.4} parent=0
    _
  %s15 = ssub.s32 1, %s13
  %s16 = scalar_select 0, %s15, %s13
  loop: start=0, step=1, limit=4
  $region2: #{decoder_forward.4} parent=0 // loop_pre_header
    _
  $region3: #{decoder_forward.4} parent=0 // loop_header
    %s18 = sphi 0, %s22
    %p19 = scmp.ge.s32.totalorder %s18, 4
    %s28 = sphi 0, %s30
    %s31 = sphi 0, %s28
    %s32 = sphi 0, %s31
    %s48 = sphi 0, %s32
    %s54 = sphi 0, %s56
    %s57 = sphi 0, %s54
    %s58 = sphi 0, %s57
    %s74 = sphi 0, %s58
    %s78 = sphi 0, %s78
    %s80 = sphi 0, %s78
    %s81 = sphi 0, %s80
    %s95 = sphi 0, %s81
    %s99 = sphi 0, %s99
    %s101 = sphi 0, %s99
    %s102 = sphi 0, %s101
    %s116 = sphi 0, %s102
    %s120 = sphi 0, %s120
    %s122 = sphi 0, %s120
    %s123 = sphi 0, %s122
    %s137 = sphi 0, %s123
    %s141 = sphi 0, %s141
    %s143 = sphi 0, %s141
    %s144 = sphi 0, %s143
    %s158 = sphi 0, %s144
    %s162 = sphi 0, %s162
    %s164 = sphi 0, %s162
    %s165 = sphi 0, %s164
    %s179 = sphi 0, %s165
    %s183 = sphi 0, %s183
    %s185 = sphi 0, %s183
    %s186 = sphi 0, %s185
    %s200 = sphi 0, %s186
    %s204 = sphi 0, %s204
    %s206 = sphi 0, %s204
    %s207 = sphi 0, %s206
    %s221 = sphi 0, %s207
    %s225 = sphi 0, %s225
    %s227 = sphi 0, %s225
    %s228 = sphi 0, %s227
    %s242 = sphi 0, %s228
    %s248 = sphi 0, %s250
    %s251 = sphi 0, %s248
    %s252 = sphi 0, %s251
    %s268 = sphi 0, %s252
    %s274 = sphi 0, %s276
    %s277 = sphi 0, %s274
    %s278 = sphi 0, %s277
    %s294 = sphi 0, %s278
  $region4: #{decoder_forward.4} parent=0 // loop_header_branch
    %21 = sbr.rel (%p19) target = $region8
  $region5: #{decoder_forward.4} parent=0 // loop_body
    %s23 = ssub.s32 %s18, 1
    %s24 = ssub.s32 %s18, 2
    %s25 = sadd.s32 %s18, 1
    %s26 = ssub.s32 %s18, %s25
    %p27 = scmp.eq.s32.totalorder %s26, 0
    %s29 = sadd.s32 %s28, 1
    %s30 = scalar_select %p27, %s28, %s29
    %p33 = pneg %p27
    %p34 = scmp.eq.s32.totalorder %s18, 1
    %p35 = por %p33, %p34
    %p36 = scmp.ne.s32.totalorder %s28, %s31
    %p37 = scmp.eq.s32.totalorder %s18, 0
    %p38 = por %p36, %p37
    %p39 = scmp.ne.s32.totalorder %s28, %s31
    %p40 = scmp.eq.s32.totalorder %s23, 1
    %p41 = por %p39, %p40
    %p42 = scmp.ne.s32.totalorder %s31, %s32
    %p43 = scmp.eq.s32.totalorder %s23, 0
    %p44 = por %p42, %p43
    %p45 = scmp.ne.s32.totalorder %s31, %s32
    %p46 = scmp.eq.s32.totalorder %s24, 1
    %p47 = por %p45, %p46
    %p49 = scmp.ne.s32.totalorder %s32, %s48
    %p50 = scmp.eq.s32.totalorder %s24, 0
    %p51 = por %p49, %p50
    %s52 = ssub.s32 %s18, %s25
    %p53 = scmp.eq.s32.totalorder %s52, 0
    %s55 = sadd.s32 %s54, 1
    %s56 = scalar_select %p53, %s54, %s55
    %p59 = pneg %p53
    %p60 = scmp.eq.s32.totalorder %s18, 1
    %p61 = por %p59, %p60
    %p62 = scmp.ne.s32.totalorder %s54, %s57
    %p63 = scmp.eq.s32.totalorder %s18, 0
    %p64 = por %p62, %p63
    %p65 = scmp.ne.s32.totalorder %s54, %s57
    %p66 = scmp.eq.s32.totalorder %s23, 1
    %p67 = por %p65, %p66
    %p68 = scmp.ne.s32.totalorder %s57, %s58
    %p69 = scmp.eq.s32.totalorder %s23, 0
    %p70 = por %p68, %p69
    %p71 = scmp.ne.s32.totalorder %s57, %s58
    %p72 = scmp.eq.s32.totalorder %s24, 1
    %p73 = por %p71, %p72
    %p75 = scmp.ne.s32.totalorder %s58, %s74
    %p76 = scmp.eq.s32.totalorder %s24, 0
    %p77 = por %p75, %p76
    %s79 = sadd.s32 %s78, 1
    %p82 = scmp.eq.s32.totalorder %s18, 1
    %p83 = scmp.ne.s32.totalorder %s78, %s80
    %p84 = scmp.eq.s32.totalorder %s18, 0
    %p85 = por %p83, %p84
    %p86 = scmp.ne.s32.totalorder %s78, %s80
    %p87 = scmp.eq.s32.totalorder %s23, 1
    %p88 = por %p86, %p87
    %p89 = scmp.ne.s32.totalorder %s80, %s81
    %p90 = scmp.eq.s32.totalorder %s23, 0
    %p91 = por %p89, %p90
    %p92 = scmp.ne.s32.totalorder %s80, %s81
    %p93 = scmp.eq.s32.totalorder %s24, 1
    %p94 = por %p92, %p93
    %p96 = scmp.ne.s32.totalorder %s81, %s95
    %p97 = scmp.eq.s32.totalorder %s24, 0
    %p98 = por %p96, %p97
    %s100 = sadd.s32 %s99, 1
    %p103 = scmp.eq.s32.totalorder %s18, 1
    %p104 = scmp.ne.s32.totalorder %s99, %s101
    %p105 = scmp.eq.s32.totalorder %s18, 0
    %p106 = por %p104, %p105
    %p107 = scmp.ne.s32.totalorder %s99, %s101
    %p108 = scmp.eq.s32.totalorder %s23, 1
    %p109 = por %p107, %p108
    %p110 = scmp.ne.s32.totalorder %s101, %s102
    %p111 = scmp.eq.s32.totalorder %s23, 0
    %p112 = por %p110, %p111
    %p113 = scmp.ne.s32.totalorder %s101, %s102
    %p114 = scmp.eq.s32.totalorder %s24, 1
    %p115 = por %p113, %p114
    %p117 = scmp.ne.s32.totalorder %s102, %s116
    %p118 = scmp.eq.s32.totalorder %s24, 0
    %p119 = por %p117, %p118
    %s121 = sadd.s32 %s120, 1
    %p124 = scmp.eq.s32.totalorder %s18, 1
    %p125 = scmp.ne.s32.totalorder %s120, %s122
    %p126 = scmp.eq.s32.totalorder %s18, 0
    %p127 = por %p125, %p126
    %p128 = scmp.ne.s32.totalorder %s120, %s122
    %p129 = scmp.eq.s32.totalorder %s23, 1
    %p130 = por %p128, %p129
    %p131 = scmp.ne.s32.totalorder %s122, %s123
    %p132 = scmp.eq.s32.totalorder %s23, 0
    %p133 = por %p131, %p132
    %p134 = scmp.ne.s32.totalorder %s122, %s123
    %p135 = scmp.eq.s32.totalorder %s24, 1
    %p136 = por %p134, %p135
    %p138 = scmp.ne.s32.totalorder %s123, %s137
    %p139 = scmp.eq.s32.totalorder %s24, 0
    %p140 = por %p138, %p139
    %s142 = sadd.s32 %s141, 1
    %p145 = scmp.eq.s32.totalorder %s18, 1
    %p146 = scmp.ne.s32.totalorder %s141, %s143
    %p147 = scmp.eq.s32.totalorder %s18, 0
    %p148 = por %p146, %p147
    %p149 = scmp.ne.s32.totalorder %s141, %s143
    %p150 = scmp.eq.s32.totalorder %s23, 1
    %p151 = por %p149, %p150
    %p152 = scmp.ne.s32.totalorder %s143, %s144
    %p153 = scmp.eq.s32.totalorder %s23, 0
    %p154 = por %p152, %p153
    %p155 = scmp.ne.s32.totalorder %s143, %s144
    %p156 = scmp.eq.s32.totalorder %s24, 1
    %p157 = por %p155, %p156
    %p159 = scmp.ne.s32.totalorder %s144, %s158
    %p160 = scmp.eq.s32.totalorder %s24, 0
    %p161 = por %p159, %p160
    %s163 = sadd.s32 %s162, 1
    %p166 = scmp.eq.s32.totalorder %s18, 1
    %p167 = scmp.ne.s32.totalorder %s162, %s164
    %p168 = scmp.eq.s32.totalorder %s18, 0
    %p169 = por %p167, %p168
    %p170 = scmp.ne.s32.totalorder %s162, %s164
    %p171 = scmp.eq.s32.totalorder %s23, 1
    %p172 = por %p170, %p171
    %p173 = scmp.ne.s32.totalorder %s164, %s165
    %p174 = scmp.eq.s32.totalorder %s23, 0
    %p175 = por %p173, %p174
    %p176 = scmp.ne.s32.totalorder %s164, %s165
    %p177 = scmp.eq.s32.totalorder %s24, 1
    %p178 = por %p176, %p177
    %p180 = scmp.ne.s32.totalorder %s165, %s179
    %p181 = scmp.eq.s32.totalorder %s24, 0
    %p182 = por %p180, %p181
    %s184 = sadd.s32 %s183, 1
    %p187 = scmp.eq.s32.totalorder %s18, 1
    %p188 = scmp.ne.s32.totalorder %s183, %s185
    %p189 = scmp.eq.s32.totalorder %s18, 0
    %p190 = por %p188, %p189
    %p191 = scmp.ne.s32.totalorder %s183, %s185
    %p192 = scmp.eq.s32.totalorder %s23, 1
    %p193 = por %p191, %p192
    %p194 = scmp.ne.s32.totalorder %s185, %s186
    %p195 = scmp.eq.s32.totalorder %s23, 0
    %p196 = por %p194, %p195
    %p197 = scmp.ne.s32.totalorder %s185, %s186
    %p198 = scmp.eq.s32.totalorder %s24, 1
    %p199 = por %p197, %p198
    %p201 = scmp.ne.s32.totalorder %s186, %s200
    %p202 = scmp.eq.s32.totalorder %s24, 0
    %p203 = por %p201, %p202
    %s205 = sadd.s32 %s204, 1
    %p208 = scmp.eq.s32.totalorder %s18, 1
    %p209 = scmp.ne.s32.totalorder %s204, %s206
    %p210 = scmp.eq.s32.totalorder %s18, 0
    %p211 = por %p209, %p210
    %p212 = scmp.ne.s32.totalorder %s204, %s206
    %p213 = scmp.eq.s32.totalorder %s23, 1
    %p214 = por %p212, %p213
    %p215 = scmp.ne.s32.totalorder %s206, %s207
    %p216 = scmp.eq.s32.totalorder %s23, 0
    %p217 = por %p215, %p216
    %p218 = scmp.ne.s32.totalorder %s206, %s207
    %p219 = scmp.eq.s32.totalorder %s24, 1
    %p220 = por %p218, %p219
    %p222 = scmp.ne.s32.totalorder %s207, %s221
    %p223 = scmp.eq.s32.totalorder %s24, 0
    %p224 = por %p222, %p223
    %s226 = sadd.s32 %s225, 1
    %p229 = scmp.eq.s32.totalorder %s18, 1
    %p230 = scmp.ne.s32.totalorder %s225, %s227
    %p231 = scmp.eq.s32.totalorder %s18, 0
    %p232 = por %p230, %p231
    %p233 = scmp.ne.s32.totalorder %s225, %s227
    %p234 = scmp.eq.s32.totalorder %s23, 1
    %p235 = por %p233, %p234
    %p236 = scmp.ne.s32.totalorder %s227, %s228
    %p237 = scmp.eq.s32.totalorder %s23, 0
    %p238 = por %p236, %p237
    %p239 = scmp.ne.s32.totalorder %s227, %s228
    %p240 = scmp.eq.s32.totalorder %s24, 1
    %p241 = por %p239, %p240
    %p243 = scmp.ne.s32.totalorder %s228, %s242
    %p244 = scmp.eq.s32.totalorder %s24, 0
    %p245 = por %p243, %p244
    %s246 = ssub.s32 %s18, %s25
    %p247 = scmp.eq.s32.totalorder %s246, 0
    %s249 = sadd.s32 %s248, 1
    %s250 = scalar_select %p247, %s248, %s249
    %p253 = pneg %p247
    %p254 = scmp.eq.s32.totalorder %s18, 1
    %p255 = por %p253, %p254
    %p256 = scmp.ne.s32.totalorder %s248, %s251
    %p257 = scmp.eq.s32.totalorder %s18, 0
    %p258 = por %p256, %p257
    %p259 = scmp.ne.s32.totalorder %s248, %s251
    %p260 = scmp.eq.s32.totalorder %s23, 1
    %p261 = por %p259, %p260
    %p262 = scmp.ne.s32.totalorder %s251, %s252
    %p263 = scmp.eq.s32.totalorder %s23, 0
    %p264 = por %p262, %p263
    %p265 = scmp.ne.s32.totalorder %s251, %s252
    %p266 = scmp.eq.s32.totalorder %s24, 1
    %p267 = por %p265, %p266
    %p269 = scmp.ne.s32.totalorder %s252, %s268
    %p270 = scmp.eq.s32.totalorder %s24, 0
    %p271 = por %p269, %p270
    %s272 = ssub.s32 %s18, %s25
    %p273 = scmp.eq.s32.totalorder %s272, 0
    %s275 = sadd.s32 %s274, 1
    %s276 = scalar_select %p273, %s274, %s275
    %p279 = pneg %p273
    %p280 = scmp.eq.s32.totalorder %s18, 1
    %p281 = por %p279, %p280
    %p282 = scmp.ne.s32.totalorder %s274, %s277
    %p283 = scmp.eq.s32.totalorder %s18, 0
    %p284 = por %p282, %p283
    %p285 = scmp.ne.s32.totalorder %s274, %s277
    %p286 = scmp.eq.s32.totalorder %s23, 1
    %p287 = por %p285, %p286
    %p288 = scmp.ne.s32.totalorder %s277, %s278
    %p289 = scmp.eq.s32.totalorder %s23, 0
    %p290 = por %p288, %p289
    %p291 = scmp.ne.s32.totalorder %s277, %s278
    %p292 = scmp.eq.s32.totalorder %s24, 1
    %p293 = por %p291, %p292
    %p295 = scmp.ne.s32.totalorder %s278, %s294
    %p296 = scmp.eq.s32.totalorder %s24, 0
    %p297 = por %p295, %p296
    %p298 = scmp.le.s32.totalorder 1, %s18
    %p299 = scmp.lt.s32.totalorder %s18, 3
    %p300 = pnand %p298, %p299
    %p301 = pneg %p300
    // Predicated region
    $region9: #{decoder_forward.4} parent=5 // pred_check
      _
    $region10: #{decoder_forward.4} parent=5 // pred_check_branch
      %303 = sbr.rel (%p300) target = $region12
    $region11: #{decoder_forward.4} parent=5 // pred_region
      %s304 = ssub.s32 %s18, 1
      // Predicated region
      $region13: #{decoder_forward.4} parent=11 // pred_check
        %p305 = pneg %p91
      $region14: #{decoder_forward.4} parent=11 // pred_check_branch
        %307 = sbr.rel (%p305) target = $region16
      $region15: #{decoder_forward.4} parent=11 // pred_region
        _
      $region16: #{decoder_forward.4} parent=11 // pred_fallthru
        _
      // Predicated region
      $region17: #{decoder_forward.4} parent=11 // pred_check
        %p308 = pneg %p112
      $region18: #{decoder_forward.4} parent=11 // pred_check_branch
        %310 = sbr.rel (%p308) target = $region20
      $region19: #{decoder_forward.4} parent=11 // pred_region
        _
      $region20: #{decoder_forward.4} parent=11 // pred_fallthru
        _
      // Predicated region
      $region21: #{decoder_forward.4} parent=11 // pred_check
        %p311 = pneg %p133
      $region22: #{decoder_forward.4} parent=11 // pred_check_branch
        %313 = sbr.rel (%p311) target = $region24
      $region23: #{decoder_forward.4} parent=11 // pred_region
        _
      $region24: #{decoder_forward.4} parent=11 // pred_fallthru
        _
      // Predicated region
      $region25: #{decoder_forward.4} parent=11 // pred_check
        %p314 = pneg %p154
      $region26: #{decoder_forward.4} parent=11 // pred_check_branch
        %316 = sbr.rel (%p314) target = $region28
      $region27: #{decoder_forward.4} parent=11 // pred_region
        _
      $region28: #{decoder_forward.4} parent=11 // pred_fallthru
        _
      // Predicated region
      $region29: #{decoder_forward.4} parent=11 // pred_check
        %p317 = pneg %p175
      $region30: #{decoder_forward.4} parent=11 // pred_check_branch
        %319 = sbr.rel (%p317) target = $region32
      $region31: #{decoder_forward.4} parent=11 // pred_region
        _
      $region32: #{decoder_forward.4} parent=11 // pred_fallthru
        _
      // Predicated region
      $region33: #{decoder_forward.4} parent=11 // pred_check
        %p320 = pneg %p196
      $region34: #{decoder_forward.4} parent=11 // pred_check_branch
        %322 = sbr.rel (%p320) target = $region36
      $region35: #{decoder_forward.4} parent=11 // pred_region
        _
      $region36: #{decoder_forward.4} parent=11 // pred_fallthru
        _
      // Predicated region
      $region37: #{decoder_forward.4} parent=11 // pred_check
        %p323 = pneg %p217
      $region38: #{decoder_forward.4} parent=11 // pred_check_branch
        %325 = sbr.rel (%p323) target = $region40
      $region39: #{decoder_forward.4} parent=11 // pred_region
        _
      $region40: #{decoder_forward.4} parent=11 // pred_fallthru
        _
      // Predicated region
      $region41: #{decoder_forward.4} parent=11 // pred_check
        %p326 = pneg %p238
      $region42: #{decoder_forward.4} parent=11 // pred_check_branch
        %328 = sbr.rel (%p326) target = $region44
      $region43: #{decoder_forward.4} parent=11 // pred_region
        _
      $region44: #{decoder_forward.4} parent=11 // pred_fallthru
        _
    $region12: #{decoder_forward.4} parent=5 // pred_fallthru
      _
    %p329 = scmp.lt.s32.totalorder %s18, 2
    // Predicated region
    $region45: #{decoder_forward.4} parent=5 // pred_check
      %p330 = pneg %p329
    $region46: #{decoder_forward.4} parent=5 // pred_check_branch
      %332 = sbr.rel (%p330) target = $region48
    $region47: #{decoder_forward.4} parent=5 // pred_region
      // Predicated region
      $region49: #{decoder_forward.4} parent=47 // pred_check
        %p333 = pneg %p38
      $region50: #{decoder_forward.4} parent=47 // pred_check_branch
        %335 = sbr.rel (%p333) target = $region52
      $region51: #{decoder_forward.4} parent=47 // pred_region
        %p336 = scmp.lt.s32.totalorder %s18, 1
        %s337 = scalar_select %p336, %s18, 1
        %s338 = smul.addr %s337, 8
        %s339 = smul.addr %s338, 8
        %s340 = scalar_lea.vmem %s0, %s339
      $region52: #{decoder_forward.4} parent=47 // pred_fallthru
        _
      // Predicated region
      $region53: #{decoder_forward.4} parent=47 // pred_check
        %p341 = pneg %p64
      $region54: #{decoder_forward.4} parent=47 // pred_check_branch
        %343 = sbr.rel (%p341) target = $region56
      $region55: #{decoder_forward.4} parent=47 // pred_region
        %p344 = scmp.lt.s32.totalorder %s18, 1
        %s345 = scalar_select %p344, %s18, 1
        %s346 = smul.addr %s345, 8
        %s347 = smul.addr %s346, 8
        %s348 = scalar_lea.vmem %s1, %s347
      $region56: #{decoder_forward.4} parent=47 // pred_fallthru
        _
    $region48: #{decoder_forward.4} parent=5 // pred_fallthru
      _
    %p349 = scmp.le.s32.totalorder 1, %s18
    %p350 = scmp.lt.s32.totalorder %s18, 3
    %p351 = pnand %p349, %p350
    %p352 = pneg %p351
    // Predicated region
    $region57: #{decoder_forward.4} parent=5 // pred_check
      _
    $region58: #{decoder_forward.4} parent=5 // pred_check_branch
      %354 = sbr.rel (%p351) target = $region60
    $region59: #{decoder_forward.4} parent=5 // pred_region
      %s355 = ssub.s32 %s18, 1
      %p356 = scmp.lt.s32.totalorder %s23, 1
      %s357 = scalar_select %p356, %s23, 1
      %s358 = smul.addr %s357, 8
      %s359 = smul.addr %s358, 8
      %s360 = scalar_lea.vmem %s0, %s359
      %p361 = pneg %p44
      %p362 = pneg %p41
      %p363 = scmp.lt.s32.totalorder %s23, 1
      %s364 = scalar_select %p363, %s23, 1
      %s365 = smul.addr %s364, 8
      %s366 = smul.addr %s365, 8
      %s367 = scalar_lea.vmem %s1, %s366
      %p368 = pneg %p70
      %p369 = pneg %p67
      %p370 = pneg %p91
      %p371 = pneg %p88
      %p372 = pneg %p112
      %p373 = pneg %p109
      %p374 = pneg %p133
      %p375 = pneg %p130
      %p376 = pneg %p154
      %p377 = pneg %p151
      %p378 = pneg %p175
      %p379 = pneg %p172
      %p380 = pneg %p196
      %p381 = pneg %p193
      %p382 = pneg %p217
      %p383 = pneg %p214
      %p384 = pneg %p238
      %p385 = pneg %p235
      %p386 = pneg %p264
      %p387 = pneg %p261
      %p388 = scmp.lt.s32.totalorder %s23, 1
      %s389 = scalar_select %p388, %s23, 1
      %s390 = smul.addr %s389, 4
      %s391 = scalar_lea.vmem %s10, %s390
      %p392 = pneg %p290
      %p393 = pneg %p287
      %p394 = scmp.lt.s32.totalorder %s23, 1
      %s395 = scalar_select %p394, %s23, 1
      %s396 = smul.addr %s395, 8
      %s397 = smul.addr %s396, 8
      %s398 = scalar_lea.vmem %s11, %s397
      %p399 = scmp.lt.s32.totalorder %s23, 1
      %s400 = scalar_select %p399, %s23, 1
      %s401 = smul.addr %s400, 8
      %s402 = smul.addr %s401, 8
      %s403 = scalar_lea.vmem %s0, %s402
      %p404 = scmp.lt.s32.totalorder %s23, 1
      %s405 = scalar_select %p404, %s23, 1
      %s406 = smul.addr %s405, 8
      %s407 = smul.addr %s406, 8
      %s408 = scalar_lea.vmem %s1, %s407
      %p409 = scmp.lt.s32.totalorder %s23, 1
      %s410 = scalar_select %p409, %s23, 1
      %s411 = smul.addr %s410, 4
      %s412 = scalar_lea.vmem %s10, %s411
      %p413 = scmp.lt.s32.totalorder %s23, 1
      %s414 = scalar_select %p413, %s23, 1
      %s415 = smul.addr %s414, 8
      %s416 = smul.addr %s415, 8
      %s417 = scalar_lea.vmem %s11, %s416
      %vm418 = vcmask 261120
      %419 = vst.msk [vmem:[#allocation2] sm:$0xff] %vm418, 0.0
      %vm420 = vcmask 254976
      %421 = vst.msk [vmem:[#allocation2 + $0x8] sm:$0x3] %vm420, 0.0
      %s422 = scalar_lea.vmem [#allocation2], 144
      %423 = vst.msk [vmem:[%s422] sm:$0xff] %vm418, 0.0
      %424 = vst.msk [vmem:[%s422 + $0x8] sm:$0x3] %vm420, 0.0
      %vm425 = vcmask 253952
      %426 = vst.msk [vmem:[#allocation2] sm:$0x1] %vm425, 0.0
      %427 = vst.msk [vmem:[#allocation2 + $0x10] sm:$0x1] %vm425, 0.0
      %428 = vst.msk [vmem:[#allocation2 + $0x20] sm:$0x1] %vm425, 0.0
      %429 = vst.msk [vmem:[#allocation2 + $0x30] sm:$0x1] %vm425, 0.0
      %430 = vst.msk [vmem:[#allocation2 + $0x40] sm:$0x1] %vm425, 0.0
      %431 = vst.msk [vmem:[#allocation2 + $0x50] sm:$0x1] %vm425, 0.0
      %432 = vst.msk [vmem:[#allocation2 + $0x60] sm:$0x1] %vm425, 0.0
      %433 = vst.msk [vmem:[#allocation2 + $0x70] sm:$0x1] %vm425, 0.0
      %434 = vst.msk [vmem:[#allocation2 + $0x80] sm:$0x1] %vm425, 0.0
      %435 = vst.msk [vmem:[#allocation2 + $0x90] sm:$0x1] %vm425, 0.0
      %436 = vst.msk [vmem:[#allocation2 + $0x9] sm:$0x1] %vm425, 0.0
      %437 = vst.msk [vmem:[#allocation2 + $0x19] sm:$0x1] %vm425, 0.0
      %438 = vst.msk [vmem:[#allocation2 + $0x29] sm:$0x1] %vm425, 0.0
      %439 = vst.msk [vmem:[#allocation2 + $0x39] sm:$0x1] %vm425, 0.0
      %440 = vst.msk [vmem:[#allocation2 + $0x49] sm:$0x1] %vm425, 0.0
      %441 = vst.msk [vmem:[#allocation2 + $0x59] sm:$0x1] %vm425, 0.0
      %442 = vst.msk [vmem:[#allocation2 + $0x69] sm:$0x1] %vm425, 0.0
      %443 = vst.msk [vmem:[#allocation2 + $0x79] sm:$0x1] %vm425, 0.0
      %444 = vst.msk [vmem:[#allocation2 + $0x89] sm:$0x1] %vm425, 0.0
      %445 = vst.msk [vmem:[#allocation2 + $0x99] sm:$0x1] %vm425, 0.0
      %vm446 = vcmask 130048
      %447 = vst.msk [vmem:[#allocation3] sm:$0xff] %vm446, 0.0
      %vm448 = vcmask 123904
      %449 = vst.msk [vmem:[#allocation3 + $0x8] sm:$0x3] %vm448, 0.0
      %s450 = scalar_lea.vmem [#allocation3], 144
      %451 = vst.msk [vmem:[%s450] sm:$0xff] %vm446, 0.0
      %452 = vst.msk [vmem:[%s450 + $0x8] sm:$0x3] %vm448, 0.0
      %vm453 = vcmask 122880
      %454 = vst.msk [vmem:[#allocation3] sm:$0x1] %vm453, 0.0
      %455 = vst.msk [vmem:[#allocation3 + $0x10] sm:$0x1] %vm453, 0.0
      %456 = vst.msk [vmem:[#allocation3 + $0x20] sm:$0x1] %vm453, 0.0
      %457 = vst.msk [vmem:[#allocation3 + $0x30] sm:$0x1] %vm453, 0.0
      %458 = vst.msk [vmem:[#allocation3 + $0x40] sm:$0x1] %vm453, 0.0
      %459 = vst.msk [vmem:[#allocation3 + $0x50] sm:$0x1] %vm453, 0.0
      %460 = vst.msk [vmem:[#allocation3 + $0x60] sm:$0x1] %vm453, 0.0
      %461 = vst.msk [vmem:[#allocation3 + $0x70] sm:$0x1] %vm453, 0.0
      %462 = vst.msk [vmem:[#allocation3 + $0x80] sm:$0x1] %vm453, 0.0
      %463 = vst.msk [vmem:[#allocation3 + $0x90] sm:$0x1] %vm453, 0.0
      %464 = vst.msk [vmem:[#allocation3 + $0x9] sm:$0x1] %vm453, 0.0
      %465 = vst.msk [vmem:[#allocation3 + $0x19] sm:$0x1] %vm453, 0.0
      %466 = vst.msk [vmem:[#allocation3 + $0x29] sm:$0x1] %vm453, 0.0
      %467 = vst.msk [vmem:[#allocation3 + $0x39] sm:$0x1] %vm453, 0.0
      %468 = vst.msk [vmem:[#allocation3 + $0x49] sm:$0x1] %vm453, 0.0
      %469 = vst.msk [vmem:[#allocation3 + $0x59] sm:$0x1] %vm453, 0.0
      %470 = vst.msk [vmem:[#allocation3 + $0x69] sm:$0x1] %vm453, 0.0
      %471 = vst.msk [vmem:[#allocation3 + $0x79] sm:$0x1] %vm453, 0.0
      %472 = vst.msk [vmem:[#allocation3 + $0x89] sm:$0x1] %vm453, 0.0
      %473 = vst.msk [vmem:[#allocation3 + $0x99] sm:$0x1] %vm453, 0.0
      %474 = vst.msk [vmem:[#allocation4] sm:$0xff] %vm418, 0.0
      %475 = vst.msk [vmem:[#allocation4 + $0x8] sm:$0x3] %vm420, 0.0
      %s476 = scalar_lea.vmem [#allocation4], 144
      %477 = vst.msk [vmem:[%s476] sm:$0xff] %vm418, 0.0
      %478 = vst.msk [vmem:[%s476 + $0x8] sm:$0x3] %vm420, 0.0
      %479 = vst.msk [vmem:[#allocation4] sm:$0x1] %vm425, 0.0
      %480 = vst.msk [vmem:[#allocation4 + $0x10] sm:$0x1] %vm425, 0.0
      %481 = vst.msk [vmem:[#allocation4 + $0x20] sm:$0x1] %vm425, 0.0
      %482 = vst.msk [vmem:[#allocation4 + $0x30] sm:$0x1] %vm425, 0.0
      %483 = vst.msk [vmem:[#allocation4 + $0x40] sm:$0x1] %vm425, 0.0
      %484 = vst.msk [vmem:[#allocation4 + $0x50] sm:$0x1] %vm425, 0.0
      %485 = vst.msk [vmem:[#allocation4 + $0x60] sm:$0x1] %vm425, 0.0
      %486 = vst.msk [vmem:[#allocation4 + $0x70] sm:$0x1] %vm425, 0.0
      %487 = vst.msk [vmem:[#allocation4 + $0x80] sm:$0x1] %vm425, 0.0
      %488 = vst.msk [vmem:[#allocation4 + $0x90] sm:$0x1] %vm425, 0.0
      %489 = vst.msk [vmem:[#allocation4 + $0x9] sm:$0x1] %vm425, 0.0
      %490 = vst.msk [vmem:[#allocation4 + $0x19] sm:$0x1] %vm425, 0.0
      %491 = vst.msk [vmem:[#allocation4 + $0x29] sm:$0x1] %vm425, 0.0
      %492 = vst.msk [vmem:[#allocation4 + $0x39] sm:$0x1] %vm425, 0.0
      %493 = vst.msk [vmem:[#allocation4 + $0x49] sm:$0x1] %vm425, 0.0
      %494 = vst.msk [vmem:[#allocation4 + $0x59] sm:$0x1] %vm425, 0.0
      %495 = vst.msk [vmem:[#allocation4 + $0x69] sm:$0x1] %vm425, 0.0
      %496 = vst.msk [vmem:[#allocation4 + $0x79] sm:$0x1] %vm425, 0.0
      %497 = vst.msk [vmem:[#allocation4 + $0x89] sm:$0x1] %vm425, 0.0
      %498 = vst.msk [vmem:[#allocation4 + $0x99] sm:$0x1] %vm425, 0.0
      %v499 = vld [vmem:[%s403] sm:$0xff]
      %v500 = vld [vmem:[%s403 + $0x8] sm:$0xff]
      %v501 = vld [vmem:[%s403 + $0x10] sm:$0xff]
      %v502 = vld [vmem:[%s403 + $0x18] sm:$0xff]
      %v503 = vld [vmem:[%s403 + $0x20] sm:$0xff]
      %v504 = vld [vmem:[%s403 + $0x28] sm:$0xff]
      %v505 = vld [vmem:[%s403 + $0x30] sm:$0xff]
      %v506 = vld [vmem:[%s403 + $0x38] sm:$0xff]
      %s507 = scalar_lea.vmem [#allocation2], 16
      %508 = vst.msk [vmem:[%s507 + $0x1] sm:$0xff] %vm418, %v499
      %509 = vst.msk [vmem:[%s507 + $0x11] sm:$0xff] %vm418, %v500
      %510 = vst.msk [vmem:[%s507 + $0x21] sm:$0xff] %vm418, %v501
      %511 = vst.msk [vmem:[%s507 + $0x31] sm:$0xff] %vm418, %v502
      %512 = vst.msk [vmem:[%s507 + $0x41] sm:$0xff] %vm418, %v503
      %513 = vst.msk [vmem:[%s507 + $0x51] sm:$0xff] %vm418, %v504
      %514 = vst.msk [vmem:[%s507 + $0x61] sm:$0xff] %vm418, %v505
      %515 = vst.msk [vmem:[%s507 + $0x71] sm:$0xff] %vm418, %v506
      %v516 = vld [vmem:[%s408] sm:$0xff]
      %v517 = vld [vmem:[%s408 + $0x8] sm:$0xff]
      %v518 = vld [vmem:[%s408 + $0x10] sm:$0xff]
      %v519 = vld [vmem:[%s408 + $0x18] sm:$0xff]
      %v520 = vld [vmem:[%s408 + $0x20] sm:$0xff]
      %v521 = vld [vmem:[%s408 + $0x28] sm:$0xff]
      %v522 = vld [vmem:[%s408 + $0x30] sm:$0xff]
      %v523 = vld [vmem:[%s408 + $0x38] sm:$0xff]
      %s524 = scalar_lea.vmem [#allocation3], 16
      %525 = vst.msk [vmem:[%s524 + $0x1] sm:$0xff] %vm446, %v516
      %526 = vst.msk [vmem:[%s524 + $0x11] sm:$0xff] %vm446, %v517
      %527 = vst.msk [vmem:[%s524 + $0x21] sm:$0xff] %vm446, %v518
      %528 = vst.msk [vmem:[%s524 + $0x31] sm:$0xff] %vm446, %v519
      %529 = vst.msk [vmem:[%s524 + $0x41] sm:$0xff] %vm446, %v520
      %530 = vst.msk [vmem:[%s524 + $0x51] sm:$0xff] %vm446, %v521
      %531 = vst.msk [vmem:[%s524 + $0x61] sm:$0xff] %vm446, %v522
      %532 = vst.msk [vmem:[%s524 + $0x71] sm:$0xff] %vm446, %v523
      %v533 = vld [vmem:[#allocation2] sm:$0xff]
      %v534 = vld [vmem:[#allocation2 + $0x10] sm:$0xff]
      %v535 = vld [vmem:[#allocation2 + $0x20] sm:$0xff]
      %v536 = vld [vmem:[#allocation2 + $0x30] sm:$0xff]
      %v537 = vld [vmem:[#allocation2 + $0x40] sm:$0xff]
      %v538 = vld [vmem:[#allocation2 + $0x50] sm:$0xff]
      %v539 = vld [vmem:[#allocation2 + $0x60] sm:$0xff]
      %v540 = vld [vmem:[#allocation2 + $0x70] sm:$0xff]
      %541 = vst.msk [vmem:[#allocation5] sm:$0xff] %vm418, %v533
      %542 = vst.msk [vmem:[#allocation5 + $0x20] sm:$0xff] %vm418, %v534
      %543 = vst.msk [vmem:[#allocation5 + $0x40] sm:$0xff] %vm418, %v535
      %544 = vst.msk [vmem:[#allocation5 + $0x60] sm:$0xff] %vm418, %v536
      %545 = vst.msk [vmem:[#allocation5 + $0x80] sm:$0xff] %vm418, %v537
      %546 = vst.msk [vmem:[#allocation5 + $0xa0] sm:$0xff] %vm418, %v538
      %547 = vst.msk [vmem:[#allocation5 + $0xc0] sm:$0xff] %vm418, %v539
      %548 = vst.msk [vmem:[#allocation5 + $0xe0] sm:$0xff] %vm418, %v540
      %v549 = vld [vmem:[#allocation2 + $0x1] sm:$0xff]
      %v550 = vld [vmem:[#allocation2 + $0x11] sm:$0xff]
      %v551 = vld [vmem:[#allocation2 + $0x21] sm:$0xff]
      %v552 = vld [vmem:[#allocation2 + $0x31] sm:$0xff]
      %v553 = vld [vmem:[#allocation2 + $0x41] sm:$0xff]
      %v554 = vld [vmem:[#allocation2 + $0x51] sm:$0xff]
      %v555 = vld [vmem:[#allocation2 + $0x61] sm:$0xff]
      %v556 = vld [vmem:[#allocation2 + $0x71] sm:$0xff]
      %565 = vrot.lane.b32.xlu0 %v549, 32
      %v566 = vpop.permute.xlu0 %565
      %567 = vrot.lane.b32.xlu0 %v550, 32
      %v568 = vpop.permute.xlu0 %567
      %569 = vrot.lane.b32.xlu0 %v551, 32
      %v570 = vpop.permute.xlu0 %569
      %571 = vrot.lane.b32.xlu0 %v552, 32
      %v572 = vpop.permute.xlu0 %571
      %573 = vrot.lane.b32.xlu0 %v553, 32
      %v574 = vpop.permute.xlu0 %573
      %575 = vrot.lane.b32.xlu0 %v554, 32
      %v576 = vpop.permute.xlu0 %575
      %577 = vrot.lane.b32.xlu0 %v555, 32
      %v578 = vpop.permute.xlu0 %577
      %579 = vrot.lane.b32.xlu0 %v556, 32
      %v580 = vpop.permute.xlu0 %579
      %vm589 = vcmask 523520
      %590 = vst.msk [vmem:[#allocation5] sm:$0xff] %vm589, %v566
      %591 = vst.msk [vmem:[#allocation5 + $0x20] sm:$0xff] %vm589, %v568
      %592 = vst.msk [vmem:[#allocation5 + $0x40] sm:$0xff] %vm589, %v570
      %593 = vst.msk [vmem:[#allocation5 + $0x60] sm:$0xff] %vm589, %v572
      %594 = vst.msk [vmem:[#allocation5 + $0x80] sm:$0xff] %vm589, %v574
      %595 = vst.msk [vmem:[#allocation5 + $0xa0] sm:$0xff] %vm589, %v576
      %596 = vst.msk [vmem:[#allocation5 + $0xc0] sm:$0xff] %vm589, %v578
      %597 = vst.msk [vmem:[#allocation5 + $0xe0] sm:$0xff] %vm589, %v580
      %v598 = vld [vmem:[#allocation2 + $0x2] sm:$0xff]
      %v599 = vld [vmem:[#allocation2 + $0x12] sm:$0xff]
      %v600 = vld [vmem:[#allocation2 + $0x22] sm:$0xff]
      %v601 = vld [vmem:[#allocation2 + $0x32] sm:$0xff]
      %v602 = vld [vmem:[#allocation2 + $0x42] sm:$0xff]
      %v603 = vld [vmem:[#allocation2 + $0x52] sm:$0xff]
      %v604 = vld [vmem:[#allocation2 + $0x62] sm:$0xff]
      %v605 = vld [vmem:[#allocation2 + $0x72] sm:$0xff]
      %614 = vrot.lane.b32.xlu0 %v598, 64
      %v615 = vpop.permute.xlu0 %614
      %616 = vrot.lane.b32.xlu0 %v599, 64
      %v617 = vpop.permute.xlu0 %616
      %618 = vrot.lane.b32.xlu0 %v600, 64
      %v619 = vpop.permute.xlu0 %618
      %620 = vrot.lane.b32.xlu0 %v601, 64
      %v621 = vpop.permute.xlu0 %620
      %622 = vrot.lane.b32.xlu0 %v602, 64
      %v623 = vpop.permute.xlu0 %622
      %624 = vrot.lane.b32.xlu0 %v603, 64
      %v625 = vpop.permute.xlu0 %624
      %626 = vrot.lane.b32.xlu0 %v604, 64
      %v627 = vpop.permute.xlu0 %626
      %628 = vrot.lane.b32.xlu0 %v605, 64
      %v629 = vpop.permute.xlu0 %628
      %vm638 = vcmask 785920
      %639 = vst.msk [vmem:[#allocation5] sm:$0xff] %vm638, %v615
      %640 = vst.msk [vmem:[#allocation5 + $0x20] sm:$0xff] %vm638, %v617
      %641 = vst.msk [vmem:[#allocation5 + $0x40] sm:$0xff] %vm638, %v619
      %642 = vst.msk [vmem:[#allocation5 + $0x60] sm:$0xff] %vm638, %v621
      %643 = vst.msk [vmem:[#allocation5 + $0x80] sm:$0xff] %vm638, %v623
      %644 = vst.msk [vmem:[#allocation5 + $0xa0] sm:$0xff] %vm638, %v625
      %645 = vst.msk [vmem:[#allocation5 + $0xc0] sm:$0xff] %vm638, %v627
      %646 = vst.msk [vmem:[#allocation5 + $0xe0] sm:$0xff] %vm638, %v629
      %v647 = vld [vmem:[%s507] sm:$0xff]
      %v648 = vld [vmem:[%s507 + $0x10] sm:$0xff]
      %v649 = vld [vmem:[%s507 + $0x20] sm:$0xff]
      %v650 = vld [vmem:[%s507 + $0x30] sm:$0xff]
      %v651 = vld [vmem:[%s507 + $0x40] sm:$0xff]
      %v652 = vld [vmem:[%s507 + $0x50] sm:$0xff]
      %v653 = vld [vmem:[%s507 + $0x60] sm:$0xff]
      %v654 = vld [vmem:[%s507 + $0x70] sm:$0xff]
      %663 = vrot.lane.b32.xlu0 %v647, 96
      %v664 = vpop.permute.xlu0 %663
      %665 = vrot.lane.b32.xlu0 %v648, 96
      %v666 = vpop.permute.xlu0 %665
      %667 = vrot.lane.b32.xlu0 %v649, 96
      %v668 = vpop.permute.xlu0 %667
      %669 = vrot.lane.b32.xlu0 %v650, 96
      %v670 = vpop.permute.xlu0 %669
      %671 = vrot.lane.b32.xlu0 %v651, 96
      %v672 = vpop.permute.xlu0 %671
      %673 = vrot.lane.b32.xlu0 %v652, 96
      %v674 = vpop.permute.xlu0 %673
      %675 = vrot.lane.b32.xlu0 %v653, 96
      %v676 = vpop.permute.xlu0 %675
      %677 = vrot.lane.b32.xlu0 %v654, 96
      %v678 = vpop.permute.xlu0 %677
      %vm687 = vcmask 1048320
      %688 = vst.msk [vmem:[#allocation5] sm:$0xff] %vm687, %v664
      %689 = vst.msk [vmem:[#allocation5 + $0x20] sm:$0xff] %vm687, %v666
      %690 = vst.msk [vmem:[#allocation5 + $0x40] sm:$0xff] %vm687, %v668
      %691 = vst.msk [vmem:[#allocation5 + $0x60] sm:$0xff] %vm687, %v670
      %692 = vst.msk [vmem:[#allocation5 + $0x80] sm:$0xff] %vm687, %v672
      %693 = vst.msk [vmem:[#allocation5 + $0xa0] sm:$0xff] %vm687, %v674
      %694 = vst.msk [vmem:[#allocation5 + $0xc0] sm:$0xff] %vm687, %v676
      %695 = vst.msk [vmem:[#allocation5 + $0xe0] sm:$0xff] %vm687, %v678
      %v696 = vld [vmem:[%s507 + $0x1] sm:$0xff]
      %v697 = vld [vmem:[%s507 + $0x11] sm:$0xff]
      %v698 = vld [vmem:[%s507 + $0x21] sm:$0xff]
      %v699 = vld [vmem:[%s507 + $0x31] sm:$0xff]
      %v700 = vld [vmem:[%s507 + $0x41] sm:$0xff]
      %v701 = vld [vmem:[%s507 + $0x51] sm:$0xff]
      %v702 = vld [vmem:[%s507 + $0x61] sm:$0xff]
      %v703 = vld [vmem:[%s507 + $0x71] sm:$0xff]
      %704 = vst.msk [vmem:[#allocation5 + $0x8] sm:$0xff] %vm418, %v696
      %705 = vst.msk [vmem:[#allocation5 + $0x28] sm:$0xff] %vm418, %v697
      %706 = vst.msk [vmem:[#allocation5 + $0x48] sm:$0xff] %vm418, %v698
      %707 = vst.msk [vmem:[#allocation5 + $0x68] sm:$0xff] %vm418, %v699
      %708 = vst.msk [vmem:[#allocation5 + $0x88] sm:$0xff] %vm418, %v700
      %709 = vst.msk [vmem:[#allocation5 + $0xa8] sm:$0xff] %vm418, %v701
      %710 = vst.msk [vmem:[#allocation5 + $0xc8] sm:$0xff] %vm418, %v702
      %711 = vst.msk [vmem:[#allocation5 + $0xe8] sm:$0xff] %vm418, %v703
      %v712 = vld [vmem:[%s507 + $0x2] sm:$0xff]
      %v713 = vld [vmem:[%s507 + $0x12] sm:$0xff]
      %v714 = vld [vmem:[%s507 + $0x22] sm:$0xff]
      %v715 = vld [vmem:[%s507 + $0x32] sm:$0xff]
      %v716 = vld [vmem:[%s507 + $0x42] sm:$0xff]
      %v717 = vld [vmem:[%s507 + $0x52] sm:$0xff]
      %v718 = vld [vmem:[%s507 + $0x62] sm:$0xff]
      %v719 = vld [vmem:[%s507 + $0x72] sm:$0xff]
      %728 = vrot.lane.b32.xlu0 %v712, 32
      %v729 = vpop.permute.xlu0 %728
      %730 = vrot.lane.b32.xlu0 %v713, 32
      %v731 = vpop.permute.xlu0 %730
      %732 = vrot.lane.b32.xlu0 %v714, 32
      %v733 = vpop.permute.xlu0 %732
      %734 = vrot.lane.b32.xlu0 %v715, 32
      %v735 = vpop.permute.xlu0 %734
      %736 = vrot.lane.b32.xlu0 %v716, 32
      %v737 = vpop.permute.xlu0 %736
      %738 = vrot.lane.b32.xlu0 %v717, 32
      %v739 = vpop.permute.xlu0 %738
      %740 = vrot.lane.b32.xlu0 %v718, 32
      %v741 = vpop.permute.xlu0 %740
      %742 = vrot.lane.b32.xlu0 %v719, 32
      %v743 = vpop.permute.xlu0 %742
      %752 = vst.msk [vmem:[#allocation5 + $0x8] sm:$0xff] %vm589, %v729
      %753 = vst.msk [vmem:[#allocation5 + $0x28] sm:$0xff] %vm589, %v731
      %754 = vst.msk [vmem:[#allocation5 + $0x48] sm:$0xff] %vm589, %v733
      %755 = vst.msk [vmem:[#allocation5 + $0x68] sm:$0xff] %vm589, %v735
      %756 = vst.msk [vmem:[#allocation5 + $0x88] sm:$0xff] %vm589, %v737
      %757 = vst.msk [vmem:[#allocation5 + $0xa8] sm:$0xff] %vm589, %v739
      %758 = vst.msk [vmem:[#allocation5 + $0xc8] sm:$0xff] %vm589, %v741
      %759 = vst.msk [vmem:[#allocation5 + $0xe8] sm:$0xff] %vm589, %v743
      %s760 = scalar_lea.vmem [#allocation2], 32
      %v761 = vld [vmem:[%s760] sm:$0xff]
      %v762 = vld [vmem:[%s760 + $0x10] sm:$0xff]
      %v763 = vld [vmem:[%s760 + $0x20] sm:$0xff]
      %v764 = vld [vmem:[%s760 + $0x30] sm:$0xff]
      %v765 = vld [vmem:[%s760 + $0x40] sm:$0xff]
      %v766 = vld [vmem:[%s760 + $0x50] sm:$0xff]
      %v767 = vld [vmem:[%s760 + $0x60] sm:$0xff]
      %v768 = vld [vmem:[%s760 + $0x70] sm:$0xff]
      %777 = vrot.lane.b32.xlu0 %v761, 64
      %v778 = vpop.permute.xlu0 %777
      %779 = vrot.lane.b32.xlu0 %v762, 64
      %v780 = vpop.permute.xlu0 %779
      %781 = vrot.lane.b32.xlu0 %v763, 64
      %v782 = vpop.permute.xlu0 %781
      %783 = vrot.lane.b32.xlu0 %v764, 64
      %v784 = vpop.permute.xlu0 %783
      %785 = vrot.lane.b32.xlu0 %v765, 64
      %v786 = vpop.permute.xlu0 %785
      %787 = vrot.lane.b32.xlu0 %v766, 64
      %v788 = vpop.permute.xlu0 %787
      %789 = vrot.lane.b32.xlu0 %v767, 64
      %v790 = vpop.permute.xlu0 %789
      %791 = vrot.lane.b32.xlu0 %v768, 64
      %v792 = vpop.permute.xlu0 %791
      %801 = vst.msk [vmem:[#allocation5 + $0x8] sm:$0xff] %vm638, %v778
      %802 = vst.msk [vmem:[#allocation5 + $0x28] sm:$0xff] %vm638, %v780
      %803 = vst.msk [vmem:[#allocation5 + $0x48] sm:$0xff] %vm638, %v782
      %804 = vst.msk [vmem:[#allocation5 + $0x68] sm:$0xff] %vm638, %v784
      %805 = vst.msk [vmem:[#allocation5 + $0x88] sm:$0xff] %vm638, %v786
      %806 = vst.msk [vmem:[#allocation5 + $0xa8] sm:$0xff] %vm638, %v788
      %807 = vst.msk [vmem:[#allocation5 + $0xc8] sm:$0xff] %vm638, %v790
      %808 = vst.msk [vmem:[#allocation5 + $0xe8] sm:$0xff] %vm638, %v792
      %v809 = vld [vmem:[%s760 + $0x1] sm:$0xff]
      %v810 = vld [vmem:[%s760 + $0x11] sm:$0xff]
      %v811 = vld [vmem:[%s760 + $0x21] sm:$0xff]
      %v812 = vld [vmem:[%s760 + $0x31] sm:$0xff]
      %v813 = vld [vmem:[%s760 + $0x41] sm:$0xff]
      %v814 = vld [vmem:[%s760 + $0x51] sm:$0xff]
      %v815 = vld [vmem:[%s760 + $0x61] sm:$0xff]
      %v816 = vld [vmem:[%s760 + $0x71] sm:$0xff]
      %825 = vrot.lane.b32.xlu0 %v809, 96
      %v826 = vpop.permute.xlu0 %825
      %827 = vrot.lane.b32.xlu0 %v810, 96
      %v828 = vpop.permute.xlu0 %827
      %829 = vrot.lane.b32.xlu0 %v811, 96
      %v830 = vpop.permute.xlu0 %829
      %831 = vrot.lane.b32.xlu0 %v812, 96
      %v832 = vpop.permute.xlu0 %831
      %833 = vrot.lane.b32.xlu0 %v813, 96
      %v834 = vpop.permute.xlu0 %833
      %835 = vrot.lane.b32.xlu0 %v814, 96
      %v836 = vpop.permute.xlu0 %835
      %837 = vrot.lane.b32.xlu0 %v815, 96
      %v838 = vpop.permute.xlu0 %837
      %839 = vrot.lane.b32.xlu0 %v816, 96
      %v840 = vpop.permute.xlu0 %839
      %849 = vst.msk [vmem:[#allocation5 + $0x8] sm:$0xff] %vm687, %v826
      %850 = vst.msk [vmem:[#allocation5 + $0x28] sm:$0xff] %vm687, %v828
      %851 = vst.msk [vmem:[#allocation5 + $0x48] sm:$0xff] %vm687, %v830
      %852 = vst.msk [vmem:[#allocation5 + $0x68] sm:$0xff] %vm687, %v832
      %853 = vst.msk [vmem:[#allocation5 + $0x88] sm:$0xff] %vm687, %v834
      %854 = vst.msk [vmem:[#allocation5 + $0xa8] sm:$0xff] %vm687, %v836
      %855 = vst.msk [vmem:[#allocation5 + $0xc8] sm:$0xff] %vm687, %v838
      %856 = vst.msk [vmem:[#allocation5 + $0xe8] sm:$0xff] %vm687, %v840
      %v857 = vld [vmem:[%s760 + $0x2] sm:$0xff]
      %v858 = vld [vmem:[%s760 + $0x12] sm:$0xff]
      %v859 = vld [vmem:[%s760 + $0x22] sm:$0xff]
      %v860 = vld [vmem:[%s760 + $0x32] sm:$0xff]
      %v861 = vld [vmem:[%s760 + $0x42] sm:$0xff]
      %v862 = vld [vmem:[%s760 + $0x52] sm:$0xff]
      %v863 = vld [vmem:[%s760 + $0x62] sm:$0xff]
      %v864 = vld [vmem:[%s760 + $0x72] sm:$0xff]
      %865 = vst.msk [vmem:[#allocation5 + $0x10] sm:$0xff] %vm418, %v857
      %866 = vst.msk [vmem:[#allocation5 + $0x30] sm:$0xff] %vm418, %v858
      %867 = vst.msk [vmem:[#allocation5 + $0x50] sm:$0xff] %vm418, %v859
      %868 = vst.msk [vmem:[#allocation5 + $0x70] sm:$0xff] %vm418, %v860
      %869 = vst.msk [vmem:[#allocation5 + $0x90] sm:$0xff] %vm418, %v861
      %870 = vst.msk [vmem:[#allocation5 + $0xb0] sm:$0xff] %vm418, %v862
      %871 = vst.msk [vmem:[#allocation5 + $0xd0] sm:$0xff] %vm418, %v863
      %872 = vst.msk [vmem:[#allocation5 + $0xf0] sm:$0xff] %vm418, %v864
      %v873 = vld [vmem:[#allocation3] sm:$0xff]
      %v874 = vld [vmem:[#allocation3 + $0x10] sm:$0xff]
      %v875 = vld [vmem:[#allocation3 + $0x20] sm:$0xff]
      %v876 = vld [vmem:[#allocation3 + $0x30] sm:$0xff]
      %v877 = vld [vmem:[#allocation3 + $0x40] sm:$0xff]
      %v878 = vld [vmem:[#allocation3 + $0x50] sm:$0xff]
      %v879 = vld [vmem:[#allocation3 + $0x60] sm:$0xff]
      %v880 = vld [vmem:[#allocation3 + $0x70] sm:$0xff]
      %889 = vrot.lane.b32.xlu0 %v873, 32
      %v890 = vpop.permute.xlu0 %889
      %891 = vrot.lane.b32.xlu0 %v874, 32
      %v892 = vpop.permute.xlu0 %891
      %893 = vrot.lane.b32.xlu0 %v875, 32
      %v894 = vpop.permute.xlu0 %893
      %895 = vrot.lane.b32.xlu0 %v876, 32
      %v896 = vpop.permute.xlu0 %895
      %897 = vrot.lane.b32.xlu0 %v877, 32
      %v898 = vpop.permute.xlu0 %897
      %899 = vrot.lane.b32.xlu0 %v878, 32
      %v900 = vpop.permute.xlu0 %899
      %901 = vrot.lane.b32.xlu0 %v879, 32
      %v902 = vpop.permute.xlu0 %901
      %903 = vrot.lane.b32.xlu0 %v880, 32
      %v904 = vpop.permute.xlu0 %903
      %vm913 = vcmask 392448
      %914 = vst.msk [vmem:[#allocation5 + $0x10] sm:$0xff] %vm913, %v890
      %915 = vst.msk [vmem:[#allocation5 + $0x30] sm:$0xff] %vm913, %v892
      %916 = vst.msk [vmem:[#allocation5 + $0x50] sm:$0xff] %vm913, %v894
      %917 = vst.msk [vmem:[#allocation5 + $0x70] sm:$0xff] %vm913, %v896
      %918 = vst.msk [vmem:[#allocation5 + $0x90] sm:$0xff] %vm913, %v898
      %919 = vst.msk [vmem:[#allocation5 + $0xb0] sm:$0xff] %vm913, %v900
      %920 = vst.msk [vmem:[#allocation5 + $0xd0] sm:$0xff] %vm913, %v902
      %921 = vst.msk [vmem:[#allocation5 + $0xf0] sm:$0xff] %vm913, %v904
      %v922 = vld [vmem:[#allocation3 + $0x1] sm:$0xff]
      %v923 = vld [vmem:[#allocation3 + $0x11] sm:$0xff]
      %v924 = vld [vmem:[#allocation3 + $0x21] sm:$0xff]
      %v925 = vld [vmem:[#allocation3 + $0x31] sm:$0xff]
      %v926 = vld [vmem:[#allocation3 + $0x41] sm:$0xff]
      %v927 = vld [vmem:[#allocation3 + $0x51] sm:$0xff]
      %v928 = vld [vmem:[#allocation3 + $0x61] sm:$0xff]
      %v929 = vld [vmem:[#allocation3 + $0x71] sm:$0xff]
      %938 = vrot.lane.b32.xlu0 %v922, 48
      %v939 = vpop.permute.xlu0 %938
      %940 = vrot.lane.b32.xlu0 %v923, 48
      %v941 = vpop.permute.xlu0 %940
      %942 = vrot.lane.b32.xlu0 %v924, 48
      %v943 = vpop.permute.xlu0 %942
      %944 = vrot.lane.b32.xlu0 %v925, 48
      %v945 = vpop.permute.xlu0 %944
      %946 = vrot.lane.b32.xlu0 %v926, 48
      %v947 = vpop.permute.xlu0 %946
      %948 = vrot.lane.b32.xlu0 %v927, 48
      %v949 = vpop.permute.xlu0 %948
      %950 = vrot.lane.b32.xlu0 %v928, 48
      %v951 = vpop.permute.xlu0 %950
      %952 = vrot.lane.b32.xlu0 %v929, 48
      %v953 = vpop.permute.xlu0 %952
      %vm962 = vcmask 523648
      %963 = vst.msk [vmem:[#allocation5 + $0x10] sm:$0xff] %vm962, %v939
      %964 = vst.msk [vmem:[#allocation5 + $0x30] sm:$0xff] %vm962, %v941
      %965 = vst.msk [vmem:[#allocation5 + $0x50] sm:$0xff] %vm962, %v943
      %966 = vst.msk [vmem:[#allocation5 + $0x70] sm:$0xff] %vm962, %v945
      %967 = vst.msk [vmem:[#allocation5 + $0x90] sm:$0xff] %vm962, %v947
      %968 = vst.msk [vmem:[#allocation5 + $0xb0] sm:$0xff] %vm962, %v949
      %969 = vst.msk [vmem:[#allocation5 + $0xd0] sm:$0xff] %vm962, %v951
      %970 = vst.msk [vmem:[#allocation5 + $0xf0] sm:$0xff] %vm962, %v953
      %v971 = vld [vmem:[#allocation3 + $0x2] sm:$0xff]
      %v972 = vld [vmem:[#allocation3 + $0x12] sm:$0xff]
      %v973 = vld [vmem:[#allocation3 + $0x22] sm:$0xff]
      %v974 = vld [vmem:[#allocation3 + $0x32] sm:$0xff]
      %v975 = vld [vmem:[#allocation3 + $0x42] sm:$0xff]
      %v976 = vld [vmem:[#allocation3 + $0x52] sm:$0xff]
      %v977 = vld [vmem:[#allocation3 + $0x62] sm:$0xff]
      %v978 = vld [vmem:[#allocation3 + $0x72] sm:$0xff]
      %987 = vrot.lane.b32.xlu0 %v971, 64
      %v988 = vpop.permute.xlu0 %987
      %989 = vrot.lane.b32.xlu0 %v972, 64
      %v990 = vpop.permute.xlu0 %989
      %991 = vrot.lane.b32.xlu0 %v973, 64
      %v992 = vpop.permute.xlu0 %991
      %993 = vrot.lane.b32.xlu0 %v974, 64
      %v994 = vpop.permute.xlu0 %993
      %995 = vrot.lane.b32.xlu0 %v975, 64
      %v996 = vpop.permute.xlu0 %995
      %997 = vrot.lane.b32.xlu0 %v976, 64
      %v998 = vpop.permute.xlu0 %997
      %999 = vrot.lane.b32.xlu0 %v977, 64
      %v1000 = vpop.permute.xlu0 %999
      %1001 = vrot.lane.b32.xlu0 %v978, 64
      %v1002 = vpop.permute.xlu0 %1001
      %vm1011 = vcmask 654848
      %1012 = vst.msk [vmem:[#allocation5 + $0x10] sm:$0xff] %vm1011, %v988
      %1013 = vst.msk [vmem:[#allocation5 + $0x30] sm:$0xff] %vm1011, %v990
      %1014 = vst.msk [vmem:[#allocation5 + $0x50] sm:$0xff] %vm1011, %v992
      %1015 = vst.msk [vmem:[#allocation5 + $0x70] sm:$0xff] %vm1011, %v994
      %1016 = vst.msk [vmem:[#allocation5 + $0x90] sm:$0xff] %vm1011, %v996
      %1017 = vst.msk [vmem:[#allocation5 + $0xb0] sm:$0xff] %vm1011, %v998
      %1018 = vst.msk [vmem:[#allocation5 + $0xd0] sm:$0xff] %vm1011, %v1000
      %1019 = vst.msk [vmem:[#allocation5 + $0xf0] sm:$0xff] %vm1011, %v1002
      %v1020 = vld [vmem:[%s524] sm:$0xff]
      %v1021 = vld [vmem:[%s524 + $0x10] sm:$0xff]
      %v1022 = vld [vmem:[%s524 + $0x20] sm:$0xff]
      %v1023 = vld [vmem:[%s524 + $0x30] sm:$0xff]
      %v1024 = vld [vmem:[%s524 + $0x40] sm:$0xff]
      %v1025 = vld [vmem:[%s524 + $0x50] sm:$0xff]
      %v1026 = vld [vmem:[%s524 + $0x60] sm:$0xff]
      %v1027 = vld [vmem:[%s524 + $0x70] sm:$0xff]
      %1036 = vrot.lane.b32.xlu0 %v1020, 80
      %v1037 = vpop.permute.xlu0 %1036
      %1038 = vrot.lane.b32.xlu0 %v1021, 80
      %v1039 = vpop.permute.xlu0 %1038
      %1040 = vrot.lane.b32.xlu0 %v1022, 80
      %v1041 = vpop.permute.xlu0 %1040
      %1042 = vrot.lane.b32.xlu0 %v1023, 80
      %v1043 = vpop.permute.xlu0 %1042
      %1044 = vrot.lane.b32.xlu0 %v1024, 80
      %v1045 = vpop.permute.xlu0 %1044
      %1046 = vrot.lane.b32.xlu0 %v1025, 80
      %v1047 = vpop.permute.xlu0 %1046
      %1048 = vrot.lane.b32.xlu0 %v1026, 80
      %v1049 = vpop.permute.xlu0 %1048
      %1050 = vrot.lane.b32.xlu0 %v1027, 80
      %v1051 = vpop.permute.xlu0 %1050
      %vm1060 = vcmask 786048
      %1061 = vst.msk [vmem:[#allocation5 + $0x10] sm:$0xff] %vm1060, %v1037
      %1062 = vst.msk [vmem:[#allocation5 + $0x30] sm:$0xff] %vm1060, %v1039
      %1063 = vst.msk [vmem:[#allocation5 + $0x50] sm:$0xff] %vm1060, %v1041
      %1064 = vst.msk [vmem:[#allocation5 + $0x70] sm:$0xff] %vm1060, %v1043
      %1065 = vst.msk [vmem:[#allocation5 + $0x90] sm:$0xff] %vm1060, %v1045
      %1066 = vst.msk [vmem:[#allocation5 + $0xb0] sm:$0xff] %vm1060, %v1047
      %1067 = vst.msk [vmem:[#allocation5 + $0xd0] sm:$0xff] %vm1060, %v1049
      %1068 = vst.msk [vmem:[#allocation5 + $0xf0] sm:$0xff] %vm1060, %v1051
      %v1069 = vld [vmem:[%s524 + $0x1] sm:$0xff]
      %v1070 = vld [vmem:[%s524 + $0x11] sm:$0xff]
      %v1071 = vld [vmem:[%s524 + $0x21] sm:$0xff]
      %v1072 = vld [vmem:[%s524 + $0x31] sm:$0xff]
      %v1073 = vld [vmem:[%s524 + $0x41] sm:$0xff]
      %v1074 = vld [vmem:[%s524 + $0x51] sm:$0xff]
      %v1075 = vld [vmem:[%s524 + $0x61] sm:$0xff]
      %v1076 = vld [vmem:[%s524 + $0x71] sm:$0xff]
      %1085 = vrot.lane.b32.xlu0 %v1069, 96
      %v1086 = vpop.permute.xlu0 %1085
      %1087 = vrot.lane.b32.xlu0 %v1070, 96
      %v1088 = vpop.permute.xlu0 %1087
      %1089 = vrot.lane.b32.xlu0 %v1071, 96
      %v1090 = vpop.permute.xlu0 %1089
      %1091 = vrot.lane.b32.xlu0 %v1072, 96
      %v1092 = vpop.permute.xlu0 %1091
      %1093 = vrot.lane.b32.xlu0 %v1073, 96
      %v1094 = vpop.permute.xlu0 %1093
      %1095 = vrot.lane.b32.xlu0 %v1074, 96
      %v1096 = vpop.permute.xlu0 %1095
      %1097 = vrot.lane.b32.xlu0 %v1075, 96
      %v1098 = vpop.permute.xlu0 %1097
      %1099 = vrot.lane.b32.xlu0 %v1076, 96
      %v1100 = vpop.permute.xlu0 %1099
      %vm1109 = vcmask 917248
      %1110 = vst.msk [vmem:[#allocation5 + $0x10] sm:$0xff] %vm1109, %v1086
      %1111 = vst.msk [vmem:[#allocation5 + $0x30] sm:$0xff] %vm1109, %v1088
      %1112 = vst.msk [vmem:[#allocation5 + $0x50] sm:$0xff] %vm1109, %v1090
      %1113 = vst.msk [vmem:[#allocation5 + $0x70] sm:$0xff] %vm1109, %v1092
      %1114 = vst.msk [vmem:[#allocation5 + $0x90] sm:$0xff] %vm1109, %v1094
      %1115 = vst.msk [vmem:[#allocation5 + $0xb0] sm:$0xff] %vm1109, %v1096
      %1116 = vst.msk [vmem:[#allocation5 + $0xd0] sm:$0xff] %vm1109, %v1098
      %1117 = vst.msk [vmem:[#allocation5 + $0xf0] sm:$0xff] %vm1109, %v1100
      %v1118 = vld [vmem:[%s524 + $0x2] sm:$0xff]
      %v1119 = vld [vmem:[%s524 + $0x12] sm:$0xff]
      %v1120 = vld [vmem:[%s524 + $0x22] sm:$0xff]
      %v1121 = vld [vmem:[%s524 + $0x32] sm:$0xff]
      %v1122 = vld [vmem:[%s524 + $0x42] sm:$0xff]
      %v1123 = vld [vmem:[%s524 + $0x52] sm:$0xff]
      %v1124 = vld [vmem:[%s524 + $0x62] sm:$0xff]
      %v1125 = vld [vmem:[%s524 + $0x72] sm:$0xff]
      %1134 = vrot.lane.b32.xlu0 %v1118, 112
      %v1135 = vpop.permute.xlu0 %1134
      %1136 = vrot.lane.b32.xlu0 %v1119, 112
      %v1137 = vpop.permute.xlu0 %1136
      %1138 = vrot.lane.b32.xlu0 %v1120, 112
      %v1139 = vpop.permute.xlu0 %1138
      %1140 = vrot.lane.b32.xlu0 %v1121, 112
      %v1141 = vpop.permute.xlu0 %1140
      %1142 = vrot.lane.b32.xlu0 %v1122, 112
      %v1143 = vpop.permute.xlu0 %1142
      %1144 = vrot.lane.b32.xlu0 %v1123, 112
      %v1145 = vpop.permute.xlu0 %1144
      %1146 = vrot.lane.b32.xlu0 %v1124, 112
      %v1147 = vpop.permute.xlu0 %1146
      %1148 = vrot.lane.b32.xlu0 %v1125, 112
      %v1149 = vpop.permute.xlu0 %1148
      %vm1158 = vcmask 1048448
      %1159 = vst.msk [vmem:[#allocation5 + $0x10] sm:$0xff] %vm1158, %v1135
      %1160 = vst.msk [vmem:[#allocation5 + $0x30] sm:$0xff] %vm1158, %v1137
      %1161 = vst.msk [vmem:[#allocation5 + $0x50] sm:$0xff] %vm1158, %v1139
      %1162 = vst.msk [vmem:[#allocation5 + $0x70] sm:$0xff] %vm1158, %v1141
      %1163 = vst.msk [vmem:[#allocation5 + $0x90] sm:$0xff] %vm1158, %v1143
      %1164 = vst.msk [vmem:[#allocation5 + $0xb0] sm:$0xff] %vm1158, %v1145
      %1165 = vst.msk [vmem:[#allocation5 + $0xd0] sm:$0xff] %vm1158, %v1147
      %1166 = vst.msk [vmem:[#allocation5 + $0xf0] sm:$0xff] %vm1158, %v1149
      %s1167 = scalar_lea.vmem [#allocation3], 32
      %v1168 = vld [vmem:[%s1167] sm:$0xff]
      %v1169 = vld [vmem:[%s1167 + $0x10] sm:$0xff]
      %v1170 = vld [vmem:[%s1167 + $0x20] sm:$0xff]
      %v1171 = vld [vmem:[%s1167 + $0x30] sm:$0xff]
      %v1172 = vld [vmem:[%s1167 + $0x40] sm:$0xff]
      %v1173 = vld [vmem:[%s1167 + $0x50] sm:$0xff]
      %v1174 = vld [vmem:[%s1167 + $0x60] sm:$0xff]
      %v1175 = vld [vmem:[%s1167 + $0x70] sm:$0xff]
      %1176 = vst.msk [vmem:[#allocation5 + $0x18] sm:$0xff] %vm446, %v1168
      %1177 = vst.msk [vmem:[#allocation5 + $0x38] sm:$0xff] %vm446, %v1169
      %1178 = vst.msk [vmem:[#allocation5 + $0x58] sm:$0xff] %vm446, %v1170
      %1179 = vst.msk [vmem:[#allocation5 + $0x78] sm:$0xff] %vm446, %v1171
      %1180 = vst.msk [vmem:[#allocation5 + $0x98] sm:$0xff] %vm446, %v1172
      %1181 = vst.msk [vmem:[#allocation5 + $0xb8] sm:$0xff] %vm446, %v1173
      %1182 = vst.msk [vmem:[#allocation5 + $0xd8] sm:$0xff] %vm446, %v1174
      %1183 = vst.msk [vmem:[#allocation5 + $0xf8] sm:$0xff] %vm446, %v1175
      %v1184 = vld [vmem:[%s1167 + $0x1] sm:$0xff]
      %v1185 = vld [vmem:[%s1167 + $0x11] sm:$0xff]
      %v1186 = vld [vmem:[%s1167 + $0x21] sm:$0xff]
      %v1187 = vld [vmem:[%s1167 + $0x31] sm:$0xff]
      %v1188 = vld [vmem:[%s1167 + $0x41] sm:$0xff]
      %v1189 = vld [vmem:[%s1167 + $0x51] sm:$0xff]
      %v1190 = vld [vmem:[%s1167 + $0x61] sm:$0xff]
      %v1191 = vld [vmem:[%s1167 + $0x71] sm:$0xff]
      %1200 = vrot.lane.b32.xlu0 %v1184, 16
      %v1201 = vpop.permute.xlu0 %1200
      %1202 = vrot.lane.b32.xlu0 %v1185, 16
      %v1203 = vpop.permute.xlu0 %1202
      %1204 = vrot.lane.b32.xlu0 %v1186, 16
      %v1205 = vpop.permute.xlu0 %1204
      %1206 = vrot.lane.b32.xlu0 %v1187, 16
      %v1207 = vpop.permute.xlu0 %1206
      %1208 = vrot.lane.b32.xlu0 %v1188, 16
      %v1209 = vpop.permute.xlu0 %1208
      %1210 = vrot.lane.b32.xlu0 %v1189, 16
      %v1211 = vpop.permute.xlu0 %1210
      %1212 = vrot.lane.b32.xlu0 %v1190, 16
      %v1213 = vpop.permute.xlu0 %1212
      %1214 = vrot.lane.b32.xlu0 %v1191, 16
      %v1215 = vpop.permute.xlu0 %1214
      %vm1224 = vcmask 261248
      %1225 = vst.msk [vmem:[#allocation5 + $0x18] sm:$0xff] %vm1224, %v1201
      %1226 = vst.msk [vmem:[#allocation5 + $0x38] sm:$0xff] %vm1224, %v1203
      %1227 = vst.msk [vmem:[#allocation5 + $0x58] sm:$0xff] %vm1224, %v1205
      %1228 = vst.msk [vmem:[#allocation5 + $0x78] sm:$0xff] %vm1224, %v1207
      %1229 = vst.msk [vmem:[#allocation5 + $0x98] sm:$0xff] %vm1224, %v1209
      %1230 = vst.msk [vmem:[#allocation5 + $0xb8] sm:$0xff] %vm1224, %v1211
      %1231 = vst.msk [vmem:[#allocation5 + $0xd8] sm:$0xff] %vm1224, %v1213
      %1232 = vst.msk [vmem:[#allocation5 + $0xf8] sm:$0xff] %vm1224, %v1215
      %v1233 = vld [vmem:[%s1167 + $0x2] sm:$0xff]
      %v1234 = vld [vmem:[%s1167 + $0x12] sm:$0xff]
      %v1235 = vld [vmem:[%s1167 + $0x22] sm:$0xff]
      %v1236 = vld [vmem:[%s1167 + $0x32] sm:$0xff]
      %v1237 = vld [vmem:[%s1167 + $0x42] sm:$0xff]
      %v1238 = vld [vmem:[%s1167 + $0x52] sm:$0xff]
      %v1239 = vld [vmem:[%s1167 + $0x62] sm:$0xff]
      %v1240 = vld [vmem:[%s1167 + $0x72] sm:$0xff]
      %1249 = vrot.lane.b32.xlu0 %v1233, 32
      %v1250 = vpop.permute.xlu0 %1249
      %1251 = vrot.lane.b32.xlu0 %v1234, 32
      %v1252 = vpop.permute.xlu0 %1251
      %1253 = vrot.lane.b32.xlu0 %v1235, 32
      %v1254 = vpop.permute.xlu0 %1253
      %1255 = vrot.lane.b32.xlu0 %v1236, 32
      %v1256 = vpop.permute.xlu0 %1255
      %1257 = vrot.lane.b32.xlu0 %v1237, 32
      %v1258 = vpop.permute.xlu0 %1257
      %1259 = vrot.lane.b32.xlu0 %v1238, 32
      %v1260 = vpop.permute.xlu0 %1259
      %1261 = vrot.lane.b32.xlu0 %v1239, 32
      %v1262 = vpop.permute.xlu0 %1261
      %1263 = vrot.lane.b32.xlu0 %v1240, 32
      %v1264 = vpop.permute.xlu0 %1263
      %1273 = vst.msk [vmem:[#allocation5 + $0x18] sm:$0xff] %vm913, %v1250
      %1274 = vst.msk [vmem:[#allocation5 + $0x38] sm:$0xff] %vm913, %v1252
      %1275 = vst.msk [vmem:[#allocation5 + $0x58] sm:$0xff] %vm913, %v1254
      %1276 = vst.msk [vmem:[#allocation5 + $0x78] sm:$0xff] %vm913, %v1256
      %1277 = vst.msk [vmem:[#allocation5 + $0x98] sm:$0xff] %vm913, %v1258
      %1278 = vst.msk [vmem:[#allocation5 + $0xb8] sm:$0xff] %vm913, %v1260
      %1279 = vst.msk [vmem:[#allocation5 + $0xd8] sm:$0xff] %vm913, %v1262
      %1280 = vst.msk [vmem:[#allocation5 + $0xf8] sm:$0xff] %vm913, %v1264
      %v1281 = vld [vmem:[#allocation5] sm:$0xff]
      %v1282 = vld [vmem:[#allocation5 + $0x8] sm:$0xff]
      %v1283 = vld [vmem:[#allocation5 + $0x10] sm:$0xff]
      %v1284 = vld [vmem:[#allocation5 + $0x18] sm:$0xff]
      %v1285 = vld [vmem:[#allocation5 + $0x20] sm:$0xff]
      %v1286 = vld [vmem:[#allocation5 + $0x28] sm:$0xff]
      %v1287 = vld [vmem:[#allocation5 + $0x30] sm:$0xff]
      %v1288 = vld [vmem:[#allocation5 + $0x38] sm:$0xff]
      %v1289 = vld [vmem:[#allocation5 + $0x40] sm:$0xff]
      %v1290 = vld [vmem:[#allocation5 + $0x48] sm:$0xff]
      %v1291 = vld [vmem:[#allocation5 + $0x50] sm:$0xff]
      %v1292 = vld [vmem:[#allocation5 + $0x58] sm:$0xff]
      %v1293 = vld [vmem:[#allocation5 + $0x60] sm:$0xff]
      %v1294 = vld [vmem:[#allocation5 + $0x68] sm:$0xff]
      %v1295 = vld [vmem:[#allocation5 + $0x70] sm:$0xff]
      %v1296 = vld [vmem:[#allocation5 + $0x78] sm:$0xff]
      %v1297 = vld [vmem:[#allocation5 + $0x80] sm:$0xff]
      %v1298 = vld [vmem:[#allocation5 + $0x88] sm:$0xff]
      %v1299 = vld [vmem:[#allocation5 + $0x90] sm:$0xff]
      %v1300 = vld [vmem:[#allocation5 + $0x98] sm:$0xff]
      %v1301 = vld [vmem:[#allocation5 + $0xa0] sm:$0xff]
      %v1302 = vld [vmem:[#allocation5 + $0xa8] sm:$0xff]
      %v1303 = vld [vmem:[#allocation5 + $0xb0] sm:$0xff]
      %v1304 = vld [vmem:[#allocation5 + $0xb8] sm:$0xff]
      %v1305 = vld [vmem:[#allocation5 + $0xc0] sm:$0xff]
      %v1306 = vld [vmem:[#allocation5 + $0xc8] sm:$0xff]
      %v1307 = vld [vmem:[#allocation5 + $0xd0] sm:$0xff]
      %v1308 = vld [vmem:[#allocation5 + $0xd8] sm:$0xff]
      %v1309 = vld [vmem:[#allocation5 + $0xe0] sm:$0xff]
      %v1310 = vld [vmem:[#allocation5 + $0xe8] sm:$0xff]
      %v1311 = vld [vmem:[#allocation5 + $0xf0] sm:$0xff]
      %v1312 = vld [vmem:[#allocation5 + $0xf8] sm:$0xff]
      %v1313 = vld [vmem:[%s2] sm:$0xff]
      %v1314 = vld [vmem:[%s2 + $0x8] sm:$0xff]
      %v1315 = vld [vmem:[%s2 + $0x10] sm:$0xff]
      %v1316 = vld [vmem:[%s2 + $0x18] sm:$0xff]
      %v1317 = vld [vmem:[%s2 + $0x20] sm:$0xff]
      %v1318 = vld [vmem:[%s2 + $0x28] sm:$0xff]
      %v1319 = vld [vmem:[%s2 + $0x30] sm:$0xff]
      %v1320 = vld [vmem:[%s2 + $0x38] sm:$0xff]
      %v1321 = vld [vmem:[%s2 + $0x40] sm:$0xff]
      %v1322 = vld [vmem:[%s2 + $0x48] sm:$0xff]
      %v1323 = vld [vmem:[%s2 + $0x50] sm:$0xff]
      %v1324 = vld [vmem:[%s2 + $0x58] sm:$0xff]
      %v1325 = vld [vmem:[%s2 + $0x60] sm:$0xff]
      %v1326 = vld [vmem:[%s2 + $0x68] sm:$0xff]
      %v1327 = vld [vmem:[%s2 + $0x70] sm:$0xff]
      %v1328 = vld [vmem:[%s2 + $0x78] sm:$0xff]
      %v1329 = vld [vmem:[%s2 + $0x80] sm:$0xff]
      %v1330 = vld [vmem:[%s2 + $0x88] sm:$0xff]
      %v1331 = vld [vmem:[%s2 + $0x90] sm:$0xff]
      %v1332 = vld [vmem:[%s2 + $0x98] sm:$0xff]
      %v1333 = vld [vmem:[%s2 + $0xa0] sm:$0xff]
      %v1334 = vld [vmem:[%s2 + $0xa8] sm:$0xff]
      %v1335 = vld [vmem:[%s2 + $0xb0] sm:$0xff]
      %v1336 = vld [vmem:[%s2 + $0xb8] sm:$0xff]
      %v1337 = vld [vmem:[%s2 + $0xc0] sm:$0xff]
      %v1338 = vld [vmem:[%s2 + $0xc8] sm:$0xff]
      %v1339 = vld [vmem:[%s2 + $0xd0] sm:$0xff]
      %v1340 = vld [vmem:[%s2 + $0xd8] sm:$0xff]
      %v1341 = vld [vmem:[%s2 + $0xe0] sm:$0xff]
      %v1342 = vld [vmem:[%s2 + $0xe8] sm:$0xff]
      %v1343 = vld [vmem:[%s2 + $0xf0] sm:$0xff]
      %v1344 = vld [vmem:[%s2 + $0xf8] sm:$0xff]
      %v1345 = vld [vmem:[%s2 + $0x100] sm:$0xff]
      %v1346 = vld [vmem:[%s2 + $0x108] sm:$0xff]
      %v1347 = vld [vmem:[%s2 + $0x110] sm:$0xff]
      %v1348 = vld [vmem:[%s2 + $0x118] sm:$0xff]
      %v1349 = vld [vmem:[%s2 + $0x120] sm:$0xff]
      %v1350 = vld [vmem:[%s2 + $0x128] sm:$0xff]
      %v1351 = vld [vmem:[%s2 + $0x130] sm:$0xff]
      %v1352 = vld [vmem:[%s2 + $0x138] sm:$0xff]
      %v1353 = vld [vmem:[%s2 + $0x140] sm:$0xff]
      %v1354 = vld [vmem:[%s2 + $0x148] sm:$0xff]
      %v1355 = vld [vmem:[%s2 + $0x150] sm:$0xff]
      %v1356 = vld [vmem:[%s2 + $0x158] sm:$0xff]
      %v1357 = vld [vmem:[%s2 + $0x160] sm:$0xff]
      %v1358 = vld [vmem:[%s2 + $0x168] sm:$0xff]
      %v1359 = vld [vmem:[%s2 + $0x170] sm:$0xff]
      %v1360 = vld [vmem:[%s2 + $0x178] sm:$0xff]
      %v1361 = vld [vmem:[%s2 + $0x180] sm:$0xff]
      %v1362 = vld [vmem:[%s2 + $0x188] sm:$0xff]
      %v1363 = vld [vmem:[%s2 + $0x190] sm:$0xff]
      %v1364 = vld [vmem:[%s2 + $0x198] sm:$0xff]
      %v1365 = vld [vmem:[%s2 + $0x1a0] sm:$0xff]
      %v1366 = vld [vmem:[%s2 + $0x1a8] sm:$0xff]
      %vm1367 = vcmask 392192
      %v1369 = vsel %vm1367, %v1284, 0
      %v1372 = vsel %vm1367, %v1288, 0
      %v1375 = vsel %vm1367, %v1292, 0
      %v1378 = vsel %vm1367, %v1296, 0
      %v1381 = vsel %vm1367, %v1300, 0
      %v1384 = vsel %vm1367, %v1304, 0
      %v1387 = vsel %vm1367, %v1308, 0
      %v1390 = vsel %vm1367, %v1312, 0
      %1392 = vmatprep.subr.mxu0 0.0
      %1393 = vmatpush1.msra.mxu0 %v1328
      %1394 = vmatprep.subr.mxu0 0.0
      %1395 = vmatpush1.msra.mxu0 %v1327
      %1396 = vmatprep.subr.mxu0 0.0
      %1397 = vmatpush1.msra.mxu0 %v1326
      %1398 = vmatprep.subr.mxu0 0.0
      %1399 = vmatpush1.msra.mxu0 %v1325
      %1400 = vmatprep.subr.mxu0 0.0
      %1401 = vmatpush1.msra.mxu0 %v1324
      %1402 = vmatprep.subr.mxu0 0.0
      %1403 = vmatpush1.msra.mxu0 %v1323
      %1404 = vmatprep.subr.mxu0 0.0
      %1405 = vmatpush1.msra.mxu0 %v1322
      %1406 = vmatprep.subr.mxu0 0.0
      %1407 = vmatpush1.msra.mxu0 %v1321
      %1408 = vmatprep.subr.mxu0 0.0
      %1409 = vmatpush1.msra.mxu0 %v1320
      %1410 = vmatprep.subr.mxu0 0.0
      %1411 = vmatpush1.msra.mxu0 %v1319
      %1412 = vmatprep.subr.mxu0 0.0
      %1413 = vmatpush1.msra.mxu0 %v1318
      %1414 = vmatprep.subr.mxu0 0.0
      %1415 = vmatpush1.msra.mxu0 %v1317
      %1416 = vmatprep.subr.mxu0 0.0
      %1417 = vmatpush1.msra.mxu0 %v1316
      %1418 = vmatprep.subr.mxu0 0.0
      %1419 = vmatpush1.msra.mxu0 %v1315
      %1420 = vmatprep.subr.mxu0 0.0
      %1421 = vmatpush1.msra.mxu0 %v1314
      %1422 = vmatprep.subr.mxu0 0.0
      %1423 = vmatpush1.msra.mxu0 %v1313
      %1424 = vmatprep.subr.mxu0 0.0
      %1425 = vmatpush2.msra.mxu0 %v1344
      %1426 = vmatprep.subr.mxu0 0.0
      %1427 = vmatpush2.msra.mxu0 %v1343
      %1428 = vmatprep.subr.mxu0 0.0
      %1429 = vmatpush2.msra.mxu0 %v1342
      %1430 = vmatprep.subr.mxu0 0.0
      %1431 = vmatpush2.msra.mxu0 %v1341
      %1432 = vmatprep.subr.mxu0 0.0
      %1433 = vmatpush2.msra.mxu0 %v1340
      %1434 = vmatprep.subr.mxu0 0.0
      %1435 = vmatpush2.msra.mxu0 %v1339
      %1436 = vmatprep.subr.mxu0 0.0
      %1437 = vmatpush2.msra.mxu0 %v1338
      %1438 = vmatprep.subr.mxu0 0.0
      %1439 = vmatpush2.msra.mxu0 %v1337
      %1440 = vmatprep.subr.mxu0 0.0
      %1441 = vmatpush2.msra.mxu0 %v1336
      %1442 = vmatprep.subr.mxu0 0.0
      %1443 = vmatpush2.msra.mxu0 %v1335
      %1444 = vmatprep.subr.mxu0 0.0
      %1445 = vmatpush2.msra.mxu0 %v1334
      %1446 = vmatprep.subr.mxu0 0.0
      %1447 = vmatpush2.msra.mxu0 %v1333
      %1448 = vmatprep.subr.mxu0 0.0
      %1449 = vmatpush2.msra.mxu0 %v1332
      %1450 = vmatprep.subr.mxu0 0.0
      %1451 = vmatpush2.msra.mxu0 %v1331
      %1452 = vmatprep.subr.mxu0 0.0
      %1453 = vmatpush2.msra.mxu0 %v1330
      %1454 = vmatprep.subr.mxu0 0.0
      %1455 = vmatpush2.msra.mxu0 %v1329
      %1456 = vmatprep.mubr.f32.mxu0 %v1282
      %1457 = vmatmul.mubr.f32.gmra.mxu0 %v1281
      %v1458 = vpop.f32.mrf.mxu0
      %v1459 = vadd.f32 0.0, %v1458
      %v1460 = vpop.f32.mrf.mxu0
      %1461 = vmatprep.mubr.f32.mxu0 %v1286
      %1462 = vmatmul.mubr.f32.gmra.mxu0 %v1285
      %v1463 = vpop.f32.mrf.mxu0
      %v1464 = vadd.f32 0.0, %v1463
      %v1465 = vpop.f32.mrf.mxu0
      %1466 = vmatprep.mubr.f32.mxu0 %v1290
      %1467 = vmatmul.mubr.f32.gmra.mxu0 %v1289
      %v1468 = vpop.f32.mrf.mxu0
      %v1469 = vadd.f32 0.0, %v1468
      %v1470 = vpop.f32.mrf.mxu0
      %1471 = vmatprep.mubr.f32.mxu0 %v1294
      %1472 = vmatmul.mubr.f32.gmra.mxu0 %v1293
      %v1473 = vpop.f32.mrf.mxu0
      %v1474 = vadd.f32 0.0, %v1473
      %v1475 = vpop.f32.mrf.mxu0
      %1476 = vmatprep.mubr.f32.mxu0 %v1298
      %1477 = vmatmul.mubr.f32.gmra.mxu0 %v1297
      %v1478 = vpop.f32.mrf.mxu0
      %v1479 = vadd.f32 0.0, %v1478
      %v1480 = vpop.f32.mrf.mxu0
      %1481 = vmatprep.mubr.f32.mxu0 %v1302
      %1482 = vmatmul.mubr.f32.gmra.mxu0 %v1301
      %v1483 = vpop.f32.mrf.mxu0
      %v1484 = vadd.f32 0.0, %v1483
      %v1485 = vpop.f32.mrf.mxu0
      %1486 = vmatprep.mubr.f32.mxu0 %v1306
      %1487 = vmatmul.mubr.f32.gmra.mxu0 %v1305
      %v1488 = vpop.f32.mrf.mxu0
      %v1489 = vadd.f32 0.0, %v1488
      %v1490 = vpop.f32.mrf.mxu0
      %1491 = vmatprep.mubr.f32.mxu0 %v1310
      %1492 = vmatmul.mubr.f32.gmra.mxu0 %v1309
      %v1493 = vpop.f32.mrf.mxu0
      %v1494 = vadd.f32 0.0, %v1493
      %v1495 = vpop.f32.mrf.mxu0
      %1496 = vdwg.mxu0
      %1497 = vmatprep.subr.mxu0 0.0
      %1498 = vmatpush1.msra.mxu0 %v1360
      %1499 = vmatprep.subr.mxu0 0.0
      %1500 = vmatpush1.msra.mxu0 %v1359
      %1501 = vmatprep.subr.mxu0 0.0
      %1502 = vmatpush1.msra.mxu0 %v1358
      %1503 = vmatprep.subr.mxu0 0.0
      %1504 = vmatpush1.msra.mxu0 %v1357
      %1505 = vmatprep.subr.mxu0 0.0
      %1506 = vmatpush1.msra.mxu0 %v1356
      %1507 = vmatprep.subr.mxu0 0.0
      %1508 = vmatpush1.msra.mxu0 %v1355
      %1509 = vmatprep.subr.mxu0 0.0
      %1510 = vmatpush1.msra.mxu0 %v1354
      %1511 = vmatprep.subr.mxu0 0.0
      %1512 = vmatpush1.msra.mxu0 %v1353
      %1513 = vmatprep.subr.mxu0 0.0
      %1514 = vmatpush1.msra.mxu0 %v1352
      %1515 = vmatprep.subr.mxu0 0.0
      %1516 = vmatpush1.msra.mxu0 %v1351
      %1517 = vmatprep.subr.mxu0 0.0
      %1518 = vmatpush1.msra.mxu0 %v1350
      %1519 = vmatprep.subr.mxu0 0.0
      %1520 = vmatpush1.msra.mxu0 %v1349
      %1521 = vmatprep.subr.mxu0 0.0
      %1522 = vmatpush1.msra.mxu0 %v1348
      %1523 = vmatprep.subr.mxu0 0.0
      %1524 = vmatpush1.msra.mxu0 %v1347
      %1525 = vmatprep.subr.mxu0 0.0
      %1526 = vmatpush1.msra.mxu0 %v1346
      %1527 = vmatprep.subr.mxu0 0.0
      %1528 = vmatpush1.msra.mxu0 %v1345
      %1529 = vmatprep.subr.mxu0 0.0
      %1530 = vmatpush2.msra.mxu0 0.0
      %1531 = vmatprep.subr.mxu0 0.0
      %1532 = vmatpush2.msra.mxu0 0.0
      %1533 = vmatprep.subr.mxu0 0.0
      %1534 = vmatpush2.msra.mxu0 0.0
      %1535 = vmatprep.subr.mxu0 0.0
      %1536 = vmatpush2.msra.mxu0 0.0
      %1537 = vmatprep.subr.mxu0 0.0
      %1538 = vmatpush2.msra.mxu0 0.0
      %1539 = vmatprep.subr.mxu0 0.0
      %1540 = vmatpush2.msra.mxu0 0.0
      %1541 = vmatprep.subr.mxu0 0.0
      %1542 = vmatpush2.msra.mxu0 0.0
      %1543 = vmatprep.subr.mxu0 0.0
      %1544 = vmatpush2.msra.mxu0 0.0
      %1545 = vmatprep.subr.mxu0 0.0
      %1546 = vmatpush2.msra.mxu0 0.0
      %1547 = vmatprep.subr.mxu0 0.0
      %1548 = vmatpush2.msra.mxu0 0.0
      %1549 = vmatprep.subr.mxu0 0.0
      %1550 = vmatpush2.msra.mxu0 %v1366
      %1551 = vmatprep.subr.mxu0 0.0
      %1552 = vmatpush2.msra.mxu0 %v1365
      %1553 = vmatprep.subr.mxu0 0.0
      %1554 = vmatpush2.msra.mxu0 %v1364
      %1555 = vmatprep.subr.mxu0 0.0
      %1556 = vmatpush2.msra.mxu0 %v1363
      %1557 = vmatprep.subr.mxu0 0.0
      %1558 = vmatpush2.msra.mxu0 %v1362
      %1559 = vmatprep.subr.mxu0 0.0
      %1560 = vmatpush2.msra.mxu0 %v1361
      %1561 = vmatprep.mubr.f32.mxu0 %v1369
      %1562 = vmatmul.mubr.f32.gmra.mxu0 %v1283
      %v1563 = vpop.f32.mrf.mxu0
      %v1564 = vadd.f32 %v1459, %v1563
      %v1565 = vpop.f32.mrf.mxu0
      %1566 = vmatprep.mubr.f32.mxu0 %v1372
      %1567 = vmatmul.mubr.f32.gmra.mxu0 %v1287
      %v1568 = vpop.f32.mrf.mxu0
      %v1569 = vadd.f32 %v1464, %v1568
      %v1570 = vpop.f32.mrf.mxu0
      %1571 = vmatprep.mubr.f32.mxu0 %v1375
      %1572 = vmatmul.mubr.f32.gmra.mxu0 %v1291
      %v1573 = vpop.f32.mrf.mxu0
      %v1574 = vadd.f32 %v1469, %v1573
      %v1575 = vpop.f32.mrf.mxu0
      %1576 = vmatprep.mubr.f32.mxu0 %v1378
      %1577 = vmatmul.mubr.f32.gmra.mxu0 %v1295
      %v1578 = vpop.f32.mrf.mxu0
      %v1579 = vadd.f32 %v1474, %v1578
      %v1580 = vpop.f32.mrf.mxu0
      %1581 = vmatprep.mubr.f32.mxu0 %v1381
      %1582 = vmatmul.mubr.f32.gmra.mxu0 %v1299
      %v1583 = vpop.f32.mrf.mxu0
      %v1584 = vadd.f32 %v1479, %v1583
      %v1585 = vpop.f32.mrf.mxu0
      %1586 = vmatprep.mubr.f32.mxu0 %v1384
      %1587 = vmatmul.mubr.f32.gmra.mxu0 %v1303
      %v1588 = vpop.f32.mrf.mxu0
      %v1589 = vadd.f32 %v1484, %v1588
      %v1590 = vpop.f32.mrf.mxu0
      %1591 = vmatprep.mubr.f32.mxu0 %v1387
      %1592 = vmatmul.mubr.f32.gmra.mxu0 %v1307
      %v1593 = vpop.f32.mrf.mxu0
      %v1594 = vadd.f32 %v1489, %v1593
      %v1595 = vpop.f32.mrf.mxu0
      %1596 = vmatprep.mubr.f32.mxu0 %v1390
      %1597 = vmatmul.mubr.f32.gmra.mxu0 %v1311
      %v1598 = vpop.f32.mrf.mxu0
      %v1599 = vadd.f32 %v1494, %v1598
      %v1600 = vpop.f32.mrf.mxu0
      %1601 = vdwg.mxu0
      %v1602 = vld [vmem:[%s3] sm:$0x1]
      %v1604 = vlaneseq
      %v1605 = vshrl.u32 %v1604, 7
      %v1606 = vsub.s32 0, %v1605
      %v1607 = vrot.slane %v1602, %v1606
      %v1609 = vmul.f32 %v1564, %v1607
      %v1610 = vmul.f32 %v1569, %v1607
      %v1611 = vmul.f32 %v1574, %v1607
      %v1612 = vmul.f32 %v1579, %v1607
      %v1613 = vmul.f32 %v1584, %v1607
      %v1614 = vmul.f32 %v1589, %v1607
      %v1615 = vmul.f32 %v1594, %v1607
      %v1616 = vmul.f32 %v1599, %v1607
      %v1617 = vld [vmem:[%s4] sm:$0x1]
      %v1619 = vlaneseq
      %v1620 = vshrl.u32 %v1619, 7
      %v1621 = vsub.s32 0, %v1620
      %v1622 = vrot.slane %v1617, %v1621
      %v1624 = vadd.f32 %v1609, %v1622
      %v1625 = vadd.f32 %v1610, %v1622
      %v1626 = vadd.f32 %v1611, %v1622
      %v1627 = vadd.f32 %v1612, %v1622
      %v1628 = vadd.f32 %v1613, %v1622
      %v1629 = vadd.f32 %v1614, %v1622
      %v1630 = vadd.f32 %v1615, %v1622
      %v1631 = vadd.f32 %v1616, %v1622
      %v1632 = vmul.f32 %v1624, 0.01
      %v1633 = vmul.f32 %v1625, 0.01
      %v1634 = vmul.f32 %v1626, 0.01
      %v1635 = vmul.f32 %v1627, 0.01
      %v1636 = vmul.f32 %v1628, 0.01
      %v1637 = vmul.f32 %v1629, 0.01
      %v1638 = vmul.f32 %v1630, 0.01
      %v1639 = vmul.f32 %v1631, 0.01
      %v1640 = vmax.f32 %v1624, %v1632
      %v1641 = vmax.f32 %v1625, %v1633
      %v1642 = vmax.f32 %v1626, %v1634
      %v1643 = vmax.f32 %v1627, %v1635
      %v1644 = vmax.f32 %v1628, %v1636
      %v1645 = vmax.f32 %v1629, %v1637
      %v1646 = vmax.f32 %v1630, %v1638
      %v1647 = vmax.f32 %v1631, %v1639
      %s1648 = scalar_lea.vmem [#allocation4], 16
      %1649 = vst.msk [vmem:[%s1648 + $0x1] sm:$0xff] %vm418, %v1640
      %1650 = vst.msk [vmem:[%s1648 + $0x11] sm:$0xff] %vm418, %v1641
      %1651 = vst.msk [vmem:[%s1648 + $0x21] sm:$0xff] %vm418, %v1642
      %1652 = vst.msk [vmem:[%s1648 + $0x31] sm:$0xff] %vm418, %v1643
      %1653 = vst.msk [vmem:[%s1648 + $0x41] sm:$0xff] %vm418, %v1644
      %1654 = vst.msk [vmem:[%s1648 + $0x51] sm:$0xff] %vm418, %v1645
      %1655 = vst.msk [vmem:[%s1648 + $0x61] sm:$0xff] %vm418, %v1646
      %1656 = vst.msk [vmem:[%s1648 + $0x71] sm:$0xff] %vm418, %v1647
      %v1657 = vld [vmem:[#allocation4] sm:$0xff]
      %v1658 = vld [vmem:[#allocation4 + $0x10] sm:$0xff]
      %v1659 = vld [vmem:[#allocation4 + $0x20] sm:$0xff]
      %v1660 = vld [vmem:[#allocation4 + $0x30] sm:$0xff]
      %v1661 = vld [vmem:[#allocation4 + $0x40] sm:$0xff]
      %v1662 = vld [vmem:[#allocation4 + $0x50] sm:$0xff]
      %v1663 = vld [vmem:[#allocation4 + $0x60] sm:$0xff]
      %v1664 = vld [vmem:[#allocation4 + $0x70] sm:$0xff]
      %1665 = vst.msk [vmem:[#allocation5] sm:$0xff] %vm418, %v1657
      %1666 = vst.msk [vmem:[#allocation5 + $0x20] sm:$0xff] %vm418, %v1658
      %1667 = vst.msk [vmem:[#allocation5 + $0x40] sm:$0xff] %vm418, %v1659
      %1668 = vst.msk [vmem:[#allocation5 + $0x60] sm:$0xff] %vm418, %v1660
      %1669 = vst.msk [vmem:[#allocation5 + $0x80] sm:$0xff] %vm418, %v1661
      %1670 = vst.msk [vmem:[#allocation5 + $0xa0] sm:$0xff] %vm418, %v1662
      %1671 = vst.msk [vmem:[#allocation5 + $0xc0] sm:$0xff] %vm418, %v1663
      %1672 = vst.msk [vmem:[#allocation5 + $0xe0] sm:$0xff] %vm418, %v1664
      %v1673 = vld [vmem:[#allocation4 + $0x1] sm:$0xff]
      %v1674 = vld [vmem:[#allocation4 + $0x11] sm:$0xff]
      %v1675 = vld [vmem:[#allocation4 + $0x21] sm:$0xff]
      %v1676 = vld [vmem:[#allocation4 + $0x31] sm:$0xff]
      %v1677 = vld [vmem:[#allocation4 + $0x41] sm:$0xff]
      %v1678 = vld [vmem:[#allocation4 + $0x51] sm:$0xff]
      %v1679 = vld [vmem:[#allocation4 + $0x61] sm:$0xff]
      %v1680 = vld [vmem:[#allocation4 + $0x71] sm:$0xff]
      %1689 = vrot.lane.b32.xlu0 %v1673, 32
      %v1690 = vpop.permute.xlu0 %1689
      %1691 = vrot.lane.b32.xlu0 %v1674, 32
      %v1692 = vpop.permute.xlu0 %1691
      %1693 = vrot.lane.b32.xlu0 %v1675, 32
      %v1694 = vpop.permute.xlu0 %1693
      %1695 = vrot.lane.b32.xlu0 %v1676, 32
      %v1696 = vpop.permute.xlu0 %1695
      %1697 = vrot.lane.b32.xlu0 %v1677, 32
      %v1698 = vpop.permute.xlu0 %1697
      %1699 = vrot.lane.b32.xlu0 %v1678, 32
      %v1700 = vpop.permute.xlu0 %1699
      %1701 = vrot.lane.b32.xlu0 %v1679, 32
      %v1702 = vpop.permute.xlu0 %1701
      %1703 = vrot.lane.b32.xlu0 %v1680, 32
      %v1704 = vpop.permute.xlu0 %1703
      %1713 = vst.msk [vmem:[#allocation5] sm:$0xff] %vm589, %v1690
      %1714 = vst.msk [vmem:[#allocation5 + $0x20] sm:$0xff] %vm589, %v1692
      %1715 = vst.msk [vmem:[#allocation5 + $0x40] sm:$0xff] %vm589, %v1694
      %1716 = vst.msk [vmem:[#allocation5 + $0x60] sm:$0xff] %vm589, %v1696
      %1717 = vst.msk [vmem:[#allocation5 + $0x80] sm:$0xff] %vm589, %v1698
      %1718 = vst.msk [vmem:[#allocation5 + $0xa0] sm:$0xff] %vm589, %v1700
      %1719 = vst.msk [vmem:[#allocation5 + $0xc0] sm:$0xff] %vm589, %v1702
      %1720 = vst.msk [vmem:[#allocation5 + $0xe0] sm:$0xff] %vm589, %v1704
      %v1721 = vld [vmem:[#allocation4 + $0x2] sm:$0xff]
      %v1722 = vld [vmem:[#allocation4 + $0x12] sm:$0xff]
      %v1723 = vld [vmem:[#allocation4 + $0x22] sm:$0xff]
      %v1724 = vld [vmem:[#allocation4 + $0x32] sm:$0xff]
      %v1725 = vld [vmem:[#allocation4 + $0x42] sm:$0xff]
      %v1726 = vld [vmem:[#allocation4 + $0x52] sm:$0xff]
      %v1727 = vld [vmem:[#allocation4 + $0x62] sm:$0xff]
      %v1728 = vld [vmem:[#allocation4 + $0x72] sm:$0xff]
      %1737 = vrot.lane.b32.xlu0 %v1721, 64
      %v1738 = vpop.permute.xlu0 %1737
      %1739 = vrot.lane.b32.xlu0 %v1722, 64
      %v1740 = vpop.permute.xlu0 %1739
      %1741 = vrot.lane.b32.xlu0 %v1723, 64
      %v1742 = vpop.permute.xlu0 %1741
      %1743 = vrot.lane.b32.xlu0 %v1724, 64
      %v1744 = vpop.permute.xlu0 %1743
      %1745 = vrot.lane.b32.xlu0 %v1725, 64
      %v1746 = vpop.permute.xlu0 %1745
      %1747 = vrot.lane.b32.xlu0 %v1726, 64
      %v1748 = vpop.permute.xlu0 %1747
      %1749 = vrot.lane.b32.xlu0 %v1727, 64
      %v1750 = vpop.permute.xlu0 %1749
      %1751 = vrot.lane.b32.xlu0 %v1728, 64
      %v1752 = vpop.permute.xlu0 %1751
      %1761 = vst.msk [vmem:[#allocation5] sm:$0xff] %vm638, %v1738
      %1762 = vst.msk [vmem:[#allocation5 + $0x20] sm:$0xff] %vm638, %v1740
      %1763 = vst.msk [vmem:[#allocation5 + $0x40] sm:$0xff] %vm638, %v1742
      %1764 = vst.msk [vmem:[#allocation5 + $0x60] sm:$0xff] %vm638, %v1744
      %1765 = vst.msk [vmem:[#allocation5 + $0x80] sm:$0xff] %vm638, %v1746
      %1766 = vst.msk [vmem:[#allocation5 + $0xa0] sm:$0xff] %vm638, %v1748
      %1767 = vst.msk [vmem:[#allocation5 + $0xc0] sm:$0xff] %vm638, %v1750
      %1768 = vst.msk [vmem:[#allocation5 + $0xe0] sm:$0xff] %vm638, %v1752
      %v1769 = vld [vmem:[%s1648] sm:$0xff]
      %v1770 = vld [vmem:[%s1648 + $0x10] sm:$0xff]
      %v1771 = vld [vmem:[%s1648 + $0x20] sm:$0xff]
      %v1772 = vld [vmem:[%s1648 + $0x30] sm:$0xff]
      %v1773 = vld [vmem:[%s1648 + $0x40] sm:$0xff]
      %v1774 = vld [vmem:[%s1648 + $0x50] sm:$0xff]
      %v1775 = vld [vmem:[%s1648 + $0x60] sm:$0xff]
      %v1776 = vld [vmem:[%s1648 + $0x70] sm:$0xff]
      %1785 = vrot.lane.b32.xlu0 %v1769, 96
      %v1786 = vpop.permute.xlu0 %1785
      %1787 = vrot.lane.b32.xlu0 %v1770, 96
      %v1788 = vpop.permute.xlu0 %1787
      %1789 = vrot.lane.b32.xlu0 %v1771, 96
      %v1790 = vpop.permute.xlu0 %1789
      %1791 = vrot.lane.b32.xlu0 %v1772, 96
      %v1792 = vpop.permute.xlu0 %1791
      %1793 = vrot.lane.b32.xlu0 %v1773, 96
      %v1794 = vpop.permute.xlu0 %1793
      %1795 = vrot.lane.b32.xlu0 %v1774, 96
      %v1796 = vpop.permute.xlu0 %1795
      %1797 = vrot.lane.b32.xlu0 %v1775, 96
      %v1798 = vpop.permute.xlu0 %1797
      %1799 = vrot.lane.b32.xlu0 %v1776, 96
      %v1800 = vpop.permute.xlu0 %1799
      %1809 = vst.msk [vmem:[#allocation5] sm:$0xff] %vm687, %v1786
      %1810 = vst.msk [vmem:[#allocation5 + $0x20] sm:$0xff] %vm687, %v1788
      %1811 = vst.msk [vmem:[#allocation5 + $0x40] sm:$0xff] %vm687, %v1790
      %1812 = vst.msk [vmem:[#allocation5 + $0x60] sm:$0xff] %vm687, %v1792
      %1813 = vst.msk [vmem:[#allocation5 + $0x80] sm:$0xff] %vm687, %v1794
      %1814 = vst.msk [vmem:[#allocation5 + $0xa0] sm:$0xff] %vm687, %v1796
      %1815 = vst.msk [vmem:[#allocation5 + $0xc0] sm:$0xff] %vm687, %v1798
      %1816 = vst.msk [vmem:[#allocation5 + $0xe0] sm:$0xff] %vm687, %v1800
      %v1817 = vld [vmem:[%s1648 + $0x1] sm:$0xff]
      %v1818 = vld [vmem:[%s1648 + $0x11] sm:$0xff]
      %v1819 = vld [vmem:[%s1648 + $0x21] sm:$0xff]
      %v1820 = vld [vmem:[%s1648 + $0x31] sm:$0xff]
      %v1821 = vld [vmem:[%s1648 + $0x41] sm:$0xff]
      %v1822 = vld [vmem:[%s1648 + $0x51] sm:$0xff]
      %v1823 = vld [vmem:[%s1648 + $0x61] sm:$0xff]
      %v1824 = vld [vmem:[%s1648 + $0x71] sm:$0xff]
      %1825 = vst.msk [vmem:[#allocation5 + $0x8] sm:$0xff] %vm418, %v1817
      %1826 = vst.msk [vmem:[#allocation5 + $0x28] sm:$0xff] %vm418, %v1818
      %1827 = vst.msk [vmem:[#allocation5 + $0x48] sm:$0xff] %vm418, %v1819
      %1828 = vst.msk [vmem:[#allocation5 + $0x68] sm:$0xff] %vm418, %v1820
      %1829 = vst.msk [vmem:[#allocation5 + $0x88] sm:$0xff] %vm418, %v1821
      %1830 = vst.msk [vmem:[#allocation5 + $0xa8] sm:$0xff] %vm418, %v1822
      %1831 = vst.msk [vmem:[#allocation5 + $0xc8] sm:$0xff] %vm418, %v1823
      %1832 = vst.msk [vmem:[#allocation5 + $0xe8] sm:$0xff] %vm418, %v1824
      %v1833 = vld [vmem:[%s1648 + $0x2] sm:$0xff]
      %v1834 = vld [vmem:[%s1648 + $0x12] sm:$0xff]
      %v1835 = vld [vmem:[%s1648 + $0x22] sm:$0xff]
      %v1836 = vld [vmem:[%s1648 + $0x32] sm:$0xff]
      %v1837 = vld [vmem:[%s1648 + $0x42] sm:$0xff]
      %v1838 = vld [vmem:[%s1648 + $0x52] sm:$0xff]
      %v1839 = vld [vmem:[%s1648 + $0x62] sm:$0xff]
      %v1840 = vld [vmem:[%s1648 + $0x72] sm:$0xff]
      %1849 = vrot.lane.b32.xlu0 %v1833, 32
      %v1850 = vpop.permute.xlu0 %1849
      %1851 = vrot.lane.b32.xlu0 %v1834, 32
      %v1852 = vpop.permute.xlu0 %1851
      %1853 = vrot.lane.b32.xlu0 %v1835, 32
      %v1854 = vpop.permute.xlu0 %1853
      %1855 = vrot.lane.b32.xlu0 %v1836, 32
      %v1856 = vpop.permute.xlu0 %1855
      %1857 = vrot.lane.b32.xlu0 %v1837, 32
      %v1858 = vpop.permute.xlu0 %1857
      %1859 = vrot.lane.b32.xlu0 %v1838, 32
      %v1860 = vpop.permute.xlu0 %1859
      %1861 = vrot.lane.b32.xlu0 %v1839, 32
      %v1862 = vpop.permute.xlu0 %1861
      %1863 = vrot.lane.b32.xlu0 %v1840, 32
      %v1864 = vpop.permute.xlu0 %1863
      %1873 = vst.msk [vmem:[#allocation5 + $0x8] sm:$0xff] %vm589, %v1850
      %1874 = vst.msk [vmem:[#allocation5 + $0x28] sm:$0xff] %vm589, %v1852
      %1875 = vst.msk [vmem:[#allocation5 + $0x48] sm:$0xff] %vm589, %v1854
      %1876 = vst.msk [vmem:[#allocation5 + $0x68] sm:$0xff] %vm589, %v1856
      %1877 = vst.msk [vmem:[#allocation5 + $0x88] sm:$0xff] %vm589, %v1858
      %1878 = vst.msk [vmem:[#allocation5 + $0xa8] sm:$0xff] %vm589, %v1860
      %1879 = vst.msk [vmem:[#allocation5 + $0xc8] sm:$0xff] %vm589, %v1862
      %1880 = vst.msk [vmem:[#allocation5 + $0xe8] sm:$0xff] %vm589, %v1864
      %s1881 = scalar_lea.vmem [#allocation4], 32
      %v1882 = vld [vmem:[%s1881] sm:$0xff]
      %v1883 = vld [vmem:[%s1881 + $0x10] sm:$0xff]
      %v1884 = vld [vmem:[%s1881 + $0x20] sm:$0xff]
      %v1885 = vld [vmem:[%s1881 + $0x30] sm:$0xff]
      %v1886 = vld [vmem:[%s1881 + $0x40] sm:$0xff]
      %v1887 = vld [vmem:[%s1881 + $0x50] sm:$0xff]
      %v1888 = vld [vmem:[%s1881 + $0x60] sm:$0xff]
      %v1889 = vld [vmem:[%s1881 + $0x70] sm:$0xff]
      %1898 = vrot.lane.b32.xlu0 %v1882, 64
      %v1899 = vpop.permute.xlu0 %1898
      %1900 = vrot.lane.b32.xlu0 %v1883, 64
      %v1901 = vpop.permute.xlu0 %1900
      %1902 = vrot.lane.b32.xlu0 %v1884, 64
      %v1903 = vpop.permute.xlu0 %1902
      %1904 = vrot.lane.b32.xlu0 %v1885, 64
      %v1905 = vpop.permute.xlu0 %1904
      %1906 = vrot.lane.b32.xlu0 %v1886, 64
      %v1907 = vpop.permute.xlu0 %1906
      %1908 = vrot.lane.b32.xlu0 %v1887, 64
      %v1909 = vpop.permute.xlu0 %1908
      %1910 = vrot.lane.b32.xlu0 %v1888, 64
      %v1911 = vpop.permute.xlu0 %1910
      %1912 = vrot.lane.b32.xlu0 %v1889, 64
      %v1913 = vpop.permute.xlu0 %1912
      %1922 = vst.msk [vmem:[#allocation5 + $0x8] sm:$0xff] %vm638, %v1899
      %1923 = vst.msk [vmem:[#allocation5 + $0x28] sm:$0xff] %vm638, %v1901
      %1924 = vst.msk [vmem:[#allocation5 + $0x48] sm:$0xff] %vm638, %v1903
      %1925 = vst.msk [vmem:[#allocation5 + $0x68] sm:$0xff] %vm638, %v1905
      %1926 = vst.msk [vmem:[#allocation5 + $0x88] sm:$0xff] %vm638, %v1907
      %1927 = vst.msk [vmem:[#allocation5 + $0xa8] sm:$0xff] %vm638, %v1909
      %1928 = vst.msk [vmem:[#allocation5 + $0xc8] sm:$0xff] %vm638, %v1911
      %1929 = vst.msk [vmem:[#allocation5 + $0xe8] sm:$0xff] %vm638, %v1913
      %v1930 = vld [vmem:[%s1881 + $0x1] sm:$0xff]
      %v1931 = vld [vmem:[%s1881 + $0x11] sm:$0xff]
      %v1932 = vld [vmem:[%s1881 + $0x21] sm:$0xff]
      %v1933 = vld [vmem:[%s1881 + $0x31] sm:$0xff]
      %v1934 = vld [vmem:[%s1881 + $0x41] sm:$0xff]
      %v1935 = vld [vmem:[%s1881 + $0x51] sm:$0xff]
      %v1936 = vld [vmem:[%s1881 + $0x61] sm:$0xff]
      %v1937 = vld [vmem:[%s1881 + $0x71] sm:$0xff]
      %1946 = vrot.lane.b32.xlu0 %v1930, 96
      %v1947 = vpop.permute.xlu0 %1946
      %1948 = vrot.lane.b32.xlu0 %v1931, 96
      %v1949 = vpop.permute.xlu0 %1948
      %1950 = vrot.lane.b32.xlu0 %v1932, 96
      %v1951 = vpop.permute.xlu0 %1950
      %1952 = vrot.lane.b32.xlu0 %v1933, 96
      %v1953 = vpop.permute.xlu0 %1952
      %1954 = vrot.lane.b32.xlu0 %v1934, 96
      %v1955 = vpop.permute.xlu0 %1954
      %1956 = vrot.lane.b32.xlu0 %v1935, 96
      %v1957 = vpop.permute.xlu0 %1956
      %1958 = vrot.lane.b32.xlu0 %v1936, 96
      %v1959 = vpop.permute.xlu0 %1958
      %1960 = vrot.lane.b32.xlu0 %v1937, 96
      %v1961 = vpop.permute.xlu0 %1960
      %1970 = vst.msk [vmem:[#allocation5 + $0x8] sm:$0xff] %vm687, %v1947
      %1971 = vst.msk [vmem:[#allocation5 + $0x28] sm:$0xff] %vm687, %v1949
      %1972 = vst.msk [vmem:[#allocation5 + $0x48] sm:$0xff] %vm687, %v1951
      %1973 = vst.msk [vmem:[#allocation5 + $0x68] sm:$0xff] %vm687, %v1953
      %1974 = vst.msk [vmem:[#allocation5 + $0x88] sm:$0xff] %vm687, %v1955
      %1975 = vst.msk [vmem:[#allocation5 + $0xa8] sm:$0xff] %vm687, %v1957
      %1976 = vst.msk [vmem:[#allocation5 + $0xc8] sm:$0xff] %vm687, %v1959
      %1977 = vst.msk [vmem:[#allocation5 + $0xe8] sm:$0xff] %vm687, %v1961
      %v1978 = vld [vmem:[%s1881 + $0x2] sm:$0xff]
      %v1979 = vld [vmem:[%s1881 + $0x12] sm:$0xff]
      %v1980 = vld [vmem:[%s1881 + $0x22] sm:$0xff]
      %v1981 = vld [vmem:[%s1881 + $0x32] sm:$0xff]
      %v1982 = vld [vmem:[%s1881 + $0x42] sm:$0xff]
      %v1983 = vld [vmem:[%s1881 + $0x52] sm:$0xff]
      %v1984 = vld [vmem:[%s1881 + $0x62] sm:$0xff]
      %v1985 = vld [vmem:[%s1881 + $0x72] sm:$0xff]
      %1986 = vst.msk [vmem:[#allocation5 + $0x10] sm:$0xff] %vm418, %v1978
      %1987 = vst.msk [vmem:[#allocation5 + $0x30] sm:$0xff] %vm418, %v1979
      %1988 = vst.msk [vmem:[#allocation5 + $0x50] sm:$0xff] %vm418, %v1980
      %1989 = vst.msk [vmem:[#allocation5 + $0x70] sm:$0xff] %vm418, %v1981
      %1990 = vst.msk [vmem:[#allocation5 + $0x90] sm:$0xff] %vm418, %v1982
      %1991 = vst.msk [vmem:[#allocation5 + $0xb0] sm:$0xff] %vm418, %v1983
      %1992 = vst.msk [vmem:[#allocation5 + $0xd0] sm:$0xff] %vm418, %v1984
      %1993 = vst.msk [vmem:[#allocation5 + $0xf0] sm:$0xff] %vm418, %v1985
      %v1994 = vld [vmem:[#allocation5] sm:$0xff]
      %v1995 = vld [vmem:[#allocation5 + $0x8] sm:$0xff]
      %v1996 = vld [vmem:[#allocation5 + $0x10] sm:$0xff]
      %v1997 = vld [vmem:[#allocation5 + $0x20] sm:$0xff]
      %v1998 = vld [vmem:[#allocation5 + $0x28] sm:$0xff]
      %v1999 = vld [vmem:[#allocation5 + $0x30] sm:$0xff]
      %v2000 = vld [vmem:[#allocation5 + $0x40] sm:$0xff]
      %v2001 = vld [vmem:[#allocation5 + $0x48] sm:$0xff]
      %v2002 = vld [vmem:[#allocation5 + $0x50] sm:$0xff]
      %v2003 = vld [vmem:[#allocation5 + $0x60] sm:$0xff]
      %v2004 = vld [vmem:[#allocation5 + $0x68] sm:$0xff]
      %v2005 = vld [vmem:[#allocation5 + $0x70] sm:$0xff]
      %v2006 = vld [vmem:[#allocation5 + $0x80] sm:$0xff]
      %v2007 = vld [vmem:[#allocation5 + $0x88] sm:$0xff]
      %v2008 = vld [vmem:[#allocation5 + $0x90] sm:$0xff]
      %v2009 = vld [vmem:[#allocation5 + $0xa0] sm:$0xff]
      %v2010 = vld [vmem:[#allocation5 + $0xa8] sm:$0xff]
      %v2011 = vld [vmem:[#allocation5 + $0xb0] sm:$0xff]
      %v2012 = vld [vmem:[#allocation5 + $0xc0] sm:$0xff]
      %v2013 = vld [vmem:[#allocation5 + $0xc8] sm:$0xff]
      %v2014 = vld [vmem:[#allocation5 + $0xd0] sm:$0xff]
      %v2015 = vld [vmem:[#allocation5 + $0xe0] sm:$0xff]
      %v2016 = vld [vmem:[#allocation5 + $0xe8] sm:$0xff]
      %v2017 = vld [vmem:[#allocation5 + $0xf0] sm:$0xff]
      %v2018 = vld [vmem:[%s5] sm:$0xff]
      %v2019 = vld [vmem:[%s5 + $0x8] sm:$0xff]
      %v2020 = vld [vmem:[%s5 + $0x10] sm:$0xff]
      %v2021 = vld [vmem:[%s5 + $0x18] sm:$0xff]
      %v2022 = vld [vmem:[%s5 + $0x20] sm:$0xff]
      %v2023 = vld [vmem:[%s5 + $0x28] sm:$0xff]
      %v2024 = vld [vmem:[%s5 + $0x30] sm:$0xff]
      %v2025 = vld [vmem:[%s5 + $0x38] sm:$0xff]
      %v2026 = vld [vmem:[%s5 + $0x40] sm:$0xff]
      %v2027 = vld [vmem:[%s5 + $0x48] sm:$0xff]
      %v2028 = vld [vmem:[%s5 + $0x50] sm:$0xff]
      %v2029 = vld [vmem:[%s5 + $0x58] sm:$0xff]
      %v2030 = vld [vmem:[%s5 + $0x60] sm:$0xff]
      %v2031 = vld [vmem:[%s5 + $0x68] sm:$0xff]
      %v2032 = vld [vmem:[%s5 + $0x70] sm:$0xff]
      %v2033 = vld [vmem:[%s5 + $0x78] sm:$0xff]
      %v2034 = vld [vmem:[%s5 + $0x80] sm:$0xff]
      %v2035 = vld [vmem:[%s5 + $0x88] sm:$0xff]
      %v2036 = vld [vmem:[%s5 + $0x90] sm:$0xff]
      %v2037 = vld [vmem:[%s5 + $0x98] sm:$0xff]
      %v2038 = vld [vmem:[%s5 + $0xa0] sm:$0xff]
      %v2039 = vld [vmem:[%s5 + $0xa8] sm:$0xff]
      %v2040 = vld [vmem:[%s5 + $0xb0] sm:$0xff]
      %v2041 = vld [vmem:[%s5 + $0xb8] sm:$0xff]
      %v2042 = vld [vmem:[%s5 + $0xc0] sm:$0xff]
      %v2043 = vld [vmem:[%s5 + $0xc8] sm:$0xff]
      %v2044 = vld [vmem:[%s5 + $0xd0] sm:$0xff]
      %v2045 = vld [vmem:[%s5 + $0xd8] sm:$0xff]
      %v2046 = vld [vmem:[%s5 + $0xe0] sm:$0xff]
      %v2047 = vld [vmem:[%s5 + $0xe8] sm:$0xff]
      %v2048 = vld [vmem:[%s5 + $0xf0] sm:$0xff]
      %v2049 = vld [vmem:[%s5 + $0xf8] sm:$0xff]
      %v2050 = vld [vmem:[%s5 + $0x100] sm:$0xff]
      %v2051 = vld [vmem:[%s5 + $0x108] sm:$0xff]
      %v2052 = vld [vmem:[%s5 + $0x110] sm:$0xff]
      %v2053 = vld [vmem:[%s5 + $0x118] sm:$0xff]
      %v2055 = vsel %vm418, %v1996, 0
      %v2058 = vsel %vm418, %v1999, 0
      %v2061 = vsel %vm418, %v2002, 0
      %v2064 = vsel %vm418, %v2005, 0
      %v2067 = vsel %vm418, %v2008, 0
      %v2070 = vsel %vm418, %v2011, 0
      %v2073 = vsel %vm418, %v2014, 0
      %v2076 = vsel %vm418, %v2017, 0
      %2078 = vmatprep.subr.mxu0 0.0
      %2079 = vmatpush1.msra.mxu0 %v2033
      %2080 = vmatprep.subr.mxu0 0.0
      %2081 = vmatpush1.msra.mxu0 %v2032
      %2082 = vmatprep.subr.mxu0 0.0
      %2083 = vmatpush1.msra.mxu0 %v2031
      %2084 = vmatprep.subr.mxu0 0.0
      %2085 = vmatpush1.msra.mxu0 %v2030
      %2086 = vmatprep.subr.mxu0 0.0
      %2087 = vmatpush1.msra.mxu0 %v2029
      %2088 = vmatprep.subr.mxu0 0.0
      %2089 = vmatpush1.msra.mxu0 %v2028
      %2090 = vmatprep.subr.mxu0 0.0
      %2091 = vmatpush1.msra.mxu0 %v2027
      %2092 = vmatprep.subr.mxu0 0.0
      %2093 = vmatpush1.msra.mxu0 %v2026
      %2094 = vmatprep.subr.mxu0 0.0
      %2095 = vmatpush1.msra.mxu0 %v2025
      %2096 = vmatprep.subr.mxu0 0.0
      %2097 = vmatpush1.msra.mxu0 %v2024
      %2098 = vmatprep.subr.mxu0 0.0
      %2099 = vmatpush1.msra.mxu0 %v2023
      %2100 = vmatprep.subr.mxu0 0.0
      %2101 = vmatpush1.msra.mxu0 %v2022
      %2102 = vmatprep.subr.mxu0 0.0
      %2103 = vmatpush1.msra.mxu0 %v2021
      %2104 = vmatprep.subr.mxu0 0.0
      %2105 = vmatpush1.msra.mxu0 %v2020
      %2106 = vmatprep.subr.mxu0 0.0
      %2107 = vmatpush1.msra.mxu0 %v2019
      %2108 = vmatprep.subr.mxu0 0.0
      %2109 = vmatpush1.msra.mxu0 %v2018
      %2110 = vmatprep.subr.mxu0 0.0
      %2111 = vmatpush2.msra.mxu0 %v2049
      %2112 = vmatprep.subr.mxu0 0.0
      %2113 = vmatpush2.msra.mxu0 %v2048
      %2114 = vmatprep.subr.mxu0 0.0
      %2115 = vmatpush2.msra.mxu0 %v2047
      %2116 = vmatprep.subr.mxu0 0.0
      %2117 = vmatpush2.msra.mxu0 %v2046
      %2118 = vmatprep.subr.mxu0 0.0
      %2119 = vmatpush2.msra.mxu0 %v2045
      %2120 = vmatprep.subr.mxu0 0.0
      %2121 = vmatpush2.msra.mxu0 %v2044
      %2122 = vmatprep.subr.mxu0 0.0
      %2123 = vmatpush2.msra.mxu0 %v2043
      %2124 = vmatprep.subr.mxu0 0.0
      %2125 = vmatpush2.msra.mxu0 %v2042
      %2126 = vmatprep.subr.mxu0 0.0
      %2127 = vmatpush2.msra.mxu0 %v2041
      %2128 = vmatprep.subr.mxu0 0.0
      %2129 = vmatpush2.msra.mxu0 %v2040
      %2130 = vmatprep.subr.mxu0 0.0
      %2131 = vmatpush2.msra.mxu0 %v2039
      %2132 = vmatprep.subr.mxu0 0.0
      %2133 = vmatpush2.msra.mxu0 %v2038
      %2134 = vmatprep.subr.mxu0 0.0
      %2135 = vmatpush2.msra.mxu0 %v2037
      %2136 = vmatprep.subr.mxu0 0.0
      %2137 = vmatpush2.msra.mxu0 %v2036
      %2138 = vmatprep.subr.mxu0 0.0
      %2139 = vmatpush2.msra.mxu0 %v2035
      %2140 = vmatprep.subr.mxu0 0.0
      %2141 = vmatpush2.msra.mxu0 %v2034
      %2142 = vmatprep.mubr.f32.mxu0 %v1995
      %2143 = vmatmul.mubr.f32.gmra.mxu0 %v1994
      %v2144 = vpop.f32.mrf.mxu0
      %v2145 = vadd.f32 0.0, %v2144
      %v2146 = vpop.f32.mrf.mxu0
      %2147 = vmatprep.mubr.f32.mxu0 %v1998
      %2148 = vmatmul.mubr.f32.gmra.mxu0 %v1997
      %v2149 = vpop.f32.mrf.mxu0
      %v2150 = vadd.f32 0.0, %v2149
      %v2151 = vpop.f32.mrf.mxu0
      %2152 = vmatprep.mubr.f32.mxu0 %v2001
      %2153 = vmatmul.mubr.f32.gmra.mxu0 %v2000
      %v2154 = vpop.f32.mrf.mxu0
      %v2155 = vadd.f32 0.0, %v2154
      %v2156 = vpop.f32.mrf.mxu0
      %2157 = vmatprep.mubr.f32.mxu0 %v2004
      %2158 = vmatmul.mubr.f32.gmra.mxu0 %v2003
      %v2159 = vpop.f32.mrf.mxu0
      %v2160 = vadd.f32 0.0, %v2159
      %v2161 = vpop.f32.mrf.mxu0
      %2162 = vmatprep.mubr.f32.mxu0 %v2007
      %2163 = vmatmul.mubr.f32.gmra.mxu0 %v2006
      %v2164 = vpop.f32.mrf.mxu0
      %v2165 = vadd.f32 0.0, %v2164
      %v2166 = vpop.f32.mrf.mxu0
      %2167 = vmatprep.mubr.f32.mxu0 %v2010
      %2168 = vmatmul.mubr.f32.gmra.mxu0 %v2009
      %v2169 = vpop.f32.mrf.mxu0
      %v2170 = vadd.f32 0.0, %v2169
      %v2171 = vpop.f32.mrf.mxu0
      %2172 = vmatprep.mubr.f32.mxu0 %v2013
      %2173 = vmatmul.mubr.f32.gmra.mxu0 %v2012
      %v2174 = vpop.f32.mrf.mxu0
      %v2175 = vadd.f32 0.0, %v2174
      %v2176 = vpop.f32.mrf.mxu0
      %2177 = vmatprep.mubr.f32.mxu0 %v2016
      %2178 = vmatmul.mubr.f32.gmra.mxu0 %v2015
      %v2179 = vpop.f32.mrf.mxu0
      %v2180 = vadd.f32 0.0, %v2179
      %v2181 = vpop.f32.mrf.mxu0
      %2182 = vdwg.mxu0
      %2183 = vmatprep.subr.mxu0 0.0
      %2184 = vmatpush1.msra.mxu0 0.0
      %2185 = vmatprep.subr.mxu0 0.0
      %2186 = vmatpush1.msra.mxu0 0.0
      %2187 = vmatprep.subr.mxu0 0.0
      %2188 = vmatpush1.msra.mxu0 0.0
      %2189 = vmatprep.subr.mxu0 0.0
      %2190 = vmatpush1.msra.mxu0 0.0
      %2191 = vmatprep.subr.mxu0 0.0
      %2192 = vmatpush1.msra.mxu0 0.0
      %2193 = vmatprep.subr.mxu0 0.0
      %2194 = vmatpush1.msra.mxu0 0.0
      %2195 = vmatprep.subr.mxu0 0.0
      %2196 = vmatpush1.msra.mxu0 0.0
      %2197 = vmatprep.subr.mxu0 0.0
      %2198 = vmatpush1.msra.mxu0 0.0
      %2199 = vmatprep.subr.mxu0 0.0
      %2200 = vmatpush1.msra.mxu0 0.0
      %2201 = vmatprep.subr.mxu0 0.0
      %2202 = vmatpush1.msra.mxu0 0.0
      %2203 = vmatprep.subr.mxu0 0.0
      %2204 = vmatpush1.msra.mxu0 0.0
      %2205 = vmatprep.subr.mxu0 0.0
      %2206 = vmatpush1.msra.mxu0 0.0
      %2207 = vmatprep.subr.mxu0 0.0
      %2208 = vmatpush1.msra.mxu0 %v2053
      %2209 = vmatprep.subr.mxu0 0.0
      %2210 = vmatpush1.msra.mxu0 %v2052
      %2211 = vmatprep.subr.mxu0 0.0
      %2212 = vmatpush1.msra.mxu0 %v2051
      %2213 = vmatprep.subr.mxu0 0.0
      %2214 = vmatpush1.msra.mxu0 %v2050
      %2215 = vmatprep.subr.mxu0 0.0
      %2216 = vmatpush2.msra.mxu0 0.0
      %2217 = vmatprep.subr.mxu0 0.0
      %2218 = vmatpush2.msra.mxu0 0.0
      %2219 = vmatprep.subr.mxu0 0.0
      %2220 = vmatpush2.msra.mxu0 0.0
      %2221 = vmatprep.subr.mxu0 0.0
      %2222 = vmatpush2.msra.mxu0 0.0
      %2223 = vmatprep.subr.mxu0 0.0
      %2224 = vmatpush2.msra.mxu0 0.0
      %2225 = vmatprep.subr.mxu0 0.0
      %2226 = vmatpush2.msra.mxu0 0.0
      %2227 = vmatprep.subr.mxu0 0.0
      %2228 = vmatpush2.msra.mxu0 0.0
      %2229 = vmatprep.subr.mxu0 0.0
      %2230 = vmatpush2.msra.mxu0 0.0
      %2231 = vmatprep.subr.mxu0 0.0
      %2232 = vmatpush2.msra.mxu0 0.0
      %2233 = vmatprep.subr.mxu0 0.0
      %2234 = vmatpush2.msra.mxu0 0.0
      %2235 = vmatprep.subr.mxu0 0.0
      %2236 = vmatpush2.msra.mxu0 0.0
      %2237 = vmatprep.subr.mxu0 0.0
      %2238 = vmatpush2.msra.mxu0 0.0
      %2239 = vmatprep.subr.mxu0 0.0
      %2240 = vmatpush2.msra.mxu0 0.0
      %2241 = vmatprep.subr.mxu0 0.0
      %2242 = vmatpush2.msra.mxu0 0.0
      %2243 = vmatprep.subr.mxu0 0.0
      %2244 = vmatpush2.msra.mxu0 0.0
      %2245 = vmatprep.subr.mxu0 0.0
      %2246 = vmatpush2.msra.mxu0 0.0
      %2247 = vmatprep.mubr.f32.mxu0 0.0
      %2248 = vmatmul.mubr.f32.gmra.mxu0 %v2055
      %v2249 = vpop.f32.mrf.mxu0
      %v2250 = vadd.f32 %v2145, %v2249
      %v2251 = vpop.f32.mrf.mxu0
      %2252 = vmatprep.mubr.f32.mxu0 0.0
      %2253 = vmatmul.mubr.f32.gmra.mxu0 %v2058
      %v2254 = vpop.f32.mrf.mxu0
      %v2255 = vadd.f32 %v2150, %v2254
      %v2256 = vpop.f32.mrf.mxu0
      %2257 = vmatprep.mubr.f32.mxu0 0.0
      %2258 = vmatmul.mubr.f32.gmra.mxu0 %v2061
      %v2259 = vpop.f32.mrf.mxu0
      %v2260 = vadd.f32 %v2155, %v2259
      %v2261 = vpop.f32.mrf.mxu0
      %2262 = vmatprep.mubr.f32.mxu0 0.0
      %2263 = vmatmul.mubr.f32.gmra.mxu0 %v2064
      %v2264 = vpop.f32.mrf.mxu0
      %v2265 = vadd.f32 %v2160, %v2264
      %v2266 = vpop.f32.mrf.mxu0
      %2267 = vmatprep.mubr.f32.mxu0 0.0
      %2268 = vmatmul.mubr.f32.gmra.mxu0 %v2067
      %v2269 = vpop.f32.mrf.mxu0
      %v2270 = vadd.f32 %v2165, %v2269
      %v2271 = vpop.f32.mrf.mxu0
      %2272 = vmatprep.mubr.f32.mxu0 0.0
      %2273 = vmatmul.mubr.f32.gmra.mxu0 %v2070
      %v2274 = vpop.f32.mrf.mxu0
      %v2275 = vadd.f32 %v2170, %v2274
      %v2276 = vpop.f32.mrf.mxu0
      %2277 = vmatprep.mubr.f32.mxu0 0.0
      %2278 = vmatmul.mubr.f32.gmra.mxu0 %v2073
      %v2279 = vpop.f32.mrf.mxu0
      %v2280 = vadd.f32 %v2175, %v2279
      %v2281 = vpop.f32.mrf.mxu0
      %2282 = vmatprep.mubr.f32.mxu0 0.0
      %2283 = vmatmul.mubr.f32.gmra.mxu0 %v2076
      %v2284 = vpop.f32.mrf.mxu0
      %v2285 = vadd.f32 %v2180, %v2284
      %v2286 = vpop.f32.mrf.mxu0
      %2287 = vdwg.mxu0
      %v2288 = vld [vmem:[%s6] sm:$0x1]
      %v2290 = vlaneseq
      %v2291 = vshrl.u32 %v2290, 7
      %v2292 = vsub.s32 0, %v2291
      %v2293 = vrot.slane %v2288, %v2292
      %v2295 = vmul.f32 %v2250, %v2293
      %v2296 = vmul.f32 %v2255, %v2293
      %v2297 = vmul.f32 %v2260, %v2293
      %v2298 = vmul.f32 %v2265, %v2293
      %v2299 = vmul.f32 %v2270, %v2293
      %v2300 = vmul.f32 %v2275, %v2293
      %v2301 = vmul.f32 %v2280, %v2293
      %v2302 = vmul.f32 %v2285, %v2293
      %v2303 = vld [vmem:[%s7] sm:$0x1]
      %v2305 = vlaneseq
      %v2306 = vshrl.u32 %v2305, 7
      %v2307 = vsub.s32 0, %v2306
      %v2308 = vrot.slane %v2303, %v2307
      %v2310 = vadd.f32 %v2295, %v2308
      %v2311 = vadd.f32 %v2296, %v2308
      %v2312 = vadd.f32 %v2297, %v2308
      %v2313 = vadd.f32 %v2298, %v2308
      %v2314 = vadd.f32 %v2299, %v2308
      %v2315 = vadd.f32 %v2300, %v2308
      %v2316 = vadd.f32 %v2301, %v2308
      %v2317 = vadd.f32 %v2302, %v2308
      %v2318 = vld [vmem:[%s8] sm:$0x7]
      %v2320 = vsel %vm418, %v2318, 0
      %v2323 = vsel %vm418, %v2310, 0
      %v2326 = vsel %vm418, %v2311, 0
      %v2329 = vsel %vm418, %v2312, 0
      %v2332 = vsel %vm418, %v2313, 0
      %v2335 = vsel %vm418, %v2314, 0
      %v2338 = vsel %vm418, %v2315, 0
      %v2341 = vsel %vm418, %v2316, 0
      %v2344 = vsel %vm418, %v2317, 0
      %2346 = vmatprep.subr.mxu0 0.0
      %2347 = vmatpush1.xpose.msra.mxu0 0.0
      %2348 = vmatprep.subr.mxu0 0.0
      %2349 = vmatpush1.xpose.msra.mxu0 0.0
      %2350 = vmatprep.subr.mxu0 0.0
      %2351 = vmatpush1.xpose.msra.mxu0 0.0
      %2352 = vmatprep.subr.mxu0 0.0
      %2353 = vmatpush1.xpose.msra.mxu0 0.0
      %2354 = vmatprep.subr.mxu0 0.0
      %2355 = vmatpush1.xpose.msra.mxu0 0.0
      %2356 = vmatprep.subr.mxu0 0.0
      %2357 = vmatpush1.xpose.msra.mxu0 0.0
      %2358 = vmatprep.subr.mxu0 0.0
      %2359 = vmatpush1.xpose.msra.mxu0 0.0
      %2360 = vmatprep.subr.mxu0 0.0
      %2361 = vmatpush1.xpose.msra.mxu0 0.0
      %2362 = vmatprep.subr.mxu0 0.0
      %2363 = vmatpush1.xpose.msra.mxu0 %v2344
      %2364 = vmatprep.subr.mxu0 0.0
      %2365 = vmatpush1.xpose.msra.mxu0 %v2341
      %2366 = vmatprep.subr.mxu0 0.0
      %2367 = vmatpush1.xpose.msra.mxu0 %v2338
      %2368 = vmatprep.subr.mxu0 0.0
      %2369 = vmatpush1.xpose.msra.mxu0 %v2335
      %2370 = vmatprep.subr.mxu0 0.0
      %2371 = vmatpush1.xpose.msra.mxu0 %v2332
      %2372 = vmatprep.subr.mxu0 0.0
      %2373 = vmatpush1.xpose.msra.mxu0 %v2329
      %2374 = vmatprep.subr.mxu0 0.0
      %2375 = vmatpush1.xpose.msra.mxu0 %v2326
      %2376 = vmatprep.subr.mxu0 0.0
      %2377 = vmatpush1.xpose.msra.mxu0 %v2323
      %2378 = vmatprep.subr.mxu0 0.0
      %2379 = vmatpush2.xpose.msra.mxu0 0.0
      %2380 = vmatprep.subr.mxu0 0.0
      %2381 = vmatpush2.xpose.msra.mxu0 0.0
      %2382 = vmatprep.subr.mxu0 0.0
      %2383 = vmatpush2.xpose.msra.mxu0 0.0
      %2384 = vmatprep.subr.mxu0 0.0
      %2385 = vmatpush2.xpose.msra.mxu0 0.0
      %2386 = vmatprep.subr.mxu0 0.0
      %2387 = vmatpush2.xpose.msra.mxu0 0.0
      %2388 = vmatprep.subr.mxu0 0.0
      %2389 = vmatpush2.xpose.msra.mxu0 0.0
      %2390 = vmatprep.subr.mxu0 0.0
      %2391 = vmatpush2.xpose.msra.mxu0 0.0
      %2392 = vmatprep.subr.mxu0 0.0
      %2393 = vmatpush2.xpose.msra.mxu0 0.0
      %2394 = vmatprep.subr.mxu0 0.0
      %2395 = vmatpush2.xpose.msra.mxu0 0.0
      %2396 = vmatprep.subr.mxu0 0.0
      %2397 = vmatpush2.xpose.msra.mxu0 0.0
      %2398 = vmatprep.subr.mxu0 0.0
      %2399 = vmatpush2.xpose.msra.mxu0 0.0
      %2400 = vmatprep.subr.mxu0 0.0
      %2401 = vmatpush2.xpose.msra.mxu0 0.0
      %2402 = vmatprep.subr.mxu0 0.0
      %2403 = vmatpush2.xpose.msra.mxu0 0.0
      %2404 = vmatprep.subr.mxu0 0.0
      %2405 = vmatpush2.xpose.msra.mxu0 0.0
      %2406 = vmatprep.subr.mxu0 0.0
      %2407 = vmatpush2.xpose.msra.mxu0 0.0
      %2408 = vmatprep.subr.mxu0 0.0
      %2409 = vmatpush2.xpose.msra.mxu0 0.0
      %2410 = vmatprep.mubr.f32.mxu0 0.0
      %2411 = vmatmul.mubr.f32.gmra.mxu0 %v2320
      %v2412 = vpop.f32.mrf.mxu0
      %v2413 = vadd.f32 0.0, %v2412
      %v2414 = vpop.f32.mrf.mxu0
      %2415 = vdwg.mxu0
      %vm2416 = vcmask 518144
      %v2417 = vsel %vm2416, %v2413, -inf
      %v2418 = vrot.slane %v2417, 4
      %v2419 = vmax.f32 %v2417, %v2418
      %v2420 = vrot.slane %v2419, 2
      %v2421 = vmax.f32 %v2419, %v2420
      %v2422 = vrot.slane %v2421, 1
      %v2423 = vmax.f32 %v2421, %v2422
      %v2424 = vsub.f32 %v2413, %v2423
      %v2425 = vmul.f32 %v2424, 1.442695
      %v2426 = vpow.pop %v2425
      %v2427 = vsel %vm2416, %v2426, 0.0
      %v2428 = vrot.slane %v2427, 4
      %v2429 = vadd.f32 %v2427, %v2428
      %v2430 = vrot.slane %v2429, 2
      %v2431 = vadd.f32 %v2429, %v2430
      %v2432 = vrot.slane %v2431, 1
      %v2433 = vadd.f32 %v2431, %v2432
      %v2434 = vrcp.pop %v2433
      %v2435 = vmul.f32 %v2426, %v2434
      %2436 = vst.msk [vmem:[%s412] sm:$0x7] %vm2416, %v2435
      %v2437 = vld [vmem:[%s9] sm:$0xff]
      %v2438 = vld [vmem:[%s9 + $0x8] sm:$0xff]
      %v2439 = vld [vmem:[%s9 + $0x10] sm:$0xff]
      %v2440 = vld [vmem:[%s9 + $0x18] sm:$0xff]
      %2441 = vmatprep.subr.mxu0 0.0
      %2442 = vmatpush1.msra.mxu0 0.0
      %2443 = vmatprep.subr.mxu0 0.0
      %2444 = vmatpush1.msra.mxu0 0.0
      %2445 = vmatprep.subr.mxu0 0.0
      %2446 = vmatpush1.msra.mxu0 0.0
      %2447 = vmatprep.subr.mxu0 0.0
      %2448 = vmatpush1.msra.mxu0 0.0
      %2449 = vmatprep.subr.mxu0 0.0
      %2450 = vmatpush1.msra.mxu0 0.0
      %2451 = vmatprep.subr.mxu0 0.0
      %2452 = vmatpush1.msra.mxu0 0.0
      %2453 = vmatprep.subr.mxu0 0.0
      %2454 = vmatpush1.msra.mxu0 0.0
      %2455 = vmatprep.subr.mxu0 0.0
      %2456 = vmatpush1.msra.mxu0 0.0
      %2457 = vmatprep.subr.mxu0 0.0
      %2458 = vmatpush1.msra.mxu0 0.0
      %2459 = vmatprep.subr.mxu0 0.0
      %2460 = vmatpush1.msra.mxu0 0.0
      %2461 = vmatprep.subr.mxu0 0.0
      %2462 = vmatpush1.msra.mxu0 0.0
      %2463 = vmatprep.subr.mxu0 0.0
      %2464 = vmatpush1.msra.mxu0 0.0
      %2465 = vmatprep.subr.mxu0 0.0
      %2466 = vmatpush1.msra.mxu0 %v2440
      %2467 = vmatprep.subr.mxu0 0.0
      %2468 = vmatpush1.msra.mxu0 %v2439
      %2469 = vmatprep.subr.mxu0 0.0
      %2470 = vmatpush1.msra.mxu0 %v2438
      %2471 = vmatprep.subr.mxu0 0.0
      %2472 = vmatpush1.msra.mxu0 %v2437
      %2473 = vmatprep.subr.mxu0 0.0
      %2474 = vmatpush2.msra.mxu0 0.0
      %2475 = vmatprep.subr.mxu0 0.0
      %2476 = vmatpush2.msra.mxu0 0.0
      %2477 = vmatprep.subr.mxu0 0.0
      %2478 = vmatpush2.msra.mxu0 0.0
      %2479 = vmatprep.subr.mxu0 0.0
      %2480 = vmatpush2.msra.mxu0 0.0
      %2481 = vmatprep.subr.mxu0 0.0
      %2482 = vmatpush2.msra.mxu0 0.0
      %2483 = vmatprep.subr.mxu0 0.0
      %2484 = vmatpush2.msra.mxu0 0.0
      %2485 = vmatprep.subr.mxu0 0.0
      %2486 = vmatpush2.msra.mxu0 0.0
      %2487 = vmatprep.subr.mxu0 0.0
      %2488 = vmatpush2.msra.mxu0 0.0
      %2489 = vmatprep.subr.mxu0 0.0
      %2490 = vmatpush2.msra.mxu0 0.0
      %2491 = vmatprep.subr.mxu0 0.0
      %2492 = vmatpush2.msra.mxu0 0.0
      %2493 = vmatprep.subr.mxu0 0.0
      %2494 = vmatpush2.msra.mxu0 0.0
      %2495 = vmatprep.subr.mxu0 0.0
      %2496 = vmatpush2.msra.mxu0 0.0
      %2497 = vmatprep.subr.mxu0 0.0
      %2498 = vmatpush2.msra.mxu0 0.0
      %2499 = vmatprep.subr.mxu0 0.0
      %2500 = vmatpush2.msra.mxu0 0.0
      %2501 = vmatprep.subr.mxu0 0.0
      %2502 = vmatpush2.msra.mxu0 0.0
      %2503 = vmatprep.subr.mxu0 0.0
      %2504 = vmatpush2.msra.mxu0 0.0
      %2505 = vmatprep.mubr.f32.mxu0 0.0
      %2506 = vmatmul.mubr.f32.gmra.mxu0 %v2323
      %v2507 = vpop.f32.mrf.mxu0
      %v2508 = vadd.f32 0.0, %v2507
      %v2509 = vpop.f32.mrf.mxu0
      %2510 = vmatprep.mubr.f32.mxu0 0.0
      %2511 = vmatmul.mubr.f32.gmra.mxu0 %v2326
      %v2512 = vpop.f32.mrf.mxu0
      %v2513 = vadd.f32 0.0, %v2512
      %v2514 = vpop.f32.mrf.mxu0
      %2515 = vmatprep.mubr.f32.mxu0 0.0
      %2516 = vmatmul.mubr.f32.gmra.mxu0 %v2329
      %v2517 = vpop.f32.mrf.mxu0
      %v2518 = vadd.f32 0.0, %v2517
      %v2519 = vpop.f32.mrf.mxu0
      %2520 = vmatprep.mubr.f32.mxu0 0.0
      %2521 = vmatmul.mubr.f32.gmra.mxu0 %v2332
      %v2522 = vpop.f32.mrf.mxu0
      %v2523 = vadd.f32 0.0, %v2522
      %v2524 = vpop.f32.mrf.mxu0
      %2525 = vmatprep.mubr.f32.mxu0 0.0
      %2526 = vmatmul.mubr.f32.gmra.mxu0 %v2335
      %v2527 = vpop.f32.mrf.mxu0
      %v2528 = vadd.f32 0.0, %v2527
      %v2529 = vpop.f32.mrf.mxu0
      %2530 = vmatprep.mubr.f32.mxu0 0.0
      %2531 = vmatmul.mubr.f32.gmra.mxu0 %v2338
      %v2532 = vpop.f32.mrf.mxu0
      %v2533 = vadd.f32 0.0, %v2532
      %v2534 = vpop.f32.mrf.mxu0
      %2535 = vmatprep.mubr.f32.mxu0 0.0
      %2536 = vmatmul.mubr.f32.gmra.mxu0 %v2341
      %v2537 = vpop.f32.mrf.mxu0
      %v2538 = vadd.f32 0.0, %v2537
      %v2539 = vpop.f32.mrf.mxu0
      %2540 = vmatprep.mubr.f32.mxu0 0.0
      %2541 = vmatmul.mubr.f32.gmra.mxu0 %v2344
      %v2542 = vpop.f32.mrf.mxu0
      %v2543 = vadd.f32 0.0, %v2542
      %v2544 = vpop.f32.mrf.mxu0
      %2545 = vdwg.mxu0
      %vm2546 = vcmask 523264
      %2547 = vst.msk [vmem:[%s417] sm:$0xff] %vm2546, %v2508
      %2548 = vst.msk [vmem:[%s417 + $0x8] sm:$0xff] %vm2546, %v2513
      %2549 = vst.msk [vmem:[%s417 + $0x10] sm:$0xff] %vm2546, %v2518
      %2550 = vst.msk [vmem:[%s417 + $0x18] sm:$0xff] %vm2546, %v2523
      %2551 = vst.msk [vmem:[%s417 + $0x20] sm:$0xff] %vm2546, %v2528
      %2552 = vst.msk [vmem:[%s417 + $0x28] sm:$0xff] %vm2546, %v2533
      %2553 = vst.msk [vmem:[%s417 + $0x30] sm:$0xff] %vm2546, %v2538
      %2554 = vst.msk [vmem:[%s417 + $0x38] sm:$0xff] %vm2546, %v2543
      %p2555 = scmp.lt.s32.totalorder %s23, 1
      %s2556 = scalar_select %p2555, %s23, 1
      %s2557 = smul.addr %s2556, 4
      %s2558 = scalar_lea.vmem %s10, %s2557
      %p2559 = scmp.lt.s32.totalorder %s23, 1
      %s2560 = scalar_select %p2559, %s23, 1
      %s2561 = smul.addr %s2560, 8
      %s2562 = smul.addr %s2561, 8
      %s2563 = scalar_lea.vmem %s11, %s2562
      // Predicated region
      $region61: #{decoder_forward.4} parent=59 // pred_check
        %p2564 = pneg %p261
      $region62: #{decoder_forward.4} parent=59 // pred_check_branch
        %2566 = sbr.rel (%p2564) target = $region64
      $region63: #{decoder_forward.4} parent=59 // pred_region
        _
      $region64: #{decoder_forward.4} parent=59 // pred_fallthru
        _
      // Predicated region
      $region65: #{decoder_forward.4} parent=59 // pred_check
        %p2567 = pneg %p287
      $region66: #{decoder_forward.4} parent=59 // pred_check_branch
        %2569 = sbr.rel (%p2567) target = $region68
      $region67: #{decoder_forward.4} parent=59 // pred_region
        _
      $region68: #{decoder_forward.4} parent=59 // pred_fallthru
        _
    $region60: #{decoder_forward.4} parent=5 // pred_fallthru
      _
    %p2570 = scmp.le.s32.totalorder 2, %s18
    // Predicated region
    $region69: #{decoder_forward.4} parent=5 // pred_check
      %p2571 = pneg %p2570
    $region70: #{decoder_forward.4} parent=5 // pred_check_branch
      %2573 = sbr.rel (%p2571) target = $region72
    $region71: #{decoder_forward.4} parent=5 // pred_region
      %s2574 = ssub.s32 %s18, 2
      // Predicated region
      $region73: #{decoder_forward.4} parent=71 // pred_check
        %p2575 = pneg %p267
      $region74: #{decoder_forward.4} parent=71 // pred_check_branch
        %2577 = sbr.rel (%p2575) target = $region76
      $region75: #{decoder_forward.4} parent=71 // pred_region
        %p2578 = scmp.lt.s32.totalorder %s24, 1
        %s2579 = scalar_select %p2578, %s24, 1
        %s2580 = smul.addr %s2579, 4
        %s2581 = scalar_lea.vmem %s10, %s2580
      $region76: #{decoder_forward.4} parent=71 // pred_fallthru
        _
      // Predicated region
      $region77: #{decoder_forward.4} parent=71 // pred_check
        %p2582 = pneg %p293
      $region78: #{decoder_forward.4} parent=71 // pred_check_branch
        %2584 = sbr.rel (%p2582) target = $region80
      $region79: #{decoder_forward.4} parent=71 // pred_region
        %p2585 = scmp.lt.s32.totalorder %s24, 1
        %s2586 = scalar_select %p2585, %s24, 1
        %s2587 = smul.addr %s2586, 8
        %s2588 = smul.addr %s2587, 8
        %s2589 = scalar_lea.vmem %s11, %s2588
      $region80: #{decoder_forward.4} parent=71 // pred_fallthru
        _
    $region72: #{decoder_forward.4} parent=5 // pred_fallthru
      _
  $region6: #{decoder_forward.4} parent=0 // loop_footer
    %s22 = sadd.s32 1, %s18
  $region7: #{decoder_forward.4} parent=0 // loop_footer_branch
    %17 = sbr.rel target = $region3
  $region8: #{decoder_forward.4} parent=0 // loop_exit
    _

// kernel: decoder_forward.5
$region0: #{decoder_forward.5}
  #allocation0 [shape = 'u32[]', space=smem, size = 0x4, offset = 0x4, fixed_abs, tag = 'smem constant byte address 0x4 - core index']
  #allocation1 [shape = 'u32[144,128]{1,0:T(1,128)}', space=vmem, size = 0x12000, scoped, tag = 'internal scratch']
  #allocation2 [shape = 'f32[18,18,16]{2,1,0:T(8,128)}', space=vmem, size = 0x36000, scoped, tag = 'scratch operand']
  #allocation3 [shape = 'f32[18,18,8]{2,1,0:T(8,128)}', space=vmem, size = 0x36000, scoped, tag = 'scratch operand']
  #allocation4 [shape = 'f32[18,18,16]{2,1,0:T(8,128)}', space=vmem, size = 0x36000, scoped, tag = 'scratch operand']
  #allocation5 [shape = 'f32[256,216]{1,0:T(8,128)}', space=vmem, size = 0x40000, scoped, tag = 'scratch operand']
  %s0 = inlined_call_operand.vmem [shape: f32[2,16,16,16], index: 0, kind: input, shape index: {}]
  %s1 = inlined_call_operand.vmem [shape: f32[2,16,16,8], index: 1, kind: input, shape index: {}]
  %s2 = inlined_call_operand.vmem [shape: f32[216,16], index: 2, kind: input, shape index: {}]
  %s3 = inlined_call_operand.vmem [shape: f32[1,16], index: 3, kind: input, shape index: {}]
  %s4 = inlined_call_operand.vmem [shape: f32[1,16], index: 4, kind: input, shape index: {}]
  %s5 = inlined_call_operand.vmem [shape: f32[144,16], index: 5, kind: input, shape index: {}]
  %s6 = inlined_call_operand.vmem [shape: f32[1,16], index: 6, kind: input, shape index: {}]
  %s7 = inlined_call_operand.vmem [shape: f32[1,16], index: 7, kind: input, shape index: {}]
  %s8 = inlined_call_operand.vmem [shape: f32[3,16], index: 8, kind: input, shape index: {}]
  %s9 = inlined_call_operand.vmem [shape: f32[2,3,256], index: 9, kind: output, shape index: {}]
  %s10 = sld [smem:[#allocation0]]
  $region69: #{decoder_forward.5} parent=0
    _
  %s12 = ssub.s32 1, %s10
  %s13 = scalar_select 0, %s12, %s10
  loop: start=0, step=1, limit=4
  $region2: #{decoder_forward.5} parent=0 // loop_pre_header
    _
  $region3: #{decoder_forward.5} parent=0 // loop_header
    %s15 = sphi 0, %s19
    %p16 = scmp.ge.s32.totalorder %s15, 4
    %s25 = sphi 0, %s27
    %s28 = sphi 0, %s25
    %s29 = sphi 0, %s28
    %s45 = sphi 0, %s29
    %s51 = sphi 0, %s53
    %s54 = sphi 0, %s51
    %s55 = sphi 0, %s54
    %s71 = sphi 0, %s55
    %s75 = sphi 0, %s75
    %s77 = sphi 0, %s75
    %s78 = sphi 0, %s77
    %s92 = sphi 0, %s78
    %s96 = sphi 0, %s96
    %s98 = sphi 0, %s96
    %s99 = sphi 0, %s98
    %s113 = sphi 0, %s99
    %s117 = sphi 0, %s117
    %s119 = sphi 0, %s117
    %s120 = sphi 0, %s119
    %s134 = sphi 0, %s120
    %s138 = sphi 0, %s138
    %s140 = sphi 0, %s138
    %s141 = sphi 0, %s140
    %s155 = sphi 0, %s141
    %s159 = sphi 0, %s159
    %s161 = sphi 0, %s159
    %s162 = sphi 0, %s161
    %s176 = sphi 0, %s162
    %s180 = sphi 0, %s180
    %s182 = sphi 0, %s180
    %s183 = sphi 0, %s182
    %s197 = sphi 0, %s183
    %s201 = sphi 0, %s201
    %s203 = sphi 0, %s201
    %s204 = sphi 0, %s203
    %s218 = sphi 0, %s204
    %s224 = sphi 0, %s226
    %s227 = sphi 0, %s224
    %s228 = sphi 0, %s227
    %s244 = sphi 0, %s228
  $region4: #{decoder_forward.5} parent=0 // loop_header_branch
    %18 = sbr.rel (%p16) target = $region8
  $region5: #{decoder_forward.5} parent=0 // loop_body
    %s20 = ssub.s32 %s15, 1
    %s21 = ssub.s32 %s15, 2
    %s22 = sadd.s32 %s15, 1
    %s23 = ssub.s32 %s15, %s22
    %p24 = scmp.eq.s32.totalorder %s23, 0
    %s26 = sadd.s32 %s25, 1
    %s27 = scalar_select %p24, %s25, %s26
    %p30 = pneg %p24
    %p31 = scmp.eq.s32.totalorder %s15, 1
    %p32 = por %p30, %p31
    %p33 = scmp.ne.s32.totalorder %s25, %s28
    %p34 = scmp.eq.s32.totalorder %s15, 0
    %p35 = por %p33, %p34
    %p36 = scmp.ne.s32.totalorder %s25, %s28
    %p37 = scmp.eq.s32.totalorder %s20, 1
    %p38 = por %p36, %p37
    %p39 = scmp.ne.s32.totalorder %s28, %s29
    %p40 = scmp.eq.s32.totalorder %s20, 0
    %p41 = por %p39, %p40
    %p42 = scmp.ne.s32.totalorder %s28, %s29
    %p43 = scmp.eq.s32.totalorder %s21, 1
    %p44 = por %p42, %p43
    %p46 = scmp.ne.s32.totalorder %s29, %s45
    %p47 = scmp.eq.s32.totalorder %s21, 0
    %p48 = por %p46, %p47
    %s49 = ssub.s32 %s15, %s22
    %p50 = scmp.eq.s32.totalorder %s49, 0
    %s52 = sadd.s32 %s51, 1
    %s53 = scalar_select %p50, %s51, %s52
    %p56 = pneg %p50
    %p57 = scmp.eq.s32.totalorder %s15, 1
    %p58 = por %p56, %p57
    %p59 = scmp.ne.s32.totalorder %s51, %s54
    %p60 = scmp.eq.s32.totalorder %s15, 0
    %p61 = por %p59, %p60
    %p62 = scmp.ne.s32.totalorder %s51, %s54
    %p63 = scmp.eq.s32.totalorder %s20, 1
    %p64 = por %p62, %p63
    %p65 = scmp.ne.s32.totalorder %s54, %s55
    %p66 = scmp.eq.s32.totalorder %s20, 0
    %p67 = por %p65, %p66
    %p68 = scmp.ne.s32.totalorder %s54, %s55
    %p69 = scmp.eq.s32.totalorder %s21, 1
    %p70 = por %p68, %p69
    %p72 = scmp.ne.s32.totalorder %s55, %s71
    %p73 = scmp.eq.s32.totalorder %s21, 0
    %p74 = por %p72, %p73
    %s76 = sadd.s32 %s75, 1
    %p79 = scmp.eq.s32.totalorder %s15, 1
    %p80 = scmp.ne.s32.totalorder %s75, %s77
    %p81 = scmp.eq.s32.totalorder %s15, 0
    %p82 = por %p80, %p81
    %p83 = scmp.ne.s32.totalorder %s75, %s77
    %p84 = scmp.eq.s32.totalorder %s20, 1
    %p85 = por %p83, %p84
    %p86 = scmp.ne.s32.totalorder %s77, %s78
    %p87 = scmp.eq.s32.totalorder %s20, 0
    %p88 = por %p86, %p87
    %p89 = scmp.ne.s32.totalorder %s77, %s78
    %p90 = scmp.eq.s32.totalorder %s21, 1
    %p91 = por %p89, %p90
    %p93 = scmp.ne.s32.totalorder %s78, %s92
    %p94 = scmp.eq.s32.totalorder %s21, 0
    %p95 = por %p93, %p94
    %s97 = sadd.s32 %s96, 1
    %p100 = scmp.eq.s32.totalorder %s15, 1
    %p101 = scmp.ne.s32.totalorder %s96, %s98
    %p102 = scmp.eq.s32.totalorder %s15, 0
    %p103 = por %p101, %p102
    %p104 = scmp.ne.s32.totalorder %s96, %s98
    %p105 = scmp.eq.s32.totalorder %s20, 1
    %p106 = por %p104, %p105
    %p107 = scmp.ne.s32.totalorder %s98, %s99
    %p108 = scmp.eq.s32.totalorder %s20, 0
    %p109 = por %p107, %p108
    %p110 = scmp.ne.s32.totalorder %s98, %s99
    %p111 = scmp.eq.s32.totalorder %s21, 1
    %p112 = por %p110, %p111
    %p114 = scmp.ne.s32.totalorder %s99, %s113
    %p115 = scmp.eq.s32.totalorder %s21, 0
    %p116 = por %p114, %p115
    %s118 = sadd.s32 %s117, 1
    %p121 = scmp.eq.s32.totalorder %s15, 1
    %p122 = scmp.ne.s32.totalorder %s117, %s119
    %p123 = scmp.eq.s32.totalorder %s15, 0
    %p124 = por %p122, %p123
    %p125 = scmp.ne.s32.totalorder %s117, %s119
    %p126 = scmp.eq.s32.totalorder %s20, 1
    %p127 = por %p125, %p126
    %p128 = scmp.ne.s32.totalorder %s119, %s120
    %p129 = scmp.eq.s32.totalorder %s20, 0
    %p130 = por %p128, %p129
    %p131 = scmp.ne.s32.totalorder %s119, %s120
    %p132 = scmp.eq.s32.totalorder %s21, 1
    %p133 = por %p131, %p132
    %p135 = scmp.ne.s32.totalorder %s120, %s134
    %p136 = scmp.eq.s32.totalorder %s21, 0
    %p137 = por %p135, %p136
    %s139 = sadd.s32 %s138, 1
    %p142 = scmp.eq.s32.totalorder %s15, 1
    %p143 = scmp.ne.s32.totalorder %s138, %s140
    %p144 = scmp.eq.s32.totalorder %s15, 0
    %p145 = por %p143, %p144
    %p146 = scmp.ne.s32.totalorder %s138, %s140
    %p147 = scmp.eq.s32.totalorder %s20, 1
    %p148 = por %p146, %p147
    %p149 = scmp.ne.s32.totalorder %s140, %s141
    %p150 = scmp.eq.s32.totalorder %s20, 0
    %p151 = por %p149, %p150
    %p152 = scmp.ne.s32.totalorder %s140, %s141
    %p153 = scmp.eq.s32.totalorder %s21, 1
    %p154 = por %p152, %p153
    %p156 = scmp.ne.s32.totalorder %s141, %s155
    %p157 = scmp.eq.s32.totalorder %s21, 0
    %p158 = por %p156, %p157
    %s160 = sadd.s32 %s159, 1
    %p163 = scmp.eq.s32.totalorder %s15, 1
    %p164 = scmp.ne.s32.totalorder %s159, %s161
    %p165 = scmp.eq.s32.totalorder %s15, 0
    %p166 = por %p164, %p165
    %p167 = scmp.ne.s32.totalorder %s159, %s161
    %p168 = scmp.eq.s32.totalorder %s20, 1
    %p169 = por %p167, %p168
    %p170 = scmp.ne.s32.totalorder %s161, %s162
    %p171 = scmp.eq.s32.totalorder %s20, 0
    %p172 = por %p170, %p171
    %p173 = scmp.ne.s32.totalorder %s161, %s162
    %p174 = scmp.eq.s32.totalorder %s21, 1
    %p175 = por %p173, %p174
    %p177 = scmp.ne.s32.totalorder %s162, %s176
    %p178 = scmp.eq.s32.totalorder %s21, 0
    %p179 = por %p177, %p178
    %s181 = sadd.s32 %s180, 1
    %p184 = scmp.eq.s32.totalorder %s15, 1
    %p185 = scmp.ne.s32.totalorder %s180, %s182
    %p186 = scmp.eq.s32.totalorder %s15, 0
    %p187 = por %p185, %p186
    %p188 = scmp.ne.s32.totalorder %s180, %s182
    %p189 = scmp.eq.s32.totalorder %s20, 1
    %p190 = por %p188, %p189
    %p191 = scmp.ne.s32.totalorder %s182, %s183
    %p192 = scmp.eq.s32.totalorder %s20, 0
    %p193 = por %p191, %p192
    %p194 = scmp.ne.s32.totalorder %s182, %s183
    %p195 = scmp.eq.s32.totalorder %s21, 1
    %p196 = por %p194, %p195
    %p198 = scmp.ne.s32.totalorder %s183, %s197
    %p199 = scmp.eq.s32.totalorder %s21, 0
    %p200 = por %p198, %p199
    %s202 = sadd.s32 %s201, 1
    %p205 = scmp.eq.s32.totalorder %s15, 1
    %p206 = scmp.ne.s32.totalorder %s201, %s203
    %p207 = scmp.eq.s32.totalorder %s15, 0
    %p208 = por %p206, %p207
    %p209 = scmp.ne.s32.totalorder %s201, %s203
    %p210 = scmp.eq.s32.totalorder %s20, 1
    %p211 = por %p209, %p210
    %p212 = scmp.ne.s32.totalorder %s203, %s204
    %p213 = scmp.eq.s32.totalorder %s20, 0
    %p214 = por %p212, %p213
    %p215 = scmp.ne.s32.totalorder %s203, %s204
    %p216 = scmp.eq.s32.totalorder %s21, 1
    %p217 = por %p215, %p216
    %p219 = scmp.ne.s32.totalorder %s204, %s218
    %p220 = scmp.eq.s32.totalorder %s21, 0
    %p221 = por %p219, %p220
    %s222 = ssub.s32 %s15, %s22
    %p223 = scmp.eq.s32.totalorder %s222, 0
    %s225 = sadd.s32 %s224, 1
    %s226 = scalar_select %p223, %s224, %s225
    %p229 = pneg %p223
    %p230 = scmp.eq.s32.totalorder %s15, 1
    %p231 = por %p229, %p230
    %p232 = scmp.ne.s32.totalorder %s224, %s227
    %p233 = scmp.eq.s32.totalorder %s15, 0
    %p234 = por %p232, %p233
    %p235 = scmp.ne.s32.totalorder %s224, %s227
    %p236 = scmp.eq.s32.totalorder %s20, 1
    %p237 = por %p235, %p236
    %p238 = scmp.ne.s32.totalorder %s227, %s228
    %p239 = scmp.eq.s32.totalorder %s20, 0
    %p240 = por %p238, %p239
    %p241 = scmp.ne.s32.totalorder %s227, %s228
    %p242 = scmp.eq.s32.totalorder %s21, 1
    %p243 = por %p241, %p242
    %p245 = scmp.ne.s32.totalorder %s228, %s244
    %p246 = scmp.eq.s32.totalorder %s21, 0
    %p247 = por %p245, %p246
    %p248 = scmp.le.s32.totalorder 1, %s15
    %p249 = scmp.lt.s32.totalorder %s15, 3
    %p250 = pnand %p248, %p249
    %p251 = pneg %p250
    // Predicated region
    $region9: #{decoder_forward.5} parent=5 // pred_check
      _
    $region10: #{decoder_forward.5} parent=5 // pred_check_branch
      %253 = sbr.rel (%p250) target = $region12
    $region11: #{decoder_forward.5} parent=5 // pred_region
      %s254 = ssub.s32 %s15, 1
      // Predicated region
      $region13: #{decoder_forward.5} parent=11 // pred_check
        %p255 = pneg %p88
      $region14: #{decoder_forward.5} parent=11 // pred_check_branch
        %257 = sbr.rel (%p255) target = $region16
      $region15: #{decoder_forward.5} parent=11 // pred_region
        _
      $region16: #{decoder_forward.5} parent=11 // pred_fallthru
        _
      // Predicated region
      $region17: #{decoder_forward.5} parent=11 // pred_check
        %p258 = pneg %p109
      $region18: #{decoder_forward.5} parent=11 // pred_check_branch
        %260 = sbr.rel (%p258) target = $region20
      $region19: #{decoder_forward.5} parent=11 // pred_region
        _
      $region20: #{decoder_forward.5} parent=11 // pred_fallthru
        _
      // Predicated region
      $region21: #{decoder_forward.5} parent=11 // pred_check
        %p261 = pneg %p130
      $region22: #{decoder_forward.5} parent=11 // pred_check_branch
        %263 = sbr.rel (%p261) target = $region24
      $region23: #{decoder_forward.5} parent=11 // pred_region
        _
      $region24: #{decoder_forward.5} parent=11 // pred_fallthru
        _
      // Predicated region
      $region25: #{decoder_forward.5} parent=11 // pred_check
        %p264 = pneg %p151
      $region26: #{decoder_forward.5} parent=11 // pred_check_branch
        %266 = sbr.rel (%p264) target = $region28
      $region27: #{decoder_forward.5} parent=11 // pred_region
        _
      $region28: #{decoder_forward.5} parent=11 // pred_fallthru
        _
      // Predicated region
      $region29: #{decoder_forward.5} parent=11 // pred_check
        %p267 = pneg %p172
      $region30: #{decoder_forward.5} parent=11 // pred_check_branch
        %269 = sbr.rel (%p267) target = $region32
      $region31: #{decoder_forward.5} parent=11 // pred_region
        _
      $region32: #{decoder_forward.5} parent=11 // pred_fallthru
        _
      // Predicated region
      $region33: #{decoder_forward.5} parent=11 // pred_check
        %p270 = pneg %p193
      $region34: #{decoder_forward.5} parent=11 // pred_check_branch
        %272 = sbr.rel (%p270) target = $region36
      $region35: #{decoder_forward.5} parent=11 // pred_region
        _
      $region36: #{decoder_forward.5} parent=11 // pred_fallthru
        _
      // Predicated region
      $region37: #{decoder_forward.5} parent=11 // pred_check
        %p273 = pneg %p214
      $region38: #{decoder_forward.5} parent=11 // pred_check_branch
        %275 = sbr.rel (%p273) target = $region40
      $region39: #{decoder_forward.5} parent=11 // pred_region
        _
      $region40: #{decoder_forward.5} parent=11 // pred_fallthru
        _
    $region12: #{decoder_forward.5} parent=5 // pred_fallthru
      _
    %p276 = scmp.lt.s32.totalorder %s15, 2
    // Predicated region
    $region41: #{decoder_forward.5} parent=5 // pred_check
      %p277 = pneg %p276
    $region42: #{decoder_forward.5} parent=5 // pred_check_branch
      %279 = sbr.rel (%p277) target = $region44
    $region43: #{decoder_forward.5} parent=5 // pred_region
      // Predicated region
      $region45: #{decoder_forward.5} parent=43 // pred_check
        %p280 = pneg %p35
      $region46: #{decoder_forward.5} parent=43 // pred_check_branch
        %282 = sbr.rel (%p280) target = $region48
      $region47: #{decoder_forward.5} parent=43 // pred_region
        %p283 = scmp.lt.s32.totalorder %s15, 1
        %s284 = scalar_select %p283, %s15, 1
        %s285 = smul.addr %s284, 32
        %s286 = smul.addr %s285, 8
        %s287 = scalar_lea.vmem %s0, %s286
      $region48: #{decoder_forward.5} parent=43 // pred_fallthru
        _
      // Predicated region
      $region49: #{decoder_forward.5} parent=43 // pred_check
        %p288 = pneg %p61
      $region50: #{decoder_forward.5} parent=43 // pred_check_branch
        %290 = sbr.rel (%p288) target = $region52
      $region51: #{decoder_forward.5} parent=43 // pred_region
        %p291 = scmp.lt.s32.totalorder %s15, 1
        %s292 = scalar_select %p291, %s15, 1
        %s293 = smul.addr %s292, 32
        %s294 = smul.addr %s293, 8
        %s295 = scalar_lea.vmem %s1, %s294
      $region52: #{decoder_forward.5} parent=43 // pred_fallthru
        _
    $region44: #{decoder_forward.5} parent=5 // pred_fallthru
      _
    %p296 = scmp.le.s32.totalorder 1, %s15
    %p297 = scmp.lt.s32.totalorder %s15, 3
    %p298 = pnand %p296, %p297
    %p299 = pneg %p298
    // Predicated region
    $region53: #{decoder_forward.5} parent=5 // pred_check
      _
    $region54: #{decoder_forward.5} parent=5 // pred_check_branch
      %301 = sbr.rel (%p298) target = $region56
    $region55: #{decoder_forward.5} parent=5 // pred_region
      %s302 = ssub.s32 %s15, 1
      %p303 = scmp.lt.s32.totalorder %s20, 1
      %s304 = scalar_select %p303, %s20, 1
      %s305 = smul.addr %s304, 32
      %s306 = smul.addr %s305, 8
      %s307 = scalar_lea.vmem %s0, %s306
      %p308 = pneg %p41
      %p309 = pneg %p38
      %p310 = scmp.lt.s32.totalorder %s20, 1
      %s311 = scalar_select %p310, %s20, 1
      %s312 = smul.addr %s311, 32
      %s313 = smul.addr %s312, 8
      %s314 = scalar_lea.vmem %s1, %s313
      %p315 = pneg %p67
      %p316 = pneg %p64
      %p317 = pneg %p88
      %p318 = pneg %p85
      %p319 = pneg %p109
      %p320 = pneg %p106
      %p321 = pneg %p130
      %p322 = pneg %p127
      %p323 = pneg %p151
      %p324 = pneg %p148
      %p325 = pneg %p172
      %p326 = pneg %p169
      %p327 = pneg %p193
      %p328 = pneg %p190
      %p329 = pneg %p214
      %p330 = pneg %p211
      %p331 = pneg %p240
      %p332 = pneg %p237
      %p333 = scmp.lt.s32.totalorder %s20, 1
      %s334 = scalar_select %p333, %s20, 1
      %s335 = smul.addr %s334, 2
      %s336 = smul.addr %s335, 4
      %s337 = scalar_lea.vmem %s9, %s336
      %p338 = scmp.lt.s32.totalorder %s20, 1
      %s339 = scalar_select %p338, %s20, 1
      %s340 = smul.addr %s339, 32
      %s341 = smul.addr %s340, 8
      %s342 = scalar_lea.vmem %s0, %s341
      %p343 = scmp.lt.s32.totalorder %s20, 1
      %s344 = scalar_select %p343, %s20, 1
      %s345 = smul.addr %s344, 32
      %s346 = smul.addr %s345, 8
      %s347 = scalar_lea.vmem %s1, %s346
      %p348 = scmp.lt.s32.totalorder %s20, 1
      %s349 = scalar_select %p348, %s20, 1
      %s350 = smul.addr %s349, 2
      %s351 = smul.addr %s350, 4
      %s352 = scalar_lea.vmem %s9, %s351
      %vm353 = vcmask 130048
      %354 = vst.msk [vmem:[#allocation2] sm:$0xff] %vm353, 0.0
      %355 = vst.msk [vmem:[#allocation2 + $0x8] sm:$0xff] %vm353, 0.0
      %vm356 = vcmask 123904
      %357 = vst.msk [vmem:[#allocation2 + $0x10] sm:$0x3] %vm356, 0.0
      %s358 = scalar_lea.vmem [#allocation2], 408
      %359 = vst.msk [vmem:[%s358] sm:$0xff] %vm353, 0.0
      %360 = vst.msk [vmem:[%s358 + $0x8] sm:$0xff] %vm353, 0.0
      %361 = vst.msk [vmem:[%s358 + $0x10] sm:$0x3] %vm356, 0.0
      %vm362 = vcmask 122880
      %363 = vst.msk [vmem:[#allocation2] sm:$0x1] %vm362, 0.0
      %364 = vst.msk [vmem:[#allocation2 + $0x18] sm:$0x1] %vm362, 0.0
      %365 = vst.msk [vmem:[#allocation2 + $0x30] sm:$0x1] %vm362, 0.0
      %366 = vst.msk [vmem:[#allocation2 + $0x48] sm:$0x1] %vm362, 0.0
      %367 = vst.msk [vmem:[#allocation2 + $0x60] sm:$0x1] %vm362, 0.0
      %368 = vst.msk [vmem:[#allocation2 + $0x78] sm:$0x1] %vm362, 0.0
      %369 = vst.msk [vmem:[#allocation2 + $0x90] sm:$0x1] %vm362, 0.0
      %370 = vst.msk [vmem:[#allocation2 + $0xa8] sm:$0x1] %vm362, 0.0
      %371 = vst.msk [vmem:[#allocation2 + $0xc0] sm:$0x1] %vm362, 0.0
      %372 = vst.msk [vmem:[#allocation2 + $0xd8] sm:$0x1] %vm362, 0.0
      %373 = vst.msk [vmem:[#allocation2 + $0xf0] sm:$0x1] %vm362, 0.0
      %374 = vst.msk [vmem:[#allocation2 + $0x108] sm:$0x1] %vm362, 0.0
      %375 = vst.msk [vmem:[#allocation2 + $0x120] sm:$0x1] %vm362, 0.0
      %376 = vst.msk [vmem:[#allocation2 + $0x138] sm:$0x1] %vm362, 0.0
      %377 = vst.msk [vmem:[#allocation2 + $0x150] sm:$0x1] %vm362, 0.0
      %378 = vst.msk [vmem:[#allocation2 + $0x168] sm:$0x1] %vm362, 0.0
      %379 = vst.msk [vmem:[#allocation2 + $0x180] sm:$0x1] %vm362, 0.0
      %380 = vst.msk [vmem:[#allocation2 + $0x198] sm:$0x1] %vm362, 0.0
      %381 = vst.msk [vmem:[#allocation2 + $0x11] sm:$0x1] %vm362, 0.0
      %382 = vst.msk [vmem:[#allocation2 + $0x29] sm:$0x1] %vm362, 0.0
      %383 = vst.msk [vmem:[#allocation2 + $0x41] sm:$0x1] %vm362, 0.0
      %384 = vst.msk [vmem:[#allocation2 + $0x59] sm:$0x1] %vm362, 0.0
      %385 = vst.msk [vmem:[#allocation2 + $0x71] sm:$0x1] %vm362, 0.0
      %386 = vst.msk [vmem:[#allocation2 + $0x89] sm:$0x1] %vm362, 0.0
      %387 = vst.msk [vmem:[#allocation2 + $0xa1] sm:$0x1] %vm362, 0.0
      %388 = vst.msk [vmem:[#allocation2 + $0xb9] sm:$0x1] %vm362, 0.0
      %389 = vst.msk [vmem:[#allocation2 + $0xd1] sm:$0x1] %vm362, 0.0
      %390 = vst.msk [vmem:[#allocation2 + $0xe9] sm:$0x1] %vm362, 0.0
      %391 = vst.msk [vmem:[#allocation2 + $0x101] sm:$0x1] %vm362, 0.0
      %392 = vst.msk [vmem:[#allocation2 + $0x119] sm:$0x1] %vm362, 0.0
      %393 = vst.msk [vmem:[#allocation2 + $0x131] sm:$0x1] %vm362, 0.0
      %394 = vst.msk [vmem:[#allocation2 + $0x149] sm:$0x1] %vm362, 0.0
      %395 = vst.msk [vmem:[#allocation2 + $0x161] sm:$0x1] %vm362, 0.0
      %396 = vst.msk [vmem:[#allocation2 + $0x179] sm:$0x1] %vm362, 0.0
      %397 = vst.msk [vmem:[#allocation2 + $0x191] sm:$0x1] %vm362, 0.0
      %398 = vst.msk [vmem:[#allocation2 + $0x1a9] sm:$0x1] %vm362, 0.0
      %vm399 = vcmask 64512
      %400 = vst.msk [vmem:[#allocation3] sm:$0xff] %vm399, 0.0
      %401 = vst.msk [vmem:[#allocation3 + $0x8] sm:$0xff] %vm399, 0.0
      %vm402 = vcmask 58368
      %403 = vst.msk [vmem:[#allocation3 + $0x10] sm:$0x3] %vm402, 0.0
      %s404 = scalar_lea.vmem [#allocation3], 408
      %405 = vst.msk [vmem:[%s404] sm:$0xff] %vm399, 0.0
      %406 = vst.msk [vmem:[%s404 + $0x8] sm:$0xff] %vm399, 0.0
      %407 = vst.msk [vmem:[%s404 + $0x10] sm:$0x3] %vm402, 0.0
      %vm408 = vcmask 57344
      %409 = vst.msk [vmem:[#allocation3] sm:$0x1] %vm408, 0.0
      %410 = vst.msk [vmem:[#allocation3 + $0x18] sm:$0x1] %vm408, 0.0
      %411 = vst.msk [vmem:[#allocation3 + $0x30] sm:$0x1] %vm408, 0.0
      %412 = vst.msk [vmem:[#allocation3 + $0x48] sm:$0x1] %vm408, 0.0
      %413 = vst.msk [vmem:[#allocation3 + $0x60] sm:$0x1] %vm408, 0.0
      %414 = vst.msk [vmem:[#allocation3 + $0x78] sm:$0x1] %vm408, 0.0
      %415 = vst.msk [vmem:[#allocation3 + $0x90] sm:$0x1] %vm408, 0.0
      %416 = vst.msk [vmem:[#allocation3 + $0xa8] sm:$0x1] %vm408, 0.0
      %417 = vst.msk [vmem:[#allocation3 + $0xc0] sm:$0x1] %vm408, 0.0
      %418 = vst.msk [vmem:[#allocation3 + $0xd8] sm:$0x1] %vm408, 0.0
      %419 = vst.msk [vmem:[#allocation3 + $0xf0] sm:$0x1] %vm408, 0.0
      %420 = vst.msk [vmem:[#allocation3 + $0x108] sm:$0x1] %vm408, 0.0
      %421 = vst.msk [vmem:[#allocation3 + $0x120] sm:$0x1] %vm408, 0.0
      %422 = vst.msk [vmem:[#allocation3 + $0x138] sm:$0x1] %vm408, 0.0
      %423 = vst.msk [vmem:[#allocation3 + $0x150] sm:$0x1] %vm408, 0.0
      %424 = vst.msk [vmem:[#allocation3 + $0x168] sm:$0x1] %vm408, 0.0
      %425 = vst.msk [vmem:[#allocation3 + $0x180] sm:$0x1] %vm408, 0.0
      %426 = vst.msk [vmem:[#allocation3 + $0x198] sm:$0x1] %vm408, 0.0
      %427 = vst.msk [vmem:[#allocation3 + $0x11] sm:$0x1] %vm408, 0.0
      %428 = vst.msk [vmem:[#allocation3 + $0x29] sm:$0x1] %vm408, 0.0
      %429 = vst.msk [vmem:[#allocation3 + $0x41] sm:$0x1] %vm408, 0.0
      %430 = vst.msk [vmem:[#allocation3 + $0x59] sm:$0x1] %vm408, 0.0
      %431 = vst.msk [vmem:[#allocation3 + $0x71] sm:$0x1] %vm408, 0.0
      %432 = vst.msk [vmem:[#allocation3 + $0x89] sm:$0x1] %vm408, 0.0
      %433 = vst.msk [vmem:[#allocation3 + $0xa1] sm:$0x1] %vm408, 0.0
      %434 = vst.msk [vmem:[#allocation3 + $0xb9] sm:$0x1] %vm408, 0.0
      %435 = vst.msk [vmem:[#allocation3 + $0xd1] sm:$0x1] %vm408, 0.0
      %436 = vst.msk [vmem:[#allocation3 + $0xe9] sm:$0x1] %vm408, 0.0
      %437 = vst.msk [vmem:[#allocation3 + $0x101] sm:$0x1] %vm408, 0.0
      %438 = vst.msk [vmem:[#allocation3 + $0x119] sm:$0x1] %vm408, 0.0
      %439 = vst.msk [vmem:[#allocation3 + $0x131] sm:$0x1] %vm408, 0.0
      %440 = vst.msk [vmem:[#allocation3 + $0x149] sm:$0x1] %vm408, 0.0
      %441 = vst.msk [vmem:[#allocation3 + $0x161] sm:$0x1] %vm408, 0.0
      %442 = vst.msk [vmem:[#allocation3 + $0x179] sm:$0x1] %vm408, 0.0
      %443 = vst.msk [vmem:[#allocation3 + $0x191] sm:$0x1] %vm408, 0.0
      %444 = vst.msk [vmem:[#allocation3 + $0x1a9] sm:$0x1] %vm408, 0.0
      %445 = vst.msk [vmem:[#allocation4] sm:$0xff] %vm353, 0.0
      %446 = vst.msk [vmem:[#allocation4 + $0x8] sm:$0xff] %vm353, 0.0
      %447 = vst.msk [vmem:[#allocation4 + $0x10] sm:$0x3] %vm356, 0.0
      %s448 = scalar_lea.vmem [#allocation4], 408
      %449 = vst.msk [vmem:[%s448] sm:$0xff] %vm353, 0.0
      %450 = vst.msk [vmem:[%s448 + $0x8] sm:$0xff] %vm353, 0.0
      %451 = vst.msk [vmem:[%s448 + $0x10] sm:$0x3] %vm356, 0.0
      %452 = vst.msk [vmem:[#allocation4] sm:$0x1] %vm362, 0.0
      %453 = vst.msk [vmem:[#allocation4 + $0x18] sm:$0x1] %vm362, 0.0
      %454 = vst.msk [vmem:[#allocation4 + $0x30] sm:$0x1] %vm362, 0.0
      %455 = vst.msk [vmem:[#allocation4 + $0x48] sm:$0x1] %vm362, 0.0
      %456 = vst.msk [vmem:[#allocation4 + $0x60] sm:$0x1] %vm362, 0.0
      %457 = vst.msk [vmem:[#allocation4 + $0x78] sm:$0x1] %vm362, 0.0
      %458 = vst.msk [vmem:[#allocation4 + $0x90] sm:$0x1] %vm362, 0.0
      %459 = vst.msk [vmem:[#allocation4 + $0xa8] sm:$0x1] %vm362, 0.0
      %460 = vst.msk [vmem:[#allocation4 + $0xc0] sm:$0x1] %vm362, 0.0
      %461 = vst.msk [vmem:[#allocation4 + $0xd8] sm:$0x1] %vm362, 0.0
      %462 = vst.msk [vmem:[#allocation4 + $0xf0] sm:$0x1] %vm362, 0.0
      %463 = vst.msk [vmem:[#allocation4 + $0x108] sm:$0x1] %vm362, 0.0
      %464 = vst.msk [vmem:[#allocation4 + $0x120] sm:$0x1] %vm362, 0.0
      %465 = vst.msk [vmem:[#allocation4 + $0x138] sm:$0x1] %vm362, 0.0
      %466 = vst.msk [vmem:[#allocation4 + $0x150] sm:$0x1] %vm362, 0.0
      %467 = vst.msk [vmem:[#allocation4 + $0x168] sm:$0x1] %vm362, 0.0
      %468 = vst.msk [vmem:[#allocation4 + $0x180] sm:$0x1] %vm362, 0.0
      %469 = vst.msk [vmem:[#allocation4 + $0x198] sm:$0x1] %vm362, 0.0
      %470 = vst.msk [vmem:[#allocation4 + $0x11] sm:$0x1] %vm362, 0.0
      %471 = vst.msk [vmem:[#allocation4 + $0x29] sm:$0x1] %vm362, 0.0
      %472 = vst.msk [vmem:[#allocation4 + $0x41] sm:$0x1] %vm362, 0.0
      %473 = vst.msk [vmem:[#allocation4 + $0x59] sm:$0x1] %vm362, 0.0
      %474 = vst.msk [vmem:[#allocation4 + $0x71] sm:$0x1] %vm362, 0.0
      %475 = vst.msk [vmem:[#allocation4 + $0x89] sm:$0x1] %vm362, 0.0
      %476 = vst.msk [vmem:[#allocation4 + $0xa1] sm:$0x1] %vm362, 0.0
      %477 = vst.msk [vmem:[#allocation4 + $0xb9] sm:$0x1] %vm362, 0.0
      %478 = vst.msk [vmem:[#allocation4 + $0xd1] sm:$0x1] %vm362, 0.0
      %479 = vst.msk [vmem:[#allocation4 + $0xe9] sm:$0x1] %vm362, 0.0
      %480 = vst.msk [vmem:[#allocation4 + $0x101] sm:$0x1] %vm362, 0.0
      %481 = vst.msk [vmem:[#allocation4 + $0x119] sm:$0x1] %vm362, 0.0
      %482 = vst.msk [vmem:[#allocation4 + $0x131] sm:$0x1] %vm362, 0.0
      %483 = vst.msk [vmem:[#allocation4 + $0x149] sm:$0x1] %vm362, 0.0
      %484 = vst.msk [vmem:[#allocation4 + $0x161] sm:$0x1] %vm362, 0.0
      %485 = vst.msk [vmem:[#allocation4 + $0x179] sm:$0x1] %vm362, 0.0
      %486 = vst.msk [vmem:[#allocation4 + $0x191] sm:$0x1] %vm362, 0.0
      %487 = vst.msk [vmem:[#allocation4 + $0x1a9] sm:$0x1] %vm362, 0.0
      %v488 = vld [vmem:[%s342] sm:$0xff]
      %v489 = vld [vmem:[%s342 + $0x8] sm:$0xff]
      %v490 = vld [vmem:[%s342 + $0x10] sm:$0xff]
      %v491 = vld [vmem:[%s342 + $0x18] sm:$0xff]
      %v492 = vld [vmem:[%s342 + $0x20] sm:$0xff]
      %v493 = vld [vmem:[%s342 + $0x28] sm:$0xff]
      %v494 = vld [vmem:[%s342 + $0x30] sm:$0xff]
      %v495 = vld [vmem:[%s342 + $0x38] sm:$0xff]
      %v496 = vld [vmem:[%s342 + $0x40] sm:$0xff]
      %v497 = vld [vmem:[%s342 + $0x48] sm:$0xff]
      %v498 = vld [vmem:[%s342 + $0x50] sm:$0xff]
      %v499 = vld [vmem:[%s342 + $0x58] sm:$0xff]
      %v500 = vld [vmem:[%s342 + $0x60] sm:$0xff]
      %v501 = vld [vmem:[%s342 + $0x68] sm:$0xff]
      %v502 = vld [vmem:[%s342 + $0x70] sm:$0xff]
      %v503 = vld [vmem:[%s342 + $0x78] sm:$0xff]
      %v504 = vld [vmem:[%s342 + $0x80] sm:$0xff]
      %v505 = vld [vmem:[%s342 + $0x88] sm:$0xff]
      %v506 = vld [vmem:[%s342 + $0x90] sm:$0xff]
      %v507 = vld [vmem:[%s342 + $0x98] sm:$0xff]
      %v508 = vld [vmem:[%s342 + $0xa0] sm:$0xff]
      %v509 = vld [vmem:[%s342 + $0xa8] sm:$0xff]
      %v510 = vld [vmem:[%s342 + $0xb0] sm:$0xff]
      %v511 = vld [vmem:[%s342 + $0xb8] sm:$0xff]
      %v512 = vld [vmem:[%s342 + $0xc0] sm:$0xff]
      %v513 = vld [vmem:[%s342 + $0xc8] sm:$0xff]
      %v514 = vld [vmem:[%s342 + $0xd0] sm:$0xff]
      %v515 = vld [vmem:[%s342 + $0xd8] sm:$0xff]
      %v516 = vld [vmem:[%s342 + $0xe0] sm:$0xff]
      %v517 = vld [vmem:[%s342 + $0xe8] sm:$0xff]
      %v518 = vld [vmem:[%s342 + $0xf0] sm:$0xff]
      %v519 = vld [vmem:[%s342 + $0xf8] sm:$0xff]
      %s520 = scalar_lea.vmem [#allocation2], 24
      %521 = vst.msk [vmem:[%s520 + $0x1] sm:$0xff] %vm353, %v488
      %522 = vst.msk [vmem:[%s520 + $0x9] sm:$0xff] %vm353, %v489
      %523 = vst.msk [vmem:[%s520 + $0x19] sm:$0xff] %vm353, %v490
      %524 = vst.msk [vmem:[%s520 + $0x21] sm:$0xff] %vm353, %v491
      %525 = vst.msk [vmem:[%s520 + $0x31] sm:$0xff] %vm353, %v492
      %526 = vst.msk [vmem:[%s520 + $0x39] sm:$0xff] %vm353, %v493
      %527 = vst.msk [vmem:[%s520 + $0x49] sm:$0xff] %vm353, %v494
      %528 = vst.msk [vmem:[%s520 + $0x51] sm:$0xff] %vm353, %v495
      %529 = vst.msk [vmem:[%s520 + $0x61] sm:$0xff] %vm353, %v496
      %530 = vst.msk [vmem:[%s520 + $0x69] sm:$0xff] %vm353, %v497
      %531 = vst.msk [vmem:[%s520 + $0x79] sm:$0xff] %vm353, %v498
      %532 = vst.msk [vmem:[%s520 + $0x81] sm:$0xff] %vm353, %v499
      %533 = vst.msk [vmem:[%s520 + $0x91] sm:$0xff] %vm353, %v500
      %534 = vst.msk [vmem:[%s520 + $0x99] sm:$0xff] %vm353, %v501
      %535 = vst.msk [vmem:[%s520 + $0xa9] sm:$0xff] %vm353, %v502
      %536 = vst.msk [vmem:[%s520 + $0xb1] sm:$0xff] %vm353, %v503
      %537 = vst.msk [vmem:[%s520 + $0xc1] sm:$0xff] %vm353, %v504
      %538 = vst.msk [vmem:[%s520 + $0xc9] sm:$0xff] %vm353, %v505
      %539 = vst.msk [vmem:[%s520 + $0xd9] sm:$0xff] %vm353, %v506
      %540 = vst.msk [vmem:[%s520 + $0xe1] sm:$0xff] %vm353, %v507
      %541 = vst.msk [vmem:[%s520 + $0xf1] sm:$0xff] %vm353, %v508
      %542 = vst.msk [vmem:[%s520 + $0xf9] sm:$0xff] %vm353, %v509
      %543 = vst.msk [vmem:[%s520 + $0x109] sm:$0xff] %vm353, %v510
      %544 = vst.msk [vmem:[%s520 + $0x111] sm:$0xff] %vm353, %v511
      %545 = vst.msk [vmem:[%s520 + $0x121] sm:$0xff] %vm353, %v512
      %546 = vst.msk [vmem:[%s520 + $0x129] sm:$0xff] %vm353, %v513
      %547 = vst.msk [vmem:[%s520 + $0x139] sm:$0xff] %vm353, %v514
      %548 = vst.msk [vmem:[%s520 + $0x141] sm:$0xff] %vm353, %v515
      %549 = vst.msk [vmem:[%s520 + $0x151] sm:$0xff] %vm353, %v516
      %550 = vst.msk [vmem:[%s520 + $0x159] sm:$0xff] %vm353, %v517
      %551 = vst.msk [vmem:[%s520 + $0x169] sm:$0xff] %vm353, %v518
      %552 = vst.msk [vmem:[%s520 + $0x171] sm:$0xff] %vm353, %v519
      %v553 = vld [vmem:[%s347] sm:$0xff]
      %v554 = vld [vmem:[%s347 + $0x8] sm:$0xff]
      %v555 = vld [vmem:[%s347 + $0x10] sm:$0xff]
      %v556 = vld [vmem:[%s347 + $0x18] sm:$0xff]
      %v557 = vld [vmem:[%s347 + $0x20] sm:$0xff]
      %v558 = vld [vmem:[%s347 + $0x28] sm:$0xff]
      %v559 = vld [vmem:[%s347 + $0x30] sm:$0xff]
      %v560 = vld [vmem:[%s347 + $0x38] sm:$0xff]
      %v561 = vld [vmem:[%s347 + $0x40] sm:$0xff]
      %v562 = vld [vmem:[%s347 + $0x48] sm:$0xff]
      %v563 = vld [vmem:[%s347 + $0x50] sm:$0xff]
      %v564 = vld [vmem:[%s347 + $0x58] sm:$0xff]
      %v565 = vld [vmem:[%s347 + $0x60] sm:$0xff]
      %v566 = vld [vmem:[%s347 + $0x68] sm:$0xff]
      %v567 = vld [vmem:[%s347 + $0x70] sm:$0xff]
      %v568 = vld [vmem:[%s347 + $0x78] sm:$0xff]
      %v569 = vld [vmem:[%s347 + $0x80] sm:$0xff]
      %v570 = vld [vmem:[%s347 + $0x88] sm:$0xff]
      %v571 = vld [vmem:[%s347 + $0x90] sm:$0xff]
      %v572 = vld [vmem:[%s347 + $0x98] sm:$0xff]
      %v573 = vld [vmem:[%s347 + $0xa0] sm:$0xff]
      %v574 = vld [vmem:[%s347 + $0xa8] sm:$0xff]
      %v575 = vld [vmem:[%s347 + $0xb0] sm:$0xff]
      %v576 = vld [vmem:[%s347 + $0xb8] sm:$0xff]
      %v577 = vld [vmem:[%s347 + $0xc0] sm:$0xff]
      %v578 = vld [vmem:[%s347 + $0xc8] sm:$0xff]
      %v579 = vld [vmem:[%s347 + $0xd0] sm:$0xff]
      %v580 = vld [vmem:[%s347 + $0xd8] sm:$0xff]
      %v581 = vld [vmem:[%s347 + $0xe0] sm:$0xff]
      %v582 = vld [vmem:[%s347 + $0xe8] sm:$0xff]
      %v583 = vld [vmem:[%s347 + $0xf0] sm:$0xff]
      %v584 = vld [vmem:[%s347 + $0xf8] sm:$0xff]
      %s585 = scalar_lea.vmem [#allocation3], 24
      %586 = vst.msk [vmem:[%s585 + $0x1] sm:$0xff] %vm399, %v553
      %587 = vst.msk [vmem:[%s585 + $0x9] sm:$0xff] %vm399, %v554
      %588 = vst.msk [vmem:[%s585 + $0x19] sm:$0xff] %vm399, %v555
      %589 = vst.msk [vmem:[%s585 + $0x21] sm:$0xff] %vm399, %v556
      %590 = vst.msk [vmem:[%s585 + $0x31] sm:$0xff] %vm399, %v557
      %591 = vst.msk [vmem:[%s585 + $0x39] sm:$0xff] %vm399, %v558
      %592 = vst.msk [vmem:[%s585 + $0x49] sm:$0xff] %vm399, %v559
      %593 = vst.msk [vmem:[%s585 + $0x51] sm:$0xff] %vm399, %v560
      %594 = vst.msk [vmem:[%s585 + $0x61] sm:$0xff] %vm399, %v561
      %595 = vst.msk [vmem:[%s585 + $0x69] sm:$0xff] %vm399, %v562
      %596 = vst.msk [vmem:[%s585 + $0x79] sm:$0xff] %vm399, %v563
      %597 = vst.msk [vmem:[%s585 + $0x81] sm:$0xff] %vm399, %v564
      %598 = vst.msk [vmem:[%s585 + $0x91] sm:$0xff] %vm399, %v565
      %599 = vst.msk [vmem:[%s585 + $0x99] sm:$0xff] %vm399, %v566
      %600 = vst.msk [vmem:[%s585 + $0xa9] sm:$0xff] %vm399, %v567
      %601 = vst.msk [vmem:[%s585 + $0xb1] sm:$0xff] %vm399, %v568
      %602 = vst.msk [vmem:[%s585 + $0xc1] sm:$0xff] %vm399, %v569
      %603 = vst.msk [vmem:[%s585 + $0xc9] sm:$0xff] %vm399, %v570
      %604 = vst.msk [vmem:[%s585 + $0xd9] sm:$0xff] %vm399, %v571
      %605 = vst.msk [vmem:[%s585 + $0xe1] sm:$0xff] %vm399, %v572
      %606 = vst.msk [vmem:[%s585 + $0xf1] sm:$0xff] %vm399, %v573
      %607 = vst.msk [vmem:[%s585 + $0xf9] sm:$0xff] %vm399, %v574
      %608 = vst.msk [vmem:[%s585 + $0x109] sm:$0xff] %vm399, %v575
      %609 = vst.msk [vmem:[%s585 + $0x111] sm:$0xff] %vm399, %v576
      %610 = vst.msk [vmem:[%s585 + $0x121] sm:$0xff] %vm399, %v577
      %611 = vst.msk [vmem:[%s585 + $0x129] sm:$0xff] %vm399, %v578
      %612 = vst.msk [vmem:[%s585 + $0x139] sm:$0xff] %vm399, %v579
      %613 = vst.msk [vmem:[%s585 + $0x141] sm:$0xff] %vm399, %v580
      %614 = vst.msk [vmem:[%s585 + $0x151] sm:$0xff] %vm399, %v581
      %615 = vst.msk [vmem:[%s585 + $0x159] sm:$0xff] %vm399, %v582
      %616 = vst.msk [vmem:[%s585 + $0x169] sm:$0xff] %vm399, %v583
      %617 = vst.msk [vmem:[%s585 + $0x171] sm:$0xff] %vm399, %v584
      %v618 = vld [vmem:[#allocation2] sm:$0xff]
      %v619 = vld [vmem:[#allocation2 + $0x8] sm:$0xff]
      %v620 = vld [vmem:[#allocation2 + $0x18] sm:$0xff]
      %v621 = vld [vmem:[#allocation2 + $0x20] sm:$0xff]
      %v622 = vld [vmem:[#allocation2 + $0x30] sm:$0xff]
      %v623 = vld [vmem:[#allocation2 + $0x38] sm:$0xff]
      %v624 = vld [vmem:[#allocation2 + $0x48] sm:$0xff]
      %v625 = vld [vmem:[#allocation2 + $0x50] sm:$0xff]
      %v626 = vld [vmem:[#allocation2 + $0x60] sm:$0xff]
      %v627 = vld [vmem:[#allocation2 + $0x68] sm:$0xff]
      %v628 = vld [vmem:[#allocation2 + $0x78] sm:$0xff]
      %v629 = vld [vmem:[#allocation2 + $0x80] sm:$0xff]
      %v630 = vld [vmem:[#allocation2 + $0x90] sm:$0xff]
      %v631 = vld [vmem:[#allocation2 + $0x98] sm:$0xff]
      %v632 = vld [vmem:[#allocation2 + $0xa8] sm:$0xff]
      %v633 = vld [vmem:[#allocation2 + $0xb0] sm:$0xff]
      %v634 = vld [vmem:[#allocation2 + $0xc0] sm:$0xff]
      %v635 = vld [vmem:[#allocation2 + $0xc8] sm:$0xff]
      %v636 = vld [vmem:[#allocation2 + $0xd8] sm:$0xff]
      %v637 = vld [vmem:[#allocation2 + $0xe0] sm:$0xff]
      %v638 = vld [vmem:[#allocation2 + $0xf0] sm:$0xff]
      %v639 = vld [vmem:[#allocation2 + $0xf8] sm:$0xff]
      %v640 = vld [vmem:[#allocation2 + $0x108] sm:$0xff]
      %v641 = vld [vmem:[#allocation2 + $0x110] sm:$0xff]
      %v642 = vld [vmem:[#allocation2 + $0x120] sm:$0xff]
      %v643 = vld [vmem:[#allocation2 + $0x128] sm:$0xff]
      %v644 = vld [vmem:[#allocation2 + $0x138] sm:$0xff]
      %v645 = vld [vmem:[#allocation2 + $0x140] sm:$0xff]
      %v646 = vld [vmem:[#allocation2 + $0x150] sm:$0xff]
      %v647 = vld [vmem:[#allocation2 + $0x158] sm:$0xff]
      %v648 = vld [vmem:[#allocation2 + $0x168] sm:$0xff]
      %v649 = vld [vmem:[#allocation2 + $0x170] sm:$0xff]
      %650 = vst.msk [vmem:[#allocation5] sm:$0xff] %vm353, %v618
      %651 = vst.msk [vmem:[#allocation5 + $0x10] sm:$0xff] %vm353, %v619
      %652 = vst.msk [vmem:[#allocation5 + $0x20] sm:$0xff] %vm353, %v620
      %653 = vst.msk [vmem:[#allocation5 + $0x30] sm:$0xff] %vm353, %v621
      %654 = vst.msk [vmem:[#allocation5 + $0x40] sm:$0xff] %vm353, %v622
      %655 = vst.msk [vmem:[#allocation5 + $0x50] sm:$0xff] %vm353, %v623
      %656 = vst.msk [vmem:[#allocation5 + $0x60] sm:$0xff] %vm353, %v624
      %657 = vst.msk [vmem:[#allocation5 + $0x70] sm:$0xff] %vm353, %v625
      %658 = vst.msk [vmem:[#allocation5 + $0x80] sm:$0xff] %vm353, %v626
      %659 = vst.msk [vmem:[#allocation5 + $0x90] sm:$0xff] %vm353, %v627
      %660 = vst.msk [vmem:[#allocation5 + $0xa0] sm:$0xff] %vm353, %v628
      %661 = vst.msk [vmem:[#allocation5 + $0xb0] sm:$0xff] %vm353, %v629
      %662 = vst.msk [vmem:[#allocation5 + $0xc0] sm:$0xff] %vm353, %v630
      %663 = vst.msk [vmem:[#allocation5 + $0xd0] sm:$0xff] %vm353, %v631
      %664 = vst.msk [vmem:[#allocation5 + $0xe0] sm:$0xff] %vm353, %v632
      %665 = vst.msk [vmem:[#allocation5 + $0xf0] sm:$0xff] %vm353, %v633
      %666 = vst.msk [vmem:[#allocation5 + $0x100] sm:$0xff] %vm353, %v634
      %667 = vst.msk [vmem:[#allocation5 + $0x110] sm:$0xff] %vm353, %v635
      %668 = vst.msk [vmem:[#allocation5 + $0x120] sm:$0xff] %vm353, %v636
      %669 = vst.msk [vmem:[#allocation5 + $0x130] sm:$0xff] %vm353, %v637
      %670 = vst.msk [vmem:[#allocation5 + $0x140] sm:$0xff] %vm353, %v638
      %671 = vst.msk [vmem:[#allocation5 + $0x150] sm:$0xff] %vm353, %v639
      %672 = vst.msk [vmem:[#allocation5 + $0x160] sm:$0xff] %vm353, %v640
      %673 = vst.msk [vmem:[#allocation5 + $0x170] sm:$0xff] %vm353, %v641
      %674 = vst.msk [vmem:[#allocation5 + $0x180] sm:$0xff] %vm353, %v642
      %675 = vst.msk [vmem:[#allocation5 + $0x190] sm:$0xff] %vm353, %v643
      %676 = vst.msk [vmem:[#allocation5 + $0x1a0] sm:$0xff] %vm353, %v644
      %677 = vst.msk [vmem:[#allocation5 + $0x1b0] sm:$0xff] %vm353, %v645
      %678 = vst.msk [vmem:[#allocation5 + $0x1c0] sm:$0xff] %vm353, %v646
      %679 = vst.msk [vmem:[#allocation5 + $0x1d0] sm:$0xff] %vm353, %v647
      %680 = vst.msk [vmem:[#allocation5 + $0x1e0] sm:$0xff] %vm353, %v648
      %681 = vst.msk [vmem:[#allocation5 + $0x1f0] sm:$0xff] %vm353, %v649
      %v682 = vld [vmem:[#allocation2 + $0x1] sm:$0xff]
      %v683 = vld [vmem:[#allocation2 + $0x9] sm:$0xff]
      %v684 = vld [vmem:[#allocation2 + $0x19] sm:$0xff]
      %v685 = vld [vmem:[#allocation2 + $0x21] sm:$0xff]
      %v686 = vld [vmem:[#allocation2 + $0x31] sm:$0xff]
      %v687 = vld [vmem:[#allocation2 + $0x39] sm:$0xff]
      %v688 = vld [vmem:[#allocation2 + $0x49] sm:$0xff]
      %v689 = vld [vmem:[#allocation2 + $0x51] sm:$0xff]
      %v690 = vld [vmem:[#allocation2 + $0x61] sm:$0xff]
      %v691 = vld [vmem:[#allocation2 + $0x69] sm:$0xff]
      %v692 = vld [vmem:[#allocation2 + $0x79] sm:$0xff]
      %v693 = vld [vmem:[#allocation2 + $0x81] sm:$0xff]
      %v694 = vld [vmem:[#allocation2 + $0x91] sm:$0xff]
      %v695 = vld [vmem:[#allocation2 + $0x99] sm:$0xff]
      %v696 = vld [vmem:[#allocation2 + $0xa9] sm:$0xff]
      %v697 = vld [vmem:[#allocation2 + $0xb1] sm:$0xff]
      %v698 = vld [vmem:[#allocation2 + $0xc1] sm:$0xff]
      %v699 = vld [vmem:[#allocation2 + $0xc9] sm:$0xff]
      %v700 = vld [vmem:[#allocation2 + $0xd9] sm:$0xff]
      %v701 = vld [vmem:[#allocation2 + $0xe1] sm:$0xff]
      %v702 = vld [vmem:[#allocation2 + $0xf1] sm:$0xff]
      %v703 = vld [vmem:[#allocation2 + $0xf9] sm:$0xff]
      %v704 = vld [vmem:[#allocation2 + $0x109] sm:$0xff]
      %v705 = vld [vmem:[#allocation2 + $0x111] sm:$0xff]
      %v706 = vld [vmem:[#allocation2 + $0x121] sm:$0xff]
      %v707 = vld [vmem:[#allocation2 + $0x129] sm:$0xff]
      %v708 = vld [vmem:[#allocation2 + $0x139] sm:$0xff]
      %v709 = vld [vmem:[#allocation2 + $0x141] sm:$0xff]
      %v710 = vld [vmem:[#allocation2 + $0x151] sm:$0xff]
      %v711 = vld [vmem:[#allocation2 + $0x159] sm:$0xff]
      %v712 = vld [vmem:[#allocation2 + $0x169] sm:$0xff]
      %v713 = vld [vmem:[#allocation2 + $0x171] sm:$0xff]
      %746 = vrot.lane.b32.xlu0 %v682, 16
      %v747 = vpop.permute.xlu0 %746
      %748 = vrot.lane.b32.xlu0 %v683, 16
      %v749 = vpop.permute.xlu0 %748
      %750 = vrot.lane.b32.xlu0 %v684, 16
      %v751 = vpop.permute.xlu0 %750
      %752 = vrot.lane.b32.xlu0 %v685, 16
      %v753 = vpop.permute.xlu0 %752
      %754 = vrot.lane.b32.xlu0 %v686, 16
      %v755 = vpop.permute.xlu0 %754
      %756 = vrot.lane.b32.xlu0 %v687, 16
      %v757 = vpop.permute.xlu0 %756
      %758 = vrot.lane.b32.xlu0 %v688, 16
      %v759 = vpop.permute.xlu0 %758
      %760 = vrot.lane.b32.xlu0 %v689, 16
      %v761 = vpop.permute.xlu0 %760
      %762 = vrot.lane.b32.xlu0 %v690, 16
      %v763 = vpop.permute.xlu0 %762
      %764 = vrot.lane.b32.xlu0 %v691, 16
      %v765 = vpop.permute.xlu0 %764
      %766 = vrot.lane.b32.xlu0 %v692, 16
      %v767 = vpop.permute.xlu0 %766
      %768 = vrot.lane.b32.xlu0 %v693, 16
      %v769 = vpop.permute.xlu0 %768
      %770 = vrot.lane.b32.xlu0 %v694, 16
      %v771 = vpop.permute.xlu0 %770
      %772 = vrot.lane.b32.xlu0 %v695, 16
      %v773 = vpop.permute.xlu0 %772
      %774 = vrot.lane.b32.xlu0 %v696, 16
      %v775 = vpop.permute.xlu0 %774
      %776 = vrot.lane.b32.xlu0 %v697, 16
      %v777 = vpop.permute.xlu0 %776
      %778 = vrot.lane.b32.xlu0 %v698, 16
      %v779 = vpop.permute.xlu0 %778
      %780 = vrot.lane.b32.xlu0 %v699, 16
      %v781 = vpop.permute.xlu0 %780
      %782 = vrot.lane.b32.xlu0 %v700, 16
      %v783 = vpop.permute.xlu0 %782
      %784 = vrot.lane.b32.xlu0 %v701, 16
      %v785 = vpop.permute.xlu0 %784
      %786 = vrot.lane.b32.xlu0 %v702, 16
      %v787 = vpop.permute.xlu0 %786
      %788 = vrot.lane.b32.xlu0 %v703, 16
      %v789 = vpop.permute.xlu0 %788
      %790 = vrot.lane.b32.xlu0 %v704, 16
      %v791 = vpop.permute.xlu0 %790
      %792 = vrot.lane.b32.xlu0 %v705, 16
      %v793 = vpop.permute.xlu0 %792
      %794 = vrot.lane.b32.xlu0 %v706, 16
      %v795 = vpop.permute.xlu0 %794
      %796 = vrot.lane.b32.xlu0 %v707, 16
      %v797 = vpop.permute.xlu0 %796
      %798 = vrot.lane.b32.xlu0 %v708, 16
      %v799 = vpop.permute.xlu0 %798
      %800 = vrot.lane.b32.xlu0 %v709, 16
      %v801 = vpop.permute.xlu0 %800
      %802 = vrot.lane.b32.xlu0 %v710, 16
      %v803 = vpop.permute.xlu0 %802
      %804 = vrot.lane.b32.xlu0 %v711, 16
      %v805 = vpop.permute.xlu0 %804
      %806 = vrot.lane.b32.xlu0 %v712, 16
      %v807 = vpop.permute.xlu0 %806
      %808 = vrot.lane.b32.xlu0 %v713, 16
      %v809 = vpop.permute.xlu0 %808
      %vm842 = vcmask 261248
      %843 = vst.msk [vmem:[#allocation5] sm:$0xff] %vm842, %v747
      %844 = vst.msk [vmem:[#allocation5 + $0x10] sm:$0xff] %vm842, %v749
      %845 = vst.msk [vmem:[#allocation5 + $0x20] sm:$0xff] %vm842, %v751
      %846 = vst.msk [vmem:[#allocation5 + $0x30] sm:$0xff] %vm842, %v753
      %847 = vst.msk [vmem:[#allocation5 + $0x40] sm:$0xff] %vm842, %v755
      %848 = vst.msk [vmem:[#allocation5 + $0x50] sm:$0xff] %vm842, %v757
      %849 = vst.msk [vmem:[#allocation5 + $0x60] sm:$0xff] %vm842, %v759
      %850 = vst.msk [vmem:[#allocation5 + $0x70] sm:$0xff] %vm842, %v761
      %851 = vst.msk [vmem:[#allocation5 + $0x80] sm:$0xff] %vm842, %v763
      %852 = vst.msk [vmem:[#allocation5 + $0x90] sm:$0xff] %vm842, %v765
      %853 = vst.msk [vmem:[#allocation5 + $0xa0] sm:$0xff] %vm842, %v767
      %854 = vst.msk [vmem:[#allocation5 + $0xb0] sm:$0xff] %vm842, %v769
      %855 = vst.msk [vmem:[#allocation5 + $0xc0] sm:$0xff] %vm842, %v771
      %856 = vst.msk [vmem:[#allocation5 + $0xd0] sm:$0xff] %vm842, %v773
      %857 = vst.msk [vmem:[#allocation5 + $0xe0] sm:$0xff] %vm842, %v775
      %858 = vst.msk [vmem:[#allocation5 + $0xf0] sm:$0xff] %vm842, %v777
      %859 = vst.msk [vmem:[#allocation5 + $0x100] sm:$0xff] %vm842, %v779
      %860 = vst.msk [vmem:[#allocation5 + $0x110] sm:$0xff] %vm842, %v781
      %861 = vst.msk [vmem:[#allocation5 + $0x120] sm:$0xff] %vm842, %v783
      %862 = vst.msk [vmem:[#allocation5 + $0x130] sm:$0xff] %vm842, %v785
      %863 = vst.msk [vmem:[#allocation5 + $0x140] sm:$0xff] %vm842, %v787
      %864 = vst.msk [vmem:[#allocation5 + $0x150] sm:$0xff] %vm842, %v789
      %865 = vst.msk [vmem:[#allocation5 + $0x160] sm:$0xff] %vm842, %v791
      %866 = vst.msk [vmem:[#allocation5 + $0x170] sm:$0xff] %vm842, %v793
      %867 = vst.msk [vmem:[#allocation5 + $0x180] sm:$0xff] %vm842, %v795
      %868 = vst.msk [vmem:[#allocation5 + $0x190] sm:$0xff] %vm842, %v797
      %869 = vst.msk [vmem:[#allocation5 + $0x1a0] sm:$0xff] %vm842, %v799
      %870 = vst.msk [vmem:[#allocation5 + $0x1b0] sm:$0xff] %vm842, %v801
      %871 = vst.msk [vmem:[#allocation5 + $0x1c0] sm:$0xff] %vm842, %v803
      %872 = vst.msk [vmem:[#allocation5 + $0x1d0] sm:$0xff] %vm842, %v805
      %873 = vst.msk [vmem:[#allocation5 + $0x1e0] sm:$0xff] %vm842, %v807
      %874 = vst.msk [vmem:[#allocation5 + $0x1f0] sm:$0xff] %vm842, %v809
      %v875 = vld [vmem:[#allocation2 + $0x2] sm:$0xff]
      %v876 = vld [vmem:[#allocation2 + $0xa] sm:$0xff]
      %v877 = vld [vmem:[#allocation2 + $0x1a] sm:$0xff]
      %v878 = vld [vmem:[#allocation2 + $0x22] sm:$0xff]
      %v879 = vld [vmem:[#allocation2 + $0x32] sm:$0xff]
      %v880 = vld [vmem:[#allocation2 + $0x3a] sm:$0xff]
      %v881 = vld [vmem:[#allocation2 + $0x4a] sm:$0xff]
      %v882 = vld [vmem:[#allocation2 + $0x52] sm:$0xff]
      %v883 = vld [vmem:[#allocation2 + $0x62] sm:$0xff]
      %v884 = vld [vmem:[#allocation2 + $0x6a] sm:$0xff]
      %v885 = vld [vmem:[#allocation2 + $0x7a] sm:$0xff]
      %v886 = vld [vmem:[#allocation2 + $0x82] sm:$0xff]
      %v887 = vld [vmem:[#allocation2 + $0x92] sm:$0xff]
      %v888 = vld [vmem:[#allocation2 + $0x9a] sm:$0xff]
      %v889 = vld [vmem:[#allocation2 + $0xaa] sm:$0xff]
      %v890 = vld [vmem:[#allocation2 + $0xb2] sm:$0xff]
      %v891 = vld [vmem:[#allocation2 + $0xc2] sm:$0xff]
      %v892 = vld [vmem:[#allocation2 + $0xca] sm:$0xff]
      %v893 = vld [vmem:[#allocation2 + $0xda] sm:$0xff]
      %v894 = vld [vmem:[#allocation2 + $0xe2] sm:$0xff]
      %v895 = vld [vmem:[#allocation2 + $0xf2] sm:$0xff]
      %v896 = vld [vmem:[#allocation2 + $0xfa] sm:$0xff]
      %v897 = vld [vmem:[#allocation2 + $0x10a] sm:$0xff]
      %v898 = vld [vmem:[#allocation2 + $0x112] sm:$0xff]
      %v899 = vld [vmem:[#allocation2 + $0x122] sm:$0xff]
      %v900 = vld [vmem:[#allocation2 + $0x12a] sm:$0xff]
      %v901 = vld [vmem:[#allocation2 + $0x13a] sm:$0xff]
      %v902 = vld [vmem:[#allocation2 + $0x142] sm:$0xff]
      %v903 = vld [vmem:[#allocation2 + $0x152] sm:$0xff]
      %v904 = vld [vmem:[#allocation2 + $0x15a] sm:$0xff]
      %v905 = vld [vmem:[#allocation2 + $0x16a] sm:$0xff]
      %v906 = vld [vmem:[#allocation2 + $0x172] sm:$0xff]
      %939 = vrot.lane.b32.xlu0 %v875, 32
      %v940 = vpop.permute.xlu0 %939
      %941 = vrot.lane.b32.xlu0 %v876, 32
      %v942 = vpop.permute.xlu0 %941
      %943 = vrot.lane.b32.xlu0 %v877, 32
      %v944 = vpop.permute.xlu0 %943
      %945 = vrot.lane.b32.xlu0 %v878, 32
      %v946 = vpop.permute.xlu0 %945
      %947 = vrot.lane.b32.xlu0 %v879, 32
      %v948 = vpop.permute.xlu0 %947
      %949 = vrot.lane.b32.xlu0 %v880, 32
      %v950 = vpop.permute.xlu0 %949
      %951 = vrot.lane.b32.xlu0 %v881, 32
      %v952 = vpop.permute.xlu0 %951
      %953 = vrot.lane.b32.xlu0 %v882, 32
      %v954 = vpop.permute.xlu0 %953
      %955 = vrot.lane.b32.xlu0 %v883, 32
      %v956 = vpop.permute.xlu0 %955
      %957 = vrot.lane.b32.xlu0 %v884, 32
      %v958 = vpop.permute.xlu0 %957
      %959 = vrot.lane.b32.xlu0 %v885, 32
      %v960 = vpop.permute.xlu0 %959
      %961 = vrot.lane.b32.xlu0 %v886, 32
      %v962 = vpop.permute.xlu0 %961
      %963 = vrot.lane.b32.xlu0 %v887, 32
      %v964 = vpop.permute.xlu0 %963
      %965 = vrot.lane.b32.xlu0 %v888, 32
      %v966 = vpop.permute.xlu0 %965
      %967 = vrot.lane.b32.xlu0 %v889, 32
      %v968 = vpop.permute.xlu0 %967
      %969 = vrot.lane.b32.xlu0 %v890, 32
      %v970 = vpop.permute.xlu0 %969
      %971 = vrot.lane.b32.xlu0 %v891, 32
      %v972 = vpop.permute.xlu0 %971
      %973 = vrot.lane.b32.xlu0 %v892, 32
      %v974 = vpop.permute.xlu0 %973
      %975 = vrot.lane.b32.xlu0 %v893, 32
      %v976 = vpop.permute.xlu0 %975
      %977 = vrot.lane.b32.xlu0 %v894, 32
      %v978 = vpop.permute.xlu0 %977
      %979 = vrot.lane.b32.xlu0 %v895, 32
      %v980 = vpop.permute.xlu0 %979
      %981 = vrot.lane.b32.xlu0 %v896, 32
      %v982 = vpop.permute.xlu0 %981
      %983 = vrot.lane.b32.xlu0 %v897, 32
      %v984 = vpop.permute.xlu0 %983
      %985 = vrot.lane.b32.xlu0 %v898, 32
      %v986 = vpop.permute.xlu0 %985
      %987 = vrot.lane.b32.xlu0 %v899, 32
      %v988 = vpop.permute.xlu0 %987
      %989 = vrot.lane.b32.xlu0 %v900, 32
      %v990 = vpop.permute.xlu0 %989
      %991 = vrot.lane.b32.xlu0 %v901, 32
      %v992 = vpop.permute.xlu0 %991
      %993 = vrot.lane.b32.xlu0 %v902, 32
      %v994 = vpop.permute.xlu0 %993
      %995 = vrot.lane.b32.xlu0 %v903, 32
      %v996 = vpop.permute.xlu0 %995
      %997 = vrot.lane.b32.xlu0 %v904, 32
      %v998 = vpop.permute.xlu0 %997
      %999 = vrot.lane.b32.xlu0 %v905, 32
      %v1000 = vpop.permute.xlu0 %999
      %1001 = vrot.lane.b32.xlu0 %v906, 32
      %v1002 = vpop.permute.xlu0 %1001
      %vm1035 = vcmask 392448
      %1036 = vst.msk [vmem:[#allocation5] sm:$0xff] %vm1035, %v940
      %1037 = vst.msk [vmem:[#allocation5 + $0x10] sm:$0xff] %vm1035, %v942
      %1038 = vst.msk [vmem:[#allocation5 + $0x20] sm:$0xff] %vm1035, %v944
      %1039 = vst.msk [vmem:[#allocation5 + $0x30] sm:$0xff] %vm1035, %v946
      %1040 = vst.msk [vmem:[#allocation5 + $0x40] sm:$0xff] %vm1035, %v948
      %1041 = vst.msk [vmem:[#allocation5 + $0x50] sm:$0xff] %vm1035, %v950
      %1042 = vst.msk [vmem:[#allocation5 + $0x60] sm:$0xff] %vm1035, %v952
      %1043 = vst.msk [vmem:[#allocation5 + $0x70] sm:$0xff] %vm1035, %v954
      %1044 = vst.msk [vmem:[#allocation5 + $0x80] sm:$0xff] %vm1035, %v956
      %1045 = vst.msk [vmem:[#allocation5 + $0x90] sm:$0xff] %vm1035, %v958
      %1046 = vst.msk [vmem:[#allocation5 + $0xa0] sm:$0xff] %vm1035, %v960
      %1047 = vst.msk [vmem:[#allocation5 + $0xb0] sm:$0xff] %vm1035, %v962
      %1048 = vst.msk [vmem:[#allocation5 + $0xc0] sm:$0xff] %vm1035, %v964
      %1049 = vst.msk [vmem:[#allocation5 + $0xd0] sm:$0xff] %vm1035, %v966
      %1050 = vst.msk [vmem:[#allocation5 + $0xe0] sm:$0xff] %vm1035, %v968
      %1051 = vst.msk [vmem:[#allocation5 + $0xf0] sm:$0xff] %vm1035, %v970
      %1052 = vst.msk [vmem:[#allocation5 + $0x100] sm:$0xff] %vm1035, %v972
      %1053 = vst.msk [vmem:[#allocation5 + $0x110] sm:$0xff] %vm1035, %v974
      %1054 = vst.msk [vmem:[#allocation5 + $0x120] sm:$0xff] %vm1035, %v976
      %1055 = vst.msk [vmem:[#allocation5 + $0x130] sm:$0xff] %vm1035, %v978
      %1056 = vst.msk [vmem:[#allocation5 + $0x140] sm:$0xff] %vm1035, %v980
      %1057 = vst.msk [vmem:[#allocation5 + $0x150] sm:$0xff] %vm1035, %v982
      %1058 = vst.msk [vmem:[#allocation5 + $0x160] sm:$0xff] %vm1035, %v984
      %1059 = vst.msk [vmem:[#allocation5 + $0x170] sm:$0xff] %vm1035, %v986
      %1060 = vst.msk [vmem:[#allocation5 + $0x180] sm:$0xff] %vm1035, %v988
      %1061 = vst.msk [vmem:[#allocation5 + $0x190] sm:$0xff] %vm1035, %v990
      %1062 = vst.msk [vmem:[#allocation5 + $0x1a0] sm:$0xff] %vm1035, %v992
      %1063 = vst.msk [vmem:[#allocation5 + $0x1b0] sm:$0xff] %vm1035, %v994
      %1064 = vst.msk [vmem:[#allocation5 + $0x1c0] sm:$0xff] %vm1035, %v996
      %1065 = vst.msk [vmem:[#allocation5 + $0x1d0] sm:$0xff] %vm1035, %v998
      %1066 = vst.msk [vmem:[#allocation5 + $0x1e0] sm:$0xff] %vm1035, %v1000
      %1067 = vst.msk [vmem:[#allocation5 + $0x1f0] sm:$0xff] %vm1035, %v1002
      %v1068 = vld [vmem:[%s520] sm:$0xff]
      %v1069 = vld [vmem:[%s520 + $0x8] sm:$0xff]
      %v1070 = vld [vmem:[%s520 + $0x18] sm:$0xff]
      %v1071 = vld [vmem:[%s520 + $0x20] sm:$0xff]
      %v1072 = vld [vmem:[%s520 + $0x30] sm:$0xff]
      %v1073 = vld [vmem:[%s520 + $0x38] sm:$0xff]
      %v1074 = vld [vmem:[%s520 + $0x48] sm:$0xff]
      %v1075 = vld [vmem:[%s520 + $0x50] sm:$0xff]
      %v1076 = vld [vmem:[%s520 + $0x60] sm:$0xff]
      %v1077 = vld [vmem:[%s520 + $0x68] sm:$0xff]
      %v1078 = vld [vmem:[%s520 + $0x78] sm:$0xff]
      %v1079 = vld [vmem:[%s520 + $0x80] sm:$0xff]
      %v1080 = vld [vmem:[%s520 + $0x90] sm:$0xff]
      %v1081 = vld [vmem:[%s520 + $0x98] sm:$0xff]
      %v1082 = vld [vmem:[%s520 + $0xa8] sm:$0xff]
      %v1083 = vld [vmem:[%s520 + $0xb0] sm:$0xff]
      %v1084 = vld [vmem:[%s520 + $0xc0] sm:$0xff]
      %v1085 = vld [vmem:[%s520 + $0xc8] sm:$0xff]
      %v1086 = vld [vmem:[%s520 + $0xd8] sm:$0xff]
      %v1087 = vld [vmem:[%s520 + $0xe0] sm:$0xff]
      %v1088 = vld [vmem:[%s520 + $0xf0] sm:$0xff]
      %v1089 = vld [vmem:[%s520 + $0xf8] sm:$0xff]
      %v1090 = vld [vmem:[%s520 + $0x108] sm:$0xff]
      %v1091 = vld [vmem:[%s520 + $0x110] sm:$0xff]
      %v1092 = vld [vmem:[%s520 + $0x120] sm:$0xff]
      %v1093 = vld [vmem:[%s520 + $0x128] sm:$0xff]
      %v1094 = vld [vmem:[%s520 + $0x138] sm:$0xff]
      %v1095 = vld [vmem:[%s520 + $0x140] sm:$0xff]
      %v1096 = vld [vmem:[%s520 + $0x150] sm:$0xff]
      %v1097 = vld [vmem:[%s520 + $0x158] sm:$0xff]
      %v1098 = vld [vmem:[%s520 + $0x168] sm:$0xff]
      %v1099 = vld [vmem:[%s520 + $0x170] sm:$0xff]
      %1132 = vrot.lane.b32.xlu0 %v1068, 48
      %v1133 = vpop.permute.xlu0 %1132
      %1134 = vrot.lane.b32.xlu0 %v1069, 48
      %v1135 = vpop.permute.xlu0 %1134
      %1136 = vrot.lane.b32.xlu0 %v1070, 48
      %v1137 = vpop.permute.xlu0 %1136
      %1138 = vrot.lane.b32.xlu0 %v1071, 48
      %v1139 = vpop.permute.xlu0 %1138
      %1140 = vrot.lane.b32.xlu0 %v1072, 48
      %v1141 = vpop.permute.xlu0 %1140
      %1142 = vrot.lane.b32.xlu0 %v1073, 48
      %v1143 = vpop.permute.xlu0 %1142
      %1144 = vrot.lane.b32.xlu0 %v1074, 48
      %v1145 = vpop.permute.xlu0 %1144
      %1146 = vrot.lane.b32.xlu0 %v1075, 48
      %v1147 = vpop.permute.xlu0 %1146
      %1148 = vrot.lane.b32.xlu0 %v1076, 48
      %v1149 = vpop.permute.xlu0 %1148
      %1150 = vrot.lane.b32.xlu0 %v1077, 48
      %v1151 = vpop.permute.xlu0 %1150
      %1152 = vrot.lane.b32.xlu0 %v1078, 48
      %v1153 = vpop.permute.xlu0 %1152
      %1154 = vrot.lane.b32.xlu0 %v1079, 48
      %v1155 = vpop.permute.xlu0 %1154
      %1156 = vrot.lane.b32.xlu0 %v1080, 48
      %v1157 = vpop.permute.xlu0 %1156
      %1158 = vrot.lane.b32.xlu0 %v1081, 48
      %v1159 = vpop.permute.xlu0 %1158
      %1160 = vrot.lane.b32.xlu0 %v1082, 48
      %v1161 = vpop.permute.xlu0 %1160
      %1162 = vrot.lane.b32.xlu0 %v1083, 48
      %v1163 = vpop.permute.xlu0 %1162
      %1164 = vrot.lane.b32.xlu0 %v1084, 48
      %v1165 = vpop.permute.xlu0 %1164
      %1166 = vrot.lane.b32.xlu0 %v1085, 48
      %v1167 = vpop.permute.xlu0 %1166
      %1168 = vrot.lane.b32.xlu0 %v1086, 48
      %v1169 = vpop.permute.xlu0 %1168
      %1170 = vrot.lane.b32.xlu0 %v1087, 48
      %v1171 = vpop.permute.xlu0 %1170
      %1172 = vrot.lane.b32.xlu0 %v1088, 48
      %v1173 = vpop.permute.xlu0 %1172
      %1174 = vrot.lane.b32.xlu0 %v1089, 48
      %v1175 = vpop.permute.xlu0 %1174
      %1176 = vrot.lane.b32.xlu0 %v1090, 48
      %v1177 = vpop.permute.xlu0 %1176
      %1178 = vrot.lane.b32.xlu0 %v1091, 48
      %v1179 = vpop.permute.xlu0 %1178
      %1180 = vrot.lane.b32.xlu0 %v1092, 48
      %v1181 = vpop.permute.xlu0 %1180
      %1182 = vrot.lane.b32.xlu0 %v1093, 48
      %v1183 = vpop.permute.xlu0 %1182
      %1184 = vrot.lane.b32.xlu0 %v1094, 48
      %v1185 = vpop.permute.xlu0 %1184
      %1186 = vrot.lane.b32.xlu0 %v1095, 48
      %v1187 = vpop.permute.xlu0 %1186
      %1188 = vrot.lane.b32.xlu0 %v1096, 48
      %v1189 = vpop.permute.xlu0 %1188
      %1190 = vrot.lane.b32.xlu0 %v1097, 48
      %v1191 = vpop.permute.xlu0 %1190
      %1192 = vrot.lane.b32.xlu0 %v1098, 48
      %v1193 = vpop.permute.xlu0 %1192
      %1194 = vrot.lane.b32.xlu0 %v1099, 48
      %v1195 = vpop.permute.xlu0 %1194
      %vm1228 = vcmask 523648
      %1229 = vst.msk [vmem:[#allocation5] sm:$0xff] %vm1228, %v1133
      %1230 = vst.msk [vmem:[#allocation5 + $0x10] sm:$0xff] %vm1228, %v1135
      %1231 = vst.msk [vmem:[#allocation5 + $0x20] sm:$0xff] %vm1228, %v1137
      %1232 = vst.msk [vmem:[#allocation5 + $0x30] sm:$0xff] %vm1228, %v1139
      %1233 = vst.msk [vmem:[#allocation5 + $0x40] sm:$0xff] %vm1228, %v1141
      %1234 = vst.msk [vmem:[#allocation5 + $0x50] sm:$0xff] %vm1228, %v1143
      %1235 = vst.msk [vmem:[#allocation5 + $0x60] sm:$0xff] %vm1228, %v1145
      %1236 = vst.msk [vmem:[#allocation5 + $0x70] sm:$0xff] %vm1228, %v1147
      %1237 = vst.msk [vmem:[#allocation5 + $0x80] sm:$0xff] %vm1228, %v1149
      %1238 = vst.msk [vmem:[#allocation5 + $0x90] sm:$0xff] %vm1228, %v1151
      %1239 = vst.msk [vmem:[#allocation5 + $0xa0] sm:$0xff] %vm1228, %v1153
      %1240 = vst.msk [vmem:[#allocation5 + $0xb0] sm:$0xff] %vm1228, %v1155
      %1241 = vst.msk [vmem:[#allocation5 + $0xc0] sm:$0xff] %vm1228, %v1157
      %1242 = vst.msk [vmem:[#allocation5 + $0xd0] sm:$0xff] %vm1228, %v1159
      %1243 = vst.msk [vmem:[#allocation5 + $0xe0] sm:$0xff] %vm1228, %v1161
      %1244 = vst.msk [vmem:[#allocation5 + $0xf0] sm:$0xff] %vm1228, %v1163
      %1245 = vst.msk [vmem:[#allocation5 + $0x100] sm:$0xff] %vm1228, %v1165
      %1246 = vst.msk [vmem:[#allocation5 + $0x110] sm:$0xff] %vm1228, %v1167
      %1247 = vst.msk [vmem:[#allocation5 + $0x120] sm:$0xff] %vm1228, %v1169
      %1248 = vst.msk [vmem:[#allocation5 + $0x130] sm:$0xff] %vm1228, %v1171
      %1249 = vst.msk [vmem:[#allocation5 + $0x140] sm:$0xff] %vm1228, %v1173
      %1250 = vst.msk [vmem:[#allocation5 + $0x150] sm:$0xff] %vm1228, %v1175
      %1251 = vst.msk [vmem:[#allocation5 + $0x160] sm:$0xff] %vm1228, %v1177
      %1252 = vst.msk [vmem:[#allocation5 + $0x170] sm:$0xff] %vm1228, %v1179
      %1253 = vst.msk [vmem:[#allocation5 + $0x180] sm:$0xff] %vm1228, %v1181
      %1254 = vst.msk [vmem:[#allocation5 + $0x190] sm:$0xff] %vm1228, %v1183
      %1255 = vst.msk [vmem:[#allocation5 + $0x1a0] sm:$0xff] %vm1228, %v1185
      %1256 = vst.msk [vmem:[#allocation5 + $0x1b0] sm:$0xff] %vm1228, %v1187
      %1257 = vst.msk [vmem:[#allocation5 + $0x1c0] sm:$0xff] %vm1228, %v1189
      %1258 = vst.msk [vmem:[#allocation5 + $0x1d0] sm:$0xff] %vm1228, %v1191
      %1259 = vst.msk [vmem:[#allocation5 + $0x1e0] sm:$0xff] %vm1228, %v1193
      %1260 = vst.msk [vmem:[#allocation5 + $0x1f0] sm:$0xff] %vm1228, %v1195
      %v1261 = vld [vmem:[%s520 + $0x1] sm:$0xff]
      %v1262 = vld [vmem:[%s520 + $0x9] sm:$0xff]
      %v1263 = vld [vmem:[%s520 + $0x19] sm:$0xff]
      %v1264 = vld [vmem:[%s520 + $0x21] sm:$0xff]
      %v1265 = vld [vmem:[%s520 + $0x31] sm:$0xff]
      %v1266 = vld [vmem:[%s520 + $0x39] sm:$0xff]
      %v1267 = vld [vmem:[%s520 + $0x49] sm:$0xff]
      %v1268 = vld [vmem:[%s520 + $0x51] sm:$0xff]
      %v1269 = vld [vmem:[%s520 + $0x61] sm:$0xff]
      %v1270 = vld [vmem:[%s520 + $0x69] sm:$0xff]
      %v1271 = vld [vmem:[%s520 + $0x79] sm:$0xff]
      %v1272 = vld [vmem:[%s520 + $0x81] sm:$0xff]
      %v1273 = vld [vmem:[%s520 + $0x91] sm:$0xff]
      %v1274 = vld [vmem:[%s520 + $0x99] sm:$0xff]
      %v1275 = vld [vmem:[%s520 + $0xa9] sm:$0xff]
      %v1276 = vld [vmem:[%s520 + $0xb1] sm:$0xff]
      %v1277 = vld [vmem:[%s520 + $0xc1] sm:$0xff]
      %v1278 = vld [vmem:[%s520 + $0xc9] sm:$0xff]
      %v1279 = vld [vmem:[%s520 + $0xd9] sm:$0xff]
      %v1280 = vld [vmem:[%s520 + $0xe1] sm:$0xff]
      %v1281 = vld [vmem:[%s520 + $0xf1] sm:$0xff]
      %v1282 = vld [vmem:[%s520 + $0xf9] sm:$0xff]
      %v1283 = vld [vmem:[%s520 + $0x109] sm:$0xff]
      %v1284 = vld [vmem:[%s520 + $0x111] sm:$0xff]
      %v1285 = vld [vmem:[%s520 + $0x121] sm:$0xff]
      %v1286 = vld [vmem:[%s520 + $0x129] sm:$0xff]
      %v1287 = vld [vmem:[%s520 + $0x139] sm:$0xff]
      %v1288 = vld [vmem:[%s520 + $0x141] sm:$0xff]
      %v1289 = vld [vmem:[%s520 + $0x151] sm:$0xff]
      %v1290 = vld [vmem:[%s520 + $0x159] sm:$0xff]
      %v1291 = vld [vmem:[%s520 + $0x169] sm:$0xff]
      %v1292 = vld [vmem:[%s520 + $0x171] sm:$0xff]
      %1325 = vrot.lane.b32.xlu0 %v1261, 64
      %v1326 = vpop.permute.xlu0 %1325
      %1327 = vrot.lane.b32.xlu0 %v1262, 64
      %v1328 = vpop.permute.xlu0 %1327
      %1329 = vrot.lane.b32.xlu0 %v1263, 64
      %v1330 = vpop.permute.xlu0 %1329
      %1331 = vrot.lane.b32.xlu0 %v1264, 64
      %v1332 = vpop.permute.xlu0 %1331
      %1333 = vrot.lane.b32.xlu0 %v1265, 64
      %v1334 = vpop.permute.xlu0 %1333
      %1335 = vrot.lane.b32.xlu0 %v1266, 64
      %v1336 = vpop.permute.xlu0 %1335
      %1337 = vrot.lane.b32.xlu0 %v1267, 64
      %v1338 = vpop.permute.xlu0 %1337
      %1339 = vrot.lane.b32.xlu0 %v1268, 64
      %v1340 = vpop.permute.xlu0 %1339
      %1341 = vrot.lane.b32.xlu0 %v1269, 64
      %v1342 = vpop.permute.xlu0 %1341
      %1343 = vrot.lane.b32.xlu0 %v1270, 64
      %v1344 = vpop.permute.xlu0 %1343
      %1345 = vrot.lane.b32.xlu0 %v1271, 64
      %v1346 = vpop.permute.xlu0 %1345
      %1347 = vrot.lane.b32.xlu0 %v1272, 64
      %v1348 = vpop.permute.xlu0 %1347
      %1349 = vrot.lane.b32.xlu0 %v1273, 64
      %v1350 = vpop.permute.xlu0 %1349
      %1351 = vrot.lane.b32.xlu0 %v1274, 64
      %v1352 = vpop.permute.xlu0 %1351
      %1353 = vrot.lane.b32.xlu0 %v1275, 64
      %v1354 = vpop.permute.xlu0 %1353
      %1355 = vrot.lane.b32.xlu0 %v1276, 64
      %v1356 = vpop.permute.xlu0 %1355
      %1357 = vrot.lane.b32.xlu0 %v1277, 64
      %v1358 = vpop.permute.xlu0 %1357
      %1359 = vrot.lane.b32.xlu0 %v1278, 64
      %v1360 = vpop.permute.xlu0 %1359
      %1361 = vrot.lane.b32.xlu0 %v1279, 64
      %v1362 = vpop.permute.xlu0 %1361
      %1363 = vrot.lane.b32.xlu0 %v1280, 64
      %v1364 = vpop.permute.xlu0 %1363
      %1365 = vrot.lane.b32.xlu0 %v1281, 64
      %v1366 = vpop.permute.xlu0 %1365
      %1367 = vrot.lane.b32.xlu0 %v1282, 64
      %v1368 = vpop.permute.xlu0 %1367
      %1369 = vrot.lane.b32.xlu0 %v1283, 64
      %v1370 = vpop.permute.xlu0 %1369
      %1371 = vrot.lane.b32.xlu0 %v1284, 64
      %v1372 = vpop.permute.xlu0 %1371
      %1373 = vrot.lane.b32.xlu0 %v1285, 64
      %v1374 = vpop.permute.xlu0 %1373
      %1375 = vrot.lane.b32.xlu0 %v1286, 64
      %v1376 = vpop.permute.xlu0 %1375
      %1377 = vrot.lane.b32.xlu0 %v1287, 64
      %v1378 = vpop.permute.xlu0 %1377
      %1379 = vrot.lane.b32.xlu0 %v1288, 64
      %v1380 = vpop.permute.xlu0 %1379
      %1381 = vrot.lane.b32.xlu0 %v1289, 64
      %v1382 = vpop.permute.xlu0 %1381
      %1383 = vrot.lane.b32.xlu0 %v1290, 64
      %v1384 = vpop.permute.xlu0 %1383
      %1385 = vrot.lane.b32.xlu0 %v1291, 64
      %v1386 = vpop.permute.xlu0 %1385
      %1387 = vrot.lane.b32.xlu0 %v1292, 64
      %v1388 = vpop.permute.xlu0 %1387
      %vm1421 = vcmask 654848
      %1422 = vst.msk [vmem:[#allocation5] sm:$0xff] %vm1421, %v1326
      %1423 = vst.msk [vmem:[#allocation5 + $0x10] sm:$0xff] %vm1421, %v1328
      %1424 = vst.msk [vmem:[#allocation5 + $0x20] sm:$0xff] %vm1421, %v1330
      %1425 = vst.msk [vmem:[#allocation5 + $0x30] sm:$0xff] %vm1421, %v1332
      %1426 = vst.msk [vmem:[#allocation5 + $0x40] sm:$0xff] %vm1421, %v1334
      %1427 = vst.msk [vmem:[#allocation5 + $0x50] sm:$0xff] %vm1421, %v1336
      %1428 = vst.msk [vmem:[#allocation5 + $0x60] sm:$0xff] %vm1421, %v1338
      %1429 = vst.msk [vmem:[#allocation5 + $0x70] sm:$0xff] %vm1421, %v1340
      %1430 = vst.msk [vmem:[#allocation5 + $0x80] sm:$0xff] %vm1421, %v1342
      %1431 = vst.msk [vmem:[#allocation5 + $0x90] sm:$0xff] %vm1421, %v1344
      %1432 = vst.msk [vmem:[#allocation5 + $0xa0] sm:$0xff] %vm1421, %v1346
      %1433 = vst.msk [vmem:[#allocation5 + $0xb0] sm:$0xff] %vm1421, %v1348
      %1434 = vst.msk [vmem:[#allocation5 + $0xc0] sm:$0xff] %vm1421, %v1350
      %1435 = vst.msk [vmem:[#allocation5 + $0xd0] sm:$0xff] %vm1421, %v1352
      %1436 = vst.msk [vmem:[#allocation5 + $0xe0] sm:$0xff] %vm1421, %v1354
      %1437 = vst.msk [vmem:[#allocation5 + $0xf0] sm:$0xff] %vm1421, %v1356
      %1438 = vst.msk [vmem:[#allocation5 + $0x100] sm:$0xff] %vm1421, %v1358
      %1439 = vst.msk [vmem:[#allocation5 + $0x110] sm:$0xff] %vm1421, %v1360
      %1440 = vst.msk [vmem:[#allocation5 + $0x120] sm:$0xff] %vm1421, %v1362
      %1441 = vst.msk [vmem:[#allocation5 + $0x130] sm:$0xff] %vm1421, %v1364
      %1442 = vst.msk [vmem:[#allocation5 + $0x140] sm:$0xff] %vm1421, %v1366
      %1443 = vst.msk [vmem:[#allocation5 + $0x150] sm:$0xff] %vm1421, %v1368
      %1444 = vst.msk [vmem:[#allocation5 + $0x160] sm:$0xff] %vm1421, %v1370
      %1445 = vst.msk [vmem:[#allocation5 + $0x170] sm:$0xff] %vm1421, %v1372
      %1446 = vst.msk [vmem:[#allocation5 + $0x180] sm:$0xff] %vm1421, %v1374
      %1447 = vst.msk [vmem:[#allocation5 + $0x190] sm:$0xff] %vm1421, %v1376
      %1448 = vst.msk [vmem:[#allocation5 + $0x1a0] sm:$0xff] %vm1421, %v1378
      %1449 = vst.msk [vmem:[#allocation5 + $0x1b0] sm:$0xff] %vm1421, %v1380
      %1450 = vst.msk [vmem:[#allocation5 + $0x1c0] sm:$0xff] %vm1421, %v1382
      %1451 = vst.msk [vmem:[#allocation5 + $0x1d0] sm:$0xff] %vm1421, %v1384
      %1452 = vst.msk [vmem:[#allocation5 + $0x1e0] sm:$0xff] %vm1421, %v1386
      %1453 = vst.msk [vmem:[#allocation5 + $0x1f0] sm:$0xff] %vm1421, %v1388
      %v1454 = vld [vmem:[%s520 + $0x2] sm:$0xff]
      %v1455 = vld [vmem:[%s520 + $0xa] sm:$0xff]
      %v1456 = vld [vmem:[%s520 + $0x1a] sm:$0xff]
      %v1457 = vld [vmem:[%s520 + $0x22] sm:$0xff]
      %v1458 = vld [vmem:[%s520 + $0x32] sm:$0xff]
      %v1459 = vld [vmem:[%s520 + $0x3a] sm:$0xff]
      %v1460 = vld [vmem:[%s520 + $0x4a] sm:$0xff]
      %v1461 = vld [vmem:[%s520 + $0x52] sm:$0xff]
      %v1462 = vld [vmem:[%s520 + $0x62] sm:$0xff]
      %v1463 = vld [vmem:[%s520 + $0x6a] sm:$0xff]
      %v1464 = vld [vmem:[%s520 + $0x7a] sm:$0xff]
      %v1465 = vld [vmem:[%s520 + $0x82] sm:$0xff]
      %v1466 = vld [vmem:[%s520 + $0x92] sm:$0xff]
      %v1467 = vld [vmem:[%s520 + $0x9a] sm:$0xff]
      %v1468 = vld [vmem:[%s520 + $0xaa] sm:$0xff]
      %v1469 = vld [vmem:[%s520 + $0xb2] sm:$0xff]
      %v1470 = vld [vmem:[%s520 + $0xc2] sm:$0xff]
      %v1471 = vld [vmem:[%s520 + $0xca] sm:$0xff]
      %v1472 = vld [vmem:[%s520 + $0xda] sm:$0xff]
      %v1473 = vld [vmem:[%s520 + $0xe2] sm:$0xff]
      %v1474 = vld [vmem:[%s520 + $0xf2] sm:$0xff]
      %v1475 = vld [vmem:[%s520 + $0xfa] sm:$0xff]
      %v1476 = vld [vmem:[%s520 + $0x10a] sm:$0xff]
      %v1477 = vld [vmem:[%s520 + $0x112] sm:$0xff]
      %v1478 = vld [vmem:[%s520 + $0x122] sm:$0xff]
      %v1479 = vld [vmem:[%s520 + $0x12a] sm:$0xff]
      %v1480 = vld [vmem:[%s520 + $0x13a] sm:$0xff]
      %v1481 = vld [vmem:[%s520 + $0x142] sm:$0xff]
      %v1482 = vld [vmem:[%s520 + $0x152] sm:$0xff]
      %v1483 = vld [vmem:[%s520 + $0x15a] sm:$0xff]
      %v1484 = vld [vmem:[%s520 + $0x16a] sm:$0xff]
      %v1485 = vld [vmem:[%s520 + $0x172] sm:$0xff]
      %1518 = vrot.lane.b32.xlu0 %v1454, 80
      %v1519 = vpop.permute.xlu0 %1518
      %1520 = vrot.lane.b32.xlu0 %v1455, 80
      %v1521 = vpop.permute.xlu0 %1520
      %1522 = vrot.lane.b32.xlu0 %v1456, 80
      %v1523 = vpop.permute.xlu0 %1522
      %1524 = vrot.lane.b32.xlu0 %v1457, 80
      %v1525 = vpop.permute.xlu0 %1524
      %1526 = vrot.lane.b32.xlu0 %v1458, 80
      %v1527 = vpop.permute.xlu0 %1526
      %1528 = vrot.lane.b32.xlu0 %v1459, 80
      %v1529 = vpop.permute.xlu0 %1528
      %1530 = vrot.lane.b32.xlu0 %v1460, 80
      %v1531 = vpop.permute.xlu0 %1530
      %1532 = vrot.lane.b32.xlu0 %v1461, 80
      %v1533 = vpop.permute.xlu0 %1532
      %1534 = vrot.lane.b32.xlu0 %v1462, 80
      %v1535 = vpop.permute.xlu0 %1534
      %1536 = vrot.lane.b32.xlu0 %v1463, 80
      %v1537 = vpop.permute.xlu0 %1536
      %1538 = vrot.lane.b32.xlu0 %v1464, 80
      %v1539 = vpop.permute.xlu0 %1538
      %1540 = vrot.lane.b32.xlu0 %v1465, 80
      %v1541 = vpop.permute.xlu0 %1540
      %1542 = vrot.lane.b32.xlu0 %v1466, 80
      %v1543 = vpop.permute.xlu0 %1542
      %1544 = vrot.lane.b32.xlu0 %v1467, 80
      %v1545 = vpop.permute.xlu0 %1544
      %1546 = vrot.lane.b32.xlu0 %v1468, 80
      %v1547 = vpop.permute.xlu0 %1546
      %1548 = vrot.lane.b32.xlu0 %v1469, 80
      %v1549 = vpop.permute.xlu0 %1548
      %1550 = vrot.lane.b32.xlu0 %v1470, 80
      %v1551 = vpop.permute.xlu0 %1550
      %1552 = vrot.lane.b32.xlu0 %v1471, 80
      %v1553 = vpop.permute.xlu0 %1552
      %1554 = vrot.lane.b32.xlu0 %v1472, 80
      %v1555 = vpop.permute.xlu0 %1554
      %1556 = vrot.lane.b32.xlu0 %v1473, 80
      %v1557 = vpop.permute.xlu0 %1556
      %1558 = vrot.lane.b32.xlu0 %v1474, 80
      %v1559 = vpop.permute.xlu0 %1558
      %1560 = vrot.lane.b32.xlu0 %v1475, 80
      %v1561 = vpop.permute.xlu0 %1560
      %1562 = vrot.lane.b32.xlu0 %v1476, 80
      %v1563 = vpop.permute.xlu0 %1562
      %1564 = vrot.lane.b32.xlu0 %v1477, 80
      %v1565 = vpop.permute.xlu0 %1564
      %1566 = vrot.lane.b32.xlu0 %v1478, 80
      %v1567 = vpop.permute.xlu0 %1566
      %1568 = vrot.lane.b32.xlu0 %v1479, 80
      %v1569 = vpop.permute.xlu0 %1568
      %1570 = vrot.lane.b32.xlu0 %v1480, 80
      %v1571 = vpop.permute.xlu0 %1570
      %1572 = vrot.lane.b32.xlu0 %v1481, 80
      %v1573 = vpop.permute.xlu0 %1572
      %1574 = vrot.lane.b32.xlu0 %v1482, 80
      %v1575 = vpop.permute.xlu0 %1574
      %1576 = vrot.lane.b32.xlu0 %v1483, 80
      %v1577 = vpop.permute.xlu0 %1576
      %1578 = vrot.lane.b32.xlu0 %v1484, 80
      %v1579 = vpop.permute.xlu0 %1578
      %1580 = vrot.lane.b32.xlu0 %v1485, 80
      %v1581 = vpop.permute.xlu0 %1580
      %vm1614 = vcmask 786048
      %1615 = vst.msk [vmem:[#allocation5] sm:$0xff] %vm1614, %v1519
      %1616 = vst.msk [vmem:[#allocation5 + $0x10] sm:$0xff] %vm1614, %v1521
      %1617 = vst.msk [vmem:[#allocation5 + $0x20] sm:$0xff] %vm1614, %v1523
      %1618 = vst.msk [vmem:[#allocation5 + $0x30] sm:$0xff] %vm1614, %v1525
      %1619 = vst.msk [vmem:[#allocation5 + $0x40] sm:$0xff] %vm1614, %v1527
      %1620 = vst.msk [vmem:[#allocation5 + $0x50] sm:$0xff] %vm1614, %v1529
      %1621 = vst.msk [vmem:[#allocation5 + $0x60] sm:$0xff] %vm1614, %v1531
      %1622 = vst.msk [vmem:[#allocation5 + $0x70] sm:$0xff] %vm1614, %v1533
      %1623 = vst.msk [vmem:[#allocation5 + $0x80] sm:$0xff] %vm1614, %v1535
      %1624 = vst.msk [vmem:[#allocation5 + $0x90] sm:$0xff] %vm1614, %v1537
      %1625 = vst.msk [vmem:[#allocation5 + $0xa0] sm:$0xff] %vm1614, %v1539
      %1626 = vst.msk [vmem:[#allocation5 + $0xb0] sm:$0xff] %vm1614, %v1541
      %1627 = vst.msk [vmem:[#allocation5 + $0xc0] sm:$0xff] %vm1614, %v1543
      %1628 = vst.msk [vmem:[#allocation5 + $0xd0] sm:$0xff] %vm1614, %v1545
      %1629 = vst.msk [vmem:[#allocation5 + $0xe0] sm:$0xff] %vm1614, %v1547
      %1630 = vst.msk [vmem:[#allocation5 + $0xf0] sm:$0xff] %vm1614, %v1549
      %1631 = vst.msk [vmem:[#allocation5 + $0x100] sm:$0xff] %vm1614, %v1551
      %1632 = vst.msk [vmem:[#allocation5 + $0x110] sm:$0xff] %vm1614, %v1553
      %1633 = vst.msk [vmem:[#allocation5 + $0x120] sm:$0xff] %vm1614, %v1555
      %1634 = vst.msk [vmem:[#allocation5 + $0x130] sm:$0xff] %vm1614, %v1557
      %1635 = vst.msk [vmem:[#allocation5 + $0x140] sm:$0xff] %vm1614, %v1559
      %1636 = vst.msk [vmem:[#allocation5 + $0x150] sm:$0xff] %vm1614, %v1561
      %1637 = vst.msk [vmem:[#allocation5 + $0x160] sm:$0xff] %vm1614, %v1563
      %1638 = vst.msk [vmem:[#allocation5 + $0x170] sm:$0xff] %vm1614, %v1565
      %1639 = vst.msk [vmem:[#allocation5 + $0x180] sm:$0xff] %vm1614, %v1567
      %1640 = vst.msk [vmem:[#allocation5 + $0x190] sm:$0xff] %vm1614, %v1569
      %1641 = vst.msk [vmem:[#allocation5 + $0x1a0] sm:$0xff] %vm1614, %v1571
      %1642 = vst.msk [vmem:[#allocation5 + $0x1b0] sm:$0xff] %vm1614, %v1573
      %1643 = vst.msk [vmem:[#allocation5 + $0x1c0] sm:$0xff] %vm1614, %v1575
      %1644 = vst.msk [vmem:[#allocation5 + $0x1d0] sm:$0xff] %vm1614, %v1577
      %1645 = vst.msk [vmem:[#allocation5 + $0x1e0] sm:$0xff] %vm1614, %v1579
      %1646 = vst.msk [vmem:[#allocation5 + $0x1f0] sm:$0xff] %vm1614, %v1581
      %s1647 = scalar_lea.vmem [#allocation2], 48
      %v1648 = vld [vmem:[%s1647] sm:$0xff]
      %v1649 = vld [vmem:[%s1647 + $0x8] sm:$0xff]
      %v1650 = vld [vmem:[%s1647 + $0x18] sm:$0xff]
      %v1651 = vld [vmem:[%s1647 + $0x20] sm:$0xff]
      %v1652 = vld [vmem:[%s1647 + $0x30] sm:$0xff]
      %v1653 = vld [vmem:[%s1647 + $0x38] sm:$0xff]
      %v1654 = vld [vmem:[%s1647 + $0x48] sm:$0xff]
      %v1655 = vld [vmem:[%s1647 + $0x50] sm:$0xff]
      %v1656 = vld [vmem:[%s1647 + $0x60] sm:$0xff]
      %v1657 = vld [vmem:[%s1647 + $0x68] sm:$0xff]
      %v1658 = vld [vmem:[%s1647 + $0x78] sm:$0xff]
      %v1659 = vld [vmem:[%s1647 + $0x80] sm:$0xff]
      %v1660 = vld [vmem:[%s1647 + $0x90] sm:$0xff]
      %v1661 = vld [vmem:[%s1647 + $0x98] sm:$0xff]
      %v1662 = vld [vmem:[%s1647 + $0xa8] sm:$0xff]
      %v1663 = vld [vmem:[%s1647 + $0xb0] sm:$0xff]
      %v1664 = vld [vmem:[%s1647 + $0xc0] sm:$0xff]
      %v1665 = vld [vmem:[%s1647 + $0xc8] sm:$0xff]
      %v1666 = vld [vmem:[%s1647 + $0xd8] sm:$0xff]
      %v1667 = vld [vmem:[%s1647 + $0xe0] sm:$0xff]
      %v1668 = vld [vmem:[%s1647 + $0xf0] sm:$0xff]
      %v1669 = vld [vmem:[%s1647 + $0xf8] sm:$0xff]
      %v1670 = vld [vmem:[%s1647 + $0x108] sm:$0xff]
      %v1671 = vld [vmem:[%s1647 + $0x110] sm:$0xff]
      %v1672 = vld [vmem:[%s1647 + $0x120] sm:$0xff]
      %v1673 = vld [vmem:[%s1647 + $0x128] sm:$0xff]
      %v1674 = vld [vmem:[%s1647 + $0x138] sm:$0xff]
      %v1675 = vld [vmem:[%s1647 + $0x140] sm:$0xff]
      %v1676 = vld [vmem:[%s1647 + $0x150] sm:$0xff]
      %v1677 = vld [vmem:[%s1647 + $0x158] sm:$0xff]
      %v1678 = vld [vmem:[%s1647 + $0x168] sm:$0xff]
      %v1679 = vld [vmem:[%s1647 + $0x170] sm:$0xff]
      %1712 = vrot.lane.b32.xlu0 %v1648, 96
      %v1713 = vpop.permute.xlu0 %1712
      %1714 = vrot.lane.b32.xlu0 %v1649, 96
      %v1715 = vpop.permute.xlu0 %1714
      %1716 = vrot.lane.b32.xlu0 %v1650, 96
      %v1717 = vpop.permute.xlu0 %1716
      %1718 = vrot.lane.b32.xlu0 %v1651, 96
      %v1719 = vpop.permute.xlu0 %1718
      %1720 = vrot.lane.b32.xlu0 %v1652, 96
      %v1721 = vpop.permute.xlu0 %1720
      %1722 = vrot.lane.b32.xlu0 %v1653, 96
      %v1723 = vpop.permute.xlu0 %1722
      %1724 = vrot.lane.b32.xlu0 %v1654, 96
      %v1725 = vpop.permute.xlu0 %1724
      %1726 = vrot.lane.b32.xlu0 %v1655, 96
      %v1727 = vpop.permute.xlu0 %1726
      %1728 = vrot.lane.b32.xlu0 %v1656, 96
      %v1729 = vpop.permute.xlu0 %1728
      %1730 = vrot.lane.b32.xlu0 %v1657, 96
      %v1731 = vpop.permute.xlu0 %1730
      %1732 = vrot.lane.b32.xlu0 %v1658, 96
      %v1733 = vpop.permute.xlu0 %1732
      %1734 = vrot.lane.b32.xlu0 %v1659, 96
      %v1735 = vpop.permute.xlu0 %1734
      %1736 = vrot.lane.b32.xlu0 %v1660, 96
      %v1737 = vpop.permute.xlu0 %1736
      %1738 = vrot.lane.b32.xlu0 %v1661, 96
      %v1739 = vpop.permute.xlu0 %1738
      %1740 = vrot.lane.b32.xlu0 %v1662, 96
      %v1741 = vpop.permute.xlu0 %1740
      %1742 = vrot.lane.b32.xlu0 %v1663, 96
      %v1743 = vpop.permute.xlu0 %1742
      %1744 = vrot.lane.b32.xlu0 %v1664, 96
      %v1745 = vpop.permute.xlu0 %1744
      %1746 = vrot.lane.b32.xlu0 %v1665, 96
      %v1747 = vpop.permute.xlu0 %1746
      %1748 = vrot.lane.b32.xlu0 %v1666, 96
      %v1749 = vpop.permute.xlu0 %1748
      %1750 = vrot.lane.b32.xlu0 %v1667, 96
      %v1751 = vpop.permute.xlu0 %1750
      %1752 = vrot.lane.b32.xlu0 %v1668, 96
      %v1753 = vpop.permute.xlu0 %1752
      %1754 = vrot.lane.b32.xlu0 %v1669, 96
      %v1755 = vpop.permute.xlu0 %1754
      %1756 = vrot.lane.b32.xlu0 %v1670, 96
      %v1757 = vpop.permute.xlu0 %1756
      %1758 = vrot.lane.b32.xlu0 %v1671, 96
      %v1759 = vpop.permute.xlu0 %1758
      %1760 = vrot.lane.b32.xlu0 %v1672, 96
      %v1761 = vpop.permute.xlu0 %1760
      %1762 = vrot.lane.b32.xlu0 %v1673, 96
      %v1763 = vpop.permute.xlu0 %1762
      %1764 = vrot.lane.b32.xlu0 %v1674, 96
      %v1765 = vpop.permute.xlu0 %1764
      %1766 = vrot.lane.b32.xlu0 %v1675, 96
      %v1767 = vpop.permute.xlu0 %1766
      %1768 = vrot.lane.b32.xlu0 %v1676, 96
      %v1769 = vpop.permute.xlu0 %1768
      %1770 = vrot.lane.b32.xlu0 %v1677, 96
      %v1771 = vpop.permute.xlu0 %1770
      %1772 = vrot.lane.b32.xlu0 %v1678, 96
      %v1773 = vpop.permute.xlu0 %1772
      %1774 = vrot.lane.b32.xlu0 %v1679, 96
      %v1775 = vpop.permute.xlu0 %1774
      %vm1808 = vcmask 917248
      %1809 = vst.msk [vmem:[#allocation5] sm:$0xff] %vm1808, %v1713
      %1810 = vst.msk [vmem:[#allocation5 + $0x10] sm:$0xff] %vm1808, %v1715
      %1811 = vst.msk [vmem:[#allocation5 + $0x20] sm:$0xff] %vm1808, %v1717
      %1812 = vst.msk [vmem:[#allocation5 + $0x30] sm:$0xff] %vm1808, %v1719
      %1813 = vst.msk [vmem:[#allocation5 + $0x40] sm:$0xff] %vm1808, %v1721
      %1814 = vst.msk [vmem:[#allocation5 + $0x50] sm:$0xff] %vm1808, %v1723
      %1815 = vst.msk [vmem:[#allocation5 + $0x60] sm:$0xff] %vm1808, %v1725
      %1816 = vst.msk [vmem:[#allocation5 + $0x70] sm:$0xff] %vm1808, %v1727
      %1817 = vst.msk [vmem:[#allocation5 + $0x80] sm:$0xff] %vm1808, %v1729
      %1818 = vst.msk [vmem:[#allocation5 + $0x90] sm:$0xff] %vm1808, %v1731
      %1819 = vst.msk [vmem:[#allocation5 + $0xa0] sm:$0xff] %vm1808, %v1733
      %1820 = vst.msk [vmem:[#allocation5 + $0xb0] sm:$0xff] %vm1808, %v1735
      %1821 = vst.msk [vmem:[#allocation5 + $0xc0] sm:$0xff] %vm1808, %v1737
      %1822 = vst.msk [vmem:[#allocation5 + $0xd0] sm:$0xff] %vm1808, %v1739
      %1823 = vst.msk [vmem:[#allocation5 + $0xe0] sm:$0xff] %vm1808, %v1741
      %1824 = vst.msk [vmem:[#allocation5 + $0xf0] sm:$0xff] %vm1808, %v1743
      %1825 = vst.msk [vmem:[#allocation5 + $0x100] sm:$0xff] %vm1808, %v1745
      %1826 = vst.msk [vmem:[#allocation5 + $0x110] sm:$0xff] %vm1808, %v1747
      %1827 = vst.msk [vmem:[#allocation5 + $0x120] sm:$0xff] %vm1808, %v1749
      %1828 = vst.msk [vmem:[#allocation5 + $0x130] sm:$0xff] %vm1808, %v1751
      %1829 = vst.msk [vmem:[#allocation5 + $0x140] sm:$0xff] %vm1808, %v1753
      %1830 = vst.msk [vmem:[#allocation5 + $0x150] sm:$0xff] %vm1808, %v1755
      %1831 = vst.msk [vmem:[#allocation5 + $0x160] sm:$0xff] %vm1808, %v1757
      %1832 = vst.msk [vmem:[#allocation5 + $0x170] sm:$0xff] %vm1808, %v1759
      %1833 = vst.msk [vmem:[#allocation5 + $0x180] sm:$0xff] %vm1808, %v1761
      %1834 = vst.msk [vmem:[#allocation5 + $0x190] sm:$0xff] %vm1808, %v1763
      %1835 = vst.msk [vmem:[#allocation5 + $0x1a0] sm:$0xff] %vm1808, %v1765
      %1836 = vst.msk [vmem:[#allocation5 + $0x1b0] sm:$0xff] %vm1808, %v1767
      %1837 = vst.msk [vmem:[#allocation5 + $0x1c0] sm:$0xff] %vm1808, %v1769
      %1838 = vst.msk [vmem:[#allocation5 + $0x1d0] sm:$0xff] %vm1808, %v1771
      %1839 = vst.msk [vmem:[#allocation5 + $0x1e0] sm:$0xff] %vm1808, %v1773
      %1840 = vst.msk [vmem:[#allocation5 + $0x1f0] sm:$0xff] %vm1808, %v1775
      %v1841 = vld [vmem:[%s1647 + $0x1] sm:$0xff]
      %v1842 = vld [vmem:[%s1647 + $0x9] sm:$0xff]
      %v1843 = vld [vmem:[%s1647 + $0x19] sm:$0xff]
      %v1844 = vld [vmem:[%s1647 + $0x21] sm:$0xff]
      %v1845 = vld [vmem:[%s1647 + $0x31] sm:$0xff]
      %v1846 = vld [vmem:[%s1647 + $0x39] sm:$0xff]
      %v1847 = vld [vmem:[%s1647 + $0x49] sm:$0xff]
      %v1848 = vld [vmem:[%s1647 + $0x51] sm:$0xff]
      %v1849 = vld [vmem:[%s1647 + $0x61] sm:$0xff]
      %v1850 = vld [vmem:[%s1647 + $0x69] sm:$0xff]
      %v1851 = vld [vmem:[%s1647 + $0x79] sm:$0xff]
      %v1852 = vld [vmem:[%s1647 + $0x81] sm:$0xff]
      %v1853 = vld [vmem:[%s1647 + $0x91] sm:$0xff]
      %v1854 = vld [vmem:[%s1647 + $0x99] sm:$0xff]
      %v1855 = vld [vmem:[%s1647 + $0xa9] sm:$0xff]
      %v1856 = vld [vmem:[%s1647 + $0xb1] sm:$0xff]
      %v1857 = vld [vmem:[%s1647 + $0xc1] sm:$0xff]
      %v1858 = vld [vmem:[%s1647 + $0xc9] sm:$0xff]
      %v1859 = vld [vmem:[%s1647 + $0xd9] sm:$0xff]
      %v1860 = vld [vmem:[%s1647 + $0xe1] sm:$0xff]
      %v1861 = vld [vmem:[%s1647 + $0xf1] sm:$0xff]
      %v1862 = vld [vmem:[%s1647 + $0xf9] sm:$0xff]
      %v1863 = vld [vmem:[%s1647 + $0x109] sm:$0xff]
      %v1864 = vld [vmem:[%s1647 + $0x111] sm:$0xff]
      %v1865 = vld [vmem:[%s1647 + $0x121] sm:$0xff]
      %v1866 = vld [vmem:[%s1647 + $0x129] sm:$0xff]
      %v1867 = vld [vmem:[%s1647 + $0x139] sm:$0xff]
      %v1868 = vld [vmem:[%s1647 + $0x141] sm:$0xff]
      %v1869 = vld [vmem:[%s1647 + $0x151] sm:$0xff]
      %v1870 = vld [vmem:[%s1647 + $0x159] sm:$0xff]
      %v1871 = vld [vmem:[%s1647 + $0x169] sm:$0xff]
      %v1872 = vld [vmem:[%s1647 + $0x171] sm:$0xff]
      %1905 = vrot.lane.b32.xlu0 %v1841, 112
      %v1906 = vpop.permute.xlu0 %1905
      %1907 = vrot.lane.b32.xlu0 %v1842, 112
      %v1908 = vpop.permute.xlu0 %1907
      %1909 = vrot.lane.b32.xlu0 %v1843, 112
      %v1910 = vpop.permute.xlu0 %1909
      %1911 = vrot.lane.b32.xlu0 %v1844, 112
      %v1912 = vpop.permute.xlu0 %1911
      %1913 = vrot.lane.b32.xlu0 %v1845, 112
      %v1914 = vpop.permute.xlu0 %1913
      %1915 = vrot.lane.b32.xlu0 %v1846, 112
      %v1916 = vpop.permute.xlu0 %1915
      %1917 = vrot.lane.b32.xlu0 %v1847, 112
      %v1918 = vpop.permute.xlu0 %1917
      %1919 = vrot.lane.b32.xlu0 %v1848, 112
      %v1920 = vpop.permute.xlu0 %1919
      %1921 = vrot.lane.b32.xlu0 %v1849, 112
      %v1922 = vpop.permute.xlu0 %1921
      %1923 = vrot.lane.b32.xlu0 %v1850, 112
      %v1924 = vpop.permute.xlu0 %1923
      %1925 = vrot.lane.b32.xlu0 %v1851, 112
      %v1926 = vpop.permute.xlu0 %1925
      %1927 = vrot.lane.b32.xlu0 %v1852, 112
      %v1928 = vpop.permute.xlu0 %1927
      %1929 = vrot.lane.b32.xlu0 %v1853, 112
      %v1930 = vpop.permute.xlu0 %1929
      %1931 = vrot.lane.b32.xlu0 %v1854, 112
      %v1932 = vpop.permute.xlu0 %1931
      %1933 = vrot.lane.b32.xlu0 %v1855, 112
      %v1934 = vpop.permute.xlu0 %1933
      %1935 = vrot.lane.b32.xlu0 %v1856, 112
      %v1936 = vpop.permute.xlu0 %1935
      %1937 = vrot.lane.b32.xlu0 %v1857, 112
      %v1938 = vpop.permute.xlu0 %1937
      %1939 = vrot.lane.b32.xlu0 %v1858, 112
      %v1940 = vpop.permute.xlu0 %1939
      %1941 = vrot.lane.b32.xlu0 %v1859, 112
      %v1942 = vpop.permute.xlu0 %1941
      %1943 = vrot.lane.b32.xlu0 %v1860, 112
      %v1944 = vpop.permute.xlu0 %1943
      %1945 = vrot.lane.b32.xlu0 %v1861, 112
      %v1946 = vpop.permute.xlu0 %1945
      %1947 = vrot.lane.b32.xlu0 %v1862, 112
      %v1948 = vpop.permute.xlu0 %1947
      %1949 = vrot.lane.b32.xlu0 %v1863, 112
      %v1950 = vpop.permute.xlu0 %1949
      %1951 = vrot.lane.b32.xlu0 %v1864, 112
      %v1952 = vpop.permute.xlu0 %1951
      %1953 = vrot.lane.b32.xlu0 %v1865, 112
      %v1954 = vpop.permute.xlu0 %1953
      %1955 = vrot.lane.b32.xlu0 %v1866, 112
      %v1956 = vpop.permute.xlu0 %1955
      %1957 = vrot.lane.b32.xlu0 %v1867, 112
      %v1958 = vpop.permute.xlu0 %1957
      %1959 = vrot.lane.b32.xlu0 %v1868, 112
      %v1960 = vpop.permute.xlu0 %1959
      %1961 = vrot.lane.b32.xlu0 %v1869, 112
      %v1962 = vpop.permute.xlu0 %1961
      %1963 = vrot.lane.b32.xlu0 %v1870, 112
      %v1964 = vpop.permute.xlu0 %1963
      %1965 = vrot.lane.b32.xlu0 %v1871, 112
      %v1966 = vpop.permute.xlu0 %1965
      %1967 = vrot.lane.b32.xlu0 %v1872, 112
      %v1968 = vpop.permute.xlu0 %1967
      %vm2001 = vcmask 1048448
      %2002 = vst.msk [vmem:[#allocation5] sm:$0xff] %vm2001, %v1906
      %2003 = vst.msk [vmem:[#allocation5 + $0x10] sm:$0xff] %vm2001, %v1908
      %2004 = vst.msk [vmem:[#allocation5 + $0x20] sm:$0xff] %vm2001, %v1910
      %2005 = vst.msk [vmem:[#allocation5 + $0x30] sm:$0xff] %vm2001, %v1912
      %2006 = vst.msk [vmem:[#allocation5 + $0x40] sm:$0xff] %vm2001, %v1914
      %2007 = vst.msk [vmem:[#allocation5 + $0x50] sm:$0xff] %vm2001, %v1916
      %2008 = vst.msk [vmem:[#allocation5 + $0x60] sm:$0xff] %vm2001, %v1918
      %2009 = vst.msk [vmem:[#allocation5 + $0x70] sm:$0xff] %vm2001, %v1920
      %2010 = vst.msk [vmem:[#allocation5 + $0x80] sm:$0xff] %vm2001, %v1922
      %2011 = vst.msk [vmem:[#allocation5 + $0x90] sm:$0xff] %vm2001, %v1924
      %2012 = vst.msk [vmem:[#allocation5 + $0xa0] sm:$0xff] %vm2001, %v1926
      %2013 = vst.msk [vmem:[#allocation5 + $0xb0] sm:$0xff] %vm2001, %v1928
      %2014 = vst.msk [vmem:[#allocation5 + $0xc0] sm:$0xff] %vm2001, %v1930
      %2015 = vst.msk [vmem:[#allocation5 + $0xd0] sm:$0xff] %vm2001, %v1932
      %2016 = vst.msk [vmem:[#allocation5 + $0xe0] sm:$0xff] %vm2001, %v1934
      %2017 = vst.msk [vmem:[#allocation5 + $0xf0] sm:$0xff] %vm2001, %v1936
      %2018 = vst.msk [vmem:[#allocation5 + $0x100] sm:$0xff] %vm2001, %v1938
      %2019 = vst.msk [vmem:[#allocation5 + $0x110] sm:$0xff] %vm2001, %v1940
      %2020 = vst.msk [vmem:[#allocation5 + $0x120] sm:$0xff] %vm2001, %v1942
      %2021 = vst.msk [vmem:[#allocation5 + $0x130] sm:$0xff] %vm2001, %v1944
      %2022 = vst.msk [vmem:[#allocation5 + $0x140] sm:$0xff] %vm2001, %v1946
      %2023 = vst.msk [vmem:[#allocation5 + $0x150] sm:$0xff] %vm2001, %v1948
      %2024 = vst.msk [vmem:[#allocation5 + $0x160] sm:$0xff] %vm2001, %v1950
      %2025 = vst.msk [vmem:[#allocation5 + $0x170] sm:$0xff] %vm2001, %v1952
      %2026 = vst.msk [vmem:[#allocation5 + $0x180] sm:$0xff] %vm2001, %v1954
      %2027 = vst.msk [vmem:[#allocation5 + $0x190] sm:$0xff] %vm2001, %v1956
      %2028 = vst.msk [vmem:[#allocation5 + $0x1a0] sm:$0xff] %vm2001, %v1958
      %2029 = vst.msk [vmem:[#allocation5 + $0x1b0] sm:$0xff] %vm2001, %v1960
      %2030 = vst.msk [vmem:[#allocation5 + $0x1c0] sm:$0xff] %vm2001, %v1962
      %2031 = vst.msk [vmem:[#allocation5 + $0x1d0] sm:$0xff] %vm2001, %v1964
      %2032 = vst.msk [vmem:[#allocation5 + $0x1e0] sm:$0xff] %vm2001, %v1966
      %2033 = vst.msk [vmem:[#allocation5 + $0x1f0] sm:$0xff] %vm2001, %v1968
      %v2034 = vld [vmem:[%s1647 + $0x2] sm:$0xff]
      %v2035 = vld [vmem:[%s1647 + $0xa] sm:$0xff]
      %v2036 = vld [vmem:[%s1647 + $0x1a] sm:$0xff]
      %v2037 = vld [vmem:[%s1647 + $0x22] sm:$0xff]
      %v2038 = vld [vmem:[%s1647 + $0x32] sm:$0xff]
      %v2039 = vld [vmem:[%s1647 + $0x3a] sm:$0xff]
      %v2040 = vld [vmem:[%s1647 + $0x4a] sm:$0xff]
      %v2041 = vld [vmem:[%s1647 + $0x52] sm:$0xff]
      %v2042 = vld [vmem:[%s1647 + $0x62] sm:$0xff]
      %v2043 = vld [vmem:[%s1647 + $0x6a] sm:$0xff]
      %v2044 = vld [vmem:[%s1647 + $0x7a] sm:$0xff]
      %v2045 = vld [vmem:[%s1647 + $0x82] sm:$0xff]
      %v2046 = vld [vmem:[%s1647 + $0x92] sm:$0xff]
      %v2047 = vld [vmem:[%s1647 + $0x9a] sm:$0xff]
      %v2048 = vld [vmem:[%s1647 + $0xaa] sm:$0xff]
      %v2049 = vld [vmem:[%s1647 + $0xb2] sm:$0xff]
      %v2050 = vld [vmem:[%s1647 + $0xc2] sm:$0xff]
      %v2051 = vld [vmem:[%s1647 + $0xca] sm:$0xff]
      %v2052 = vld [vmem:[%s1647 + $0xda] sm:$0xff]
      %v2053 = vld [vmem:[%s1647 + $0xe2] sm:$0xff]
      %v2054 = vld [vmem:[%s1647 + $0xf2] sm:$0xff]
      %v2055 = vld [vmem:[%s1647 + $0xfa] sm:$0xff]
      %v2056 = vld [vmem:[%s1647 + $0x10a] sm:$0xff]
      %v2057 = vld [vmem:[%s1647 + $0x112] sm:$0xff]
      %v2058 = vld [vmem:[%s1647 + $0x122] sm:$0xff]
      %v2059 = vld [vmem:[%s1647 + $0x12a] sm:$0xff]
      %v2060 = vld [vmem:[%s1647 + $0x13a] sm:$0xff]
      %v2061 = vld [vmem:[%s1647 + $0x142] sm:$0xff]
      %v2062 = vld [vmem:[%s1647 + $0x152] sm:$0xff]
      %v2063 = vld [vmem:[%s1647 + $0x15a] sm:$0xff]
      %v2064 = vld [vmem:[%s1647 + $0x16a] sm:$0xff]
      %v2065 = vld [vmem:[%s1647 + $0x172] sm:$0xff]
      %2066 = vst.msk [vmem:[#allocation5 + $0x8] sm:$0xff] %vm353, %v2034
      %2067 = vst.msk [vmem:[#allocation5 + $0x18] sm:$0xff] %vm353, %v2035
      %2068 = vst.msk [vmem:[#allocation5 + $0x28] sm:$0xff] %vm353, %v2036
      %2069 = vst.msk [vmem:[#allocation5 + $0x38] sm:$0xff] %vm353, %v2037
      %2070 = vst.msk [vmem:[#allocation5 + $0x48] sm:$0xff] %vm353, %v2038
      %2071 = vst.msk [vmem:[#allocation5 + $0x58] sm:$0xff] %vm353, %v2039
      %2072 = vst.msk [vmem:[#allocation5 + $0x68] sm:$0xff] %vm353, %v2040
      %2073 = vst.msk [vmem:[#allocation5 + $0x78] sm:$0xff] %vm353, %v2041
      %2074 = vst.msk [vmem:[#allocation5 + $0x88] sm:$0xff] %vm353, %v2042
      %2075 = vst.msk [vmem:[#allocation5 + $0x98] sm:$0xff] %vm353, %v2043
      %2076 = vst.msk [vmem:[#allocation5 + $0xa8] sm:$0xff] %vm353, %v2044
      %2077 = vst.msk [vmem:[#allocation5 + $0xb8] sm:$0xff] %vm353, %v2045
      %2078 = vst.msk [vmem:[#allocation5 + $0xc8] sm:$0xff] %vm353, %v2046
      %2079 = vst.msk [vmem:[#allocation5 + $0xd8] sm:$0xff] %vm353, %v2047
      %2080 = vst.msk [vmem:[#allocation5 + $0xe8] sm:$0xff] %vm353, %v2048
      %2081 = vst.msk [vmem:[#allocation5 + $0xf8] sm:$0xff] %vm353, %v2049
      %2082 = vst.msk [vmem:[#allocation5 + $0x108] sm:$0xff] %vm353, %v2050
      %2083 = vst.msk [vmem:[#allocation5 + $0x118] sm:$0xff] %vm353, %v2051
      %2084 = vst.msk [vmem:[#allocation5 + $0x128] sm:$0xff] %vm353, %v2052
      %2085 = vst.msk [vmem:[#allocation5 + $0x138] sm:$0xff] %vm353, %v2053
      %2086 = vst.msk [vmem:[#allocation5 + $0x148] sm:$0xff] %vm353, %v2054
      %2087 = vst.msk [vmem:[#allocation5 + $0x158] sm:$0xff] %vm353, %v2055
      %2088 = vst.msk [vmem:[#allocation5 + $0x168] sm:$0xff] %vm353, %v2056
      %2089 = vst.msk [vmem:[#allocation5 + $0x178] sm:$0xff] %vm353, %v2057
      %2090 = vst.msk [vmem:[#allocation5 + $0x188] sm:$0xff] %vm353, %v2058
      %2091 = vst.msk [vmem:[#allocation5 + $0x198] sm:$0xff] %vm353, %v2059
      %2092 = vst.msk [vmem:[#allocation5 + $0x1a8] sm:$0xff] %vm353, %v2060
      %2093 = vst.msk [vmem:[#allocation5 + $0x1b8] sm:$0xff] %vm353, %v2061
      %2094 = vst.msk [vmem:[#allocation5 + $0x1c8] sm:$0xff] %vm353, %v2062
      %2095 = vst.msk [vmem:[#allocation5 + $0x1d8] sm:$0xff] %vm353, %v2063
      %2096 = vst.msk [vmem:[#allocation5 + $0x1e8] sm:$0xff] %vm353, %v2064
      %2097 = vst.msk [vmem:[#allocation5 + $0x1f8] sm:$0xff] %vm353, %v2065
      %v2098 = vld [vmem:[#allocation3] sm:$0xff]
      %v2099 = vld [vmem:[#allocation3 + $0x8] sm:$0xff]
      %v2100 = vld [vmem:[#allocation3 + $0x18] sm:$0xff]
      %v2101 = vld [vmem:[#allocation3 + $0x20] sm:$0xff]
      %v2102 = vld [vmem:[#allocation3 + $0x30] sm:$0xff]
      %v2103 = vld [vmem:[#allocation3 + $0x38] sm:$0xff]
      %v2104 = vld [vmem:[#allocation3 + $0x48] sm:$0xff]
      %v2105 = vld [vmem:[#allocation3 + $0x50] sm:$0xff]
      %v2106 = vld [vmem:[#allocation3 + $0x60] sm:$0xff]
      %v2107 = vld [vmem:[#allocation3 + $0x68] sm:$0xff]
      %v2108 = vld [vmem:[#allocation3 + $0x78] sm:$0xff]
      %v2109 = vld [vmem:[#allocation3 + $0x80] sm:$0xff]
      %v2110 = vld [vmem:[#allocation3 + $0x90] sm:$0xff]
      %v2111 = vld [vmem:[#allocation3 + $0x98] sm:$0xff]
      %v2112 = vld [vmem:[#allocation3 + $0xa8] sm:$0xff]
      %v2113 = vld [vmem:[#allocation3 + $0xb0] sm:$0xff]
      %v2114 = vld [vmem:[#allocation3 + $0xc0] sm:$0xff]
      %v2115 = vld [vmem:[#allocation3 + $0xc8] sm:$0xff]
      %v2116 = vld [vmem:[#allocation3 + $0xd8] sm:$0xff]
      %v2117 = vld [vmem:[#allocation3 + $0xe0] sm:$0xff]
      %v2118 = vld [vmem:[#allocation3 + $0xf0] sm:$0xff]
      %v2119 = vld [vmem:[#allocation3 + $0xf8] sm:$0xff]
      %v2120 = vld [vmem:[#allocation3 + $0x108] sm:$0xff]
      %v2121 = vld [vmem:[#allocation3 + $0x110] sm:$0xff]
      %v2122 = vld [vmem:[#allocation3 + $0x120] sm:$0xff]
      %v2123 = vld [vmem:[#allocation3 + $0x128] sm:$0xff]
      %v2124 = vld [vmem:[#allocation3 + $0x138] sm:$0xff]
      %v2125 = vld [vmem:[#allocation3 + $0x140] sm:$0xff]
      %v2126 = vld [vmem:[#allocation3 + $0x150] sm:$0xff]
      %v2127 = vld [vmem:[#allocation3 + $0x158] sm:$0xff]
      %v2128 = vld [vmem:[#allocation3 + $0x168] sm:$0xff]
      %v2129 = vld [vmem:[#allocation3 + $0x170] sm:$0xff]
      %2162 = vrot.lane.b32.xlu0 %v2098, 16
      %v2163 = vpop.permute.xlu0 %2162
      %2164 = vrot.lane.b32.xlu0 %v2099, 16
      %v2165 = vpop.permute.xlu0 %2164
      %2166 = vrot.lane.b32.xlu0 %v2100, 16
      %v2167 = vpop.permute.xlu0 %2166
      %2168 = vrot.lane.b32.xlu0 %v2101, 16
      %v2169 = vpop.permute.xlu0 %2168
      %2170 = vrot.lane.b32.xlu0 %v2102, 16
      %v2171 = vpop.permute.xlu0 %2170
      %2172 = vrot.lane.b32.xlu0 %v2103, 16
      %v2173 = vpop.permute.xlu0 %2172
      %2174 = vrot.lane.b32.xlu0 %v2104, 16
      %v2175 = vpop.permute.xlu0 %2174
      %2176 = vrot.lane.b32.xlu0 %v2105, 16
      %v2177 = vpop.permute.xlu0 %2176
      %2178 = vrot.lane.b32.xlu0 %v2106, 16
      %v2179 = vpop.permute.xlu0 %2178
      %2180 = vrot.lane.b32.xlu0 %v2107, 16
      %v2181 = vpop.permute.xlu0 %2180
      %2182 = vrot.lane.b32.xlu0 %v2108, 16
      %v2183 = vpop.permute.xlu0 %2182
      %2184 = vrot.lane.b32.xlu0 %v2109, 16
      %v2185 = vpop.permute.xlu0 %2184
      %2186 = vrot.lane.b32.xlu0 %v2110, 16
      %v2187 = vpop.permute.xlu0 %2186
      %2188 = vrot.lane.b32.xlu0 %v2111, 16
      %v2189 = vpop.permute.xlu0 %2188
      %2190 = vrot.lane.b32.xlu0 %v2112, 16
      %v2191 = vpop.permute.xlu0 %2190
      %2192 = vrot.lane.b32.xlu0 %v2113, 16
      %v2193 = vpop.permute.xlu0 %2192
      %2194 = vrot.lane.b32.xlu0 %v2114, 16
      %v2195 = vpop.permute.xlu0 %2194
      %2196 = vrot.lane.b32.xlu0 %v2115, 16
      %v2197 = vpop.permute.xlu0 %2196
      %2198 = vrot.lane.b32.xlu0 %v2116, 16
      %v2199 = vpop.permute.xlu0 %2198
      %2200 = vrot.lane.b32.xlu0 %v2117, 16
      %v2201 = vpop.permute.xlu0 %2200
      %2202 = vrot.lane.b32.xlu0 %v2118, 16
      %v2203 = vpop.permute.xlu0 %2202
      %2204 = vrot.lane.b32.xlu0 %v2119, 16
      %v2205 = vpop.permute.xlu0 %2204
      %2206 = vrot.lane.b32.xlu0 %v2120, 16
      %v2207 = vpop.permute.xlu0 %2206
      %2208 = vrot.lane.b32.xlu0 %v2121, 16
      %v2209 = vpop.permute.xlu0 %2208
      %2210 = vrot.lane.b32.xlu0 %v2122, 16
      %v2211 = vpop.permute.xlu0 %2210
      %2212 = vrot.lane.b32.xlu0 %v2123, 16
      %v2213 = vpop.permute.xlu0 %2212
      %2214 = vrot.lane.b32.xlu0 %v2124, 16
      %v2215 = vpop.permute.xlu0 %2214
      %2216 = vrot.lane.b32.xlu0 %v2125, 16
      %v2217 = vpop.permute.xlu0 %2216
      %2218 = vrot.lane.b32.xlu0 %v2126, 16
      %v2219 = vpop.permute.xlu0 %2218
      %2220 = vrot.lane.b32.xlu0 %v2127, 16
      %v2221 = vpop.permute.xlu0 %2220
      %2222 = vrot.lane.b32.xlu0 %v2128, 16
      %v2223 = vpop.permute.xlu0 %2222
      %2224 = vrot.lane.b32.xlu0 %v2129, 16
      %v2225 = vpop.permute.xlu0 %2224
      %vm2258 = vcmask 195712
      %2259 = vst.msk [vmem:[#allocation5 + $0x8] sm:$0xff] %vm2258, %v2163
      %2260 = vst.msk [vmem:[#allocation5 + $0x18] sm:$0xff] %vm2258, %v2165
      %2261 = vst.msk [vmem:[#allocation5 + $0x28] sm:$0xff] %vm2258, %v2167
      %2262 = vst.msk [vmem:[#allocation5 + $0x38] sm:$0xff] %vm2258, %v2169
      %2263 = vst.msk [vmem:[#allocation5 + $0x48] sm:$0xff] %vm2258, %v2171
      %2264 = vst.msk [vmem:[#allocation5 + $0x58] sm:$0xff] %vm2258, %v2173
      %2265 = vst.msk [vmem:[#allocation5 + $0x68] sm:$0xff] %vm2258, %v2175
      %2266 = vst.msk [vmem:[#allocation5 + $0x78] sm:$0xff] %vm2258, %v2177
      %2267 = vst.msk [vmem:[#allocation5 + $0x88] sm:$0xff] %vm2258, %v2179
      %2268 = vst.msk [vmem:[#allocation5 + $0x98] sm:$0xff] %vm2258, %v2181
      %2269 = vst.msk [vmem:[#allocation5 + $0xa8] sm:$0xff] %vm2258, %v2183
      %2270 = vst.msk [vmem:[#allocation5 + $0xb8] sm:$0xff] %vm2258, %v2185
      %2271 = vst.msk [vmem:[#allocation5 + $0xc8] sm:$0xff] %vm2258, %v2187
      %2272 = vst.msk [vmem:[#allocation5 + $0xd8] sm:$0xff] %vm2258, %v2189
      %2273 = vst.msk [vmem:[#allocation5 + $0xe8] sm:$0xff] %vm2258, %v2191
      %2274 = vst.msk [vmem:[#allocation5 + $0xf8] sm:$0xff] %vm2258, %v2193
      %2275 = vst.msk [vmem:[#allocation5 + $0x108] sm:$0xff] %vm2258, %v2195
      %2276 = vst.msk [vmem:[#allocation5 + $0x118] sm:$0xff] %vm2258, %v2197
      %2277 = vst.msk [vmem:[#allocation5 + $0x128] sm:$0xff] %vm2258, %v2199
      %2278 = vst.msk [vmem:[#allocation5 + $0x138] sm:$0xff] %vm2258, %v2201
      %2279 = vst.msk [vmem:[#allocation5 + $0x148] sm:$0xff] %vm2258, %v2203
      %2280 = vst.msk [vmem:[#allocation5 + $0x158] sm:$0xff] %vm2258, %v2205
      %2281 = vst.msk [vmem:[#allocation5 + $0x168] sm:$0xff] %vm2258, %v2207
      %2282 = vst.msk [vmem:[#allocation5 + $0x178] sm:$0xff] %vm2258, %v2209
      %2283 = vst.msk [vmem:[#allocation5 + $0x188] sm:$0xff] %vm2258, %v2211
      %2284 = vst.msk [vmem:[#allocation5 + $0x198] sm:$0xff] %vm2258, %v2213
      %2285 = vst.msk [vmem:[#allocation5 + $0x1a8] sm:$0xff] %vm2258, %v2215
      %2286 = vst.msk [vmem:[#allocation5 + $0x1b8] sm:$0xff] %vm2258, %v2217
      %2287 = vst.msk [vmem:[#allocation5 + $0x1c8] sm:$0xff] %vm2258, %v2219
      %2288 = vst.msk [vmem:[#allocation5 + $0x1d8] sm:$0xff] %vm2258, %v2221
      %2289 = vst.msk [vmem:[#allocation5 + $0x1e8] sm:$0xff] %vm2258, %v2223
      %2290 = vst.msk [vmem:[#allocation5 + $0x1f8] sm:$0xff] %vm2258, %v2225
      %v2291 = vld [vmem:[#allocation3 + $0x1] sm:$0xff]
      %v2292 = vld [vmem:[#allocation3 + $0x9] sm:$0xff]
      %v2293 = vld [vmem:[#allocation3 + $0x19] sm:$0xff]
      %v2294 = vld [vmem:[#allocation3 + $0x21] sm:$0xff]
      %v2295 = vld [vmem:[#allocation3 + $0x31] sm:$0xff]
      %v2296 = vld [vmem:[#allocation3 + $0x39] sm:$0xff]
      %v2297 = vld [vmem:[#allocation3 + $0x49] sm:$0xff]
      %v2298 = vld [vmem:[#allocation3 + $0x51] sm:$0xff]
      %v2299 = vld [vmem:[#allocation3 + $0x61] sm:$0xff]
      %v2300 = vld [vmem:[#allocation3 + $0x69] sm:$0xff]
      %v2301 = vld [vmem:[#allocation3 + $0x79] sm:$0xff]
      %v2302 = vld [vmem:[#allocation3 + $0x81] sm:$0xff]
      %v2303 = vld [vmem:[#allocation3 + $0x91] sm:$0xff]
      %v2304 = vld [vmem:[#allocation3 + $0x99] sm:$0xff]
      %v2305 = vld [vmem:[#allocation3 + $0xa9] sm:$0xff]
      %v2306 = vld [vmem:[#allocation3 + $0xb1] sm:$0xff]
      %v2307 = vld [vmem:[#allocation3 + $0xc1] sm:$0xff]
      %v2308 = vld [vmem:[#allocation3 + $0xc9] sm:$0xff]
      %v2309 = vld [vmem:[#allocation3 + $0xd9] sm:$0xff]
      %v2310 = vld [vmem:[#allocation3 + $0xe1] sm:$0xff]
      %v2311 = vld [vmem:[#allocation3 + $0xf1] sm:$0xff]
      %v2312 = vld [vmem:[#allocation3 + $0xf9] sm:$0xff]
      %v2313 = vld [vmem:[#allocation3 + $0x109] sm:$0xff]
      %v2314 = vld [vmem:[#allocation3 + $0x111] sm:$0xff]
      %v2315 = vld [vmem:[#allocation3 + $0x121] sm:$0xff]
      %v2316 = vld [vmem:[#allocation3 + $0x129] sm:$0xff]
      %v2317 = vld [vmem:[#allocation3 + $0x139] sm:$0xff]
      %v2318 = vld [vmem:[#allocation3 + $0x141] sm:$0xff]
      %v2319 = vld [vmem:[#allocation3 + $0x151] sm:$0xff]
      %v2320 = vld [vmem:[#allocation3 + $0x159] sm:$0xff]
      %v2321 = vld [vmem:[#allocation3 + $0x169] sm:$0xff]
      %v2322 = vld [vmem:[#allocation3 + $0x171] sm:$0xff]
      %2355 = vrot.lane.b32.xlu0 %v2291, 24
      %v2356 = vpop.permute.xlu0 %2355
      %2357 = vrot.lane.b32.xlu0 %v2292, 24
      %v2358 = vpop.permute.xlu0 %2357
      %2359 = vrot.lane.b32.xlu0 %v2293, 24
      %v2360 = vpop.permute.xlu0 %2359
      %2361 = vrot.lane.b32.xlu0 %v2294, 24
      %v2362 = vpop.permute.xlu0 %2361
      %2363 = vrot.lane.b32.xlu0 %v2295, 24
      %v2364 = vpop.permute.xlu0 %2363
      %2365 = vrot.lane.b32.xlu0 %v2296, 24
      %v2366 = vpop.permute.xlu0 %2365
      %2367 = vrot.lane.b32.xlu0 %v2297, 24
      %v2368 = vpop.permute.xlu0 %2367
      %2369 = vrot.lane.b32.xlu0 %v2298, 24
      %v2370 = vpop.permute.xlu0 %2369
      %2371 = vrot.lane.b32.xlu0 %v2299, 24
      %v2372 = vpop.permute.xlu0 %2371
      %2373 = vrot.lane.b32.xlu0 %v2300, 24
      %v2374 = vpop.permute.xlu0 %2373
      %2375 = vrot.lane.b32.xlu0 %v2301, 24
      %v2376 = vpop.permute.xlu0 %2375
      %2377 = vrot.lane.b32.xlu0 %v2302, 24
      %v2378 = vpop.permute.xlu0 %2377
      %2379 = vrot.lane.b32.xlu0 %v2303, 24
      %v2380 = vpop.permute.xlu0 %2379
      %2381 = vrot.lane.b32.xlu0 %v2304, 24
      %v2382 = vpop.permute.xlu0 %2381
      %2383 = vrot.lane.b32.xlu0 %v2305, 24
      %v2384 = vpop.permute.xlu0 %2383
      %2385 = vrot.lane.b32.xlu0 %v2306, 24
      %v2386 = vpop.permute.xlu0 %2385
      %2387 = vrot.lane.b32.xlu0 %v2307, 24
      %v2388 = vpop.permute.xlu0 %2387
      %2389 = vrot.lane.b32.xlu0 %v2308, 24
      %v2390 = vpop.permute.xlu0 %2389
      %2391 = vrot.lane.b32.xlu0 %v2309, 24
      %v2392 = vpop.permute.xlu0 %2391
      %2393 = vrot.lane.b32.xlu0 %v2310, 24
      %v2394 = vpop.permute.xlu0 %2393
      %2395 = vrot.lane.b32.xlu0 %v2311, 24
      %v2396 = vpop.permute.xlu0 %2395
      %2397 = vrot.lane.b32.xlu0 %v2312, 24
      %v2398 = vpop.permute.xlu0 %2397
      %2399 = vrot.lane.b32.xlu0 %v2313, 24
      %v2400 = vpop.permute.xlu0 %2399
      %2401 = vrot.lane.b32.xlu0 %v2314, 24
      %v2402 = vpop.permute.xlu0 %2401
      %2403 = vrot.lane.b32.xlu0 %v2315, 24
      %v2404 = vpop.permute.xlu0 %2403
      %2405 = vrot.lane.b32.xlu0 %v2316, 24
      %v2406 = vpop.permute.xlu0 %2405
      %2407 = vrot.lane.b32.xlu0 %v2317, 24
      %v2408 = vpop.permute.xlu0 %2407
      %2409 = vrot.lane.b32.xlu0 %v2318, 24
      %v2410 = vpop.permute.xlu0 %2409
      %2411 = vrot.lane.b32.xlu0 %v2319, 24
      %v2412 = vpop.permute.xlu0 %2411
      %2413 = vrot.lane.b32.xlu0 %v2320, 24
      %v2414 = vpop.permute.xlu0 %2413
      %2415 = vrot.lane.b32.xlu0 %v2321, 24
      %v2416 = vpop.permute.xlu0 %2415
      %2417 = vrot.lane.b32.xlu0 %v2322, 24
      %v2418 = vpop.permute.xlu0 %2417
      %vm2451 = vcmask 261312
      %2452 = vst.msk [vmem:[#allocation5 + $0x8] sm:$0xff] %vm2451, %v2356
      %2453 = vst.msk [vmem:[#allocation5 + $0x18] sm:$0xff] %vm2451, %v2358
      %2454 = vst.msk [vmem:[#allocation5 + $0x28] sm:$0xff] %vm2451, %v2360
      %2455 = vst.msk [vmem:[#allocation5 + $0x38] sm:$0xff] %vm2451, %v2362
      %2456 = vst.msk [vmem:[#allocation5 + $0x48] sm:$0xff] %vm2451, %v2364
      %2457 = vst.msk [vmem:[#allocation5 + $0x58] sm:$0xff] %vm2451, %v2366
      %2458 = vst.msk [vmem:[#allocation5 + $0x68] sm:$0xff] %vm2451, %v2368
      %2459 = vst.msk [vmem:[#allocation5 + $0x78] sm:$0xff] %vm2451, %v2370
      %2460 = vst.msk [vmem:[#allocation5 + $0x88] sm:$0xff] %vm2451, %v2372
      %2461 = vst.msk [vmem:[#allocation5 + $0x98] sm:$0xff] %vm2451, %v2374
      %2462 = vst.msk [vmem:[#allocation5 + $0xa8] sm:$0xff] %vm2451, %v2376
      %2463 = vst.msk [vmem:[#allocation5 + $0xb8] sm:$0xff] %vm2451, %v2378
      %2464 = vst.msk [vmem:[#allocation5 + $0xc8] sm:$0xff] %vm2451, %v2380
      %2465 = vst.msk [vmem:[#allocation5 + $0xd8] sm:$0xff] %vm2451, %v2382
      %2466 = vst.msk [vmem:[#allocation5 + $0xe8] sm:$0xff] %vm2451, %v2384
      %2467 = vst.msk [vmem:[#allocation5 + $0xf8] sm:$0xff] %vm2451, %v2386
      %2468 = vst.msk [vmem:[#allocation5 + $0x108] sm:$0xff] %vm2451, %v2388
      %2469 = vst.msk [vmem:[#allocation5 + $0x118] sm:$0xff] %vm2451, %v2390
      %2470 = vst.msk [vmem:[#allocation5 + $0x128] sm:$0xff] %vm2451, %v2392
      %2471 = vst.msk [vmem:[#allocation5 + $0x138] sm:$0xff] %vm2451, %v2394
      %2472 = vst.msk [vmem:[#allocation5 + $0x148] sm:$0xff] %vm2451, %v2396
      %2473 = vst.msk [vmem:[#allocation5 + $0x158] sm:$0xff] %vm2451, %v2398
      %2474 = vst.msk [vmem:[#allocation5 + $0x168] sm:$0xff] %vm2451, %v2400
      %2475 = vst.msk [vmem:[#allocation5 + $0x178] sm:$0xff] %vm2451, %v2402
      %2476 = vst.msk [vmem:[#allocation5 + $0x188] sm:$0xff] %vm2451, %v2404
      %2477 = vst.msk [vmem:[#allocation5 + $0x198] sm:$0xff] %vm2451, %v2406
      %2478 = vst.msk [vmem:[#allocation5 + $0x1a8] sm:$0xff] %vm2451, %v2408
      %2479 = vst.msk [vmem:[#allocation5 + $0x1b8] sm:$0xff] %vm2451, %v2410
      %2480 = vst.msk [vmem:[#allocation5 + $0x1c8] sm:$0xff] %vm2451, %v2412
      %2481 = vst.msk [vmem:[#allocation5 + $0x1d8] sm:$0xff] %vm2451, %v2414
      %2482 = vst.msk [vmem:[#allocation5 + $0x1e8] sm:$0xff] %vm2451, %v2416
      %2483 = vst.msk [vmem:[#allocation5 + $0x1f8] sm:$0xff] %vm2451, %v2418
      %v2484 = vld [vmem:[#allocation3 + $0x2] sm:$0xff]
      %v2485 = vld [vmem:[#allocation3 + $0xa] sm:$0xff]
      %v2486 = vld [vmem:[#allocation3 + $0x1a] sm:$0xff]
      %v2487 = vld [vmem:[#allocation3 + $0x22] sm:$0xff]
      %v2488 = vld [vmem:[#allocation3 + $0x32] sm:$0xff]
      %v2489 = vld [vmem:[#allocation3 + $0x3a] sm:$0xff]
      %v2490 = vld [vmem:[#allocation3 + $0x4a] sm:$0xff]
      %v2491 = vld [vmem:[#allocation3 + $0x52] sm:$0xff]
      %v2492 = vld [vmem:[#allocation3 + $0x62] sm:$0xff]
      %v2493 = vld [vmem:[#allocation3 + $0x6a] sm:$0xff]
      %v2494 = vld [vmem:[#allocation3 + $0x7a] sm:$0xff]
      %v2495 = vld [vmem:[#allocation3 + $0x82] sm:$0xff]
      %v2496 = vld [vmem:[#allocation3 + $0x92] sm:$0xff]
      %v2497 = vld [vmem:[#allocation3 + $0x9a] sm:$0xff]
      %v2498 = vld [vmem:[#allocation3 + $0xaa] sm:$0xff]
      %v2499 = vld [vmem:[#allocation3 + $0xb2] sm:$0xff]
      %v2500 = vld [vmem:[#allocation3 + $0xc2] sm:$0xff]
      %v2501 = vld [vmem:[#allocation3 + $0xca] sm:$0xff]
      %v2502 = vld [vmem:[#allocation3 + $0xda] sm:$0xff]
      %v2503 = vld [vmem:[#allocation3 + $0xe2] sm:$0xff]
      %v2504 = vld [vmem:[#allocation3 + $0xf2] sm:$0xff]
      %v2505 = vld [vmem:[#allocation3 + $0xfa] sm:$0xff]
      %v2506 = vld [vmem:[#allocation3 + $0x10a] sm:$0xff]
      %v2507 = vld [vmem:[#allocation3 + $0x112] sm:$0xff]
      %v2508 = vld [vmem:[#allocation3 + $0x122] sm:$0xff]
      %v2509 = vld [vmem:[#allocation3 + $0x12a] sm:$0xff]
      %v2510 = vld [vmem:[#allocation3 + $0x13a] sm:$0xff]
      %v2511 = vld [vmem:[#allocation3 + $0x142] sm:$0xff]
      %v2512 = vld [vmem:[#allocation3 + $0x152] sm:$0xff]
      %v2513 = vld [vmem:[#allocation3 + $0x15a] sm:$0xff]
      %v2514 = vld [vmem:[#allocation3 + $0x16a] sm:$0xff]
      %v2515 = vld [vmem:[#allocation3 + $0x172] sm:$0xff]
      %2548 = vrot.lane.b32.xlu0 %v2484, 32
      %v2549 = vpop.permute.xlu0 %2548
      %2550 = vrot.lane.b32.xlu0 %v2485, 32
      %v2551 = vpop.permute.xlu0 %2550
      %2552 = vrot.lane.b32.xlu0 %v2486, 32
      %v2553 = vpop.permute.xlu0 %2552
      %2554 = vrot.lane.b32.xlu0 %v2487, 32
      %v2555 = vpop.permute.xlu0 %2554
      %2556 = vrot.lane.b32.xlu0 %v2488, 32
      %v2557 = vpop.permute.xlu0 %2556
      %2558 = vrot.lane.b32.xlu0 %v2489, 32
      %v2559 = vpop.permute.xlu0 %2558
      %2560 = vrot.lane.b32.xlu0 %v2490, 32
      %v2561 = vpop.permute.xlu0 %2560
      %2562 = vrot.lane.b32.xlu0 %v2491, 32
      %v2563 = vpop.permute.xlu0 %2562
      %2564 = vrot.lane.b32.xlu0 %v2492, 32
      %v2565 = vpop.permute.xlu0 %2564
      %2566 = vrot.lane.b32.xlu0 %v2493, 32
      %v2567 = vpop.permute.xlu0 %2566
      %2568 = vrot.lane.b32.xlu0 %v2494, 32
      %v2569 = vpop.permute.xlu0 %2568
      %2570 = vrot.lane.b32.xlu0 %v2495, 32
      %v2571 = vpop.permute.xlu0 %2570
      %2572 = vrot.lane.b32.xlu0 %v2496, 32
      %v2573 = vpop.permute.xlu0 %2572
      %2574 = vrot.lane.b32.xlu0 %v2497, 32
      %v2575 = vpop.permute.xlu0 %2574
      %2576 = vrot.lane.b32.xlu0 %v2498, 32
      %v2577 = vpop.permute.xlu0 %2576
      %2578 = vrot.lane.b32.xlu0 %v2499, 32
      %v2579 = vpop.permute.xlu0 %2578
      %2580 = vrot.lane.b32.xlu0 %v2500, 32
      %v2581 = vpop.permute.xlu0 %2580
      %2582 = vrot.lane.b32.xlu0 %v2501, 32
      %v2583 = vpop.permute.xlu0 %2582
      %2584 = vrot.lane.b32.xlu0 %v2502, 32
      %v2585 = vpop.permute.xlu0 %2584
      %2586 = vrot.lane.b32.xlu0 %v2503, 32
      %v2587 = vpop.permute.xlu0 %2586
      %2588 = vrot.lane.b32.xlu0 %v2504, 32
      %v2589 = vpop.permute.xlu0 %2588
      %2590 = vrot.lane.b32.xlu0 %v2505, 32
      %v2591 = vpop.permute.xlu0 %2590
      %2592 = vrot.lane.b32.xlu0 %v2506, 32
      %v2593 = vpop.permute.xlu0 %2592
      %2594 = vrot.lane.b32.xlu0 %v2507, 32
      %v2595 = vpop.permute.xlu0 %2594
      %2596 = vrot.lane.b32.xlu0 %v2508, 32
      %v2597 = vpop.permute.xlu0 %2596
      %2598 = vrot.lane.b32.xlu0 %v2509, 32
      %v2599 = vpop.permute.xlu0 %2598
      %2600 = vrot.lane.b32.xlu0 %v2510, 32
      %v2601 = vpop.permute.xlu0 %2600
      %2602 = vrot.lane.b32.xlu0 %v2511, 32
      %v2603 = vpop.permute.xlu0 %2602
      %2604 = vrot.lane.b32.xlu0 %v2512, 32
      %v2605 = vpop.permute.xlu0 %2604
      %2606 = vrot.lane.b32.xlu0 %v2513, 32
      %v2607 = vpop.permute.xlu0 %2606
      %2608 = vrot.lane.b32.xlu0 %v2514, 32
      %v2609 = vpop.permute.xlu0 %2608
      %2610 = vrot.lane.b32.xlu0 %v2515, 32
      %v2611 = vpop.permute.xlu0 %2610
      %vm2644 = vcmask 326912
      %2645 = vst.msk [vmem:[#allocation5 + $0x8] sm:$0xff] %vm2644, %v2549
      %2646 = vst.msk [vmem:[#allocation5 + $0x18] sm:$0xff] %vm2644, %v2551
      %2647 = vst.msk [vmem:[#allocation5 + $0x28] sm:$0xff] %vm2644, %v2553
      %2648 = vst.msk [vmem:[#allocation5 + $0x38] sm:$0xff] %vm2644, %v2555
      %2649 = vst.msk [vmem:[#allocation5 + $0x48] sm:$0xff] %vm2644, %v2557
      %2650 = vst.msk [vmem:[#allocation5 + $0x58] sm:$0xff] %vm2644, %v2559
      %2651 = vst.msk [vmem:[#allocation5 + $0x68] sm:$0xff] %vm2644, %v2561
      %2652 = vst.msk [vmem:[#allocation5 + $0x78] sm:$0xff] %vm2644, %v2563
      %2653 = vst.msk [vmem:[#allocation5 + $0x88] sm:$0xff] %vm2644, %v2565
      %2654 = vst.msk [vmem:[#allocation5 + $0x98] sm:$0xff] %vm2644, %v2567
      %2655 = vst.msk [vmem:[#allocation5 + $0xa8] sm:$0xff] %vm2644, %v2569
      %2656 = vst.msk [vmem:[#allocation5 + $0xb8] sm:$0xff] %vm2644, %v2571
      %2657 = vst.msk [vmem:[#allocation5 + $0xc8] sm:$0xff] %vm2644, %v2573
      %2658 = vst.msk [vmem:[#allocation5 + $0xd8] sm:$0xff] %vm2644, %v2575
      %2659 = vst.msk [vmem:[#allocation5 + $0xe8] sm:$0xff] %vm2644, %v2577
      %2660 = vst.msk [vmem:[#allocation5 + $0xf8] sm:$0xff] %vm2644, %v2579
      %2661 = vst.msk [vmem:[#allocation5 + $0x108] sm:$0xff] %vm2644, %v2581
      %2662 = vst.msk [vmem:[#allocation5 + $0x118] sm:$0xff] %vm2644, %v2583
      %2663 = vst.msk [vmem:[#allocation5 + $0x128] sm:$0xff] %vm2644, %v2585
      %2664 = vst.msk [vmem:[#allocation5 + $0x138] sm:$0xff] %vm2644, %v2587
      %2665 = vst.msk [vmem:[#allocation5 + $0x148] sm:$0xff] %vm2644, %v2589
      %2666 = vst.msk [vmem:[#allocation5 + $0x158] sm:$0xff] %vm2644, %v2591
      %2667 = vst.msk [vmem:[#allocation5 + $0x168] sm:$0xff] %vm2644, %v2593
      %2668 = vst.msk [vmem:[#allocation5 + $0x178] sm:$0xff] %vm2644, %v2595
      %2669 = vst.msk [vmem:[#allocation5 + $0x188] sm:$0xff] %vm2644, %v2597
      %2670 = vst.msk [vmem:[#allocation5 + $0x198] sm:$0xff] %vm2644, %v2599
      %2671 = vst.msk [vmem:[#allocation5 + $0x1a8] sm:$0xff] %vm2644, %v2601
      %2672 = vst.msk [vmem:[#allocation5 + $0x1b8] sm:$0xff] %vm2644, %v2603
      %2673 = vst.msk [vmem:[#allocation5 + $0x1c8] sm:$0xff] %vm2644, %v2605
      %2674 = vst.msk [vmem:[#allocation5 + $0x1d8] sm:$0xff] %vm2644, %v2607
      %2675 = vst.msk [vmem:[#allocation5 + $0x1e8] sm:$0xff] %vm2644, %v2609
      %2676 = vst.msk [vmem:[#allocation5 + $0x1f8] sm:$0xff] %vm2644, %v2611
      %v2677 = vld [vmem:[%s585] sm:$0xff]
      %v2678 = vld [vmem:[%s585 + $0x8] sm:$0xff]
      %v2679 = vld [vmem:[%s585 + $0x18] sm:$0xff]
      %v2680 = vld [vmem:[%s585 + $0x20] sm:$0xff]
      %v2681 = vld [vmem:[%s585 + $0x30] sm:$0xff]
      %v2682 = vld [vmem:[%s585 + $0x38] sm:$0xff]
      %v2683 = vld [vmem:[%s585 + $0x48] sm:$0xff]
      %v2684 = vld [vmem:[%s585 + $0x50] sm:$0xff]
      %v2685 = vld [vmem:[%s585 + $0x60] sm:$0xff]
      %v2686 = vld [vmem:[%s585 + $0x68] sm:$0xff]
      %v2687 = vld [vmem:[%s585 + $0x78] sm:$0xff]
      %v2688 = vld [vmem:[%s585 + $0x80] sm:$0xff]
      %v2689 = vld [vmem:[%s585 + $0x90] sm:$0xff]
      %v2690 = vld [vmem:[%s585 + $0x98] sm:$0xff]
      %v2691 = vld [vmem:[%s585 + $0xa8] sm:$0xff]
      %v2692 = vld [vmem:[%s585 + $0xb0] sm:$0xff]
      %v2693 = vld [vmem:[%s585 + $0xc0] sm:$0xff]
      %v2694 = vld [vmem:[%s585 + $0xc8] sm:$0xff]
      %v2695 = vld [vmem:[%s585 + $0xd8] sm:$0xff]
      %v2696 = vld [vmem:[%s585 + $0xe0] sm:$0xff]
      %v2697 = vld [vmem:[%s585 + $0xf0] sm:$0xff]
      %v2698 = vld [vmem:[%s585 + $0xf8] sm:$0xff]
      %v2699 = vld [vmem:[%s585 + $0x108] sm:$0xff]
      %v2700 = vld [vmem:[%s585 + $0x110] sm:$0xff]
      %v2701 = vld [vmem:[%s585 + $0x120] sm:$0xff]
      %v2702 = vld [vmem:[%s585 + $0x128] sm:$0xff]
      %v2703 = vld [vmem:[%s585 + $0x138] sm:$0xff]
      %v2704 = vld [vmem:[%s585 + $0x140] sm:$0xff]
      %v2705 = vld [vmem:[%s585 + $0x150] sm:$0xff]
      %v2706 = vld [vmem:[%s585 + $0x158] sm:$0xff]
      %v2707 = vld [vmem:[%s585 + $0x168] sm:$0xff]
      %v2708 = vld [vmem:[%s585 + $0x170] sm:$0xff]
      %2741 = vrot.lane.b32.xlu0 %v2677, 40
      %v2742 = vpop.permute.xlu0 %2741
      %2743 = vrot.lane.b32.xlu0 %v2678, 40
      %v2744 = vpop.permute.xlu0 %2743
      %2745 = vrot.lane.b32.xlu0 %v2679, 40
      %v2746 = vpop.permute.xlu0 %2745
      %2747 = vrot.lane.b32.xlu0 %v2680, 40
      %v2748 = vpop.permute.xlu0 %2747
      %2749 = vrot.lane.b32.xlu0 %v2681, 40
      %v2750 = vpop.permute.xlu0 %2749
      %2751 = vrot.lane.b32.xlu0 %v2682, 40
      %v2752 = vpop.permute.xlu0 %2751
      %2753 = vrot.lane.b32.xlu0 %v2683, 40
      %v2754 = vpop.permute.xlu0 %2753
      %2755 = vrot.lane.b32.xlu0 %v2684, 40
      %v2756 = vpop.permute.xlu0 %2755
      %2757 = vrot.lane.b32.xlu0 %v2685, 40
      %v2758 = vpop.permute.xlu0 %2757
      %2759 = vrot.lane.b32.xlu0 %v2686, 40
      %v2760 = vpop.permute.xlu0 %2759
      %2761 = vrot.lane.b32.xlu0 %v2687, 40
      %v2762 = vpop.permute.xlu0 %2761
      %2763 = vrot.lane.b32.xlu0 %v2688, 40
      %v2764 = vpop.permute.xlu0 %2763
      %2765 = vrot.lane.b32.xlu0 %v2689, 40
      %v2766 = vpop.permute.xlu0 %2765
      %2767 = vrot.lane.b32.xlu0 %v2690, 40
      %v2768 = vpop.permute.xlu0 %2767
      %2769 = vrot.lane.b32.xlu0 %v2691, 40
      %v2770 = vpop.permute.xlu0 %2769
      %2771 = vrot.lane.b32.xlu0 %v2692, 40
      %v2772 = vpop.permute.xlu0 %2771
      %2773 = vrot.lane.b32.xlu0 %v2693, 40
      %v2774 = vpop.permute.xlu0 %2773
      %2775 = vrot.lane.b32.xlu0 %v2694, 40
      %v2776 = vpop.permute.xlu0 %2775
      %2777 = vrot.lane.b32.xlu0 %v2695, 40
      %v2778 = vpop.permute.xlu0 %2777
      %2779 = vrot.lane.b32.xlu0 %v2696, 40
      %v2780 = vpop.permute.xlu0 %2779
      %2781 = vrot.lane.b32.xlu0 %v2697, 40
      %v2782 = vpop.permute.xlu0 %2781
      %2783 = vrot.lane.b32.xlu0 %v2698, 40
      %v2784 = vpop.permute.xlu0 %2783
      %2785 = vrot.lane.b32.xlu0 %v2699, 40
      %v2786 = vpop.permute.xlu0 %2785
      %2787 = vrot.lane.b32.xlu0 %v2700, 40
      %v2788 = vpop.permute.xlu0 %2787
      %2789 = vrot.lane.b32.xlu0 %v2701, 40
      %v2790 = vpop.permute.xlu0 %2789
      %2791 = vrot.lane.b32.xlu0 %v2702, 40
      %v2792 = vpop.permute.xlu0 %2791
      %2793 = vrot.lane.b32.xlu0 %v2703, 40
      %v2794 = vpop.permute.xlu0 %2793
      %2795 = vrot.lane.b32.xlu0 %v2704, 40
      %v2796 = vpop.permute.xlu0 %2795
      %2797 = vrot.lane.b32.xlu0 %v2705, 40
      %v2798 = vpop.permute.xlu0 %2797
      %2799 = vrot.lane.b32.xlu0 %v2706, 40
      %v2800 = vpop.permute.xlu0 %2799
      %2801 = vrot.lane.b32.xlu0 %v2707, 40
      %v2802 = vpop.permute.xlu0 %2801
      %2803 = vrot.lane.b32.xlu0 %v2708, 40
      %v2804 = vpop.permute.xlu0 %2803
      %vm2837 = vcmask 392512
      %2838 = vst.msk [vmem:[#allocation5 + $0x8] sm:$0xff] %vm2837, %v2742
      %2839 = vst.msk [vmem:[#allocation5 + $0x18] sm:$0xff] %vm2837, %v2744
      %2840 = vst.msk [vmem:[#allocation5 + $0x28] sm:$0xff] %vm2837, %v2746
      %2841 = vst.msk [vmem:[#allocation5 + $0x38] sm:$0xff] %vm2837, %v2748
      %2842 = vst.msk [vmem:[#allocation5 + $0x48] sm:$0xff] %vm2837, %v2750
      %2843 = vst.msk [vmem:[#allocation5 + $0x58] sm:$0xff] %vm2837, %v2752
      %2844 = vst.msk [vmem:[#allocation5 + $0x68] sm:$0xff] %vm2837, %v2754
      %2845 = vst.msk [vmem:[#allocation5 + $0x78] sm:$0xff] %vm2837, %v2756
      %2846 = vst.msk [vmem:[#allocation5 + $0x88] sm:$0xff] %vm2837, %v2758
      %2847 = vst.msk [vmem:[#allocation5 + $0x98] sm:$0xff] %vm2837, %v2760
      %2848 = vst.msk [vmem:[#allocation5 + $0xa8] sm:$0xff] %vm2837, %v2762
      %2849 = vst.msk [vmem:[#allocation5 + $0xb8] sm:$0xff] %vm2837, %v2764
      %2850 = vst.msk [vmem:[#allocation5 + $0xc8] sm:$0xff] %vm2837, %v2766
      %2851 = vst.msk [vmem:[#allocation5 + $0xd8] sm:$0xff] %vm2837, %v2768
      %2852 = vst.msk [vmem:[#allocation5 + $0xe8] sm:$0xff] %vm2837, %v2770
      %2853 = vst.msk [vmem:[#allocation5 + $0xf8] sm:$0xff] %vm2837, %v2772
      %2854 = vst.msk [vmem:[#allocation5 + $0x108] sm:$0xff] %vm2837, %v2774
      %2855 = vst.msk [vmem:[#allocation5 + $0x118] sm:$0xff] %vm2837, %v2776
      %2856 = vst.msk [vmem:[#allocation5 + $0x128] sm:$0xff] %vm2837, %v2778
      %2857 = vst.msk [vmem:[#allocation5 + $0x138] sm:$0xff] %vm2837, %v2780
      %2858 = vst.msk [vmem:[#allocation5 + $0x148] sm:$0xff] %vm2837, %v2782
      %2859 = vst.msk [vmem:[#allocation5 + $0x158] sm:$0xff] %vm2837, %v2784
      %2860 = vst.msk [vmem:[#allocation5 + $0x168] sm:$0xff] %vm2837, %v2786
      %2861 = vst.msk [vmem:[#allocation5 + $0x178] sm:$0xff] %vm2837, %v2788
      %2862 = vst.msk [vmem:[#allocation5 + $0x188] sm:$0xff] %vm2837, %v2790
      %2863 = vst.msk [vmem:[#allocation5 + $0x198] sm:$0xff] %vm2837, %v2792
      %2864 = vst.msk [vmem:[#allocation5 + $0x1a8] sm:$0xff] %vm2837, %v2794
      %2865 = vst.msk [vmem:[#allocation5 + $0x1b8] sm:$0xff] %vm2837, %v2796
      %2866 = vst.msk [vmem:[#allocation5 + $0x1c8] sm:$0xff] %vm2837, %v2798
      %2867 = vst.msk [vmem:[#allocation5 + $0x1d8] sm:$0xff] %vm2837, %v2800
      %2868 = vst.msk [vmem:[#allocation5 + $0x1e8] sm:$0xff] %vm2837, %v2802
      %2869 = vst.msk [vmem:[#allocation5 + $0x1f8] sm:$0xff] %vm2837, %v2804
      %v2870 = vld [vmem:[%s585 + $0x1] sm:$0xff]
      %v2871 = vld [vmem:[%s585 + $0x9] sm:$0xff]
      %v2872 = vld [vmem:[%s585 + $0x19] sm:$0xff]
      %v2873 = vld [vmem:[%s585 + $0x21] sm:$0xff]
      %v2874 = vld [vmem:[%s585 + $0x31] sm:$0xff]
      %v2875 = vld [vmem:[%s585 + $0x39] sm:$0xff]
      %v2876 = vld [vmem:[%s585 + $0x49] sm:$0xff]
      %v2877 = vld [vmem:[%s585 + $0x51] sm:$0xff]
      %v2878 = vld [vmem:[%s585 + $0x61] sm:$0xff]
      %v2879 = vld [vmem:[%s585 + $0x69] sm:$0xff]
      %v2880 = vld [vmem:[%s585 + $0x79] sm:$0xff]
      %v2881 = vld [vmem:[%s585 + $0x81] sm:$0xff]
      %v2882 = vld [vmem:[%s585 + $0x91] sm:$0xff]
      %v2883 = vld [vmem:[%s585 + $0x99] sm:$0xff]
      %v2884 = vld [vmem:[%s585 + $0xa9] sm:$0xff]
      %v2885 = vld [vmem:[%s585 + $0xb1] sm:$0xff]
      %v2886 = vld [vmem:[%s585 + $0xc1] sm:$0xff]
      %v2887 = vld [vmem:[%s585 + $0xc9] sm:$0xff]
      %v2888 = vld [vmem:[%s585 + $0xd9] sm:$0xff]
      %v2889 = vld [vmem:[%s585 + $0xe1] sm:$0xff]
      %v2890 = vld [vmem:[%s585 + $0xf1] sm:$0xff]
      %v2891 = vld [vmem:[%s585 + $0xf9] sm:$0xff]
      %v2892 = vld [vmem:[%s585 + $0x109] sm:$0xff]
      %v2893 = vld [vmem:[%s585 + $0x111] sm:$0xff]
      %v2894 = vld [vmem:[%s585 + $0x121] sm:$0xff]
      %v2895 = vld [vmem:[%s585 + $0x129] sm:$0xff]
      %v2896 = vld [vmem:[%s585 + $0x139] sm:$0xff]
      %v2897 = vld [vmem:[%s585 + $0x141] sm:$0xff]
      %v2898 = vld [vmem:[%s585 + $0x151] sm:$0xff]
      %v2899 = vld [vmem:[%s585 + $0x159] sm:$0xff]
      %v2900 = vld [vmem:[%s585 + $0x169] sm:$0xff]
      %v2901 = vld [vmem:[%s585 + $0x171] sm:$0xff]
      %2934 = vrot.lane.b32.xlu0 %v2870, 48
      %v2935 = vpop.permute.xlu0 %2934
      %2936 = vrot.lane.b32.xlu0 %v2871, 48
      %v2937 = vpop.permute.xlu0 %2936
      %2938 = vrot.lane.b32.xlu0 %v2872, 48
      %v2939 = vpop.permute.xlu0 %2938
      %2940 = vrot.lane.b32.xlu0 %v2873, 48
      %v2941 = vpop.permute.xlu0 %2940
      %2942 = vrot.lane.b32.xlu0 %v2874, 48
      %v2943 = vpop.permute.xlu0 %2942
      %2944 = vrot.lane.b32.xlu0 %v2875, 48
      %v2945 = vpop.permute.xlu0 %2944
      %2946 = vrot.lane.b32.xlu0 %v2876, 48
      %v2947 = vpop.permute.xlu0 %2946
      %2948 = vrot.lane.b32.xlu0 %v2877, 48
      %v2949 = vpop.permute.xlu0 %2948
      %2950 = vrot.lane.b32.xlu0 %v2878, 48
      %v2951 = vpop.permute.xlu0 %2950
      %2952 = vrot.lane.b32.xlu0 %v2879, 48
      %v2953 = vpop.permute.xlu0 %2952
      %2954 = vrot.lane.b32.xlu0 %v2880, 48
      %v2955 = vpop.permute.xlu0 %2954
      %2956 = vrot.lane.b32.xlu0 %v2881, 48
      %v2957 = vpop.permute.xlu0 %2956
      %2958 = vrot.lane.b32.xlu0 %v2882, 48
      %v2959 = vpop.permute.xlu0 %2958
      %2960 = vrot.lane.b32.xlu0 %v2883, 48
      %v2961 = vpop.permute.xlu0 %2960
      %2962 = vrot.lane.b32.xlu0 %v2884, 48
      %v2963 = vpop.permute.xlu0 %2962
      %2964 = vrot.lane.b32.xlu0 %v2885, 48
      %v2965 = vpop.permute.xlu0 %2964
      %2966 = vrot.lane.b32.xlu0 %v2886, 48
      %v2967 = vpop.permute.xlu0 %2966
      %2968 = vrot.lane.b32.xlu0 %v2887, 48
      %v2969 = vpop.permute.xlu0 %2968
      %2970 = vrot.lane.b32.xlu0 %v2888, 48
      %v2971 = vpop.permute.xlu0 %2970
      %2972 = vrot.lane.b32.xlu0 %v2889, 48
      %v2973 = vpop.permute.xlu0 %2972
      %2974 = vrot.lane.b32.xlu0 %v2890, 48
      %v2975 = vpop.permute.xlu0 %2974
      %2976 = vrot.lane.b32.xlu0 %v2891, 48
      %v2977 = vpop.permute.xlu0 %2976
      %2978 = vrot.lane.b32.xlu0 %v2892, 48
      %v2979 = vpop.permute.xlu0 %2978
      %2980 = vrot.lane.b32.xlu0 %v2893, 48
      %v2981 = vpop.permute.xlu0 %2980
      %2982 = vrot.lane.b32.xlu0 %v2894, 48
      %v2983 = vpop.permute.xlu0 %2982
      %2984 = vrot.lane.b32.xlu0 %v2895, 48
      %v2985 = vpop.permute.xlu0 %2984
      %2986 = vrot.lane.b32.xlu0 %v2896, 48
      %v2987 = vpop.permute.xlu0 %2986
      %2988 = vrot.lane.b32.xlu0 %v2897, 48
      %v2989 = vpop.permute.xlu0 %2988
      %2990 = vrot.lane.b32.xlu0 %v2898, 48
      %v2991 = vpop.permute.xlu0 %2990
      %2992 = vrot.lane.b32.xlu0 %v2899, 48
      %v2993 = vpop.permute.xlu0 %2992
      %2994 = vrot.lane.b32.xlu0 %v2900, 48
      %v2995 = vpop.permute.xlu0 %2994
      %2996 = vrot.lane.b32.xlu0 %v2901, 48
      %v2997 = vpop.permute.xlu0 %2996
      %vm3030 = vcmask 458112
      %3031 = vst.msk [vmem:[#allocation5 + $0x8] sm:$0xff] %vm3030, %v2935
      %3032 = vst.msk [vmem:[#allocation5 + $0x18] sm:$0xff] %vm3030, %v2937
      %3033 = vst.msk [vmem:[#allocation5 + $0x28] sm:$0xff] %vm3030, %v2939
      %3034 = vst.msk [vmem:[#allocation5 + $0x38] sm:$0xff] %vm3030, %v2941
      %3035 = vst.msk [vmem:[#allocation5 + $0x48] sm:$0xff] %vm3030, %v2943
      %3036 = vst.msk [vmem:[#allocation5 + $0x58] sm:$0xff] %vm3030, %v2945
      %3037 = vst.msk [vmem:[#allocation5 + $0x68] sm:$0xff] %vm3030, %v2947
      %3038 = vst.msk [vmem:[#allocation5 + $0x78] sm:$0xff] %vm3030, %v2949
      %3039 = vst.msk [vmem:[#allocation5 + $0x88] sm:$0xff] %vm3030, %v2951
      %3040 = vst.msk [vmem:[#allocation5 + $0x98] sm:$0xff] %vm3030, %v2953
      %3041 = vst.msk [vmem:[#allocation5 + $0xa8] sm:$0xff] %vm3030, %v2955
      %3042 = vst.msk [vmem:[#allocation5 + $0xb8] sm:$0xff] %vm3030, %v2957
      %3043 = vst.msk [vmem:[#allocation5 + $0xc8] sm:$0xff] %vm3030, %v2959
      %3044 = vst.msk [vmem:[#allocation5 + $0xd8] sm:$0xff] %vm3030, %v2961
      %3045 = vst.msk [vmem:[#allocation5 + $0xe8] sm:$0xff] %vm3030, %v2963
      %3046 = vst.msk [vmem:[#allocation5 + $0xf8] sm:$0xff] %vm3030, %v2965
      %3047 = vst.msk [vmem:[#allocation5 + $0x108] sm:$0xff] %vm3030, %v2967
      %3048 = vst.msk [vmem:[#allocation5 + $0x118] sm:$0xff] %vm3030, %v2969
      %3049 = vst.msk [vmem:[#allocation5 + $0x128] sm:$0xff] %vm3030, %v2971
      %3050 = vst.msk [vmem:[#allocation5 + $0x138] sm:$0xff] %vm3030, %v2973
      %3051 = vst.msk [vmem:[#allocation5 + $0x148] sm:$0xff] %vm3030, %v2975
      %3052 = vst.msk [vmem:[#allocation5 + $0x158] sm:$0xff] %vm3030, %v2977
      %3053 = vst.msk [vmem:[#allocation5 + $0x168] sm:$0xff] %vm3030, %v2979
      %3054 = vst.msk [vmem:[#allocation5 + $0x178] sm:$0xff] %vm3030, %v2981
      %3055 = vst.msk [vmem:[#allocation5 + $0x188] sm:$0xff] %vm3030, %v2983
      %3056 = vst.msk [vmem:[#allocation5 + $0x198] sm:$0xff] %vm3030, %v2985
      %3057 = vst.msk [vmem:[#allocation5 + $0x1a8] sm:$0xff] %vm3030, %v2987
      %3058 = vst.msk [vmem:[#allocation5 + $0x1b8] sm:$0xff] %vm3030, %v2989
      %3059 = vst.msk [vmem:[#allocation5 + $0x1c8] sm:$0xff] %vm3030, %v2991
      %3060 = vst.msk [vmem:[#allocation5 + $0x1d8] sm:$0xff] %vm3030, %v2993
      %3061 = vst.msk [vmem:[#allocation5 + $0x1e8] sm:$0xff] %vm3030, %v2995
      %3062 = vst.msk [vmem:[#allocation5 + $0x1f8] sm:$0xff] %vm3030, %v2997
      %v3063 = vld [vmem:[%s585 + $0x2] sm:$0xff]
      %v3064 = vld [vmem:[%s585 + $0xa] sm:$0xff]
      %v3065 = vld [vmem:[%s585 + $0x1a] sm:$0xff]
      %v3066 = vld [vmem:[%s585 + $0x22] sm:$0xff]
      %v3067 = vld [vmem:[%s585 + $0x32] sm:$0xff]
      %v3068 = vld [vmem:[%s585 + $0x3a] sm:$0xff]
      %v3069 = vld [vmem:[%s585 + $0x4a] sm:$0xff]
      %v3070 = vld [vmem:[%s585 + $0x52] sm:$0xff]
      %v3071 = vld [vmem:[%s585 + $0x62] sm:$0xff]
      %v3072 = vld [vmem:[%s585 + $0x6a] sm:$0xff]
      %v3073 = vld [vmem:[%s585 + $0x7a] sm:$0xff]
      %v3074 = vld [vmem:[%s585 + $0x82] sm:$0xff]
      %v3075 = vld [vmem:[%s585 + $0x92] sm:$0xff]
      %v3076 = vld [vmem:[%s585 + $0x9a] sm:$0xff]
      %v3077 = vld [vmem:[%s585 + $0xaa] sm:$0xff]
      %v3078 = vld [vmem:[%s585 + $0xb2] sm:$0xff]
      %v3079 = vld [vmem:[%s585 + $0xc2] sm:$0xff]
      %v3080 = vld [vmem:[%s585 + $0xca] sm:$0xff]
      %v3081 = vld [vmem:[%s585 + $0xda] sm:$0xff]
      %v3082 = vld [vmem:[%s585 + $0xe2] sm:$0xff]
      %v3083 = vld [vmem:[%s585 + $0xf2] sm:$0xff]
      %v3084 = vld [vmem:[%s585 + $0xfa] sm:$0xff]
      %v3085 = vld [vmem:[%s585 + $0x10a] sm:$0xff]
      %v3086 = vld [vmem:[%s585 + $0x112] sm:$0xff]
      %v3087 = vld [vmem:[%s585 + $0x122] sm:$0xff]
      %v3088 = vld [vmem:[%s585 + $0x12a] sm:$0xff]
      %v3089 = vld [vmem:[%s585 + $0x13a] sm:$0xff]
      %v3090 = vld [vmem:[%s585 + $0x142] sm:$0xff]
      %v3091 = vld [vmem:[%s585 + $0x152] sm:$0xff]
      %v3092 = vld [vmem:[%s585 + $0x15a] sm:$0xff]
      %v3093 = vld [vmem:[%s585 + $0x16a] sm:$0xff]
      %v3094 = vld [vmem:[%s585 + $0x172] sm:$0xff]
      %3127 = vrot.lane.b32.xlu0 %v3063, 56
      %v3128 = vpop.permute.xlu0 %3127
      %3129 = vrot.lane.b32.xlu0 %v3064, 56
      %v3130 = vpop.permute.xlu0 %3129
      %3131 = vrot.lane.b32.xlu0 %v3065, 56
      %v3132 = vpop.permute.xlu0 %3131
      %3133 = vrot.lane.b32.xlu0 %v3066, 56
      %v3134 = vpop.permute.xlu0 %3133
      %3135 = vrot.lane.b32.xlu0 %v3067, 56
      %v3136 = vpop.permute.xlu0 %3135
      %3137 = vrot.lane.b32.xlu0 %v3068, 56
      %v3138 = vpop.permute.xlu0 %3137
      %3139 = vrot.lane.b32.xlu0 %v3069, 56
      %v3140 = vpop.permute.xlu0 %3139
      %3141 = vrot.lane.b32.xlu0 %v3070, 56
      %v3142 = vpop.permute.xlu0 %3141
      %3143 = vrot.lane.b32.xlu0 %v3071, 56
      %v3144 = vpop.permute.xlu0 %3143
      %3145 = vrot.lane.b32.xlu0 %v3072, 56
      %v3146 = vpop.permute.xlu0 %3145
      %3147 = vrot.lane.b32.xlu0 %v3073, 56
      %v3148 = vpop.permute.xlu0 %3147
      %3149 = vrot.lane.b32.xlu0 %v3074, 56
      %v3150 = vpop.permute.xlu0 %3149
      %3151 = vrot.lane.b32.xlu0 %v3075, 56
      %v3152 = vpop.permute.xlu0 %3151
      %3153 = vrot.lane.b32.xlu0 %v3076, 56
      %v3154 = vpop.permute.xlu0 %3153
      %3155 = vrot.lane.b32.xlu0 %v3077, 56
      %v3156 = vpop.permute.xlu0 %3155
      %3157 = vrot.lane.b32.xlu0 %v3078, 56
      %v3158 = vpop.permute.xlu0 %3157
      %3159 = vrot.lane.b32.xlu0 %v3079, 56
      %v3160 = vpop.permute.xlu0 %3159
      %3161 = vrot.lane.b32.xlu0 %v3080, 56
      %v3162 = vpop.permute.xlu0 %3161
      %3163 = vrot.lane.b32.xlu0 %v3081, 56
      %v3164 = vpop.permute.xlu0 %3163
      %3165 = vrot.lane.b32.xlu0 %v3082, 56
      %v3166 = vpop.permute.xlu0 %3165
      %3167 = vrot.lane.b32.xlu0 %v3083, 56
      %v3168 = vpop.permute.xlu0 %3167
      %3169 = vrot.lane.b32.xlu0 %v3084, 56
      %v3170 = vpop.permute.xlu0 %3169
      %3171 = vrot.lane.b32.xlu0 %v3085, 56
      %v3172 = vpop.permute.xlu0 %3171
      %3173 = vrot.lane.b32.xlu0 %v3086, 56
      %v3174 = vpop.permute.xlu0 %3173
      %3175 = vrot.lane.b32.xlu0 %v3087, 56
      %v3176 = vpop.permute.xlu0 %3175
      %3177 = vrot.lane.b32.xlu0 %v3088, 56
      %v3178 = vpop.permute.xlu0 %3177
      %3179 = vrot.lane.b32.xlu0 %v3089, 56
      %v3180 = vpop.permute.xlu0 %3179
      %3181 = vrot.lane.b32.xlu0 %v3090, 56
      %v3182 = vpop.permute.xlu0 %3181
      %3183 = vrot.lane.b32.xlu0 %v3091, 56
      %v3184 = vpop.permute.xlu0 %3183
      %3185 = vrot.lane.b32.xlu0 %v3092, 56
      %v3186 = vpop.permute.xlu0 %3185
      %3187 = vrot.lane.b32.xlu0 %v3093, 56
      %v3188 = vpop.permute.xlu0 %3187
      %3189 = vrot.lane.b32.xlu0 %v3094, 56
      %v3190 = vpop.permute.xlu0 %3189
      %vm3223 = vcmask 523712
      %3224 = vst.msk [vmem:[#allocation5 + $0x8] sm:$0xff] %vm3223, %v3128
      %3225 = vst.msk [vmem:[#allocation5 + $0x18] sm:$0xff] %vm3223, %v3130
      %3226 = vst.msk [vmem:[#allocation5 + $0x28] sm:$0xff] %vm3223, %v3132
      %3227 = vst.msk [vmem:[#allocation5 + $0x38] sm:$0xff] %vm3223, %v3134
      %3228 = vst.msk [vmem:[#allocation5 + $0x48] sm:$0xff] %vm3223, %v3136
      %3229 = vst.msk [vmem:[#allocation5 + $0x58] sm:$0xff] %vm3223, %v3138
      %3230 = vst.msk [vmem:[#allocation5 + $0x68] sm:$0xff] %vm3223, %v3140
      %3231 = vst.msk [vmem:[#allocation5 + $0x78] sm:$0xff] %vm3223, %v3142
      %3232 = vst.msk [vmem:[#allocation5 + $0x88] sm:$0xff] %vm3223, %v3144
      %3233 = vst.msk [vmem:[#allocation5 + $0x98] sm:$0xff] %vm3223, %v3146
      %3234 = vst.msk [vmem:[#allocation5 + $0xa8] sm:$0xff] %vm3223, %v3148
      %3235 = vst.msk [vmem:[#allocation5 + $0xb8] sm:$0xff] %vm3223, %v3150
      %3236 = vst.msk [vmem:[#allocation5 + $0xc8] sm:$0xff] %vm3223, %v3152
      %3237 = vst.msk [vmem:[#allocation5 + $0xd8] sm:$0xff] %vm3223, %v3154
      %3238 = vst.msk [vmem:[#allocation5 + $0xe8] sm:$0xff] %vm3223, %v3156
      %3239 = vst.msk [vmem:[#allocation5 + $0xf8] sm:$0xff] %vm3223, %v3158
      %3240 = vst.msk [vmem:[#allocation5 + $0x108] sm:$0xff] %vm3223, %v3160
      %3241 = vst.msk [vmem:[#allocation5 + $0x118] sm:$0xff] %vm3223, %v3162
      %3242 = vst.msk [vmem:[#allocation5 + $0x128] sm:$0xff] %vm3223, %v3164
      %3243 = vst.msk [vmem:[#allocation5 + $0x138] sm:$0xff] %vm3223, %v3166
      %3244 = vst.msk [vmem:[#allocation5 + $0x148] sm:$0xff] %vm3223, %v3168
      %3245 = vst.msk [vmem:[#allocation5 + $0x158] sm:$0xff] %vm3223, %v3170
      %3246 = vst.msk [vmem:[#allocation5 + $0x168] sm:$0xff] %vm3223, %v3172
      %3247 = vst.msk [vmem:[#allocation5 + $0x178] sm:$0xff] %vm3223, %v3174
      %3248 = vst.msk [vmem:[#allocation5 + $0x188] sm:$0xff] %vm3223, %v3176
      %3249 = vst.msk [vmem:[#allocation5 + $0x198] sm:$0xff] %vm3223, %v3178
      %3250 = vst.msk [vmem:[#allocation5 + $0x1a8] sm:$0xff] %vm3223, %v3180
      %3251 = vst.msk [vmem:[#allocation5 + $0x1b8] sm:$0xff] %vm3223, %v3182
      %3252 = vst.msk [vmem:[#allocation5 + $0x1c8] sm:$0xff] %vm3223, %v3184
      %3253 = vst.msk [vmem:[#allocation5 + $0x1d8] sm:$0xff] %vm3223, %v3186
      %3254 = vst.msk [vmem:[#allocation5 + $0x1e8] sm:$0xff] %vm3223, %v3188
      %3255 = vst.msk [vmem:[#allocation5 + $0x1f8] sm:$0xff] %vm3223, %v3190
      %s3256 = scalar_lea.vmem [#allocation3], 48
      %v3257 = vld [vmem:[%s3256] sm:$0xff]
      %v3258 = vld [vmem:[%s3256 + $0x8] sm:$0xff]
      %v3259 = vld [vmem:[%s3256 + $0x18] sm:$0xff]
      %v3260 = vld [vmem:[%s3256 + $0x20] sm:$0xff]
      %v3261 = vld [vmem:[%s3256 + $0x30] sm:$0xff]
      %v3262 = vld [vmem:[%s3256 + $0x38] sm:$0xff]
      %v3263 = vld [vmem:[%s3256 + $0x48] sm:$0xff]
      %v3264 = vld [vmem:[%s3256 + $0x50] sm:$0xff]
      %v3265 = vld [vmem:[%s3256 + $0x60] sm:$0xff]
      %v3266 = vld [vmem:[%s3256 + $0x68] sm:$0xff]
      %v3267 = vld [vmem:[%s3256 + $0x78] sm:$0xff]
      %v3268 = vld [vmem:[%s3256 + $0x80] sm:$0xff]
      %v3269 = vld [vmem:[%s3256 + $0x90] sm:$0xff]
      %v3270 = vld [vmem:[%s3256 + $0x98] sm:$0xff]
      %v3271 = vld [vmem:[%s3256 + $0xa8] sm:$0xff]
      %v3272 = vld [vmem:[%s3256 + $0xb0] sm:$0xff]
      %v3273 = vld [vmem:[%s3256 + $0xc0] sm:$0xff]
      %v3274 = vld [vmem:[%s3256 + $0xc8] sm:$0xff]
      %v3275 = vld [vmem:[%s3256 + $0xd8] sm:$0xff]
      %v3276 = vld [vmem:[%s3256 + $0xe0] sm:$0xff]
      %v3277 = vld [vmem:[%s3256 + $0xf0] sm:$0xff]
      %v3278 = vld [vmem:[%s3256 + $0xf8] sm:$0xff]
      %v3279 = vld [vmem:[%s3256 + $0x108] sm:$0xff]
      %v3280 = vld [vmem:[%s3256 + $0x110] sm:$0xff]
      %v3281 = vld [vmem:[%s3256 + $0x120] sm:$0xff]
      %v3282 = vld [vmem:[%s3256 + $0x128] sm:$0xff]
      %v3283 = vld [vmem:[%s3256 + $0x138] sm:$0xff]
      %v3284 = vld [vmem:[%s3256 + $0x140] sm:$0xff]
      %v3285 = vld [vmem:[%s3256 + $0x150] sm:$0xff]
      %v3286 = vld [vmem:[%s3256 + $0x158] sm:$0xff]
      %v3287 = vld [vmem:[%s3256 + $0x168] sm:$0xff]
      %v3288 = vld [vmem:[%s3256 + $0x170] sm:$0xff]
      %3321 = vrot.lane.b32.xlu0 %v3257, 64
      %v3322 = vpop.permute.xlu0 %3321
      %3323 = vrot.lane.b32.xlu0 %v3258, 64
      %v3324 = vpop.permute.xlu0 %3323
      %3325 = vrot.lane.b32.xlu0 %v3259, 64
      %v3326 = vpop.permute.xlu0 %3325
      %3327 = vrot.lane.b32.xlu0 %v3260, 64
      %v3328 = vpop.permute.xlu0 %3327
      %3329 = vrot.lane.b32.xlu0 %v3261, 64
      %v3330 = vpop.permute.xlu0 %3329
      %3331 = vrot.lane.b32.xlu0 %v3262, 64
      %v3332 = vpop.permute.xlu0 %3331
      %3333 = vrot.lane.b32.xlu0 %v3263, 64
      %v3334 = vpop.permute.xlu0 %3333
      %3335 = vrot.lane.b32.xlu0 %v3264, 64
      %v3336 = vpop.permute.xlu0 %3335
      %3337 = vrot.lane.b32.xlu0 %v3265, 64
      %v3338 = vpop.permute.xlu0 %3337
      %3339 = vrot.lane.b32.xlu0 %v3266, 64
      %v3340 = vpop.permute.xlu0 %3339
      %3341 = vrot.lane.b32.xlu0 %v3267, 64
      %v3342 = vpop.permute.xlu0 %3341
      %3343 = vrot.lane.b32.xlu0 %v3268, 64
      %v3344 = vpop.permute.xlu0 %3343
      %3345 = vrot.lane.b32.xlu0 %v3269, 64
      %v3346 = vpop.permute.xlu0 %3345
      %3347 = vrot.lane.b32.xlu0 %v3270, 64
      %v3348 = vpop.permute.xlu0 %3347
      %3349 = vrot.lane.b32.xlu0 %v3271, 64
      %v3350 = vpop.permute.xlu0 %3349
      %3351 = vrot.lane.b32.xlu0 %v3272, 64
      %v3352 = vpop.permute.xlu0 %3351
      %3353 = vrot.lane.b32.xlu0 %v3273, 64
      %v3354 = vpop.permute.xlu0 %3353
      %3355 = vrot.lane.b32.xlu0 %v3274, 64
      %v3356 = vpop.permute.xlu0 %3355
      %3357 = vrot.lane.b32.xlu0 %v3275, 64
      %v3358 = vpop.permute.xlu0 %3357
      %3359 = vrot.lane.b32.xlu0 %v3276, 64
      %v3360 = vpop.permute.xlu0 %3359
      %3361 = vrot.lane.b32.xlu0 %v3277, 64
      %v3362 = vpop.permute.xlu0 %3361
      %3363 = vrot.lane.b32.xlu0 %v3278, 64
      %v3364 = vpop.permute.xlu0 %3363
      %3365 = vrot.lane.b32.xlu0 %v3279, 64
      %v3366 = vpop.permute.xlu0 %3365
      %3367 = vrot.lane.b32.xlu0 %v3280, 64
      %v3368 = vpop.permute.xlu0 %3367
      %3369 = vrot.lane.b32.xlu0 %v3281, 64
      %v3370 = vpop.permute.xlu0 %3369
      %3371 = vrot.lane.b32.xlu0 %v3282, 64
      %v3372 = vpop.permute.xlu0 %3371
      %3373 = vrot.lane.b32.xlu0 %v3283, 64
      %v3374 = vpop.permute.xlu0 %3373
      %3375 = vrot.lane.b32.xlu0 %v3284, 64
      %v3376 = vpop.permute.xlu0 %3375
      %3377 = vrot.lane.b32.xlu0 %v3285, 64
      %v3378 = vpop.permute.xlu0 %3377
      %3379 = vrot.lane.b32.xlu0 %v3286, 64
      %v3380 = vpop.permute.xlu0 %3379
      %3381 = vrot.lane.b32.xlu0 %v3287, 64
      %v3382 = vpop.permute.xlu0 %3381
      %3383 = vrot.lane.b32.xlu0 %v3288, 64
      %v3384 = vpop.permute.xlu0 %3383
      %vm3417 = vcmask 589312
      %3418 = vst.msk [vmem:[#allocation5 + $0x8] sm:$0xff] %vm3417, %v3322
      %3419 = vst.msk [vmem:[#allocation5 + $0x18] sm:$0xff] %vm3417, %v3324
      %3420 = vst.msk [vmem:[#allocation5 + $0x28] sm:$0xff] %vm3417, %v3326
      %3421 = vst.msk [vmem:[#allocation5 + $0x38] sm:$0xff] %vm3417, %v3328
      %3422 = vst.msk [vmem:[#allocation5 + $0x48] sm:$0xff] %vm3417, %v3330
      %3423 = vst.msk [vmem:[#allocation5 + $0x58] sm:$0xff] %vm3417, %v3332
      %3424 = vst.msk [vmem:[#allocation5 + $0x68] sm:$0xff] %vm3417, %v3334
      %3425 = vst.msk [vmem:[#allocation5 + $0x78] sm:$0xff] %vm3417, %v3336
      %3426 = vst.msk [vmem:[#allocation5 + $0x88] sm:$0xff] %vm3417, %v3338
      %3427 = vst.msk [vmem:[#allocation5 + $0x98] sm:$0xff] %vm3417, %v3340
      %3428 = vst.msk [vmem:[#allocation5 + $0xa8] sm:$0xff] %vm3417, %v3342
      %3429 = vst.msk [vmem:[#allocation5 + $0xb8] sm:$0xff] %vm3417, %v3344
      %3430 = vst.msk [vmem:[#allocation5 + $0xc8] sm:$0xff] %vm3417, %v3346
      %3431 = vst.msk [vmem:[#allocation5 + $0xd8] sm:$0xff] %vm3417, %v3348
      %3432 = vst.msk [vmem:[#allocation5 + $0xe8] sm:$0xff] %vm3417, %v3350
      %3433 = vst.msk [vmem:[#allocation5 + $0xf8] sm:$0xff] %vm3417, %v3352
      %3434 = vst.msk [vmem:[#allocation5 + $0x108] sm:$0xff] %vm3417, %v3354
      %3435 = vst.msk [vmem:[#allocation5 + $0x118] sm:$0xff] %vm3417, %v3356
      %3436 = vst.msk [vmem:[#allocation5 + $0x128] sm:$0xff] %vm3417, %v3358
      %3437 = vst.msk [vmem:[#allocation5 + $0x138] sm:$0xff] %vm3417, %v3360
      %3438 = vst.msk [vmem:[#allocation5 + $0x148] sm:$0xff] %vm3417, %v3362
      %3439 = vst.msk [vmem:[#allocation5 + $0x158] sm:$0xff] %vm3417, %v3364
      %3440 = vst.msk [vmem:[#allocation5 + $0x168] sm:$0xff] %vm3417, %v3366
      %3441 = vst.msk [vmem:[#allocation5 + $0x178] sm:$0xff] %vm3417, %v3368
      %3442 = vst.msk [vmem:[#allocation5 + $0x188] sm:$0xff] %vm3417, %v3370
      %3443 = vst.msk [vmem:[#allocation5 + $0x198] sm:$0xff] %vm3417, %v3372
      %3444 = vst.msk [vmem:[#allocation5 + $0x1a8] sm:$0xff] %vm3417, %v3374
      %3445 = vst.msk [vmem:[#allocation5 + $0x1b8] sm:$0xff] %vm3417, %v3376
      %3446 = vst.msk [vmem:[#allocation5 + $0x1c8] sm:$0xff] %vm3417, %v3378
      %3447 = vst.msk [vmem:[#allocation5 + $0x1d8] sm:$0xff] %vm3417, %v3380
      %3448 = vst.msk [vmem:[#allocation5 + $0x1e8] sm:$0xff] %vm3417, %v3382
      %3449 = vst.msk [vmem:[#allocation5 + $0x1f8] sm:$0xff] %vm3417, %v3384
      %v3450 = vld [vmem:[%s3256 + $0x1] sm:$0xff]
      %v3451 = vld [vmem:[%s3256 + $0x9] sm:$0xff]
      %v3452 = vld [vmem:[%s3256 + $0x19] sm:$0xff]
      %v3453 = vld [vmem:[%s3256 + $0x21] sm:$0xff]
      %v3454 = vld [vmem:[%s3256 + $0x31] sm:$0xff]
      %v3455 = vld [vmem:[%s3256 + $0x39] sm:$0xff]
      %v3456 = vld [vmem:[%s3256 + $0x49] sm:$0xff]
      %v3457 = vld [vmem:[%s3256 + $0x51] sm:$0xff]
      %v3458 = vld [vmem:[%s3256 + $0x61] sm:$0xff]
      %v3459 = vld [vmem:[%s3256 + $0x69] sm:$0xff]
      %v3460 = vld [vmem:[%s3256 + $0x79] sm:$0xff]
      %v3461 = vld [vmem:[%s3256 + $0x81] sm:$0xff]
      %v3462 = vld [vmem:[%s3256 + $0x91] sm:$0xff]
      %v3463 = vld [vmem:[%s3256 + $0x99] sm:$0xff]
      %v3464 = vld [vmem:[%s3256 + $0xa9] sm:$0xff]
      %v3465 = vld [vmem:[%s3256 + $0xb1] sm:$0xff]
      %v3466 = vld [vmem:[%s3256 + $0xc1] sm:$0xff]
      %v3467 = vld [vmem:[%s3256 + $0xc9] sm:$0xff]
      %v3468 = vld [vmem:[%s3256 + $0xd9] sm:$0xff]
      %v3469 = vld [vmem:[%s3256 + $0xe1] sm:$0xff]
      %v3470 = vld [vmem:[%s3256 + $0xf1] sm:$0xff]
      %v3471 = vld [vmem:[%s3256 + $0xf9] sm:$0xff]
      %v3472 = vld [vmem:[%s3256 + $0x109] sm:$0xff]
      %v3473 = vld [vmem:[%s3256 + $0x111] sm:$0xff]
      %v3474 = vld [vmem:[%s3256 + $0x121] sm:$0xff]
      %v3475 = vld [vmem:[%s3256 + $0x129] sm:$0xff]
      %v3476 = vld [vmem:[%s3256 + $0x139] sm:$0xff]
      %v3477 = vld [vmem:[%s3256 + $0x141] sm:$0xff]
      %v3478 = vld [vmem:[%s3256 + $0x151] sm:$0xff]
      %v3479 = vld [vmem:[%s3256 + $0x159] sm:$0xff]
      %v3480 = vld [vmem:[%s3256 + $0x169] sm:$0xff]
      %v3481 = vld [vmem:[%s3256 + $0x171] sm:$0xff]
      %3514 = vrot.lane.b32.xlu0 %v3450, 72
      %v3515 = vpop.permute.xlu0 %3514
      %3516 = vrot.lane.b32.xlu0 %v3451, 72
      %v3517 = vpop.permute.xlu0 %3516
      %3518 = vrot.lane.b32.xlu0 %v3452, 72
      %v3519 = vpop.permute.xlu0 %3518
      %3520 = vrot.lane.b32.xlu0 %v3453, 72
      %v3521 = vpop.permute.xlu0 %3520
      %3522 = vrot.lane.b32.xlu0 %v3454, 72
      %v3523 = vpop.permute.xlu0 %3522
      %3524 = vrot.lane.b32.xlu0 %v3455, 72
      %v3525 = vpop.permute.xlu0 %3524
      %3526 = vrot.lane.b32.xlu0 %v3456, 72
      %v3527 = vpop.permute.xlu0 %3526
      %3528 = vrot.lane.b32.xlu0 %v3457, 72
      %v3529 = vpop.permute.xlu0 %3528
      %3530 = vrot.lane.b32.xlu0 %v3458, 72
      %v3531 = vpop.permute.xlu0 %3530
      %3532 = vrot.lane.b32.xlu0 %v3459, 72
      %v3533 = vpop.permute.xlu0 %3532
      %3534 = vrot.lane.b32.xlu0 %v3460, 72
      %v3535 = vpop.permute.xlu0 %3534
      %3536 = vrot.lane.b32.xlu0 %v3461, 72
      %v3537 = vpop.permute.xlu0 %3536
      %3538 = vrot.lane.b32.xlu0 %v3462, 72
      %v3539 = vpop.permute.xlu0 %3538
      %3540 = vrot.lane.b32.xlu0 %v3463, 72
      %v3541 = vpop.permute.xlu0 %3540
      %3542 = vrot.lane.b32.xlu0 %v3464, 72
      %v3543 = vpop.permute.xlu0 %3542
      %3544 = vrot.lane.b32.xlu0 %v3465, 72
      %v3545 = vpop.permute.xlu0 %3544
      %3546 = vrot.lane.b32.xlu0 %v3466, 72
      %v3547 = vpop.permute.xlu0 %3546
      %3548 = vrot.lane.b32.xlu0 %v3467, 72
      %v3549 = vpop.permute.xlu0 %3548
      %3550 = vrot.lane.b32.xlu0 %v3468, 72
      %v3551 = vpop.permute.xlu0 %3550
      %3552 = vrot.lane.b32.xlu0 %v3469, 72
      %v3553 = vpop.permute.xlu0 %3552
      %3554 = vrot.lane.b32.xlu0 %v3470, 72
      %v3555 = vpop.permute.xlu0 %3554
      %3556 = vrot.lane.b32.xlu0 %v3471, 72
      %v3557 = vpop.permute.xlu0 %3556
      %3558 = vrot.lane.b32.xlu0 %v3472, 72
      %v3559 = vpop.permute.xlu0 %3558
      %3560 = vrot.lane.b32.xlu0 %v3473, 72
      %v3561 = vpop.permute.xlu0 %3560
      %3562 = vrot.lane.b32.xlu0 %v3474, 72
      %v3563 = vpop.permute.xlu0 %3562
      %3564 = vrot.lane.b32.xlu0 %v3475, 72
      %v3565 = vpop.permute.xlu0 %3564
      %3566 = vrot.lane.b32.xlu0 %v3476, 72
      %v3567 = vpop.permute.xlu0 %3566
      %3568 = vrot.lane.b32.xlu0 %v3477, 72
      %v3569 = vpop.permute.xlu0 %3568
      %3570 = vrot.lane.b32.xlu0 %v3478, 72
      %v3571 = vpop.permute.xlu0 %3570
      %3572 = vrot.lane.b32.xlu0 %v3479, 72
      %v3573 = vpop.permute.xlu0 %3572
      %3574 = vrot.lane.b32.xlu0 %v3480, 72
      %v3575 = vpop.permute.xlu0 %3574
      %3576 = vrot.lane.b32.xlu0 %v3481, 72
      %v3577 = vpop.permute.xlu0 %3576
      %vm3610 = vcmask 654912
      %3611 = vst.msk [vmem:[#allocation5 + $0x8] sm:$0xff] %vm3610, %v3515
      %3612 = vst.msk [vmem:[#allocation5 + $0x18] sm:$0xff] %vm3610, %v3517
      %3613 = vst.msk [vmem:[#allocation5 + $0x28] sm:$0xff] %vm3610, %v3519
      %3614 = vst.msk [vmem:[#allocation5 + $0x38] sm:$0xff] %vm3610, %v3521
      %3615 = vst.msk [vmem:[#allocation5 + $0x48] sm:$0xff] %vm3610, %v3523
      %3616 = vst.msk [vmem:[#allocation5 + $0x58] sm:$0xff] %vm3610, %v3525
      %3617 = vst.msk [vmem:[#allocation5 + $0x68] sm:$0xff] %vm3610, %v3527
      %3618 = vst.msk [vmem:[#allocation5 + $0x78] sm:$0xff] %vm3610, %v3529
      %3619 = vst.msk [vmem:[#allocation5 + $0x88] sm:$0xff] %vm3610, %v3531
      %3620 = vst.msk [vmem:[#allocation5 + $0x98] sm:$0xff] %vm3610, %v3533
      %3621 = vst.msk [vmem:[#allocation5 + $0xa8] sm:$0xff] %vm3610, %v3535
      %3622 = vst.msk [vmem:[#allocation5 + $0xb8] sm:$0xff] %vm3610, %v3537
      %3623 = vst.msk [vmem:[#allocation5 + $0xc8] sm:$0xff] %vm3610, %v3539
      %3624 = vst.msk [vmem:[#allocation5 + $0xd8] sm:$0xff] %vm3610, %v3541
      %3625 = vst.msk [vmem:[#allocation5 + $0xe8] sm:$0xff] %vm3610, %v3543
      %3626 = vst.msk [vmem:[#allocation5 + $0xf8] sm:$0xff] %vm3610, %v3545
      %3627 = vst.msk [vmem:[#allocation5 + $0x108] sm:$0xff] %vm3610, %v3547
      %3628 = vst.msk [vmem:[#allocation5 + $0x118] sm:$0xff] %vm3610, %v3549
      %3629 = vst.msk [vmem:[#allocation5 + $0x128] sm:$0xff] %vm3610, %v3551
      %3630 = vst.msk [vmem:[#allocation5 + $0x138] sm:$0xff] %vm3610, %v3553
      %3631 = vst.msk [vmem:[#allocation5 + $0x148] sm:$0xff] %vm3610, %v3555
      %3632 = vst.msk [vmem:[#allocation5 + $0x158] sm:$0xff] %vm3610, %v3557
      %3633 = vst.msk [vmem:[#allocation5 + $0x168] sm:$0xff] %vm3610, %v3559
      %3634 = vst.msk [vmem:[#allocation5 + $0x178] sm:$0xff] %vm3610, %v3561
      %3635 = vst.msk [vmem:[#allocation5 + $0x188] sm:$0xff] %vm3610, %v3563
      %3636 = vst.msk [vmem:[#allocation5 + $0x198] sm:$0xff] %vm3610, %v3565
      %3637 = vst.msk [vmem:[#allocation5 + $0x1a8] sm:$0xff] %vm3610, %v3567
      %3638 = vst.msk [vmem:[#allocation5 + $0x1b8] sm:$0xff] %vm3610, %v3569
      %3639 = vst.msk [vmem:[#allocation5 + $0x1c8] sm:$0xff] %vm3610, %v3571
      %3640 = vst.msk [vmem:[#allocation5 + $0x1d8] sm:$0xff] %vm3610, %v3573
      %3641 = vst.msk [vmem:[#allocation5 + $0x1e8] sm:$0xff] %vm3610, %v3575
      %3642 = vst.msk [vmem:[#allocation5 + $0x1f8] sm:$0xff] %vm3610, %v3577
      %v3643 = vld [vmem:[%s3256 + $0x2] sm:$0xff]
      %v3644 = vld [vmem:[%s3256 + $0xa] sm:$0xff]
      %v3645 = vld [vmem:[%s3256 + $0x1a] sm:$0xff]
      %v3646 = vld [vmem:[%s3256 + $0x22] sm:$0xff]
      %v3647 = vld [vmem:[%s3256 + $0x32] sm:$0xff]
      %v3648 = vld [vmem:[%s3256 + $0x3a] sm:$0xff]
      %v3649 = vld [vmem:[%s3256 + $0x4a] sm:$0xff]
      %v3650 = vld [vmem:[%s3256 + $0x52] sm:$0xff]
      %v3651 = vld [vmem:[%s3256 + $0x62] sm:$0xff]
      %v3652 = vld [vmem:[%s3256 + $0x6a] sm:$0xff]
      %v3653 = vld [vmem:[%s3256 + $0x7a] sm:$0xff]
      %v3654 = vld [vmem:[%s3256 + $0x82] sm:$0xff]
      %v3655 = vld [vmem:[%s3256 + $0x92] sm:$0xff]
      %v3656 = vld [vmem:[%s3256 + $0x9a] sm:$0xff]
      %v3657 = vld [vmem:[%s3256 + $0xaa] sm:$0xff]
      %v3658 = vld [vmem:[%s3256 + $0xb2] sm:$0xff]
      %v3659 = vld [vmem:[%s3256 + $0xc2] sm:$0xff]
      %v3660 = vld [vmem:[%s3256 + $0xca] sm:$0xff]
      %v3661 = vld [vmem:[%s3256 + $0xda] sm:$0xff]
      %v3662 = vld [vmem:[%s3256 + $0xe2] sm:$0xff]
      %v3663 = vld [vmem:[%s3256 + $0xf2] sm:$0xff]
      %v3664 = vld [vmem:[%s3256 + $0xfa] sm:$0xff]
      %v3665 = vld [vmem:[%s3256 + $0x10a] sm:$0xff]
      %v3666 = vld [vmem:[%s3256 + $0x112] sm:$0xff]
      %v3667 = vld [vmem:[%s3256 + $0x122] sm:$0xff]
      %v3668 = vld [vmem:[%s3256 + $0x12a] sm:$0xff]
      %v3669 = vld [vmem:[%s3256 + $0x13a] sm:$0xff]
      %v3670 = vld [vmem:[%s3256 + $0x142] sm:$0xff]
      %v3671 = vld [vmem:[%s3256 + $0x152] sm:$0xff]
      %v3672 = vld [vmem:[%s3256 + $0x15a] sm:$0xff]
      %v3673 = vld [vmem:[%s3256 + $0x16a] sm:$0xff]
      %v3674 = vld [vmem:[%s3256 + $0x172] sm:$0xff]
      %3707 = vrot.lane.b32.xlu0 %v3643, 80
      %v3708 = vpop.permute.xlu0 %3707
      %3709 = vrot.lane.b32.xlu0 %v3644, 80
      %v3710 = vpop.permute.xlu0 %3709
      %3711 = vrot.lane.b32.xlu0 %v3645, 80
      %v3712 = vpop.permute.xlu0 %3711
      %3713 = vrot.lane.b32.xlu0 %v3646, 80
      %v3714 = vpop.permute.xlu0 %3713
      %3715 = vrot.lane.b32.xlu0 %v3647, 80
      %v3716 = vpop.permute.xlu0 %3715
      %3717 = vrot.lane.b32.xlu0 %v3648, 80
      %v3718 = vpop.permute.xlu0 %3717
      %3719 = vrot.lane.b32.xlu0 %v3649, 80
      %v3720 = vpop.permute.xlu0 %3719
      %3721 = vrot.lane.b32.xlu0 %v3650, 80
      %v3722 = vpop.permute.xlu0 %3721
      %3723 = vrot.lane.b32.xlu0 %v3651, 80
      %v3724 = vpop.permute.xlu0 %3723
      %3725 = vrot.lane.b32.xlu0 %v3652, 80
      %v3726 = vpop.permute.xlu0 %3725
      %3727 = vrot.lane.b32.xlu0 %v3653, 80
      %v3728 = vpop.permute.xlu0 %3727
      %3729 = vrot.lane.b32.xlu0 %v3654, 80
      %v3730 = vpop.permute.xlu0 %3729
      %3731 = vrot.lane.b32.xlu0 %v3655, 80
      %v3732 = vpop.permute.xlu0 %3731
      %3733 = vrot.lane.b32.xlu0 %v3656, 80
      %v3734 = vpop.permute.xlu0 %3733
      %3735 = vrot.lane.b32.xlu0 %v3657, 80
      %v3736 = vpop.permute.xlu0 %3735
      %3737 = vrot.lane.b32.xlu0 %v3658, 80
      %v3738 = vpop.permute.xlu0 %3737
      %3739 = vrot.lane.b32.xlu0 %v3659, 80
      %v3740 = vpop.permute.xlu0 %3739
      %3741 = vrot.lane.b32.xlu0 %v3660, 80
      %v3742 = vpop.permute.xlu0 %3741
      %3743 = vrot.lane.b32.xlu0 %v3661, 80
      %v3744 = vpop.permute.xlu0 %3743
      %3745 = vrot.lane.b32.xlu0 %v3662, 80
      %v3746 = vpop.permute.xlu0 %3745
      %3747 = vrot.lane.b32.xlu0 %v3663, 80
      %v3748 = vpop.permute.xlu0 %3747
      %3749 = vrot.lane.b32.xlu0 %v3664, 80
      %v3750 = vpop.permute.xlu0 %3749
      %3751 = vrot.lane.b32.xlu0 %v3665, 80
      %v3752 = vpop.permute.xlu0 %3751
      %3753 = vrot.lane.b32.xlu0 %v3666, 80
      %v3754 = vpop.permute.xlu0 %3753
      %3755 = vrot.lane.b32.xlu0 %v3667, 80
      %v3756 = vpop.permute.xlu0 %3755
      %3757 = vrot.lane.b32.xlu0 %v3668, 80
      %v3758 = vpop.permute.xlu0 %3757
      %3759 = vrot.lane.b32.xlu0 %v3669, 80
      %v3760 = vpop.permute.xlu0 %3759
      %3761 = vrot.lane.b32.xlu0 %v3670, 80
      %v3762 = vpop.permute.xlu0 %3761
      %3763 = vrot.lane.b32.xlu0 %v3671, 80
      %v3764 = vpop.permute.xlu0 %3763
      %3765 = vrot.lane.b32.xlu0 %v3672, 80
      %v3766 = vpop.permute.xlu0 %3765
      %3767 = vrot.lane.b32.xlu0 %v3673, 80
      %v3768 = vpop.permute.xlu0 %3767
      %3769 = vrot.lane.b32.xlu0 %v3674, 80
      %v3770 = vpop.permute.xlu0 %3769
      %vm3803 = vcmask 720512
      %3804 = vst.msk [vmem:[#allocation5 + $0x8] sm:$0xff] %vm3803, %v3708
      %3805 = vst.msk [vmem:[#allocation5 + $0x18] sm:$0xff] %vm3803, %v3710
      %3806 = vst.msk [vmem:[#allocation5 + $0x28] sm:$0xff] %vm3803, %v3712
      %3807 = vst.msk [vmem:[#allocation5 + $0x38] sm:$0xff] %vm3803, %v3714
      %3808 = vst.msk [vmem:[#allocation5 + $0x48] sm:$0xff] %vm3803, %v3716
      %3809 = vst.msk [vmem:[#allocation5 + $0x58] sm:$0xff] %vm3803, %v3718
      %3810 = vst.msk [vmem:[#allocation5 + $0x68] sm:$0xff] %vm3803, %v3720
      %3811 = vst.msk [vmem:[#allocation5 + $0x78] sm:$0xff] %vm3803, %v3722
      %3812 = vst.msk [vmem:[#allocation5 + $0x88] sm:$0xff] %vm3803, %v3724
      %3813 = vst.msk [vmem:[#allocation5 + $0x98] sm:$0xff] %vm3803, %v3726
      %3814 = vst.msk [vmem:[#allocation5 + $0xa8] sm:$0xff] %vm3803, %v3728
      %3815 = vst.msk [vmem:[#allocation5 + $0xb8] sm:$0xff] %vm3803, %v3730
      %3816 = vst.msk [vmem:[#allocation5 + $0xc8] sm:$0xff] %vm3803, %v3732
      %3817 = vst.msk [vmem:[#allocation5 + $0xd8] sm:$0xff] %vm3803, %v3734
      %3818 = vst.msk [vmem:[#allocation5 + $0xe8] sm:$0xff] %vm3803, %v3736
      %3819 = vst.msk [vmem:[#allocation5 + $0xf8] sm:$0xff] %vm3803, %v3738
      %3820 = vst.msk [vmem:[#allocation5 + $0x108] sm:$0xff] %vm3803, %v3740
      %3821 = vst.msk [vmem:[#allocation5 + $0x118] sm:$0xff] %vm3803, %v3742
      %3822 = vst.msk [vmem:[#allocation5 + $0x128] sm:$0xff] %vm3803, %v3744
      %3823 = vst.msk [vmem:[#allocation5 + $0x138] sm:$0xff] %vm3803, %v3746
      %3824 = vst.msk [vmem:[#allocation5 + $0x148] sm:$0xff] %vm3803, %v3748
      %3825 = vst.msk [vmem:[#allocation5 + $0x158] sm:$0xff] %vm3803, %v3750
      %3826 = vst.msk [vmem:[#allocation5 + $0x168] sm:$0xff] %vm3803, %v3752
      %3827 = vst.msk [vmem:[#allocation5 + $0x178] sm:$0xff] %vm3803, %v3754
      %3828 = vst.msk [vmem:[#allocation5 + $0x188] sm:$0xff] %vm3803, %v3756
      %3829 = vst.msk [vmem:[#allocation5 + $0x198] sm:$0xff] %vm3803, %v3758
      %3830 = vst.msk [vmem:[#allocation5 + $0x1a8] sm:$0xff] %vm3803, %v3760
      %3831 = vst.msk [vmem:[#allocation5 + $0x1b8] sm:$0xff] %vm3803, %v3762
      %3832 = vst.msk [vmem:[#allocation5 + $0x1c8] sm:$0xff] %vm3803, %v3764
      %3833 = vst.msk [vmem:[#allocation5 + $0x1d8] sm:$0xff] %vm3803, %v3766
      %3834 = vst.msk [vmem:[#allocation5 + $0x1e8] sm:$0xff] %vm3803, %v3768
      %3835 = vst.msk [vmem:[#allocation5 + $0x1f8] sm:$0xff] %vm3803, %v3770
      %v3836 = vld [vmem:[#allocation5] sm:$0xff]
      %v3837 = vld [vmem:[#allocation5 + $0x8] sm:$0xff]
      %v3838 = vld [vmem:[#allocation5 + $0x10] sm:$0xff]
      %v3839 = vld [vmem:[#allocation5 + $0x18] sm:$0xff]
      %v3840 = vld [vmem:[#allocation5 + $0x20] sm:$0xff]
      %v3841 = vld [vmem:[#allocation5 + $0x28] sm:$0xff]
      %v3842 = vld [vmem:[#allocation5 + $0x30] sm:$0xff]
      %v3843 = vld [vmem:[#allocation5 + $0x38] sm:$0xff]
      %v3844 = vld [vmem:[#allocation5 + $0x40] sm:$0xff]
      %v3845 = vld [vmem:[#allocation5 + $0x48] sm:$0xff]
      %v3846 = vld [vmem:[#allocation5 + $0x50] sm:$0xff]
      %v3847 = vld [vmem:[#allocation5 + $0x58] sm:$0xff]
      %v3848 = vld [vmem:[#allocation5 + $0x60] sm:$0xff]
      %v3849 = vld [vmem:[#allocation5 + $0x68] sm:$0xff]
      %v3850 = vld [vmem:[#allocation5 + $0x70] sm:$0xff]
      %v3851 = vld [vmem:[#allocation5 + $0x78] sm:$0xff]
      %v3852 = vld [vmem:[#allocation5 + $0x80] sm:$0xff]
      %v3853 = vld [vmem:[#allocation5 + $0x88] sm:$0xff]
      %v3854 = vld [vmem:[#allocation5 + $0x90] sm:$0xff]
      %v3855 = vld [vmem:[#allocation5 + $0x98] sm:$0xff]
      %v3856 = vld [vmem:[#allocation5 + $0xa0] sm:$0xff]
      %v3857 = vld [vmem:[#allocation5 + $0xa8] sm:$0xff]
      %v3858 = vld [vmem:[#allocation5 + $0xb0] sm:$0xff]
      %v3859 = vld [vmem:[#allocation5 + $0xb8] sm:$0xff]
      %v3860 = vld [vmem:[#allocation5 + $0xc0] sm:$0xff]
      %v3861 = vld [vmem:[#allocation5 + $0xc8] sm:$0xff]
      %v3862 = vld [vmem:[#allocation5 + $0xd0] sm:$0xff]
      %v3863 = vld [vmem:[#allocation5 + $0xd8] sm:$0xff]
      %v3864 = vld [vmem:[#allocation5 + $0xe0] sm:$0xff]
      %v3865 = vld [vmem:[#allocation5 + $0xe8] sm:$0xff]
      %v3866 = vld [vmem:[#allocation5 + $0xf0] sm:$0xff]
      %v3867 = vld [vmem:[#allocation5 + $0xf8] sm:$0xff]
      %v3868 = vld [vmem:[#allocation5 + $0x100] sm:$0xff]
      %v3869 = vld [vmem:[#allocation5 + $0x108] sm:$0xff]
      %v3870 = vld [vmem:[#allocation5 + $0x110] sm:$0xff]
      %v3871 = vld [vmem:[#allocation5 + $0x118] sm:$0xff]
      %v3872 = vld [vmem:[#allocation5 + $0x120] sm:$0xff]
      %v3873 = vld [vmem:[#allocation5 + $0x128] sm:$0xff]
      %v3874 = vld [vmem:[#allocation5 + $0x130] sm:$0xff]
      %v3875 = vld [vmem:[#allocation5 + $0x138] sm:$0xff]
      %v3876 = vld [vmem:[#allocation5 + $0x140] sm:$0xff]
      %v3877 = vld [vmem:[#allocation5 + $0x148] sm:$0xff]
      %v3878 = vld [vmem:[#allocation5 + $0x150] sm:$0xff]
      %v3879 = vld [vmem:[#allocation5 + $0x158] sm:$0xff]
      %v3880 = vld [vmem:[#allocation5 + $0x160] sm:$0xff]
      %v3881 = vld [vmem:[#allocation5 + $0x168] sm:$0xff]
      %v3882 = vld [vmem:[#allocation5 + $0x170] sm:$0xff]
      %v3883 = vld [vmem:[#allocation5 + $0x178] sm:$0xff]
      %v3884 = vld [vmem:[#allocation5 + $0x180] sm:$0xff]
      %v3885 = vld [vmem:[#allocation5 + $0x188] sm:$0xff]
      %v3886 = vld [vmem:[#allocation5 + $0x190] sm:$0xff]
      %v3887 = vld [vmem:[#allocation5 + $0x198] sm:$0xff]
      %v3888 = vld [vmem:[#allocation5 + $0x1a0] sm:$0xff]
      %v3889 = vld [vmem:[#allocation5 + $0x1a8] sm:$0xff]
      %v3890 = vld [vmem:[#allocation5 + $0x1b0] sm:$0xff]
      %v3891 = vld [vmem:[#allocation5 + $0x1b8] sm:$0xff]
      %v3892 = vld [vmem:[#allocation5 + $0x1c0] sm:$0xff]
      %v3893 = vld [vmem:[#allocation5 + $0x1c8] sm:$0xff]
      %v3894 = vld [vmem:[#allocation5 + $0x1d0] sm:$0xff]
      %v3895 = vld [vmem:[#allocation5 + $0x1d8] sm:$0xff]
      %v3896 = vld [vmem:[#allocation5 + $0x1e0] sm:$0xff]
      %v3897 = vld [vmem:[#allocation5 + $0x1e8] sm:$0xff]
      %v3898 = vld [vmem:[#allocation5 + $0x1f0] sm:$0xff]
      %v3899 = vld [vmem:[#allocation5 + $0x1f8] sm:$0xff]
      %v3900 = vld [vmem:[%s2] sm:$0xff]
      %v3901 = vld [vmem:[%s2 + $0x8] sm:$0xff]
      %v3902 = vld [vmem:[%s2 + $0x10] sm:$0xff]
      %v3903 = vld [vmem:[%s2 + $0x18] sm:$0xff]
      %v3904 = vld [vmem:[%s2 + $0x20] sm:$0xff]
      %v3905 = vld [vmem:[%s2 + $0x28] sm:$0xff]
      %v3906 = vld [vmem:[%s2 + $0x30] sm:$0xff]
      %v3907 = vld [vmem:[%s2 + $0x38] sm:$0xff]
      %v3908 = vld [vmem:[%s2 + $0x40] sm:$0xff]
      %v3909 = vld [vmem:[%s2 + $0x48] sm:$0xff]
      %v3910 = vld [vmem:[%s2 + $0x50] sm:$0xff]
      %v3911 = vld [vmem:[%s2 + $0x58] sm:$0xff]
      %v3912 = vld [vmem:[%s2 + $0x60] sm:$0xff]
      %v3913 = vld [vmem:[%s2 + $0x68] sm:$0xff]
      %v3914 = vld [vmem:[%s2 + $0x70] sm:$0xff]
      %v3915 = vld [vmem:[%s2 + $0x78] sm:$0xff]
      %v3916 = vld [vmem:[%s2 + $0x80] sm:$0xff]
      %v3917 = vld [vmem:[%s2 + $0x88] sm:$0xff]
      %v3918 = vld [vmem:[%s2 + $0x90] sm:$0xff]
      %v3919 = vld [vmem:[%s2 + $0x98] sm:$0xff]
      %v3920 = vld [vmem:[%s2 + $0xa0] sm:$0xff]
      %v3921 = vld [vmem:[%s2 + $0xa8] sm:$0xff]
      %v3922 = vld [vmem:[%s2 + $0xb0] sm:$0xff]
      %v3923 = vld [vmem:[%s2 + $0xb8] sm:$0xff]
      %v3924 = vld [vmem:[%s2 + $0xc0] sm:$0xff]
      %v3925 = vld [vmem:[%s2 + $0xc8] sm:$0xff]
      %v3926 = vld [vmem:[%s2 + $0xd0] sm:$0xff]
      %vm3927 = vcmask 719872
      %v3929 = vsel %vm3927, %v3837, 0
      %v3932 = vsel %vm3927, %v3839, 0
      %v3935 = vsel %vm3927, %v3841, 0
      %v3938 = vsel %vm3927, %v3843, 0
      %v3941 = vsel %vm3927, %v3845, 0
      %v3944 = vsel %vm3927, %v3847, 0
      %v3947 = vsel %vm3927, %v3849, 0
      %v3950 = vsel %vm3927, %v3851, 0
      %v3953 = vsel %vm3927, %v3853, 0
      %v3956 = vsel %vm3927, %v3855, 0
      %v3959 = vsel %vm3927, %v3857, 0
      %v3962 = vsel %vm3927, %v3859, 0
      %v3965 = vsel %vm3927, %v3861, 0
      %v3968 = vsel %vm3927, %v3863, 0
      %v3971 = vsel %vm3927, %v3865, 0
      %v3974 = vsel %vm3927, %v3867, 0
      %v3977 = vsel %vm3927, %v3869, 0
      %v3980 = vsel %vm3927, %v3871, 0
      %v3983 = vsel %vm3927, %v3873, 0
      %v3986 = vsel %vm3927, %v3875, 0
      %v3989 = vsel %vm3927, %v3877, 0
      %v3992 = vsel %vm3927, %v3879, 0
      %v3995 = vsel %vm3927, %v3881, 0
      %v3998 = vsel %vm3927, %v3883, 0
      %v4001 = vsel %vm3927, %v3885, 0
      %v4004 = vsel %vm3927, %v3887, 0
      %v4007 = vsel %vm3927, %v3889, 0
      %v4010 = vsel %vm3927, %v3891, 0
      %v4013 = vsel %vm3927, %v3893, 0
      %v4016 = vsel %vm3927, %v3895, 0
      %v4019 = vsel %vm3927, %v3897, 0
      %v4022 = vsel %vm3927, %v3899, 0
      %4024 = vmatprep.subr.mxu0 0.0
      %4025 = vmatpush1.msra.mxu0 %v3915
      %4026 = vmatprep.subr.mxu0 0.0
      %4027 = vmatpush1.msra.mxu0 %v3914
      %4028 = vmatprep.subr.mxu0 0.0
      %4029 = vmatpush1.msra.mxu0 %v3913
      %4030 = vmatprep.subr.mxu0 0.0
      %4031 = vmatpush1.msra.mxu0 %v3912
      %4032 = vmatprep.subr.mxu0 0.0
      %4033 = vmatpush1.msra.mxu0 %v3911
      %4034 = vmatprep.subr.mxu0 0.0
      %4035 = vmatpush1.msra.mxu0 %v3910
      %4036 = vmatprep.subr.mxu0 0.0
      %4037 = vmatpush1.msra.mxu0 %v3909
      %4038 = vmatprep.subr.mxu0 0.0
      %4039 = vmatpush1.msra.mxu0 %v3908
      %4040 = vmatprep.subr.mxu0 0.0
      %4041 = vmatpush1.msra.mxu0 %v3907
      %4042 = vmatprep.subr.mxu0 0.0
      %4043 = vmatpush1.msra.mxu0 %v3906
      %4044 = vmatprep.subr.mxu0 0.0
      %4045 = vmatpush1.msra.mxu0 %v3905
      %4046 = vmatprep.subr.mxu0 0.0
      %4047 = vmatpush1.msra.mxu0 %v3904
      %4048 = vmatprep.subr.mxu0 0.0
      %4049 = vmatpush1.msra.mxu0 %v3903
      %4050 = vmatprep.subr.mxu0 0.0
      %4051 = vmatpush1.msra.mxu0 %v3902
      %4052 = vmatprep.subr.mxu0 0.0
      %4053 = vmatpush1.msra.mxu0 %v3901
      %4054 = vmatprep.subr.mxu0 0.0
      %4055 = vmatpush1.msra.mxu0 %v3900
      %4056 = vmatprep.subr.mxu0 0.0
      %4057 = vmatpush2.msra.mxu0 0.0
      %4058 = vmatprep.subr.mxu0 0.0
      %4059 = vmatpush2.msra.mxu0 0.0
      %4060 = vmatprep.subr.mxu0 0.0
      %4061 = vmatpush2.msra.mxu0 0.0
      %4062 = vmatprep.subr.mxu0 0.0
      %4063 = vmatpush2.msra.mxu0 0.0
      %4064 = vmatprep.subr.mxu0 0.0
      %4065 = vmatpush2.msra.mxu0 0.0
      %4066 = vmatprep.subr.mxu0 0.0
      %4067 = vmatpush2.msra.mxu0 %v3926
      %4068 = vmatprep.subr.mxu0 0.0
      %4069 = vmatpush2.msra.mxu0 %v3925
      %4070 = vmatprep.subr.mxu0 0.0
      %4071 = vmatpush2.msra.mxu0 %v3924
      %4072 = vmatprep.subr.mxu0 0.0
      %4073 = vmatpush2.msra.mxu0 %v3923
      %4074 = vmatprep.subr.mxu0 0.0
      %4075 = vmatpush2.msra.mxu0 %v3922
      %4076 = vmatprep.subr.mxu0 0.0
      %4077 = vmatpush2.msra.mxu0 %v3921
      %4078 = vmatprep.subr.mxu0 0.0
      %4079 = vmatpush2.msra.mxu0 %v3920
      %4080 = vmatprep.subr.mxu0 0.0
      %4081 = vmatpush2.msra.mxu0 %v3919
      %4082 = vmatprep.subr.mxu0 0.0
      %4083 = vmatpush2.msra.mxu0 %v3918
      %4084 = vmatprep.subr.mxu0 0.0
      %4085 = vmatpush2.msra.mxu0 %v3917
      %4086 = vmatprep.subr.mxu0 0.0
      %4087 = vmatpush2.msra.mxu0 %v3916
      %4088 = vmatprep.mubr.f32.mxu0 %v3929
      %4089 = vmatmul.mubr.f32.gmra.mxu0 %v3836
      %v4090 = vpop.f32.mrf.mxu0
      %v4091 = vadd.f32 0.0, %v4090
      %v4092 = vpop.f32.mrf.mxu0
      %4093 = vmatprep.mubr.f32.mxu0 %v3932
      %4094 = vmatmul.mubr.f32.gmra.mxu0 %v3838
      %v4095 = vpop.f32.mrf.mxu0
      %v4096 = vadd.f32 0.0, %v4095
      %v4097 = vpop.f32.mrf.mxu0
      %4098 = vmatprep.mubr.f32.mxu0 %v3935
      %4099 = vmatmul.mubr.f32.gmra.mxu0 %v3840
      %v4100 = vpop.f32.mrf.mxu0
      %v4101 = vadd.f32 0.0, %v4100
      %v4102 = vpop.f32.mrf.mxu0
      %4103 = vmatprep.mubr.f32.mxu0 %v3938
      %4104 = vmatmul.mubr.f32.gmra.mxu0 %v3842
      %v4105 = vpop.f32.mrf.mxu0
      %v4106 = vadd.f32 0.0, %v4105
      %v4107 = vpop.f32.mrf.mxu0
      %4108 = vmatprep.mubr.f32.mxu0 %v3941
      %4109 = vmatmul.mubr.f32.gmra.mxu0 %v3844
      %v4110 = vpop.f32.mrf.mxu0
      %v4111 = vadd.f32 0.0, %v4110
      %v4112 = vpop.f32.mrf.mxu0
      %4113 = vmatprep.mubr.f32.mxu0 %v3944
      %4114 = vmatmul.mubr.f32.gmra.mxu0 %v3846
      %v4115 = vpop.f32.mrf.mxu0
      %v4116 = vadd.f32 0.0, %v4115
      %v4117 = vpop.f32.mrf.mxu0
      %4118 = vmatprep.mubr.f32.mxu0 %v3947
      %4119 = vmatmul.mubr.f32.gmra.mxu0 %v3848
      %v4120 = vpop.f32.mrf.mxu0
      %v4121 = vadd.f32 0.0, %v4120
      %v4122 = vpop.f32.mrf.mxu0
      %4123 = vmatprep.mubr.f32.mxu0 %v3950
      %4124 = vmatmul.mubr.f32.gmra.mxu0 %v3850
      %v4125 = vpop.f32.mrf.mxu0
      %v4126 = vadd.f32 0.0, %v4125
      %v4127 = vpop.f32.mrf.mxu0
      %4128 = vmatprep.mubr.f32.mxu0 %v3953
      %4129 = vmatmul.mubr.f32.gmra.mxu0 %v3852
      %v4130 = vpop.f32.mrf.mxu0
      %v4131 = vadd.f32 0.0, %v4130
      %v4132 = vpop.f32.mrf.mxu0
      %4133 = vmatprep.mubr.f32.mxu0 %v3956
      %4134 = vmatmul.mubr.f32.gmra.mxu0 %v3854
      %v4135 = vpop.f32.mrf.mxu0
      %v4136 = vadd.f32 0.0, %v4135
      %v4137 = vpop.f32.mrf.mxu0
      %4138 = vmatprep.mubr.f32.mxu0 %v3959
      %4139 = vmatmul.mubr.f32.gmra.mxu0 %v3856
      %v4140 = vpop.f32.mrf.mxu0
      %v4141 = vadd.f32 0.0, %v4140
      %v4142 = vpop.f32.mrf.mxu0
      %4143 = vmatprep.mubr.f32.mxu0 %v3962
      %4144 = vmatmul.mubr.f32.gmra.mxu0 %v3858
      %v4145 = vpop.f32.mrf.mxu0
      %v4146 = vadd.f32 0.0, %v4145
      %v4147 = vpop.f32.mrf.mxu0
      %4148 = vmatprep.mubr.f32.mxu0 %v3965
      %4149 = vmatmul.mubr.f32.gmra.mxu0 %v3860
      %v4150 = vpop.f32.mrf.mxu0
      %v4151 = vadd.f32 0.0, %v4150
      %v4152 = vpop.f32.mrf.mxu0
      %4153 = vmatprep.mubr.f32.mxu0 %v3968
      %4154 = vmatmul.mubr.f32.gmra.mxu0 %v3862
      %v4155 = vpop.f32.mrf.mxu0
      %v4156 = vadd.f32 0.0, %v4155
      %v4157 = vpop.f32.mrf.mxu0
      %4158 = vmatprep.mubr.f32.mxu0 %v3971
      %4159 = vmatmul.mubr.f32.gmra.mxu0 %v3864
      %v4160 = vpop.f32.mrf.mxu0
      %v4161 = vadd.f32 0.0, %v4160
      %v4162 = vpop.f32.mrf.mxu0
      %4163 = vmatprep.mubr.f32.mxu0 %v3974
      %4164 = vmatmul.mubr.f32.gmra.mxu0 %v3866
      %v4165 = vpop.f32.mrf.mxu0
      %v4166 = vadd.f32 0.0, %v4165
      %v4167 = vpop.f32.mrf.mxu0
      %4168 = vmatprep.mubr.f32.mxu0 %v3977
      %4169 = vmatmul.mubr.f32.gmra.mxu0 %v3868
      %v4170 = vpop.f32.mrf.mxu0
      %v4171 = vadd.f32 0.0, %v4170
      %v4172 = vpop.f32.mrf.mxu0
      %4173 = vmatprep.mubr.f32.mxu0 %v3980
      %4174 = vmatmul.mubr.f32.gmra.mxu0 %v3870
      %v4175 = vpop.f32.mrf.mxu0
      %v4176 = vadd.f32 0.0, %v4175
      %v4177 = vpop.f32.mrf.mxu0
      %4178 = vmatprep.mubr.f32.mxu0 %v3983
      %4179 = vmatmul.mubr.f32.gmra.mxu0 %v3872
      %v4180 = vpop.f32.mrf.mxu0
      %v4181 = vadd.f32 0.0, %v4180
      %v4182 = vpop.f32.mrf.mxu0
      %4183 = vmatprep.mubr.f32.mxu0 %v3986
      %4184 = vmatmul.mubr.f32.gmra.mxu0 %v3874
      %v4185 = vpop.f32.mrf.mxu0
      %v4186 = vadd.f32 0.0, %v4185
      %v4187 = vpop.f32.mrf.mxu0
      %4188 = vmatprep.mubr.f32.mxu0 %v3989
      %4189 = vmatmul.mubr.f32.gmra.mxu0 %v3876
      %v4190 = vpop.f32.mrf.mxu0
      %v4191 = vadd.f32 0.0, %v4190
      %v4192 = vpop.f32.mrf.mxu0
      %4193 = vmatprep.mubr.f32.mxu0 %v3992
      %4194 = vmatmul.mubr.f32.gmra.mxu0 %v3878
      %v4195 = vpop.f32.mrf.mxu0
      %v4196 = vadd.f32 0.0, %v4195
      %v4197 = vpop.f32.mrf.mxu0
      %4198 = vmatprep.mubr.f32.mxu0 %v3995
      %4199 = vmatmul.mubr.f32.gmra.mxu0 %v3880
      %v4200 = vpop.f32.mrf.mxu0
      %v4201 = vadd.f32 0.0, %v4200
      %v4202 = vpop.f32.mrf.mxu0
      %4203 = vmatprep.mubr.f32.mxu0 %v3998
      %4204 = vmatmul.mubr.f32.gmra.mxu0 %v3882
      %v4205 = vpop.f32.mrf.mxu0
      %v4206 = vadd.f32 0.0, %v4205
      %v4207 = vpop.f32.mrf.mxu0
      %4208 = vmatprep.mubr.f32.mxu0 %v4001
      %4209 = vmatmul.mubr.f32.gmra.mxu0 %v3884
      %v4210 = vpop.f32.mrf.mxu0
      %v4211 = vadd.f32 0.0, %v4210
      %v4212 = vpop.f32.mrf.mxu0
      %4213 = vmatprep.mubr.f32.mxu0 %v4004
      %4214 = vmatmul.mubr.f32.gmra.mxu0 %v3886
      %v4215 = vpop.f32.mrf.mxu0
      %v4216 = vadd.f32 0.0, %v4215
      %v4217 = vpop.f32.mrf.mxu0
      %4218 = vmatprep.mubr.f32.mxu0 %v4007
      %4219 = vmatmul.mubr.f32.gmra.mxu0 %v3888
      %v4220 = vpop.f32.mrf.mxu0
      %v4221 = vadd.f32 0.0, %v4220
      %v4222 = vpop.f32.mrf.mxu0
      %4223 = vmatprep.mubr.f32.mxu0 %v4010
      %4224 = vmatmul.mubr.f32.gmra.mxu0 %v3890
      %v4225 = vpop.f32.mrf.mxu0
      %v4226 = vadd.f32 0.0, %v4225
      %v4227 = vpop.f32.mrf.mxu0
      %4228 = vmatprep.mubr.f32.mxu0 %v4013
      %4229 = vmatmul.mubr.f32.gmra.mxu0 %v3892
      %v4230 = vpop.f32.mrf.mxu0
      %v4231 = vadd.f32 0.0, %v4230
      %v4232 = vpop.f32.mrf.mxu0
      %4233 = vmatprep.mubr.f32.mxu0 %v4016
      %4234 = vmatmul.mubr.f32.gmra.mxu0 %v3894
      %v4235 = vpop.f32.mrf.mxu0
      %v4236 = vadd.f32 0.0, %v4235
      %v4237 = vpop.f32.mrf.mxu0
      %4238 = vmatprep.mubr.f32.mxu0 %v4019
      %4239 = vmatmul.mubr.f32.gmra.mxu0 %v3896
      %v4240 = vpop.f32.mrf.mxu0
      %v4241 = vadd.f32 0.0, %v4240
      %v4242 = vpop.f32.mrf.mxu0
      %4243 = vmatprep.mubr.f32.mxu0 %v4022
      %4244 = vmatmul.mubr.f32.gmra.mxu0 %v3898
      %v4245 = vpop.f32.mrf.mxu0
      %v4246 = vadd.f32 0.0, %v4245
      %v4247 = vpop.f32.mrf.mxu0
      %4248 = vdwg.mxu0
      %v4249 = vld [vmem:[%s3] sm:$0x1]
      %v4251 = vlaneseq
      %v4252 = vshrl.u32 %v4251, 7
      %v4253 = vsub.s32 0, %v4252
      %v4254 = vrot.slane %v4249, %v4253
      %v4256 = vmul.f32 %v4091, %v4254
      %v4257 = vmul.f32 %v4096, %v4254
      %v4258 = vmul.f32 %v4101, %v4254
      %v4259 = vmul.f32 %v4106, %v4254
      %v4260 = vmul.f32 %v4111, %v4254
      %v4261 = vmul.f32 %v4116, %v4254
      %v4262 = vmul.f32 %v4121, %v4254
      %v4263 = vmul.f32 %v4126, %v4254
      %v4264 = vmul.f32 %v4131, %v4254
      %v4265 = vmul.f32 %v4136, %v4254
      %v4266 = vmul.f32 %v4141, %v4254
      %v4267 = vmul.f32 %v4146, %v4254
      %v4268 = vmul.f32 %v4151, %v4254
      %v4269 = vmul.f32 %v4156, %v4254
      %v4270 = vmul.f32 %v4161, %v4254
      %v4271 = vmul.f32 %v4166, %v4254
      %v4272 = vmul.f32 %v4171, %v4254
      %v4273 = vmul.f32 %v4176, %v4254
      %v4274 = vmul.f32 %v4181, %v4254
      %v4275 = vmul.f32 %v4186, %v4254
      %v4276 = vmul.f32 %v4191, %v4254
      %v4277 = vmul.f32 %v4196, %v4254
      %v4278 = vmul.f32 %v4201, %v4254
      %v4279 = vmul.f32 %v4206, %v4254
      %v4280 = vmul.f32 %v4211, %v4254
      %v4281 = vmul.f32 %v4216, %v4254
      %v4282 = vmul.f32 %v4221, %v4254
      %v4283 = vmul.f32 %v4226, %v4254
      %v4284 = vmul.f32 %v4231, %v4254
      %v4285 = vmul.f32 %v4236, %v4254
      %v4286 = vmul.f32 %v4241, %v4254
      %v4287 = vmul.f32 %v4246, %v4254
      %v4288 = vld [vmem:[%s4] sm:$0x1]
      %v4290 = vlaneseq
      %v4291 = vshrl.u32 %v4290, 7
      %v4292 = vsub.s32 0, %v4291
      %v4293 = vrot.slane %v4288, %v4292
      %v4295 = vadd.f32 %v4256, %v4293
      %v4296 = vadd.f32 %v4257, %v4293
      %v4297 = vadd.f32 %v4258, %v4293
      %v4298 = vadd.f32 %v4259, %v4293
      %v4299 = vadd.f32 %v4260, %v4293
      %v4300 = vadd.f32 %v4261, %v4293
      %v4301 = vadd.f32 %v4262, %v4293
      %v4302 = vadd.f32 %v4263, %v4293
      %v4303 = vadd.f32 %v4264, %v4293
      %v4304 = vadd.f32 %v4265, %v4293
      %v4305 = vadd.f32 %v4266, %v4293
      %v4306 = vadd.f32 %v4267, %v4293
      %v4307 = vadd.f32 %v4268, %v4293
      %v4308 = vadd.f32 %v4269, %v4293
      %v4309 = vadd.f32 %v4270, %v4293
      %v4310 = vadd.f32 %v4271, %v4293
      %v4311 = vadd.f32 %v4272, %v4293
      %v4312 = vadd.f32 %v4273, %v4293
      %v4313 = vadd.f32 %v4274, %v4293
      %v4314 = vadd.f32 %v4275, %v4293
      %v4315 = vadd.f32 %v4276, %v4293
      %v4316 = vadd.f32 %v4277, %v4293
      %v4317 = vadd.f32 %v4278, %v4293
      %v4318 = vadd.f32 %v4279, %v4293
      %v4319 = vadd.f32 %v4280, %v4293
      %v4320 = vadd.f32 %v4281, %v4293
      %v4321 = vadd.f32 %v4282, %v4293
      %v4322 = vadd.f32 %v4283, %v4293
      %v4323 = vadd.f32 %v4284, %v4293
      %v4324 = vadd.f32 %v4285, %v4293
      %v4325 = vadd.f32 %v4286, %v4293
      %v4326 = vadd.f32 %v4287, %v4293
      %v4327 = vmul.f32 %v4295, 0.01
      %v4328 = vmul.f32 %v4296, 0.01
      %v4329 = vmul.f32 %v4297, 0.01
      %v4330 = vmul.f32 %v4298, 0.01
      %v4331 = vmul.f32 %v4299, 0.01
      %v4332 = vmul.f32 %v4300, 0.01
      %v4333 = vmul.f32 %v4301, 0.01
      %v4334 = vmul.f32 %v4302, 0.01
      %v4335 = vmul.f32 %v4303, 0.01
      %v4336 = vmul.f32 %v4304, 0.01
      %v4337 = vmul.f32 %v4305, 0.01
      %v4338 = vmul.f32 %v4306, 0.01
      %v4339 = vmul.f32 %v4307, 0.01
      %v4340 = vmul.f32 %v4308, 0.01
      %v4341 = vmul.f32 %v4309, 0.01
      %v4342 = vmul.f32 %v4310, 0.01
      %v4343 = vmul.f32 %v4311, 0.01
      %v4344 = vmul.f32 %v4312, 0.01
      %v4345 = vmul.f32 %v4313, 0.01
      %v4346 = vmul.f32 %v4314, 0.01
      %v4347 = vmul.f32 %v4315, 0.01
      %v4348 = vmul.f32 %v4316, 0.01
      %v4349 = vmul.f32 %v4317, 0.01
      %v4350 = vmul.f32 %v4318, 0.01
      %v4351 = vmul.f32 %v4319, 0.01
      %v4352 = vmul.f32 %v4320, 0.01
      %v4353 = vmul.f32 %v4321, 0.01
      %v4354 = vmul.f32 %v4322, 0.01
      %v4355 = vmul.f32 %v4323, 0.01
      %v4356 = vmul.f32 %v4324, 0.01
      %v4357 = vmul.f32 %v4325, 0.01
      %v4358 = vmul.f32 %v4326, 0.01
      %v4359 = vmax.f32 %v4295, %v4327
      %v4360 = vmax.f32 %v4296, %v4328
      %v4361 = vmax.f32 %v4297, %v4329
      %v4362 = vmax.f32 %v4298, %v4330
      %v4363 = vmax.f32 %v4299, %v4331
      %v4364 = vmax.f32 %v4300, %v4332
      %v4365 = vmax.f32 %v4301, %v4333
      %v4366 = vmax.f32 %v4302, %v4334
      %v4367 = vmax.f32 %v4303, %v4335
      %v4368 = vmax.f32 %v4304, %v4336
      %v4369 = vmax.f32 %v4305, %v4337
      %v4370 = vmax.f32 %v4306, %v4338
      %v4371 = vmax.f32 %v4307, %v4339
      %v4372 = vmax.f32 %v4308, %v4340
      %v4373 = vmax.f32 %v4309, %v4341
      %v4374 = vmax.f32 %v4310, %v4342
      %v4375 = vmax.f32 %v4311, %v4343
      %v4376 = vmax.f32 %v4312, %v4344
      %v4377 = vmax.f32 %v4313, %v4345
      %v4378 = vmax.f32 %v4314, %v4346
      %v4379 = vmax.f32 %v4315, %v4347
      %v4380 = vmax.f32 %v4316, %v4348
      %v4381 = vmax.f32 %v4317, %v4349
      %v4382 = vmax.f32 %v4318, %v4350
      %v4383 = vmax.f32 %v4319, %v4351
      %v4384 = vmax.f32 %v4320, %v4352
      %v4385 = vmax.f32 %v4321, %v4353
      %v4386 = vmax.f32 %v4322, %v4354
      %v4387 = vmax.f32 %v4323, %v4355
      %v4388 = vmax.f32 %v4324, %v4356
      %v4389 = vmax.f32 %v4325, %v4357
      %v4390 = vmax.f32 %v4326, %v4358
      %s4391 = scalar_lea.vmem [#allocation4], 24
      %4392 = vst.msk [vmem:[%s4391 + $0x1] sm:$0xff] %vm353, %v4359
      %4393 = vst.msk [vmem:[%s4391 + $0x9] sm:$0xff] %vm353, %v4360
      %4394 = vst.msk [vmem:[%s4391 + $0x19] sm:$0xff] %vm353, %v4361
      %4395 = vst.msk [vmem:[%s4391 + $0x21] sm:$0xff] %vm353, %v4362
      %4396 = vst.msk [vmem:[%s4391 + $0x31] sm:$0xff] %vm353, %v4363
      %4397 = vst.msk [vmem:[%s4391 + $0x39] sm:$0xff] %vm353, %v4364
      %4398 = vst.msk [vmem:[%s4391 + $0x49] sm:$0xff] %vm353, %v4365
      %4399 = vst.msk [vmem:[%s4391 + $0x51] sm:$0xff] %vm353, %v4366
      %4400 = vst.msk [vmem:[%s4391 + $0x61] sm:$0xff] %vm353, %v4367
      %4401 = vst.msk [vmem:[%s4391 + $0x69] sm:$0xff] %vm353, %v4368
      %4402 = vst.msk [vmem:[%s4391 + $0x79] sm:$0xff] %vm353, %v4369
      %4403 = vst.msk [vmem:[%s4391 + $0x81] sm:$0xff] %vm353, %v4370
      %4404 = vst.msk [vmem:[%s4391 + $0x91] sm:$0xff] %vm353, %v4371
      %4405 = vst.msk [vmem:[%s4391 + $0x99] sm:$0xff] %vm353, %v4372
      %4406 = vst.msk [vmem:[%s4391 + $0xa9] sm:$0xff] %vm353, %v4373
      %4407 = vst.msk [vmem:[%s4391 + $0xb1] sm:$0xff] %vm353, %v4374
      %4408 = vst.msk [vmem:[%s4391 + $0xc1] sm:$0xff] %vm353, %v4375
      %4409 = vst.msk [vmem:[%s4391 + $0xc9] sm:$0xff] %vm353, %v4376
      %4410 = vst.msk [vmem:[%s4391 + $0xd9] sm:$0xff] %vm353, %v4377
      %4411 = vst.msk [vmem:[%s4391 + $0xe1] sm:$0xff] %vm353, %v4378
      %4412 = vst.msk [vmem:[%s4391 + $0xf1] sm:$0xff] %vm353, %v4379
      %4413 = vst.msk [vmem:[%s4391 + $0xf9] sm:$0xff] %vm353, %v4380
      %4414 = vst.msk [vmem:[%s4391 + $0x109] sm:$0xff] %vm353, %v4381
      %4415 = vst.msk [vmem:[%s4391 + $0x111] sm:$0xff] %vm353, %v4382
      %4416 = vst.msk [vmem:[%s4391 + $0x121] sm:$0xff] %vm353, %v4383
      %4417 = vst.msk [vmem:[%s4391 + $0x129] sm:$0xff] %vm353, %v4384
      %4418 = vst.msk [vmem:[%s4391 + $0x139] sm:$0xff] %vm353, %v4385
      %4419 = vst.msk [vmem:[%s4391 + $0x141] sm:$0xff] %vm353, %v4386
      %4420 = vst.msk [vmem:[%s4391 + $0x151] sm:$0xff] %vm353, %v4387
      %4421 = vst.msk [vmem:[%s4391 + $0x159] sm:$0xff] %vm353, %v4388
      %4422 = vst.msk [vmem:[%s4391 + $0x169] sm:$0xff] %vm353, %v4389
      %4423 = vst.msk [vmem:[%s4391 + $0x171] sm:$0xff] %vm353, %v4390
      %v4424 = vld [vmem:[#allocation4] sm:$0xff]
      %v4425 = vld [vmem:[#allocation4 + $0x8] sm:$0xff]
      %v4426 = vld [vmem:[#allocation4 + $0x18] sm:$0xff]
      %v4427 = vld [vmem:[#allocation4 + $0x20] sm:$0xff]
      %v4428 = vld [vmem:[#allocation4 + $0x30] sm:$0xff]
      %v4429 = vld [vmem:[#allocation4 + $0x38] sm:$0xff]
      %v4430 = vld [vmem:[#allocation4 + $0x48] sm:$0xff]
      %v4431 = vld [vmem:[#allocation4 + $0x50] sm:$0xff]
      %v4432 = vld [vmem:[#allocation4 + $0x60] sm:$0xff]
      %v4433 = vld [vmem:[#allocation4 + $0x68] sm:$0xff]
      %v4434 = vld [vmem:[#allocation4 + $0x78] sm:$0xff]
      %v4435 = vld [vmem:[#allocation4 + $0x80] sm:$0xff]
      %v4436 = vld [vmem:[#allocation4 + $0x90] sm:$0xff]
      %v4437 = vld [vmem:[#allocation4 + $0x98] sm:$0xff]
      %v4438 = vld [vmem:[#allocation4 + $0xa8] sm:$0xff]
      %v4439 = vld [vmem:[#allocation4 + $0xb0] sm:$0xff]
      %v4440 = vld [vmem:[#allocation4 + $0xc0] sm:$0xff]
      %v4441 = vld [vmem:[#allocation4 + $0xc8] sm:$0xff]
      %v4442 = vld [vmem:[#allocation4 + $0xd8] sm:$0xff]
      %v4443 = vld [vmem:[#allocation4 + $0xe0] sm:$0xff]
      %v4444 = vld [vmem:[#allocation4 + $0xf0] sm:$0xff]
      %v4445 = vld [vmem:[#allocation4 + $0xf8] sm:$0xff]
      %v4446 = vld [vmem:[#allocation4 + $0x108] sm:$0xff]
      %v4447 = vld [vmem:[#allocation4 + $0x110] sm:$0xff]
      %v4448 = vld [vmem:[#allocation4 + $0x120] sm:$0xff]
      %v4449 = vld [vmem:[#allocation4 + $0x128] sm:$0xff]
      %v4450 = vld [vmem:[#allocation4 + $0x138] sm:$0xff]
      %v4451 = vld [vmem:[#allocation4 + $0x140] sm:$0xff]
      %v4452 = vld [vmem:[#allocation4 + $0x150] sm:$0xff]
      %v4453 = vld [vmem:[#allocation4 + $0x158] sm:$0xff]
      %v4454 = vld [vmem:[#allocation4 + $0x168] sm:$0xff]
      %v4455 = vld [vmem:[#allocation4 + $0x170] sm:$0xff]
      %4456 = vst.msk [vmem:[#allocation5] sm:$0xff] %vm353, %v4424
      %4457 = vst.msk [vmem:[#allocation5 + $0x10] sm:$0xff] %vm353, %v4425
      %4458 = vst.msk [vmem:[#allocation5 + $0x20] sm:$0xff] %vm353, %v4426
      %4459 = vst.msk [vmem:[#allocation5 + $0x30] sm:$0xff] %vm353, %v4427
      %4460 = vst.msk [vmem:[#allocation5 + $0x40] sm:$0xff] %vm353, %v4428
      %4461 = vst.msk [vmem:[#allocation5 + $0x50] sm:$0xff] %vm353, %v4429
      %4462 = vst.msk [vmem:[#allocation5 + $0x60] sm:$0xff] %vm353, %v4430
      %4463 = vst.msk [vmem:[#allocation5 + $0x70] sm:$0xff] %vm353, %v4431
      %4464 = vst.msk [vmem:[#allocation5 + $0x80] sm:$0xff] %vm353, %v4432
      %4465 = vst.msk [vmem:[#allocation5 + $0x90] sm:$0xff] %vm353, %v4433
      %4466 = vst.msk [vmem:[#allocation5 + $0xa0] sm:$0xff] %vm353, %v4434
      %4467 = vst.msk [vmem:[#allocation5 + $0xb0] sm:$0xff] %vm353, %v4435
      %4468 = vst.msk [vmem:[#allocation5 + $0xc0] sm:$0xff] %vm353, %v4436
      %4469 = vst.msk [vmem:[#allocation5 + $0xd0] sm:$0xff] %vm353, %v4437
      %4470 = vst.msk [vmem:[#allocation5 + $0xe0] sm:$0xff] %vm353, %v4438
      %4471 = vst.msk [vmem:[#allocation5 + $0xf0] sm:$0xff] %vm353, %v4439
      %4472 = vst.msk [vmem:[#allocation5 + $0x100] sm:$0xff] %vm353, %v4440
      %4473 = vst.msk [vmem:[#allocation5 + $0x110] sm:$0xff] %vm353, %v4441
      %4474 = vst.msk [vmem:[#allocation5 + $0x120] sm:$0xff] %vm353, %v4442
      %4475 = vst.msk [vmem:[#allocation5 + $0x130] sm:$0xff] %vm353, %v4443
      %4476 = vst.msk [vmem:[#allocation5 + $0x140] sm:$0xff] %vm353, %v4444
      %4477 = vst.msk [vmem:[#allocation5 + $0x150] sm:$0xff] %vm353, %v4445
      %4478 = vst.msk [vmem:[#allocation5 + $0x160] sm:$0xff] %vm353, %v4446
      %4479 = vst.msk [vmem:[#allocation5 + $0x170] sm:$0xff] %vm353, %v4447
      %4480 = vst.msk [vmem:[#allocation5 + $0x180] sm:$0xff] %vm353, %v4448
      %4481 = vst.msk [vmem:[#allocation5 + $0x190] sm:$0xff] %vm353, %v4449
      %4482 = vst.msk [vmem:[#allocation5 + $0x1a0] sm:$0xff] %vm353, %v4450
      %4483 = vst.msk [vmem:[#allocation5 + $0x1b0] sm:$0xff] %vm353, %v4451
      %4484 = vst.msk [vmem:[#allocation5 + $0x1c0] sm:$0xff] %vm353, %v4452
      %4485 = vst.msk [vmem:[#allocation5 + $0x1d0] sm:$0xff] %vm353, %v4453
      %4486 = vst.msk [vmem:[#allocation5 + $0x1e0] sm:$0xff] %vm353, %v4454
      %4487 = vst.msk [vmem:[#allocation5 + $0x1f0] sm:$0xff] %vm353, %v4455
      %v4488 = vld [vmem:[#allocation4 + $0x1] sm:$0xff]
      %v4489 = vld [vmem:[#allocation4 + $0x9] sm:$0xff]
      %v4490 = vld [vmem:[#allocation4 + $0x19] sm:$0xff]
      %v4491 = vld [vmem:[#allocation4 + $0x21] sm:$0xff]
      %v4492 = vld [vmem:[#allocation4 + $0x31] sm:$0xff]
      %v4493 = vld [vmem:[#allocation4 + $0x39] sm:$0xff]
      %v4494 = vld [vmem:[#allocation4 + $0x49] sm:$0xff]
      %v4495 = vld [vmem:[#allocation4 + $0x51] sm:$0xff]
      %v4496 = vld [vmem:[#allocation4 + $0x61] sm:$0xff]
      %v4497 = vld [vmem:[#allocation4 + $0x69] sm:$0xff]
      %v4498 = vld [vmem:[#allocation4 + $0x79] sm:$0xff]
      %v4499 = vld [vmem:[#allocation4 + $0x81] sm:$0xff]
      %v4500 = vld [vmem:[#allocation4 + $0x91] sm:$0xff]
      %v4501 = vld [vmem:[#allocation4 + $0x99] sm:$0xff]
      %v4502 = vld [vmem:[#allocation4 + $0xa9] sm:$0xff]
      %v4503 = vld [vmem:[#allocation4 + $0xb1] sm:$0xff]
      %v4504 = vld [vmem:[#allocation4 + $0xc1] sm:$0xff]
      %v4505 = vld [vmem:[#allocation4 + $0xc9] sm:$0xff]
      %v4506 = vld [vmem:[#allocation4 + $0xd9] sm:$0xff]
      %v4507 = vld [vmem:[#allocation4 + $0xe1] sm:$0xff]
      %v4508 = vld [vmem:[#allocation4 + $0xf1] sm:$0xff]
      %v4509 = vld [vmem:[#allocation4 + $0xf9] sm:$0xff]
      %v4510 = vld [vmem:[#allocation4 + $0x109] sm:$0xff]
      %v4511 = vld [vmem:[#allocation4 + $0x111] sm:$0xff]
      %v4512 = vld [vmem:[#allocation4 + $0x121] sm:$0xff]
      %v4513 = vld [vmem:[#allocation4 + $0x129] sm:$0xff]
      %v4514 = vld [vmem:[#allocation4 + $0x139] sm:$0xff]
      %v4515 = vld [vmem:[#allocation4 + $0x141] sm:$0xff]
      %v4516 = vld [vmem:[#allocation4 + $0x151] sm:$0xff]
      %v4517 = vld [vmem:[#allocation4 + $0x159] sm:$0xff]
      %v4518 = vld [vmem:[#allocation4 + $0x169] sm:$0xff]
      %v4519 = vld [vmem:[#allocation4 + $0x171] sm:$0xff]
      %4552 = vrot.lane.b32.xlu0 %v4488, 16
      %v4553 = vpop.permute.xlu0 %4552
      %4554 = vrot.lane.b32.xlu0 %v4489, 16
      %v4555 = vpop.permute.xlu0 %4554
      %4556 = vrot.lane.b32.xlu0 %v4490, 16
      %v4557 = vpop.permute.xlu0 %4556
      %4558 = vrot.lane.b32.xlu0 %v4491, 16
      %v4559 = vpop.permute.xlu0 %4558
      %4560 = vrot.lane.b32.xlu0 %v4492, 16
      %v4561 = vpop.permute.xlu0 %4560
      %4562 = vrot.lane.b32.xlu0 %v4493, 16
      %v4563 = vpop.permute.xlu0 %4562
      %4564 = vrot.lane.b32.xlu0 %v4494, 16
      %v4565 = vpop.permute.xlu0 %4564
      %4566 = vrot.lane.b32.xlu0 %v4495, 16
      %v4567 = vpop.permute.xlu0 %4566
      %4568 = vrot.lane.b32.xlu0 %v4496, 16
      %v4569 = vpop.permute.xlu0 %4568
      %4570 = vrot.lane.b32.xlu0 %v4497, 16
      %v4571 = vpop.permute.xlu0 %4570
      %4572 = vrot.lane.b32.xlu0 %v4498, 16
      %v4573 = vpop.permute.xlu0 %4572
      %4574 = vrot.lane.b32.xlu0 %v4499, 16
      %v4575 = vpop.permute.xlu0 %4574
      %4576 = vrot.lane.b32.xlu0 %v4500, 16
      %v4577 = vpop.permute.xlu0 %4576
      %4578 = vrot.lane.b32.xlu0 %v4501, 16
      %v4579 = vpop.permute.xlu0 %4578
      %4580 = vrot.lane.b32.xlu0 %v4502, 16
      %v4581 = vpop.permute.xlu0 %4580
      %4582 = vrot.lane.b32.xlu0 %v4503, 16
      %v4583 = vpop.permute.xlu0 %4582
      %4584 = vrot.lane.b32.xlu0 %v4504, 16
      %v4585 = vpop.permute.xlu0 %4584
      %4586 = vrot.lane.b32.xlu0 %v4505, 16
      %v4587 = vpop.permute.xlu0 %4586
      %4588 = vrot.lane.b32.xlu0 %v4506, 16
      %v4589 = vpop.permute.xlu0 %4588
      %4590 = vrot.lane.b32.xlu0 %v4507, 16
      %v4591 = vpop.permute.xlu0 %4590
      %4592 = vrot.lane.b32.xlu0 %v4508, 16
      %v4593 = vpop.permute.xlu0 %4592
      %4594 = vrot.lane.b32.xlu0 %v4509, 16
      %v4595 = vpop.permute.xlu0 %4594
      %4596 = vrot.lane.b32.xlu0 %v4510, 16
      %v4597 = vpop.permute.xlu0 %4596
      %4598 = vrot.lane.b32.xlu0 %v4511, 16
      %v4599 = vpop.permute.xlu0 %4598
      %4600 = vrot.lane.b32.xlu0 %v4512, 16
      %v4601 = vpop.permute.xlu0 %4600
      %4602 = vrot.lane.b32.xlu0 %v4513, 16
      %v4603 = vpop.permute.xlu0 %4602
      %4604 = vrot.lane.b32.xlu0 %v4514, 16
      %v4605 = vpop.permute.xlu0 %4604
      %4606 = vrot.lane.b32.xlu0 %v4515, 16
      %v4607 = vpop.permute.xlu0 %4606
      %4608 = vrot.lane.b32.xlu0 %v4516, 16
      %v4609 = vpop.permute.xlu0 %4608
      %4610 = vrot.lane.b32.xlu0 %v4517, 16
      %v4611 = vpop.permute.xlu0 %4610
      %4612 = vrot.lane.b32.xlu0 %v4518, 16
      %v4613 = vpop.permute.xlu0 %4612
      %4614 = vrot.lane.b32.xlu0 %v4519, 16
      %v4615 = vpop.permute.xlu0 %4614
      %4648 = vst.msk [vmem:[#allocation5] sm:$0xff] %vm842, %v4553
      %4649 = vst.msk [vmem:[#allocation5 + $0x10] sm:$0xff] %vm842, %v4555
      %4650 = vst.msk [vmem:[#allocation5 + $0x20] sm:$0xff] %vm842, %v4557
      %4651 = vst.msk [vmem:[#allocation5 + $0x30] sm:$0xff] %vm842, %v4559
      %4652 = vst.msk [vmem:[#allocation5 + $0x40] sm:$0xff] %vm842, %v4561
      %4653 = vst.msk [vmem:[#allocation5 + $0x50] sm:$0xff] %vm842, %v4563
      %4654 = vst.msk [vmem:[#allocation5 + $0x60] sm:$0xff] %vm842, %v4565
      %4655 = vst.msk [vmem:[#allocation5 + $0x70] sm:$0xff] %vm842, %v4567
      %4656 = vst.msk [vmem:[#allocation5 + $0x80] sm:$0xff] %vm842, %v4569
      %4657 = vst.msk [vmem:[#allocation5 + $0x90] sm:$0xff] %vm842, %v4571
      %4658 = vst.msk [vmem:[#allocation5 + $0xa0] sm:$0xff] %vm842, %v4573
      %4659 = vst.msk [vmem:[#allocation5 + $0xb0] sm:$0xff] %vm842, %v4575
      %4660 = vst.msk [vmem:[#allocation5 + $0xc0] sm:$0xff] %vm842, %v4577
      %4661 = vst.msk [vmem:[#allocation5 + $0xd0] sm:$0xff] %vm842, %v4579
      %4662 = vst.msk [vmem:[#allocation5 + $0xe0] sm:$0xff] %vm842, %v4581
      %4663 = vst.msk [vmem:[#allocation5 + $0xf0] sm:$0xff] %vm842, %v4583
      %4664 = vst.msk [vmem:[#allocation5 + $0x100] sm:$0xff] %vm842, %v4585
      %4665 = vst.msk [vmem:[#allocation5 + $0x110] sm:$0xff] %vm842, %v4587
      %4666 = vst.msk [vmem:[#allocation5 + $0x120] sm:$0xff] %vm842, %v4589
      %4667 = vst.msk [vmem:[#allocation5 + $0x130] sm:$0xff] %vm842, %v4591
      %4668 = vst.msk [vmem:[#allocation5 + $0x140] sm:$0xff] %vm842, %v4593
      %4669 = vst.msk [vmem:[#allocation5 + $0x150] sm:$0xff] %vm842, %v4595
      %4670 = vst.msk [vmem:[#allocation5 + $0x160] sm:$0xff] %vm842, %v4597
      %4671 = vst.msk [vmem:[#allocation5 + $0x170] sm:$0xff] %vm842, %v4599
      %4672 = vst.msk [vmem:[#allocation5 + $0x180] sm:$0xff] %vm842, %v4601
      %4673 = vst.msk [vmem:[#allocation5 + $0x190] sm:$0xff] %vm842, %v4603
      %4674 = vst.msk [vmem:[#allocation5 + $0x1a0] sm:$0xff] %vm842, %v4605
      %4675 = vst.msk [vmem:[#allocation5 + $0x1b0] sm:$0xff] %vm842, %v4607
      %4676 = vst.msk [vmem:[#allocation5 + $0x1c0] sm:$0xff] %vm842, %v4609
      %4677 = vst.msk [vmem:[#allocation5 + $0x1d0] sm:$0xff] %vm842, %v4611
      %4678 = vst.msk [vmem:[#allocation5 + $0x1e0] sm:$0xff] %vm842, %v4613
      %4679 = vst.msk [vmem:[#allocation5 + $0x1f0] sm:$0xff] %vm842, %v4615
      %v4680 = vld [vmem:[#allocation4 + $0x2] sm:$0xff]
      %v4681 = vld [vmem:[#allocation4 + $0xa] sm:$0xff]
      %v4682 = vld [vmem:[#allocation4 + $0x1a] sm:$0xff]
      %v4683 = vld [vmem:[#allocation4 + $0x22] sm:$0xff]
      %v4684 = vld [vmem:[#allocation4 + $0x32] sm:$0xff]
      %v4685 = vld [vmem:[#allocation4 + $0x3a] sm:$0xff]
      %v4686 = vld [vmem:[#allocation4 + $0x4a] sm:$0xff]
      %v4687 = vld [vmem:[#allocation4 + $0x52] sm:$0xff]
      %v4688 = vld [vmem:[#allocation4 + $0x62] sm:$0xff]
      %v4689 = vld [vmem:[#allocation4 + $0x6a] sm:$0xff]
      %v4690 = vld [vmem:[#allocation4 + $0x7a] sm:$0xff]
      %v4691 = vld [vmem:[#allocation4 + $0x82] sm:$0xff]
      %v4692 = vld [vmem:[#allocation4 + $0x92] sm:$0xff]
      %v4693 = vld [vmem:[#allocation4 + $0x9a] sm:$0xff]
      %v4694 = vld [vmem:[#allocation4 + $0xaa] sm:$0xff]
      %v4695 = vld [vmem:[#allocation4 + $0xb2] sm:$0xff]
      %v4696 = vld [vmem:[#allocation4 + $0xc2] sm:$0xff]
      %v4697 = vld [vmem:[#allocation4 + $0xca] sm:$0xff]
      %v4698 = vld [vmem:[#allocation4 + $0xda] sm:$0xff]
      %v4699 = vld [vmem:[#allocation4 + $0xe2] sm:$0xff]
      %v4700 = vld [vmem:[#allocation4 + $0xf2] sm:$0xff]
      %v4701 = vld [vmem:[#allocation4 + $0xfa] sm:$0xff]
      %v4702 = vld [vmem:[#allocation4 + $0x10a] sm:$0xff]
      %v4703 = vld [vmem:[#allocation4 + $0x112] sm:$0xff]
      %v4704 = vld [vmem:[#allocation4 + $0x122] sm:$0xff]
      %v4705 = vld [vmem:[#allocation4 + $0x12a] sm:$0xff]
      %v4706 = vld [vmem:[#allocation4 + $0x13a] sm:$0xff]
      %v4707 = vld [vmem:[#allocation4 + $0x142] sm:$0xff]
      %v4708 = vld [vmem:[#allocation4 + $0x152] sm:$0xff]
      %v4709 = vld [vmem:[#allocation4 + $0x15a] sm:$0xff]
      %v4710 = vld [vmem:[#allocation4 + $0x16a] sm:$0xff]
      %v4711 = vld [vmem:[#allocation4 + $0x172] sm:$0xff]
      %4744 = vrot.lane.b32.xlu0 %v4680, 32
      %v4745 = vpop.permute.xlu0 %4744
      %4746 = vrot.lane.b32.xlu0 %v4681, 32
      %v4747 = vpop.permute.xlu0 %4746
      %4748 = vrot.lane.b32.xlu0 %v4682, 32
      %v4749 = vpop.permute.xlu0 %4748
      %4750 = vrot.lane.b32.xlu0 %v4683, 32
      %v4751 = vpop.permute.xlu0 %4750
      %4752 = vrot.lane.b32.xlu0 %v4684, 32
      %v4753 = vpop.permute.xlu0 %4752
      %4754 = vrot.lane.b32.xlu0 %v4685, 32
      %v4755 = vpop.permute.xlu0 %4754
      %4756 = vrot.lane.b32.xlu0 %v4686, 32
      %v4757 = vpop.permute.xlu0 %4756
      %4758 = vrot.lane.b32.xlu0 %v4687, 32
      %v4759 = vpop.permute.xlu0 %4758
      %4760 = vrot.lane.b32.xlu0 %v4688, 32
      %v4761 = vpop.permute.xlu0 %4760
      %4762 = vrot.lane.b32.xlu0 %v4689, 32
      %v4763 = vpop.permute.xlu0 %4762
      %4764 = vrot.lane.b32.xlu0 %v4690, 32
      %v4765 = vpop.permute.xlu0 %4764
      %4766 = vrot.lane.b32.xlu0 %v4691, 32
      %v4767 = vpop.permute.xlu0 %4766
      %4768 = vrot.lane.b32.xlu0 %v4692, 32
      %v4769 = vpop.permute.xlu0 %4768
      %4770 = vrot.lane.b32.xlu0 %v4693, 32
      %v4771 = vpop.permute.xlu0 %4770
      %4772 = vrot.lane.b32.xlu0 %v4694, 32
      %v4773 = vpop.permute.xlu0 %4772
      %4774 = vrot.lane.b32.xlu0 %v4695, 32
      %v4775 = vpop.permute.xlu0 %4774
      %4776 = vrot.lane.b32.xlu0 %v4696, 32
      %v4777 = vpop.permute.xlu0 %4776
      %4778 = vrot.lane.b32.xlu0 %v4697, 32
      %v4779 = vpop.permute.xlu0 %4778
      %4780 = vrot.lane.b32.xlu0 %v4698, 32
      %v4781 = vpop.permute.xlu0 %4780
      %4782 = vrot.lane.b32.xlu0 %v4699, 32
      %v4783 = vpop.permute.xlu0 %4782
      %4784 = vrot.lane.b32.xlu0 %v4700, 32
      %v4785 = vpop.permute.xlu0 %4784
      %4786 = vrot.lane.b32.xlu0 %v4701, 32
      %v4787 = vpop.permute.xlu0 %4786
      %4788 = vrot.lane.b32.xlu0 %v4702, 32
      %v4789 = vpop.permute.xlu0 %4788
      %4790 = vrot.lane.b32.xlu0 %v4703, 32
      %v4791 = vpop.permute.xlu0 %4790
      %4792 = vrot.lane.b32.xlu0 %v4704, 32
      %v4793 = vpop.permute.xlu0 %4792
      %4794 = vrot.lane.b32.xlu0 %v4705, 32
      %v4795 = vpop.permute.xlu0 %4794
      %4796 = vrot.lane.b32.xlu0 %v4706, 32
      %v4797 = vpop.permute.xlu0 %4796
      %4798 = vrot.lane.b32.xlu0 %v4707, 32
      %v4799 = vpop.permute.xlu0 %4798
      %4800 = vrot.lane.b32.xlu0 %v4708, 32
      %v4801 = vpop.permute.xlu0 %4800
      %4802 = vrot.lane.b32.xlu0 %v4709, 32
      %v4803 = vpop.permute.xlu0 %4802
      %4804 = vrot.lane.b32.xlu0 %v4710, 32
      %v4805 = vpop.permute.xlu0 %4804
      %4806 = vrot.lane.b32.xlu0 %v4711, 32
      %v4807 = vpop.permute.xlu0 %4806
      %4840 = vst.msk [vmem:[#allocation5] sm:$0xff] %vm1035, %v4745
      %4841 = vst.msk [vmem:[#allocation5 + $0x10] sm:$0xff] %vm1035, %v4747
      %4842 = vst.msk [vmem:[#allocation5 + $0x20] sm:$0xff] %vm1035, %v4749
      %4843 = vst.msk [vmem:[#allocation5 + $0x30] sm:$0xff] %vm1035, %v4751
      %4844 = vst.msk [vmem:[#allocation5 + $0x40] sm:$0xff] %vm1035, %v4753
      %4845 = vst.msk [vmem:[#allocation5 + $0x50] sm:$0xff] %vm1035, %v4755
      %4846 = vst.msk [vmem:[#allocation5 + $0x60] sm:$0xff] %vm1035, %v4757
      %4847 = vst.msk [vmem:[#allocation5 + $0x70] sm:$0xff] %vm1035, %v4759
      %4848 = vst.msk [vmem:[#allocation5 + $0x80] sm:$0xff] %vm1035, %v4761
      %4849 = vst.msk [vmem:[#allocation5 + $0x90] sm:$0xff] %vm1035, %v4763
      %4850 = vst.msk [vmem:[#allocation5 + $0xa0] sm:$0xff] %vm1035, %v4765
      %4851 = vst.msk [vmem:[#allocation5 + $0xb0] sm:$0xff] %vm1035, %v4767
      %4852 = vst.msk [vmem:[#allocation5 + $0xc0] sm:$0xff] %vm1035, %v4769
      %4853 = vst.msk [vmem:[#allocation5 + $0xd0] sm:$0xff] %vm1035, %v4771
      %4854 = vst.msk [vmem:[#allocation5 + $0xe0] sm:$0xff] %vm1035, %v4773
      %4855 = vst.msk [vmem:[#allocation5 + $0xf0] sm:$0xff] %vm1035, %v4775
      %4856 = vst.msk [vmem:[#allocation5 + $0x100] sm:$0xff] %vm1035, %v4777
      %4857 = vst.msk [vmem:[#allocation5 + $0x110] sm:$0xff] %vm1035, %v4779
      %4858 = vst.msk [vmem:[#allocation5 + $0x120] sm:$0xff] %vm1035, %v4781
      %4859 = vst.msk [vmem:[#allocation5 + $0x130] sm:$0xff] %vm1035, %v4783
      %4860 = vst.msk [vmem:[#allocation5 + $0x140] sm:$0xff] %vm1035, %v4785
      %4861 = vst.msk [vmem:[#allocation5 + $0x150] sm:$0xff] %vm1035, %v4787
      %4862 = vst.msk [vmem:[#allocation5 + $0x160] sm:$0xff] %vm1035, %v4789
      %4863 = vst.msk [vmem:[#allocation5 + $0x170] sm:$0xff] %vm1035, %v4791
      %4864 = vst.msk [vmem:[#allocation5 + $0x180] sm:$0xff] %vm1035, %v4793
      %4865 = vst.msk [vmem:[#allocation5 + $0x190] sm:$0xff] %vm1035, %v4795
      %4866 = vst.msk [vmem:[#allocation5 + $0x1a0] sm:$0xff] %vm1035, %v4797
      %4867 = vst.msk [vmem:[#allocation5 + $0x1b0] sm:$0xff] %vm1035, %v4799
      %4868 = vst.msk [vmem:[#allocation5 + $0x1c0] sm:$0xff] %vm1035, %v4801
      %4869 = vst.msk [vmem:[#allocation5 + $0x1d0] sm:$0xff] %vm1035, %v4803
      %4870 = vst.msk [vmem:[#allocation5 + $0x1e0] sm:$0xff] %vm1035, %v4805
      %4871 = vst.msk [vmem:[#allocation5 + $0x1f0] sm:$0xff] %vm1035, %v4807
      %v4872 = vld [vmem:[%s4391] sm:$0xff]
      %v4873 = vld [vmem:[%s4391 + $0x8] sm:$0xff]
      %v4874 = vld [vmem:[%s4391 + $0x18] sm:$0xff]
      %v4875 = vld [vmem:[%s4391 + $0x20] sm:$0xff]
      %v4876 = vld [vmem:[%s4391 + $0x30] sm:$0xff]
      %v4877 = vld [vmem:[%s4391 + $0x38] sm:$0xff]
      %v4878 = vld [vmem:[%s4391 + $0x48] sm:$0xff]
      %v4879 = vld [vmem:[%s4391 + $0x50] sm:$0xff]
      %v4880 = vld [vmem:[%s4391 + $0x60] sm:$0xff]
      %v4881 = vld [vmem:[%s4391 + $0x68] sm:$0xff]
      %v4882 = vld [vmem:[%s4391 + $0x78] sm:$0xff]
      %v4883 = vld [vmem:[%s4391 + $0x80] sm:$0xff]
      %v4884 = vld [vmem:[%s4391 + $0x90] sm:$0xff]
      %v4885 = vld [vmem:[%s4391 + $0x98] sm:$0xff]
      %v4886 = vld [vmem:[%s4391 + $0xa8] sm:$0xff]
      %v4887 = vld [vmem:[%s4391 + $0xb0] sm:$0xff]
      %v4888 = vld [vmem:[%s4391 + $0xc0] sm:$0xff]
      %v4889 = vld [vmem:[%s4391 + $0xc8] sm:$0xff]
      %v4890 = vld [vmem:[%s4391 + $0xd8] sm:$0xff]
      %v4891 = vld [vmem:[%s4391 + $0xe0] sm:$0xff]
      %v4892 = vld [vmem:[%s4391 + $0xf0] sm:$0xff]
      %v4893 = vld [vmem:[%s4391 + $0xf8] sm:$0xff]
      %v4894 = vld [vmem:[%s4391 + $0x108] sm:$0xff]
      %v4895 = vld [vmem:[%s4391 + $0x110] sm:$0xff]
      %v4896 = vld [vmem:[%s4391 + $0x120] sm:$0xff]
      %v4897 = vld [vmem:[%s4391 + $0x128] sm:$0xff]
      %v4898 = vld [vmem:[%s4391 + $0x138] sm:$0xff]
      %v4899 = vld [vmem:[%s4391 + $0x140] sm:$0xff]
      %v4900 = vld [vmem:[%s4391 + $0x150] sm:$0xff]
      %v4901 = vld [vmem:[%s4391 + $0x158] sm:$0xff]
      %v4902 = vld [vmem:[%s4391 + $0x168] sm:$0xff]
      %v4903 = vld [vmem:[%s4391 + $0x170] sm:$0xff]
      %4936 = vrot.lane.b32.xlu0 %v4872, 48
      %v4937 = vpop.permute.xlu0 %4936
      %4938 = vrot.lane.b32.xlu0 %v4873, 48
      %v4939 = vpop.permute.xlu0 %4938
      %4940 = vrot.lane.b32.xlu0 %v4874, 48
      %v4941 = vpop.permute.xlu0 %4940
      %4942 = vrot.lane.b32.xlu0 %v4875, 48
      %v4943 = vpop.permute.xlu0 %4942
      %4944 = vrot.lane.b32.xlu0 %v4876, 48
      %v4945 = vpop.permute.xlu0 %4944
      %4946 = vrot.lane.b32.xlu0 %v4877, 48
      %v4947 = vpop.permute.xlu0 %4946
      %4948 = vrot.lane.b32.xlu0 %v4878, 48
      %v4949 = vpop.permute.xlu0 %4948
      %4950 = vrot.lane.b32.xlu0 %v4879, 48
      %v4951 = vpop.permute.xlu0 %4950
      %4952 = vrot.lane.b32.xlu0 %v4880, 48
      %v4953 = vpop.permute.xlu0 %4952
      %4954 = vrot.lane.b32.xlu0 %v4881, 48
      %v4955 = vpop.permute.xlu0 %4954
      %4956 = vrot.lane.b32.xlu0 %v4882, 48
      %v4957 = vpop.permute.xlu0 %4956
      %4958 = vrot.lane.b32.xlu0 %v4883, 48
      %v4959 = vpop.permute.xlu0 %4958
      %4960 = vrot.lane.b32.xlu0 %v4884, 48
      %v4961 = vpop.permute.xlu0 %4960
      %4962 = vrot.lane.b32.xlu0 %v4885, 48
      %v4963 = vpop.permute.xlu0 %4962
      %4964 = vrot.lane.b32.xlu0 %v4886, 48
      %v4965 = vpop.permute.xlu0 %4964
      %4966 = vrot.lane.b32.xlu0 %v4887, 48
      %v4967 = vpop.permute.xlu0 %4966
      %4968 = vrot.lane.b32.xlu0 %v4888, 48
      %v4969 = vpop.permute.xlu0 %4968
      %4970 = vrot.lane.b32.xlu0 %v4889, 48
      %v4971 = vpop.permute.xlu0 %4970
      %4972 = vrot.lane.b32.xlu0 %v4890, 48
      %v4973 = vpop.permute.xlu0 %4972
      %4974 = vrot.lane.b32.xlu0 %v4891, 48
      %v4975 = vpop.permute.xlu0 %4974
      %4976 = vrot.lane.b32.xlu0 %v4892, 48
      %v4977 = vpop.permute.xlu0 %4976
      %4978 = vrot.lane.b32.xlu0 %v4893, 48
      %v4979 = vpop.permute.xlu0 %4978
      %4980 = vrot.lane.b32.xlu0 %v4894, 48
      %v4981 = vpop.permute.xlu0 %4980
      %4982 = vrot.lane.b32.xlu0 %v4895, 48
      %v4983 = vpop.permute.xlu0 %4982
      %4984 = vrot.lane.b32.xlu0 %v4896, 48
      %v4985 = vpop.permute.xlu0 %4984
      %4986 = vrot.lane.b32.xlu0 %v4897, 48
      %v4987 = vpop.permute.xlu0 %4986
      %4988 = vrot.lane.b32.xlu0 %v4898, 48
      %v4989 = vpop.permute.xlu0 %4988
      %4990 = vrot.lane.b32.xlu0 %v4899, 48
      %v4991 = vpop.permute.xlu0 %4990
      %4992 = vrot.lane.b32.xlu0 %v4900, 48
      %v4993 = vpop.permute.xlu0 %4992
      %4994 = vrot.lane.b32.xlu0 %v4901, 48
      %v4995 = vpop.permute.xlu0 %4994
      %4996 = vrot.lane.b32.xlu0 %v4902, 48
      %v4997 = vpop.permute.xlu0 %4996
      %4998 = vrot.lane.b32.xlu0 %v4903, 48
      %v4999 = vpop.permute.xlu0 %4998
      %5032 = vst.msk [vmem:[#allocation5] sm:$0xff] %vm1228, %v4937
      %5033 = vst.msk [vmem:[#allocation5 + $0x10] sm:$0xff] %vm1228, %v4939
      %5034 = vst.msk [vmem:[#allocation5 + $0x20] sm:$0xff] %vm1228, %v4941
      %5035 = vst.msk [vmem:[#allocation5 + $0x30] sm:$0xff] %vm1228, %v4943
      %5036 = vst.msk [vmem:[#allocation5 + $0x40] sm:$0xff] %vm1228, %v4945
      %5037 = vst.msk [vmem:[#allocation5 + $0x50] sm:$0xff] %vm1228, %v4947
      %5038 = vst.msk [vmem:[#allocation5 + $0x60] sm:$0xff] %vm1228, %v4949
      %5039 = vst.msk [vmem:[#allocation5 + $0x70] sm:$0xff] %vm1228, %v4951
      %5040 = vst.msk [vmem:[#allocation5 + $0x80] sm:$0xff] %vm1228, %v4953
      %5041 = vst.msk [vmem:[#allocation5 + $0x90] sm:$0xff] %vm1228, %v4955
      %5042 = vst.msk [vmem:[#allocation5 + $0xa0] sm:$0xff] %vm1228, %v4957
      %5043 = vst.msk [vmem:[#allocation5 + $0xb0] sm:$0xff] %vm1228, %v4959
      %5044 = vst.msk [vmem:[#allocation5 + $0xc0] sm:$0xff] %vm1228, %v4961
      %5045 = vst.msk [vmem:[#allocation5 + $0xd0] sm:$0xff] %vm1228, %v4963
      %5046 = vst.msk [vmem:[#allocation5 + $0xe0] sm:$0xff] %vm1228, %v4965
      %5047 = vst.msk [vmem:[#allocation5 + $0xf0] sm:$0xff] %vm1228, %v4967
      %5048 = vst.msk [vmem:[#allocation5 + $0x100] sm:$0xff] %vm1228, %v4969
      %5049 = vst.msk [vmem:[#allocation5 + $0x110] sm:$0xff] %vm1228, %v4971
      %5050 = vst.msk [vmem:[#allocation5 + $0x120] sm:$0xff] %vm1228, %v4973
      %5051 = vst.msk [vmem:[#allocation5 + $0x130] sm:$0xff] %vm1228, %v4975
      %5052 = vst.msk [vmem:[#allocation5 + $0x140] sm:$0xff] %vm1228, %v4977
      %5053 = vst.msk [vmem:[#allocation5 + $0x150] sm:$0xff] %vm1228, %v4979
      %5054 = vst.msk [vmem:[#allocation5 + $0x160] sm:$0xff] %vm1228, %v4981
      %5055 = vst.msk [vmem:[#allocation5 + $0x170] sm:$0xff] %vm1228, %v4983
      %5056 = vst.msk [vmem:[#allocation5 + $0x180] sm:$0xff] %vm1228, %v4985
      %5057 = vst.msk [vmem:[#allocation5 + $0x190] sm:$0xff] %vm1228, %v4987
      %5058 = vst.msk [vmem:[#allocation5 + $0x1a0] sm:$0xff] %vm1228, %v4989
      %5059 = vst.msk [vmem:[#allocation5 + $0x1b0] sm:$0xff] %vm1228, %v4991
      %5060 = vst.msk [vmem:[#allocation5 + $0x1c0] sm:$0xff] %vm1228, %v4993
      %5061 = vst.msk [vmem:[#allocation5 + $0x1d0] sm:$0xff] %vm1228, %v4995
      %5062 = vst.msk [vmem:[#allocation5 + $0x1e0] sm:$0xff] %vm1228, %v4997
      %5063 = vst.msk [vmem:[#allocation5 + $0x1f0] sm:$0xff] %vm1228, %v4999
      %v5064 = vld [vmem:[%s4391 + $0x1] sm:$0xff]
      %v5065 = vld [vmem:[%s4391 + $0x9] sm:$0xff]
      %v5066 = vld [vmem:[%s4391 + $0x19] sm:$0xff]
      %v5067 = vld [vmem:[%s4391 + $0x21] sm:$0xff]
      %v5068 = vld [vmem:[%s4391 + $0x31] sm:$0xff]
      %v5069 = vld [vmem:[%s4391 + $0x39] sm:$0xff]
      %v5070 = vld [vmem:[%s4391 + $0x49] sm:$0xff]
      %v5071 = vld [vmem:[%s4391 + $0x51] sm:$0xff]
      %v5072 = vld [vmem:[%s4391 + $0x61] sm:$0xff]
      %v5073 = vld [vmem:[%s4391 + $0x69] sm:$0xff]
      %v5074 = vld [vmem:[%s4391 + $0x79] sm:$0xff]
      %v5075 = vld [vmem:[%s4391 + $0x81] sm:$0xff]
      %v5076 = vld [vmem:[%s4391 + $0x91] sm:$0xff]
      %v5077 = vld [vmem:[%s4391 + $0x99] sm:$0xff]
      %v5078 = vld [vmem:[%s4391 + $0xa9] sm:$0xff]
      %v5079 = vld [vmem:[%s4391 + $0xb1] sm:$0xff]
      %v5080 = vld [vmem:[%s4391 + $0xc1] sm:$0xff]
      %v5081 = vld [vmem:[%s4391 + $0xc9] sm:$0xff]
      %v5082 = vld [vmem:[%s4391 + $0xd9] sm:$0xff]
      %v5083 = vld [vmem:[%s4391 + $0xe1] sm:$0xff]
      %v5084 = vld [vmem:[%s4391 + $0xf1] sm:$0xff]
      %v5085 = vld [vmem:[%s4391 + $0xf9] sm:$0xff]
      %v5086 = vld [vmem:[%s4391 + $0x109] sm:$0xff]
      %v5087 = vld [vmem:[%s4391 + $0x111] sm:$0xff]
      %v5088 = vld [vmem:[%s4391 + $0x121] sm:$0xff]
      %v5089 = vld [vmem:[%s4391 + $0x129] sm:$0xff]
      %v5090 = vld [vmem:[%s4391 + $0x139] sm:$0xff]
      %v5091 = vld [vmem:[%s4391 + $0x141] sm:$0xff]
      %v5092 = vld [vmem:[%s4391 + $0x151] sm:$0xff]
      %v5093 = vld [vmem:[%s4391 + $0x159] sm:$0xff]
      %v5094 = vld [vmem:[%s4391 + $0x169] sm:$0xff]
      %v5095 = vld [vmem:[%s4391 + $0x171] sm:$0xff]
      %5128 = vrot.lane.b32.xlu0 %v5064, 64
      %v5129 = vpop.permute.xlu0 %5128
      %5130 = vrot.lane.b32.xlu0 %v5065, 64
      %v5131 = vpop.permute.xlu0 %5130
      %5132 = vrot.lane.b32.xlu0 %v5066, 64
      %v5133 = vpop.permute.xlu0 %5132
      %5134 = vrot.lane.b32.xlu0 %v5067, 64
      %v5135 = vpop.permute.xlu0 %5134
      %5136 = vrot.lane.b32.xlu0 %v5068, 64
      %v5137 = vpop.permute.xlu0 %5136
      %5138 = vrot.lane.b32.xlu0 %v5069, 64
      %v5139 = vpop.permute.xlu0 %5138
      %5140 = vrot.lane.b32.xlu0 %v5070, 64
      %v5141 = vpop.permute.xlu0 %5140
      %5142 = vrot.lane.b32.xlu0 %v5071, 64
      %v5143 = vpop.permute.xlu0 %5142
      %5144 = vrot.lane.b32.xlu0 %v5072, 64
      %v5145 = vpop.permute.xlu0 %5144
      %5146 = vrot.lane.b32.xlu0 %v5073, 64
      %v5147 = vpop.permute.xlu0 %5146
      %5148 = vrot.lane.b32.xlu0 %v5074, 64
      %v5149 = vpop.permute.xlu0 %5148
      %5150 = vrot.lane.b32.xlu0 %v5075, 64
      %v5151 = vpop.permute.xlu0 %5150
      %5152 = vrot.lane.b32.xlu0 %v5076, 64
      %v5153 = vpop.permute.xlu0 %5152
      %5154 = vrot.lane.b32.xlu0 %v5077, 64
      %v5155 = vpop.permute.xlu0 %5154
      %5156 = vrot.lane.b32.xlu0 %v5078, 64
      %v5157 = vpop.permute.xlu0 %5156
      %5158 = vrot.lane.b32.xlu0 %v5079, 64
      %v5159 = vpop.permute.xlu0 %5158
      %5160 = vrot.lane.b32.xlu0 %v5080, 64
      %v5161 = vpop.permute.xlu0 %5160
      %5162 = vrot.lane.b32.xlu0 %v5081, 64
      %v5163 = vpop.permute.xlu0 %5162
      %5164 = vrot.lane.b32.xlu0 %v5082, 64
      %v5165 = vpop.permute.xlu0 %5164
      %5166 = vrot.lane.b32.xlu0 %v5083, 64
      %v5167 = vpop.permute.xlu0 %5166
      %5168 = vrot.lane.b32.xlu0 %v5084, 64
      %v5169 = vpop.permute.xlu0 %5168
      %5170 = vrot.lane.b32.xlu0 %v5085, 64
      %v5171 = vpop.permute.xlu0 %5170
      %5172 = vrot.lane.b32.xlu0 %v5086, 64
      %v5173 = vpop.permute.xlu0 %5172
      %5174 = vrot.lane.b32.xlu0 %v5087, 64
      %v5175 = vpop.permute.xlu0 %5174
      %5176 = vrot.lane.b32.xlu0 %v5088, 64
      %v5177 = vpop.permute.xlu0 %5176
      %5178 = vrot.lane.b32.xlu0 %v5089, 64
      %v5179 = vpop.permute.xlu0 %5178
      %5180 = vrot.lane.b32.xlu0 %v5090, 64
      %v5181 = vpop.permute.xlu0 %5180
      %5182 = vrot.lane.b32.xlu0 %v5091, 64
      %v5183 = vpop.permute.xlu0 %5182
      %5184 = vrot.lane.b32.xlu0 %v5092, 64
      %v5185 = vpop.permute.xlu0 %5184
      %5186 = vrot.lane.b32.xlu0 %v5093, 64
      %v5187 = vpop.permute.xlu0 %5186
      %5188 = vrot.lane.b32.xlu0 %v5094, 64
      %v5189 = vpop.permute.xlu0 %5188
      %5190 = vrot.lane.b32.xlu0 %v5095, 64
      %v5191 = vpop.permute.xlu0 %5190
      %5224 = vst.msk [vmem:[#allocation5] sm:$0xff] %vm1421, %v5129
      %5225 = vst.msk [vmem:[#allocation5 + $0x10] sm:$0xff] %vm1421, %v5131
      %5226 = vst.msk [vmem:[#allocation5 + $0x20] sm:$0xff] %vm1421, %v5133
      %5227 = vst.msk [vmem:[#allocation5 + $0x30] sm:$0xff] %vm1421, %v5135
      %5228 = vst.msk [vmem:[#allocation5 + $0x40] sm:$0xff] %vm1421, %v5137
      %5229 = vst.msk [vmem:[#allocation5 + $0x50] sm:$0xff] %vm1421, %v5139
      %5230 = vst.msk [vmem:[#allocation5 + $0x60] sm:$0xff] %vm1421, %v5141
      %5231 = vst.msk [vmem:[#allocation5 + $0x70] sm:$0xff] %vm1421, %v5143
      %5232 = vst.msk [vmem:[#allocation5 + $0x80] sm:$0xff] %vm1421, %v5145
      %5233 = vst.msk [vmem:[#allocation5 + $0x90] sm:$0xff] %vm1421, %v5147
      %5234 = vst.msk [vmem:[#allocation5 + $0xa0] sm:$0xff] %vm1421, %v5149
      %5235 = vst.msk [vmem:[#allocation5 + $0xb0] sm:$0xff] %vm1421, %v5151
      %5236 = vst.msk [vmem:[#allocation5 + $0xc0] sm:$0xff] %vm1421, %v5153
      %5237 = vst.msk [vmem:[#allocation5 + $0xd0] sm:$0xff] %vm1421, %v5155
      %5238 = vst.msk [vmem:[#allocation5 + $0xe0] sm:$0xff] %vm1421, %v5157
      %5239 = vst.msk [vmem:[#allocation5 + $0xf0] sm:$0xff] %vm1421, %v5159
      %5240 = vst.msk [vmem:[#allocation5 + $0x100] sm:$0xff] %vm1421, %v5161
      %5241 = vst.msk [vmem:[#allocation5 + $0x110] sm:$0xff] %vm1421, %v5163
      %5242 = vst.msk [vmem:[#allocation5 + $0x120] sm:$0xff] %vm1421, %v5165
      %5243 = vst.msk [vmem:[#allocation5 + $0x130] sm:$0xff] %vm1421, %v5167
      %5244 = vst.msk [vmem:[#allocation5 + $0x140] sm:$0xff] %vm1421, %v5169
      %5245 = vst.msk [vmem:[#allocation5 + $0x150] sm:$0xff] %vm1421, %v5171
      %5246 = vst.msk [vmem:[#allocation5 + $0x160] sm:$0xff] %vm1421, %v5173
      %5247 = vst.msk [vmem:[#allocation5 + $0x170] sm:$0xff] %vm1421, %v5175
      %5248 = vst.msk [vmem:[#allocation5 + $0x180] sm:$0xff] %vm1421, %v5177
      %5249 = vst.msk [vmem:[#allocation5 + $0x190] sm:$0xff] %vm1421, %v5179
      %5250 = vst.msk [vmem:[#allocation5 + $0x1a0] sm:$0xff] %vm1421, %v5181
      %5251 = vst.msk [vmem:[#allocation5 + $0x1b0] sm:$0xff] %vm1421, %v5183
      %5252 = vst.msk [vmem:[#allocation5 + $0x1c0] sm:$0xff] %vm1421, %v5185
      %5253 = vst.msk [vmem:[#allocation5 + $0x1d0] sm:$0xff] %vm1421, %v5187
      %5254 = vst.msk [vmem:[#allocation5 + $0x1e0] sm:$0xff] %vm1421, %v5189
      %5255 = vst.msk [vmem:[#allocation5 + $0x1f0] sm:$0xff] %vm1421, %v5191
      %v5256 = vld [vmem:[%s4391 + $0x2] sm:$0xff]
      %v5257 = vld [vmem:[%s4391 + $0xa] sm:$0xff]
      %v5258 = vld [vmem:[%s4391 + $0x1a] sm:$0xff]
      %v5259 = vld [vmem:[%s4391 + $0x22] sm:$0xff]
      %v5260 = vld [vmem:[%s4391 + $0x32] sm:$0xff]
      %v5261 = vld [vmem:[%s4391 + $0x3a] sm:$0xff]
      %v5262 = vld [vmem:[%s4391 + $0x4a] sm:$0xff]
      %v5263 = vld [vmem:[%s4391 + $0x52] sm:$0xff]
      %v5264 = vld [vmem:[%s4391 + $0x62] sm:$0xff]
      %v5265 = vld [vmem:[%s4391 + $0x6a] sm:$0xff]
      %v5266 = vld [vmem:[%s4391 + $0x7a] sm:$0xff]
      %v5267 = vld [vmem:[%s4391 + $0x82] sm:$0xff]
      %v5268 = vld [vmem:[%s4391 + $0x92] sm:$0xff]
      %v5269 = vld [vmem:[%s4391 + $0x9a] sm:$0xff]
      %v5270 = vld [vmem:[%s4391 + $0xaa] sm:$0xff]
      %v5271 = vld [vmem:[%s4391 + $0xb2] sm:$0xff]
      %v5272 = vld [vmem:[%s4391 + $0xc2] sm:$0xff]
      %v5273 = vld [vmem:[%s4391 + $0xca] sm:$0xff]
      %v5274 = vld [vmem:[%s4391 + $0xda] sm:$0xff]
      %v5275 = vld [vmem:[%s4391 + $0xe2] sm:$0xff]
      %v5276 = vld [vmem:[%s4391 + $0xf2] sm:$0xff]
      %v5277 = vld [vmem:[%s4391 + $0xfa] sm:$0xff]
      %v5278 = vld [vmem:[%s4391 + $0x10a] sm:$0xff]
      %v5279 = vld [vmem:[%s4391 + $0x112] sm:$0xff]
      %v5280 = vld [vmem:[%s4391 + $0x122] sm:$0xff]
      %v5281 = vld [vmem:[%s4391 + $0x12a] sm:$0xff]
      %v5282 = vld [vmem:[%s4391 + $0x13a] sm:$0xff]
      %v5283 = vld [vmem:[%s4391 + $0x142] sm:$0xff]
      %v5284 = vld [vmem:[%s4391 + $0x152] sm:$0xff]
      %v5285 = vld [vmem:[%s4391 + $0x15a] sm:$0xff]
      %v5286 = vld [vmem:[%s4391 + $0x16a] sm:$0xff]
      %v5287 = vld [vmem:[%s4391 + $0x172] sm:$0xff]
      %5320 = vrot.lane.b32.xlu0 %v5256, 80
      %v5321 = vpop.permute.xlu0 %5320
      %5322 = vrot.lane.b32.xlu0 %v5257, 80
      %v5323 = vpop.permute.xlu0 %5322
      %5324 = vrot.lane.b32.xlu0 %v5258, 80
      %v5325 = vpop.permute.xlu0 %5324
      %5326 = vrot.lane.b32.xlu0 %v5259, 80
      %v5327 = vpop.permute.xlu0 %5326
      %5328 = vrot.lane.b32.xlu0 %v5260, 80
      %v5329 = vpop.permute.xlu0 %5328
      %5330 = vrot.lane.b32.xlu0 %v5261, 80
      %v5331 = vpop.permute.xlu0 %5330
      %5332 = vrot.lane.b32.xlu0 %v5262, 80
      %v5333 = vpop.permute.xlu0 %5332
      %5334 = vrot.lane.b32.xlu0 %v5263, 80
      %v5335 = vpop.permute.xlu0 %5334
      %5336 = vrot.lane.b32.xlu0 %v5264, 80
      %v5337 = vpop.permute.xlu0 %5336
      %5338 = vrot.lane.b32.xlu0 %v5265, 80
      %v5339 = vpop.permute.xlu0 %5338
      %5340 = vrot.lane.b32.xlu0 %v5266, 80
      %v5341 = vpop.permute.xlu0 %5340
      %5342 = vrot.lane.b32.xlu0 %v5267, 80
      %v5343 = vpop.permute.xlu0 %5342
      %5344 = vrot.lane.b32.xlu0 %v5268, 80
      %v5345 = vpop.permute.xlu0 %5344
      %5346 = vrot.lane.b32.xlu0 %v5269, 80
      %v5347 = vpop.permute.xlu0 %5346
      %5348 = vrot.lane.b32.xlu0 %v5270, 80
      %v5349 = vpop.permute.xlu0 %5348
      %5350 = vrot.lane.b32.xlu0 %v5271, 80
      %v5351 = vpop.permute.xlu0 %5350
      %5352 = vrot.lane.b32.xlu0 %v5272, 80
      %v5353 = vpop.permute.xlu0 %5352
      %5354 = vrot.lane.b32.xlu0 %v5273, 80
      %v5355 = vpop.permute.xlu0 %5354
      %5356 = vrot.lane.b32.xlu0 %v5274, 80
      %v5357 = vpop.permute.xlu0 %5356
      %5358 = vrot.lane.b32.xlu0 %v5275, 80
      %v5359 = vpop.permute.xlu0 %5358
      %5360 = vrot.lane.b32.xlu0 %v5276, 80
      %v5361 = vpop.permute.xlu0 %5360
      %5362 = vrot.lane.b32.xlu0 %v5277, 80
      %v5363 = vpop.permute.xlu0 %5362
      %5364 = vrot.lane.b32.xlu0 %v5278, 80
      %v5365 = vpop.permute.xlu0 %5364
      %5366 = vrot.lane.b32.xlu0 %v5279, 80
      %v5367 = vpop.permute.xlu0 %5366
      %5368 = vrot.lane.b32.xlu0 %v5280, 80
      %v5369 = vpop.permute.xlu0 %5368
      %5370 = vrot.lane.b32.xlu0 %v5281, 80
      %v5371 = vpop.permute.xlu0 %5370
      %5372 = vrot.lane.b32.xlu0 %v5282, 80
      %v5373 = vpop.permute.xlu0 %5372
      %5374 = vrot.lane.b32.xlu0 %v5283, 80
      %v5375 = vpop.permute.xlu0 %5374
      %5376 = vrot.lane.b32.xlu0 %v5284, 80
      %v5377 = vpop.permute.xlu0 %5376
      %5378 = vrot.lane.b32.xlu0 %v5285, 80
      %v5379 = vpop.permute.xlu0 %5378
      %5380 = vrot.lane.b32.xlu0 %v5286, 80
      %v5381 = vpop.permute.xlu0 %5380
      %5382 = vrot.lane.b32.xlu0 %v5287, 80
      %v5383 = vpop.permute.xlu0 %5382
      %5416 = vst.msk [vmem:[#allocation5] sm:$0xff] %vm1614, %v5321
      %5417 = vst.msk [vmem:[#allocation5 + $0x10] sm:$0xff] %vm1614, %v5323
      %5418 = vst.msk [vmem:[#allocation5 + $0x20] sm:$0xff] %vm1614, %v5325
      %5419 = vst.msk [vmem:[#allocation5 + $0x30] sm:$0xff] %vm1614, %v5327
      %5420 = vst.msk [vmem:[#allocation5 + $0x40] sm:$0xff] %vm1614, %v5329
      %5421 = vst.msk [vmem:[#allocation5 + $0x50] sm:$0xff] %vm1614, %v5331
      %5422 = vst.msk [vmem:[#allocation5 + $0x60] sm:$0xff] %vm1614, %v5333
      %5423 = vst.msk [vmem:[#allocation5 + $0x70] sm:$0xff] %vm1614, %v5335
      %5424 = vst.msk [vmem:[#allocation5 + $0x80] sm:$0xff] %vm1614, %v5337
      %5425 = vst.msk [vmem:[#allocation5 + $0x90] sm:$0xff] %vm1614, %v5339
      %5426 = vst.msk [vmem:[#allocation5 + $0xa0] sm:$0xff] %vm1614, %v5341
      %5427 = vst.msk [vmem:[#allocation5 + $0xb0] sm:$0xff] %vm1614, %v5343
      %5428 = vst.msk [vmem:[#allocation5 + $0xc0] sm:$0xff] %vm1614, %v5345
      %5429 = vst.msk [vmem:[#allocation5 + $0xd0] sm:$0xff] %vm1614, %v5347
      %5430 = vst.msk [vmem:[#allocation5 + $0xe0] sm:$0xff] %vm1614, %v5349
      %5431 = vst.msk [vmem:[#allocation5 + $0xf0] sm:$0xff] %vm1614, %v5351
      %5432 = vst.msk [vmem:[#allocation5 + $0x100] sm:$0xff] %vm1614, %v5353
      %5433 = vst.msk [vmem:[#allocation5 + $0x110] sm:$0xff] %vm1614, %v5355
      %5434 = vst.msk [vmem:[#allocation5 + $0x120] sm:$0xff] %vm1614, %v5357
      %5435 = vst.msk [vmem:[#allocation5 + $0x130] sm:$0xff] %vm1614, %v5359
      %5436 = vst.msk [vmem:[#allocation5 + $0x140] sm:$0xff] %vm1614, %v5361
      %5437 = vst.msk [vmem:[#allocation5 + $0x150] sm:$0xff] %vm1614, %v5363
      %5438 = vst.msk [vmem:[#allocation5 + $0x160] sm:$0xff] %vm1614, %v5365
      %5439 = vst.msk [vmem:[#allocation5 + $0x170] sm:$0xff] %vm1614, %v5367
      %5440 = vst.msk [vmem:[#allocation5 + $0x180] sm:$0xff] %vm1614, %v5369
      %5441 = vst.msk [vmem:[#allocation5 + $0x190] sm:$0xff] %vm1614, %v5371
      %5442 = vst.msk [vmem:[#allocation5 + $0x1a0] sm:$0xff] %vm1614, %v5373
      %5443 = vst.msk [vmem:[#allocation5 + $0x1b0] sm:$0xff] %vm1614, %v5375
      %5444 = vst.msk [vmem:[#allocation5 + $0x1c0] sm:$0xff] %vm1614, %v5377
      %5445 = vst.msk [vmem:[#allocation5 + $0x1d0] sm:$0xff] %vm1614, %v5379
      %5446 = vst.msk [vmem:[#allocation5 + $0x1e0] sm:$0xff] %vm1614, %v5381
      %5447 = vst.msk [vmem:[#allocation5 + $0x1f0] sm:$0xff] %vm1614, %v5383
      %s5448 = scalar_lea.vmem [#allocation4], 48
      %v5449 = vld [vmem:[%s5448] sm:$0xff]
      %v5450 = vld [vmem:[%s5448 + $0x8] sm:$0xff]
      %v5451 = vld [vmem:[%s5448 + $0x18] sm:$0xff]
      %v5452 = vld [vmem:[%s5448 + $0x20] sm:$0xff]
      %v5453 = vld [vmem:[%s5448 + $0x30] sm:$0xff]
      %v5454 = vld [vmem:[%s5448 + $0x38] sm:$0xff]
      %v5455 = vld [vmem:[%s5448 + $0x48] sm:$0xff]
      %v5456 = vld [vmem:[%s5448 + $0x50] sm:$0xff]
      %v5457 = vld [vmem:[%s5448 + $0x60] sm:$0xff]
      %v5458 = vld [vmem:[%s5448 + $0x68] sm:$0xff]
      %v5459 = vld [vmem:[%s5448 + $0x78] sm:$0xff]
      %v5460 = vld [vmem:[%s5448 + $0x80] sm:$0xff]
      %v5461 = vld [vmem:[%s5448 + $0x90] sm:$0xff]
      %v5462 = vld [vmem:[%s5448 + $0x98] sm:$0xff]
      %v5463 = vld [vmem:[%s5448 + $0xa8] sm:$0xff]
      %v5464 = vld [vmem:[%s5448 + $0xb0] sm:$0xff]
      %v5465 = vld [vmem:[%s5448 + $0xc0] sm:$0xff]
      %v5466 = vld [vmem:[%s5448 + $0xc8] sm:$0xff]
      %v5467 = vld [vmem:[%s5448 + $0xd8] sm:$0xff]
      %v5468 = vld [vmem:[%s5448 + $0xe0] sm:$0xff]
      %v5469 = vld [vmem:[%s5448 + $0xf0] sm:$0xff]
      %v5470 = vld [vmem:[%s5448 + $0xf8] sm:$0xff]
      %v5471 = vld [vmem:[%s5448 + $0x108] sm:$0xff]
      %v5472 = vld [vmem:[%s5448 + $0x110] sm:$0xff]
      %v5473 = vld [vmem:[%s5448 + $0x120] sm:$0xff]
      %v5474 = vld [vmem:[%s5448 + $0x128] sm:$0xff]
      %v5475 = vld [vmem:[%s5448 + $0x138] sm:$0xff]
      %v5476 = vld [vmem:[%s5448 + $0x140] sm:$0xff]
      %v5477 = vld [vmem:[%s5448 + $0x150] sm:$0xff]
      %v5478 = vld [vmem:[%s5448 + $0x158] sm:$0xff]
      %v5479 = vld [vmem:[%s5448 + $0x168] sm:$0xff]
      %v5480 = vld [vmem:[%s5448 + $0x170] sm:$0xff]
      %5513 = vrot.lane.b32.xlu0 %v5449, 96
      %v5514 = vpop.permute.xlu0 %5513
      %5515 = vrot.lane.b32.xlu0 %v5450, 96
      %v5516 = vpop.permute.xlu0 %5515
      %5517 = vrot.lane.b32.xlu0 %v5451, 96
      %v5518 = vpop.permute.xlu0 %5517
      %5519 = vrot.lane.b32.xlu0 %v5452, 96
      %v5520 = vpop.permute.xlu0 %5519
      %5521 = vrot.lane.b32.xlu0 %v5453, 96
      %v5522 = vpop.permute.xlu0 %5521
      %5523 = vrot.lane.b32.xlu0 %v5454, 96
      %v5524 = vpop.permute.xlu0 %5523
      %5525 = vrot.lane.b32.xlu0 %v5455, 96
      %v5526 = vpop.permute.xlu0 %5525
      %5527 = vrot.lane.b32.xlu0 %v5456, 96
      %v5528 = vpop.permute.xlu0 %5527
      %5529 = vrot.lane.b32.xlu0 %v5457, 96
      %v5530 = vpop.permute.xlu0 %5529
      %5531 = vrot.lane.b32.xlu0 %v5458, 96
      %v5532 = vpop.permute.xlu0 %5531
      %5533 = vrot.lane.b32.xlu0 %v5459, 96
      %v5534 = vpop.permute.xlu0 %5533
      %5535 = vrot.lane.b32.xlu0 %v5460, 96
      %v5536 = vpop.permute.xlu0 %5535
      %5537 = vrot.lane.b32.xlu0 %v5461, 96
      %v5538 = vpop.permute.xlu0 %5537
      %5539 = vrot.lane.b32.xlu0 %v5462, 96
      %v5540 = vpop.permute.xlu0 %5539
      %5541 = vrot.lane.b32.xlu0 %v5463, 96
      %v5542 = vpop.permute.xlu0 %5541
      %5543 = vrot.lane.b32.xlu0 %v5464, 96
      %v5544 = vpop.permute.xlu0 %5543
      %5545 = vrot.lane.b32.xlu0 %v5465, 96
      %v5546 = vpop.permute.xlu0 %5545
      %5547 = vrot.lane.b32.xlu0 %v5466, 96
      %v5548 = vpop.permute.xlu0 %5547
      %5549 = vrot.lane.b32.xlu0 %v5467, 96
      %v5550 = vpop.permute.xlu0 %5549
      %5551 = vrot.lane.b32.xlu0 %v5468, 96
      %v5552 = vpop.permute.xlu0 %5551
      %5553 = vrot.lane.b32.xlu0 %v5469, 96
      %v5554 = vpop.permute.xlu0 %5553
      %5555 = vrot.lane.b32.xlu0 %v5470, 96
      %v5556 = vpop.permute.xlu0 %5555
      %5557 = vrot.lane.b32.xlu0 %v5471, 96
      %v5558 = vpop.permute.xlu0 %5557
      %5559 = vrot.lane.b32.xlu0 %v5472, 96
      %v5560 = vpop.permute.xlu0 %5559
      %5561 = vrot.lane.b32.xlu0 %v5473, 96
      %v5562 = vpop.permute.xlu0 %5561
      %5563 = vrot.lane.b32.xlu0 %v5474, 96
      %v5564 = vpop.permute.xlu0 %5563
      %5565 = vrot.lane.b32.xlu0 %v5475, 96
      %v5566 = vpop.permute.xlu0 %5565
      %5567 = vrot.lane.b32.xlu0 %v5476, 96
      %v5568 = vpop.permute.xlu0 %5567
      %5569 = vrot.lane.b32.xlu0 %v5477, 96
      %v5570 = vpop.permute.xlu0 %5569
      %5571 = vrot.lane.b32.xlu0 %v5478, 96
      %v5572 = vpop.permute.xlu0 %5571
      %5573 = vrot.lane.b32.xlu0 %v5479, 96
      %v5574 = vpop.permute.xlu0 %5573
      %5575 = vrot.lane.b32.xlu0 %v5480, 96
      %v5576 = vpop.permute.xlu0 %5575
      %5609 = vst.msk [vmem:[#allocation5] sm:$0xff] %vm1808, %v5514
      %5610 = vst.msk [vmem:[#allocation5 + $0x10] sm:$0xff] %vm1808, %v5516
      %5611 = vst.msk [vmem:[#allocation5 + $0x20] sm:$0xff] %vm1808, %v5518
      %5612 = vst.msk [vmem:[#allocation5 + $0x30] sm:$0xff] %vm1808, %v5520
      %5613 = vst.msk [vmem:[#allocation5 + $0x40] sm:$0xff] %vm1808, %v5522
      %5614 = vst.msk [vmem:[#allocation5 + $0x50] sm:$0xff] %vm1808, %v5524
      %5615 = vst.msk [vmem:[#allocation5 + $0x60] sm:$0xff] %vm1808, %v5526
      %5616 = vst.msk [vmem:[#allocation5 + $0x70] sm:$0xff] %vm1808, %v5528
      %5617 = vst.msk [vmem:[#allocation5 + $0x80] sm:$0xff] %vm1808, %v5530
      %5618 = vst.msk [vmem:[#allocation5 + $0x90] sm:$0xff] %vm1808, %v5532
      %5619 = vst.msk [vmem:[#allocation5 + $0xa0] sm:$0xff] %vm1808, %v5534
      %5620 = vst.msk [vmem:[#allocation5 + $0xb0] sm:$0xff] %vm1808, %v5536
      %5621 = vst.msk [vmem:[#allocation5 + $0xc0] sm:$0xff] %vm1808, %v5538
      %5622 = vst.msk [vmem:[#allocation5 + $0xd0] sm:$0xff] %vm1808, %v5540
      %5623 = vst.msk [vmem:[#allocation5 + $0xe0] sm:$0xff] %vm1808, %v5542
      %5624 = vst.msk [vmem:[#allocation5 + $0xf0] sm:$0xff] %vm1808, %v5544
      %5625 = vst.msk [vmem:[#allocation5 + $0x100] sm:$0xff] %vm1808, %v5546
      %5626 = vst.msk [vmem:[#allocation5 + $0x110] sm:$0xff] %vm1808, %v5548
      %5627 = vst.msk [vmem:[#allocation5 + $0x120] sm:$0xff] %vm1808, %v5550
      %5628 = vst.msk [vmem:[#allocation5 + $0x130] sm:$0xff] %vm1808, %v5552
      %5629 = vst.msk [vmem:[#allocation5 + $0x140] sm:$0xff] %vm1808, %v5554
      %5630 = vst.msk [vmem:[#allocation5 + $0x150] sm:$0xff] %vm1808, %v5556
      %5631 = vst.msk [vmem:[#allocation5 + $0x160] sm:$0xff] %vm1808, %v5558
      %5632 = vst.msk [vmem:[#allocation5 + $0x170] sm:$0xff] %vm1808, %v5560
      %5633 = vst.msk [vmem:[#allocation5 + $0x180] sm:$0xff] %vm1808, %v5562
      %5634 = vst.msk [vmem:[#allocation5 + $0x190] sm:$0xff] %vm1808, %v5564
      %5635 = vst.msk [vmem:[#allocation5 + $0x1a0] sm:$0xff] %vm1808, %v5566
      %5636 = vst.msk [vmem:[#allocation5 + $0x1b0] sm:$0xff] %vm1808, %v5568
      %5637 = vst.msk [vmem:[#allocation5 + $0x1c0] sm:$0xff] %vm1808, %v5570
      %5638 = vst.msk [vmem:[#allocation5 + $0x1d0] sm:$0xff] %vm1808, %v5572
      %5639 = vst.msk [vmem:[#allocation5 + $0x1e0] sm:$0xff] %vm1808, %v5574
      %5640 = vst.msk [vmem:[#allocation5 + $0x1f0] sm:$0xff] %vm1808, %v5576
      %v5641 = vld [vmem:[%s5448 + $0x1] sm:$0xff]
      %v5642 = vld [vmem:[%s5448 + $0x9] sm:$0xff]
      %v5643 = vld [vmem:[%s5448 + $0x19] sm:$0xff]
      %v5644 = vld [vmem:[%s5448 + $0x21] sm:$0xff]
      %v5645 = vld [vmem:[%s5448 + $0x31] sm:$0xff]
      %v5646 = vld [vmem:[%s5448 + $0x39] sm:$0xff]
      %v5647 = vld [vmem:[%s5448 + $0x49] sm:$0xff]
      %v5648 = vld [vmem:[%s5448 + $0x51] sm:$0xff]
      %v5649 = vld [vmem:[%s5448 + $0x61] sm:$0xff]
      %v5650 = vld [vmem:[%s5448 + $0x69] sm:$0xff]
      %v5651 = vld [vmem:[%s5448 + $0x79] sm:$0xff]
      %v5652 = vld [vmem:[%s5448 + $0x81] sm:$0xff]
      %v5653 = vld [vmem:[%s5448 + $0x91] sm:$0xff]
      %v5654 = vld [vmem:[%s5448 + $0x99] sm:$0xff]
      %v5655 = vld [vmem:[%s5448 + $0xa9] sm:$0xff]
      %v5656 = vld [vmem:[%s5448 + $0xb1] sm:$0xff]
      %v5657 = vld [vmem:[%s5448 + $0xc1] sm:$0xff]
      %v5658 = vld [vmem:[%s5448 + $0xc9] sm:$0xff]
      %v5659 = vld [vmem:[%s5448 + $0xd9] sm:$0xff]
      %v5660 = vld [vmem:[%s5448 + $0xe1] sm:$0xff]
      %v5661 = vld [vmem:[%s5448 + $0xf1] sm:$0xff]
      %v5662 = vld [vmem:[%s5448 + $0xf9] sm:$0xff]
      %v5663 = vld [vmem:[%s5448 + $0x109] sm:$0xff]
      %v5664 = vld [vmem:[%s5448 + $0x111] sm:$0xff]
      %v5665 = vld [vmem:[%s5448 + $0x121] sm:$0xff]
      %v5666 = vld [vmem:[%s5448 + $0x129] sm:$0xff]
      %v5667 = vld [vmem:[%s5448 + $0x139] sm:$0xff]
      %v5668 = vld [vmem:[%s5448 + $0x141] sm:$0xff]
      %v5669 = vld [vmem:[%s5448 + $0x151] sm:$0xff]
      %v5670 = vld [vmem:[%s5448 + $0x159] sm:$0xff]
      %v5671 = vld [vmem:[%s5448 + $0x169] sm:$0xff]
      %v5672 = vld [vmem:[%s5448 + $0x171] sm:$0xff]
      %5705 = vrot.lane.b32.xlu0 %v5641, 112
      %v5706 = vpop.permute.xlu0 %5705
      %5707 = vrot.lane.b32.xlu0 %v5642, 112
      %v5708 = vpop.permute.xlu0 %5707
      %5709 = vrot.lane.b32.xlu0 %v5643, 112
      %v5710 = vpop.permute.xlu0 %5709
      %5711 = vrot.lane.b32.xlu0 %v5644, 112
      %v5712 = vpop.permute.xlu0 %5711
      %5713 = vrot.lane.b32.xlu0 %v5645, 112
      %v5714 = vpop.permute.xlu0 %5713
      %5715 = vrot.lane.b32.xlu0 %v5646, 112
      %v5716 = vpop.permute.xlu0 %5715
      %5717 = vrot.lane.b32.xlu0 %v5647, 112
      %v5718 = vpop.permute.xlu0 %5717
      %5719 = vrot.lane.b32.xlu0 %v5648, 112
      %v5720 = vpop.permute.xlu0 %5719
      %5721 = vrot.lane.b32.xlu0 %v5649, 112
      %v5722 = vpop.permute.xlu0 %5721
      %5723 = vrot.lane.b32.xlu0 %v5650, 112
      %v5724 = vpop.permute.xlu0 %5723
      %5725 = vrot.lane.b32.xlu0 %v5651, 112
      %v5726 = vpop.permute.xlu0 %5725
      %5727 = vrot.lane.b32.xlu0 %v5652, 112
      %v5728 = vpop.permute.xlu0 %5727
      %5729 = vrot.lane.b32.xlu0 %v5653, 112
      %v5730 = vpop.permute.xlu0 %5729
      %5731 = vrot.lane.b32.xlu0 %v5654, 112
      %v5732 = vpop.permute.xlu0 %5731
      %5733 = vrot.lane.b32.xlu0 %v5655, 112
      %v5734 = vpop.permute.xlu0 %5733
      %5735 = vrot.lane.b32.xlu0 %v5656, 112
      %v5736 = vpop.permute.xlu0 %5735
      %5737 = vrot.lane.b32.xlu0 %v5657, 112
      %v5738 = vpop.permute.xlu0 %5737
      %5739 = vrot.lane.b32.xlu0 %v5658, 112
      %v5740 = vpop.permute.xlu0 %5739
      %5741 = vrot.lane.b32.xlu0 %v5659, 112
      %v5742 = vpop.permute.xlu0 %5741
      %5743 = vrot.lane.b32.xlu0 %v5660, 112
      %v5744 = vpop.permute.xlu0 %5743
      %5745 = vrot.lane.b32.xlu0 %v5661, 112
      %v5746 = vpop.permute.xlu0 %5745
      %5747 = vrot.lane.b32.xlu0 %v5662, 112
      %v5748 = vpop.permute.xlu0 %5747
      %5749 = vrot.lane.b32.xlu0 %v5663, 112
      %v5750 = vpop.permute.xlu0 %5749
      %5751 = vrot.lane.b32.xlu0 %v5664, 112
      %v5752 = vpop.permute.xlu0 %5751
      %5753 = vrot.lane.b32.xlu0 %v5665, 112
      %v5754 = vpop.permute.xlu0 %5753
      %5755 = vrot.lane.b32.xlu0 %v5666, 112
      %v5756 = vpop.permute.xlu0 %5755
      %5757 = vrot.lane.b32.xlu0 %v5667, 112
      %v5758 = vpop.permute.xlu0 %5757
      %5759 = vrot.lane.b32.xlu0 %v5668, 112
      %v5760 = vpop.permute.xlu0 %5759
      %5761 = vrot.lane.b32.xlu0 %v5669, 112
      %v5762 = vpop.permute.xlu0 %5761
      %5763 = vrot.lane.b32.xlu0 %v5670, 112
      %v5764 = vpop.permute.xlu0 %5763
      %5765 = vrot.lane.b32.xlu0 %v5671, 112
      %v5766 = vpop.permute.xlu0 %5765
      %5767 = vrot.lane.b32.xlu0 %v5672, 112
      %v5768 = vpop.permute.xlu0 %5767
      %5801 = vst.msk [vmem:[#allocation5] sm:$0xff] %vm2001, %v5706
      %5802 = vst.msk [vmem:[#allocation5 + $0x10] sm:$0xff] %vm2001, %v5708
      %5803 = vst.msk [vmem:[#allocation5 + $0x20] sm:$0xff] %vm2001, %v5710
      %5804 = vst.msk [vmem:[#allocation5 + $0x30] sm:$0xff] %vm2001, %v5712
      %5805 = vst.msk [vmem:[#allocation5 + $0x40] sm:$0xff] %vm2001, %v5714
      %5806 = vst.msk [vmem:[#allocation5 + $0x50] sm:$0xff] %vm2001, %v5716
      %5807 = vst.msk [vmem:[#allocation5 + $0x60] sm:$0xff] %vm2001, %v5718
      %5808 = vst.msk [vmem:[#allocation5 + $0x70] sm:$0xff] %vm2001, %v5720
      %5809 = vst.msk [vmem:[#allocation5 + $0x80] sm:$0xff] %vm2001, %v5722
      %5810 = vst.msk [vmem:[#allocation5 + $0x90] sm:$0xff] %vm2001, %v5724
      %5811 = vst.msk [vmem:[#allocation5 + $0xa0] sm:$0xff] %vm2001, %v5726
      %5812 = vst.msk [vmem:[#allocation5 + $0xb0] sm:$0xff] %vm2001, %v5728
      %5813 = vst.msk [vmem:[#allocation5 + $0xc0] sm:$0xff] %vm2001, %v5730
      %5814 = vst.msk [vmem:[#allocation5 + $0xd0] sm:$0xff] %vm2001, %v5732
      %5815 = vst.msk [vmem:[#allocation5 + $0xe0] sm:$0xff] %vm2001, %v5734
      %5816 = vst.msk [vmem:[#allocation5 + $0xf0] sm:$0xff] %vm2001, %v5736
      %5817 = vst.msk [vmem:[#allocation5 + $0x100] sm:$0xff] %vm2001, %v5738
      %5818 = vst.msk [vmem:[#allocation5 + $0x110] sm:$0xff] %vm2001, %v5740
      %5819 = vst.msk [vmem:[#allocation5 + $0x120] sm:$0xff] %vm2001, %v5742
      %5820 = vst.msk [vmem:[#allocation5 + $0x130] sm:$0xff] %vm2001, %v5744
      %5821 = vst.msk [vmem:[#allocation5 + $0x140] sm:$0xff] %vm2001, %v5746
      %5822 = vst.msk [vmem:[#allocation5 + $0x150] sm:$0xff] %vm2001, %v5748
      %5823 = vst.msk [vmem:[#allocation5 + $0x160] sm:$0xff] %vm2001, %v5750
      %5824 = vst.msk [vmem:[#allocation5 + $0x170] sm:$0xff] %vm2001, %v5752
      %5825 = vst.msk [vmem:[#allocation5 + $0x180] sm:$0xff] %vm2001, %v5754
      %5826 = vst.msk [vmem:[#allocation5 + $0x190] sm:$0xff] %vm2001, %v5756
      %5827 = vst.msk [vmem:[#allocation5 + $0x1a0] sm:$0xff] %vm2001, %v5758
      %5828 = vst.msk [vmem:[#allocation5 + $0x1b0] sm:$0xff] %vm2001, %v5760
      %5829 = vst.msk [vmem:[#allocation5 + $0x1c0] sm:$0xff] %vm2001, %v5762
      %5830 = vst.msk [vmem:[#allocation5 + $0x1d0] sm:$0xff] %vm2001, %v5764
      %5831 = vst.msk [vmem:[#allocation5 + $0x1e0] sm:$0xff] %vm2001, %v5766
      %5832 = vst.msk [vmem:[#allocation5 + $0x1f0] sm:$0xff] %vm2001, %v5768
      %v5833 = vld [vmem:[%s5448 + $0x2] sm:$0xff]
      %v5834 = vld [vmem:[%s5448 + $0xa] sm:$0xff]
      %v5835 = vld [vmem:[%s5448 + $0x1a] sm:$0xff]
      %v5836 = vld [vmem:[%s5448 + $0x22] sm:$0xff]
      %v5837 = vld [vmem:[%s5448 + $0x32] sm:$0xff]
      %v5838 = vld [vmem:[%s5448 + $0x3a] sm:$0xff]
      %v5839 = vld [vmem:[%s5448 + $0x4a] sm:$0xff]
      %v5840 = vld [vmem:[%s5448 + $0x52] sm:$0xff]
      %v5841 = vld [vmem:[%s5448 + $0x62] sm:$0xff]
      %v5842 = vld [vmem:[%s5448 + $0x6a] sm:$0xff]
      %v5843 = vld [vmem:[%s5448 + $0x7a] sm:$0xff]
      %v5844 = vld [vmem:[%s5448 + $0x82] sm:$0xff]
      %v5845 = vld [vmem:[%s5448 + $0x92] sm:$0xff]
      %v5846 = vld [vmem:[%s5448 + $0x9a] sm:$0xff]
      %v5847 = vld [vmem:[%s5448 + $0xaa] sm:$0xff]
      %v5848 = vld [vmem:[%s5448 + $0xb2] sm:$0xff]
      %v5849 = vld [vmem:[%s5448 + $0xc2] sm:$0xff]
      %v5850 = vld [vmem:[%s5448 + $0xca] sm:$0xff]
      %v5851 = vld [vmem:[%s5448 + $0xda] sm:$0xff]
      %v5852 = vld [vmem:[%s5448 + $0xe2] sm:$0xff]
      %v5853 = vld [vmem:[%s5448 + $0xf2] sm:$0xff]
      %v5854 = vld [vmem:[%s5448 + $0xfa] sm:$0xff]
      %v5855 = vld [vmem:[%s5448 + $0x10a] sm:$0xff]
      %v5856 = vld [vmem:[%s5448 + $0x112] sm:$0xff]
      %v5857 = vld [vmem:[%s5448 + $0x122] sm:$0xff]
      %v5858 = vld [vmem:[%s5448 + $0x12a] sm:$0xff]
      %v5859 = vld [vmem:[%s5448 + $0x13a] sm:$0xff]
      %v5860 = vld [vmem:[%s5448 + $0x142] sm:$0xff]
      %v5861 = vld [vmem:[%s5448 + $0x152] sm:$0xff]
      %v5862 = vld [vmem:[%s5448 + $0x15a] sm:$0xff]
      %v5863 = vld [vmem:[%s5448 + $0x16a] sm:$0xff]
      %v5864 = vld [vmem:[%s5448 + $0x172] sm:$0xff]
      %5865 = vst.msk [vmem:[#allocation5 + $0x8] sm:$0xff] %vm353, %v5833
      %5866 = vst.msk [vmem:[#allocation5 + $0x18] sm:$0xff] %vm353, %v5834
      %5867 = vst.msk [vmem:[#allocation5 + $0x28] sm:$0xff] %vm353, %v5835
      %5868 = vst.msk [vmem:[#allocation5 + $0x38] sm:$0xff] %vm353, %v5836
      %5869 = vst.msk [vmem:[#allocation5 + $0x48] sm:$0xff] %vm353, %v5837
      %5870 = vst.msk [vmem:[#allocation5 + $0x58] sm:$0xff] %vm353, %v5838
      %5871 = vst.msk [vmem:[#allocation5 + $0x68] sm:$0xff] %vm353, %v5839
      %5872 = vst.msk [vmem:[#allocation5 + $0x78] sm:$0xff] %vm353, %v5840
      %5873 = vst.msk [vmem:[#allocation5 + $0x88] sm:$0xff] %vm353, %v5841
      %5874 = vst.msk [vmem:[#allocation5 + $0x98] sm:$0xff] %vm353, %v5842
      %5875 = vst.msk [vmem:[#allocation5 + $0xa8] sm:$0xff] %vm353, %v5843
      %5876 = vst.msk [vmem:[#allocation5 + $0xb8] sm:$0xff] %vm353, %v5844
      %5877 = vst.msk [vmem:[#allocation5 + $0xc8] sm:$0xff] %vm353, %v5845
      %5878 = vst.msk [vmem:[#allocation5 + $0xd8] sm:$0xff] %vm353, %v5846
      %5879 = vst.msk [vmem:[#allocation5 + $0xe8] sm:$0xff] %vm353, %v5847
      %5880 = vst.msk [vmem:[#allocation5 + $0xf8] sm:$0xff] %vm353, %v5848
      %5881 = vst.msk [vmem:[#allocation5 + $0x108] sm:$0xff] %vm353, %v5849
      %5882 = vst.msk [vmem:[#allocation5 + $0x118] sm:$0xff] %vm353, %v5850
      %5883 = vst.msk [vmem:[#allocation5 + $0x128] sm:$0xff] %vm353, %v5851
      %5884 = vst.msk [vmem:[#allocation5 + $0x138] sm:$0xff] %vm353, %v5852
      %5885 = vst.msk [vmem:[#allocation5 + $0x148] sm:$0xff] %vm353, %v5853
      %5886 = vst.msk [vmem:[#allocation5 + $0x158] sm:$0xff] %vm353, %v5854
      %5887 = vst.msk [vmem:[#allocation5 + $0x168] sm:$0xff] %vm353, %v5855
      %5888 = vst.msk [vmem:[#allocation5 + $0x178] sm:$0xff] %vm353, %v5856
      %5889 = vst.msk [vmem:[#allocation5 + $0x188] sm:$0xff] %vm353, %v5857
      %5890 = vst.msk [vmem:[#allocation5 + $0x198] sm:$0xff] %vm353, %v5858
      %5891 = vst.msk [vmem:[#allocation5 + $0x1a8] sm:$0xff] %vm353, %v5859
      %5892 = vst.msk [vmem:[#allocation5 + $0x1b8] sm:$0xff] %vm353, %v5860
      %5893 = vst.msk [vmem:[#allocation5 + $0x1c8] sm:$0xff] %vm353, %v5861
      %5894 = vst.msk [vmem:[#allocation5 + $0x1d8] sm:$0xff] %vm353, %v5862
      %5895 = vst.msk [vmem:[#allocation5 + $0x1e8] sm:$0xff] %vm353, %v5863
      %5896 = vst.msk [vmem:[#allocation5 + $0x1f8] sm:$0xff] %vm353, %v5864
      %v5897 = vld [vmem:[#allocation5] sm:$0xff]
      %v5898 = vld [vmem:[#allocation5 + $0x8] sm:$0xff]
      %v5899 = vld [vmem:[#allocation5 + $0x10] sm:$0xff]
      %v5900 = vld [vmem:[#allocation5 + $0x18] sm:$0xff]
      %v5901 = vld [vmem:[#allocation5 + $0x20] sm:$0xff]
      %v5902 = vld [vmem:[#allocation5 + $0x28] sm:$0xff]
      %v5903 = vld [vmem:[#allocation5 + $0x30] sm:$0xff]
      %v5904 = vld [vmem:[#allocation5 + $0x38] sm:$0xff]
      %v5905 = vld [vmem:[#allocation5 + $0x40] sm:$0xff]
      %v5906 = vld [vmem:[#allocation5 + $0x48] sm:$0xff]
      %v5907 = vld [vmem:[#allocation5 + $0x50] sm:$0xff]
      %v5908 = vld [vmem:[#allocation5 + $0x58] sm:$0xff]
      %v5909 = vld [vmem:[#allocation5 + $0x60] sm:$0xff]
      %v5910 = vld [vmem:[#allocation5 + $0x68] sm:$0xff]
      %v5911 = vld [vmem:[#allocation5 + $0x70] sm:$0xff]
      %v5912 = vld [vmem:[#allocation5 + $0x78] sm:$0xff]
      %v5913 = vld [vmem:[#allocation5 + $0x80] sm:$0xff]
      %v5914 = vld [vmem:[#allocation5 + $0x88] sm:$0xff]
      %v5915 = vld [vmem:[#allocation5 + $0x90] sm:$0xff]
      %v5916 = vld [vmem:[#allocation5 + $0x98] sm:$0xff]
      %v5917 = vld [vmem:[#allocation5 + $0xa0] sm:$0xff]
      %v5918 = vld [vmem:[#allocation5 + $0xa8] sm:$0xff]
      %v5919 = vld [vmem:[#allocation5 + $0xb0] sm:$0xff]
      %v5920 = vld [vmem:[#allocation5 + $0xb8] sm:$0xff]
      %v5921 = vld [vmem:[#allocation5 + $0xc0] sm:$0xff]
      %v5922 = vld [vmem:[#allocation5 + $0xc8] sm:$0xff]
      %v5923 = vld [vmem:[#allocation5 + $0xd0] sm:$0xff]
      %v5924 = vld [vmem:[#allocation5 + $0xd8] sm:$0xff]
      %v5925 = vld [vmem:[#allocation5 + $0xe0] sm:$0xff]
      %v5926 = vld [vmem:[#allocation5 + $0xe8] sm:$0xff]
      %v5927 = vld [vmem:[#allocation5 + $0xf0] sm:$0xff]
      %v5928 = vld [vmem:[#allocation5 + $0xf8] sm:$0xff]
      %v5929 = vld [vmem:[#allocation5 + $0x100] sm:$0xff]
      %v5930 = vld [vmem:[#allocation5 + $0x108] sm:$0xff]
      %v5931 = vld [vmem:[#allocation5 + $0x110] sm:$0xff]
      %v5932 = vld [vmem:[#allocation5 + $0x118] sm:$0xff]
      %v5933 = vld [vmem:[#allocation5 + $0x120] sm:$0xff]
      %v5934 = vld [vmem:[#allocation5 + $0x128] sm:$0xff]
      %v5935 = vld [vmem:[#allocation5 + $0x130] sm:$0xff]
      %v5936 = vld [vmem:[#allocation5 + $0x138] sm:$0xff]
      %v5937 = vld [vmem:[#allocation5 + $0x140] sm:$0xff]
      %v5938 = vld [vmem:[#allocation5 + $0x148] sm:$0xff]
      %v5939 = vld [vmem:[#allocation5 + $0x150] sm:$0xff]
      %v5940 = vld [vmem:[#allocation5 + $0x158] sm:$0xff]
      %v5941 = vld [vmem:[#allocation5 + $0x160] sm:$0xff]
      %v5942 = vld [vmem:[#allocation5 + $0x168] sm:$0xff]
      %v5943 = vld [vmem:[#allocation5 + $0x170] sm:$0xff]
      %v5944 = vld [vmem:[#allocation5 + $0x178] sm:$0xff]
      %v5945 = vld [vmem:[#allocation5 + $0x180] sm:$0xff]
      %v5946 = vld [vmem:[#allocation5 + $0x188] sm:$0xff]
      %v5947 = vld [vmem:[#allocation5 + $0x190] sm:$0xff]
      %v5948 = vld [vmem:[#allocation5 + $0x198] sm:$0xff]
      %v5949 = vld [vmem:[#allocation5 + $0x1a0] sm:$0xff]
      %v5950 = vld [vmem:[#allocation5 + $0x1a8] sm:$0xff]
      %v5951 = vld [vmem:[#allocation5 + $0x1b0] sm:$0xff]
      %v5952 = vld [vmem:[#allocation5 + $0x1b8] sm:$0xff]
      %v5953 = vld [vmem:[#allocation5 + $0x1c0] sm:$0xff]
      %v5954 = vld [vmem:[#allocation5 + $0x1c8] sm:$0xff]
      %v5955 = vld [vmem:[#allocation5 + $0x1d0] sm:$0xff]
      %v5956 = vld [vmem:[#allocation5 + $0x1d8] sm:$0xff]
      %v5957 = vld [vmem:[#allocation5 + $0x1e0] sm:$0xff]
      %v5958 = vld [vmem:[#allocation5 + $0x1e8] sm:$0xff]
      %v5959 = vld [vmem:[#allocation5 + $0x1f0] sm:$0xff]
      %v5960 = vld [vmem:[#allocation5 + $0x1f8] sm:$0xff]
      %v5961 = vld [vmem:[%s5] sm:$0xff]
      %v5962 = vld [vmem:[%s5 + $0x8] sm:$0xff]
      %v5963 = vld [vmem:[%s5 + $0x10] sm:$0xff]
      %v5964 = vld [vmem:[%s5 + $0x18] sm:$0xff]
      %v5965 = vld [vmem:[%s5 + $0x20] sm:$0xff]
      %v5966 = vld [vmem:[%s5 + $0x28] sm:$0xff]
      %v5967 = vld [vmem:[%s5 + $0x30] sm:$0xff]
      %v5968 = vld [vmem:[%s5 + $0x38] sm:$0xff]
      %v5969 = vld [vmem:[%s5 + $0x40] sm:$0xff]
      %v5970 = vld [vmem:[%s5 + $0x48] sm:$0xff]
      %v5971 = vld [vmem:[%s5 + $0x50] sm:$0xff]
      %v5972 = vld [vmem:[%s5 + $0x58] sm:$0xff]
      %v5973 = vld [vmem:[%s5 + $0x60] sm:$0xff]
      %v5974 = vld [vmem:[%s5 + $0x68] sm:$0xff]
      %v5975 = vld [vmem:[%s5 + $0x70] sm:$0xff]
      %v5976 = vld [vmem:[%s5 + $0x78] sm:$0xff]
      %v5977 = vld [vmem:[%s5 + $0x80] sm:$0xff]
      %v5978 = vld [vmem:[%s5 + $0x88] sm:$0xff]
      %v5980 = vsel %vm353, %v5898, 0
      %v5983 = vsel %vm353, %v5900, 0
      %v5986 = vsel %vm353, %v5902, 0
      %v5989 = vsel %vm353, %v5904, 0
      %v5992 = vsel %vm353, %v5906, 0
      %v5995 = vsel %vm353, %v5908, 0
      %v5998 = vsel %vm353, %v5910, 0
      %v6001 = vsel %vm353, %v5912, 0
      %v6004 = vsel %vm353, %v5914, 0
      %v6007 = vsel %vm353, %v5916, 0
      %v6010 = vsel %vm353, %v5918, 0
      %v6013 = vsel %vm353, %v5920, 0
      %v6016 = vsel %vm353, %v5922, 0
      %v6019 = vsel %vm353, %v5924, 0
      %v6022 = vsel %vm353, %v5926, 0
      %v6025 = vsel %vm353, %v5928, 0
      %v6028 = vsel %vm353, %v5930, 0
      %v6031 = vsel %vm353, %v5932, 0
      %v6034 = vsel %vm353, %v5934, 0
      %v6037 = vsel %vm353, %v5936, 0
      %v6040 = vsel %vm353, %v5938, 0
      %v6043 = vsel %vm353, %v5940, 0
      %v6046 = vsel %vm353, %v5942, 0
      %v6049 = vsel %vm353, %v5944, 0
      %v6052 = vsel %vm353, %v5946, 0
      %v6055 = vsel %vm353, %v5948, 0
      %v6058 = vsel %vm353, %v5950, 0
      %v6061 = vsel %vm353, %v5952, 0
      %v6064 = vsel %vm353, %v5954, 0
      %v6067 = vsel %vm353, %v5956, 0
      %v6070 = vsel %vm353, %v5958, 0
      %v6073 = vsel %vm353, %v5960, 0
      %6075 = vmatprep.subr.mxu0 0.0
      %6076 = vmatpush1.msra.mxu0 %v5976
      %6077 = vmatprep.subr.mxu0 0.0
      %6078 = vmatpush1.msra.mxu0 %v5975
      %6079 = vmatprep.subr.mxu0 0.0
      %6080 = vmatpush1.msra.mxu0 %v5974
      %6081 = vmatprep.subr.mxu0 0.0
      %6082 = vmatpush1.msra.mxu0 %v5973
      %6083 = vmatprep.subr.mxu0 0.0
      %6084 = vmatpush1.msra.mxu0 %v5972
      %6085 = vmatprep.subr.mxu0 0.0
      %6086 = vmatpush1.msra.mxu0 %v5971
      %6087 = vmatprep.subr.mxu0 0.0
      %6088 = vmatpush1.msra.mxu0 %v5970
      %6089 = vmatprep.subr.mxu0 0.0
      %6090 = vmatpush1.msra.mxu0 %v5969
      %6091 = vmatprep.subr.mxu0 0.0
      %6092 = vmatpush1.msra.mxu0 %v5968
      %6093 = vmatprep.subr.mxu0 0.0
      %6094 = vmatpush1.msra.mxu0 %v5967
      %6095 = vmatprep.subr.mxu0 0.0
      %6096 = vmatpush1.msra.mxu0 %v5966
      %6097 = vmatprep.subr.mxu0 0.0
      %6098 = vmatpush1.msra.mxu0 %v5965
      %6099 = vmatprep.subr.mxu0 0.0
      %6100 = vmatpush1.msra.mxu0 %v5964
      %6101 = vmatprep.subr.mxu0 0.0
      %6102 = vmatpush1.msra.mxu0 %v5963
      %6103 = vmatprep.subr.mxu0 0.0
      %6104 = vmatpush1.msra.mxu0 %v5962
      %6105 = vmatprep.subr.mxu0 0.0
      %6106 = vmatpush1.msra.mxu0 %v5961
      %6107 = vmatprep.subr.mxu0 0.0
      %6108 = vmatpush2.msra.mxu0 0.0
      %6109 = vmatprep.subr.mxu0 0.0
      %6110 = vmatpush2.msra.mxu0 0.0
      %6111 = vmatprep.subr.mxu0 0.0
      %6112 = vmatpush2.msra.mxu0 0.0
      %6113 = vmatprep.subr.mxu0 0.0
      %6114 = vmatpush2.msra.mxu0 0.0
      %6115 = vmatprep.subr.mxu0 0.0
      %6116 = vmatpush2.msra.mxu0 0.0
      %6117 = vmatprep.subr.mxu0 0.0
      %6118 = vmatpush2.msra.mxu0 0.0
      %6119 = vmatprep.subr.mxu0 0.0
      %6120 = vmatpush2.msra.mxu0 0.0
      %6121 = vmatprep.subr.mxu0 0.0
      %6122 = vmatpush2.msra.mxu0 0.0
      %6123 = vmatprep.subr.mxu0 0.0
      %6124 = vmatpush2.msra.mxu0 0.0
      %6125 = vmatprep.subr.mxu0 0.0
      %6126 = vmatpush2.msra.mxu0 0.0
      %6127 = vmatprep.subr.mxu0 0.0
      %6128 = vmatpush2.msra.mxu0 0.0
      %6129 = vmatprep.subr.mxu0 0.0
      %6130 = vmatpush2.msra.mxu0 0.0
      %6131 = vmatprep.subr.mxu0 0.0
      %6132 = vmatpush2.msra.mxu0 0.0
      %6133 = vmatprep.subr.mxu0 0.0
      %6134 = vmatpush2.msra.mxu0 0.0
      %6135 = vmatprep.subr.mxu0 0.0
      %6136 = vmatpush2.msra.mxu0 %v5978
      %6137 = vmatprep.subr.mxu0 0.0
      %6138 = vmatpush2.msra.mxu0 %v5977
      %6139 = vmatprep.mubr.f32.mxu0 %v5980
      %6140 = vmatmul.mubr.f32.gmra.mxu0 %v5897
      %v6141 = vpop.f32.mrf.mxu0
      %v6142 = vadd.f32 0.0, %v6141
      %v6143 = vpop.f32.mrf.mxu0
      %6144 = vmatprep.mubr.f32.mxu0 %v5983
      %6145 = vmatmul.mubr.f32.gmra.mxu0 %v5899
      %v6146 = vpop.f32.mrf.mxu0
      %v6147 = vadd.f32 0.0, %v6146
      %v6148 = vpop.f32.mrf.mxu0
      %6149 = vmatprep.mubr.f32.mxu0 %v5986
      %6150 = vmatmul.mubr.f32.gmra.mxu0 %v5901
      %v6151 = vpop.f32.mrf.mxu0
      %v6152 = vadd.f32 0.0, %v6151
      %v6153 = vpop.f32.mrf.mxu0
      %6154 = vmatprep.mubr.f32.mxu0 %v5989
      %6155 = vmatmul.mubr.f32.gmra.mxu0 %v5903
      %v6156 = vpop.f32.mrf.mxu0
      %v6157 = vadd.f32 0.0, %v6156
      %v6158 = vpop.f32.mrf.mxu0
      %6159 = vmatprep.mubr.f32.mxu0 %v5992
      %6160 = vmatmul.mubr.f32.gmra.mxu0 %v5905
      %v6161 = vpop.f32.mrf.mxu0
      %v6162 = vadd.f32 0.0, %v6161
      %v6163 = vpop.f32.mrf.mxu0
      %6164 = vmatprep.mubr.f32.mxu0 %v5995
      %6165 = vmatmul.mubr.f32.gmra.mxu0 %v5907
      %v6166 = vpop.f32.mrf.mxu0
      %v6167 = vadd.f32 0.0, %v6166
      %v6168 = vpop.f32.mrf.mxu0
      %6169 = vmatprep.mubr.f32.mxu0 %v5998
      %6170 = vmatmul.mubr.f32.gmra.mxu0 %v5909
      %v6171 = vpop.f32.mrf.mxu0
      %v6172 = vadd.f32 0.0, %v6171
      %v6173 = vpop.f32.mrf.mxu0
      %6174 = vmatprep.mubr.f32.mxu0 %v6001
      %6175 = vmatmul.mubr.f32.gmra.mxu0 %v5911
      %v6176 = vpop.f32.mrf.mxu0
      %v6177 = vadd.f32 0.0, %v6176
      %v6178 = vpop.f32.mrf.mxu0
      %6179 = vmatprep.mubr.f32.mxu0 %v6004
      %6180 = vmatmul.mubr.f32.gmra.mxu0 %v5913
      %v6181 = vpop.f32.mrf.mxu0
      %v6182 = vadd.f32 0.0, %v6181
      %v6183 = vpop.f32.mrf.mxu0
      %6184 = vmatprep.mubr.f32.mxu0 %v6007
      %6185 = vmatmul.mubr.f32.gmra.mxu0 %v5915
      %v6186 = vpop.f32.mrf.mxu0
      %v6187 = vadd.f32 0.0, %v6186
      %v6188 = vpop.f32.mrf.mxu0
      %6189 = vmatprep.mubr.f32.mxu0 %v6010
      %6190 = vmatmul.mubr.f32.gmra.mxu0 %v5917
      %v6191 = vpop.f32.mrf.mxu0
      %v6192 = vadd.f32 0.0, %v6191
      %v6193 = vpop.f32.mrf.mxu0
      %6194 = vmatprep.mubr.f32.mxu0 %v6013
      %6195 = vmatmul.mubr.f32.gmra.mxu0 %v5919
      %v6196 = vpop.f32.mrf.mxu0
      %v6197 = vadd.f32 0.0, %v6196
      %v6198 = vpop.f32.mrf.mxu0
      %6199 = vmatprep.mubr.f32.mxu0 %v6016
      %6200 = vmatmul.mubr.f32.gmra.mxu0 %v5921
      %v6201 = vpop.f32.mrf.mxu0
      %v6202 = vadd.f32 0.0, %v6201
      %v6203 = vpop.f32.mrf.mxu0
      %6204 = vmatprep.mubr.f32.mxu0 %v6019
      %6205 = vmatmul.mubr.f32.gmra.mxu0 %v5923
      %v6206 = vpop.f32.mrf.mxu0
      %v6207 = vadd.f32 0.0, %v6206
      %v6208 = vpop.f32.mrf.mxu0
      %6209 = vmatprep.mubr.f32.mxu0 %v6022
      %6210 = vmatmul.mubr.f32.gmra.mxu0 %v5925
      %v6211 = vpop.f32.mrf.mxu0
      %v6212 = vadd.f32 0.0, %v6211
      %v6213 = vpop.f32.mrf.mxu0
      %6214 = vmatprep.mubr.f32.mxu0 %v6025
      %6215 = vmatmul.mubr.f32.gmra.mxu0 %v5927
      %v6216 = vpop.f32.mrf.mxu0
      %v6217 = vadd.f32 0.0, %v6216
      %v6218 = vpop.f32.mrf.mxu0
      %6219 = vmatprep.mubr.f32.mxu0 %v6028
      %6220 = vmatmul.mubr.f32.gmra.mxu0 %v5929
      %v6221 = vpop.f32.mrf.mxu0
      %v6222 = vadd.f32 0.0, %v6221
      %v6223 = vpop.f32.mrf.mxu0
      %6224 = vmatprep.mubr.f32.mxu0 %v6031
      %6225 = vmatmul.mubr.f32.gmra.mxu0 %v5931
      %v6226 = vpop.f32.mrf.mxu0
      %v6227 = vadd.f32 0.0, %v6226
      %v6228 = vpop.f32.mrf.mxu0
      %6229 = vmatprep.mubr.f32.mxu0 %v6034
      %6230 = vmatmul.mubr.f32.gmra.mxu0 %v5933
      %v6231 = vpop.f32.mrf.mxu0
      %v6232 = vadd.f32 0.0, %v6231
      %v6233 = vpop.f32.mrf.mxu0
      %6234 = vmatprep.mubr.f32.mxu0 %v6037
      %6235 = vmatmul.mubr.f32.gmra.mxu0 %v5935
      %v6236 = vpop.f32.mrf.mxu0
      %v6237 = vadd.f32 0.0, %v6236
      %v6238 = vpop.f32.mrf.mxu0
      %6239 = vmatprep.mubr.f32.mxu0 %v6040
      %6240 = vmatmul.mubr.f32.gmra.mxu0 %v5937
      %v6241 = vpop.f32.mrf.mxu0
      %v6242 = vadd.f32 0.0, %v6241
      %v6243 = vpop.f32.mrf.mxu0
      %6244 = vmatprep.mubr.f32.mxu0 %v6043
      %6245 = vmatmul.mubr.f32.gmra.mxu0 %v5939
      %v6246 = vpop.f32.mrf.mxu0
      %v6247 = vadd.f32 0.0, %v6246
      %v6248 = vpop.f32.mrf.mxu0
      %6249 = vmatprep.mubr.f32.mxu0 %v6046
      %6250 = vmatmul.mubr.f32.gmra.mxu0 %v5941
      %v6251 = vpop.f32.mrf.mxu0
      %v6252 = vadd.f32 0.0, %v6251
      %v6253 = vpop.f32.mrf.mxu0
      %6254 = vmatprep.mubr.f32.mxu0 %v6049
      %6255 = vmatmul.mubr.f32.gmra.mxu0 %v5943
      %v6256 = vpop.f32.mrf.mxu0
      %v6257 = vadd.f32 0.0, %v6256
      %v6258 = vpop.f32.mrf.mxu0
      %6259 = vmatprep.mubr.f32.mxu0 %v6052
      %6260 = vmatmul.mubr.f32.gmra.mxu0 %v5945
      %v6261 = vpop.f32.mrf.mxu0
      %v6262 = vadd.f32 0.0, %v6261
      %v6263 = vpop.f32.mrf.mxu0
      %6264 = vmatprep.mubr.f32.mxu0 %v6055
      %6265 = vmatmul.mubr.f32.gmra.mxu0 %v5947
      %v6266 = vpop.f32.mrf.mxu0
      %v6267 = vadd.f32 0.0, %v6266
      %v6268 = vpop.f32.mrf.mxu0
      %6269 = vmatprep.mubr.f32.mxu0 %v6058
      %6270 = vmatmul.mubr.f32.gmra.mxu0 %v5949
      %v6271 = vpop.f32.mrf.mxu0
      %v6272 = vadd.f32 0.0, %v6271
      %v6273 = vpop.f32.mrf.mxu0
      %6274 = vmatprep.mubr.f32.mxu0 %v6061
      %6275 = vmatmul.mubr.f32.gmra.mxu0 %v5951
      %v6276 = vpop.f32.mrf.mxu0
      %v6277 = vadd.f32 0.0, %v6276
      %v6278 = vpop.f32.mrf.mxu0
      %6279 = vmatprep.mubr.f32.mxu0 %v6064
      %6280 = vmatmul.mubr.f32.gmra.mxu0 %v5953
      %v6281 = vpop.f32.mrf.mxu0
      %v6282 = vadd.f32 0.0, %v6281
      %v6283 = vpop.f32.mrf.mxu0
      %6284 = vmatprep.mubr.f32.mxu0 %v6067
      %6285 = vmatmul.mubr.f32.gmra.mxu0 %v5955
      %v6286 = vpop.f32.mrf.mxu0
      %v6287 = vadd.f32 0.0, %v6286
      %v6288 = vpop.f32.mrf.mxu0
      %6289 = vmatprep.mubr.f32.mxu0 %v6070
      %6290 = vmatmul.mubr.f32.gmra.mxu0 %v5957
      %v6291 = vpop.f32.mrf.mxu0
      %v6292 = vadd.f32 0.0, %v6291
      %v6293 = vpop.f32.mrf.mxu0
      %6294 = vmatprep.mubr.f32.mxu0 %v6073
      %6295 = vmatmul.mubr.f32.gmra.mxu0 %v5959
      %v6296 = vpop.f32.mrf.mxu0
      %v6297 = vadd.f32 0.0, %v6296
      %v6298 = vpop.f32.mrf.mxu0
      %6299 = vdwg.mxu0
      %v6300 = vld [vmem:[%s6] sm:$0x1]
      %v6302 = vlaneseq
      %v6303 = vshrl.u32 %v6302, 7
      %v6304 = vsub.s32 0, %v6303
      %v6305 = vrot.slane %v6300, %v6304
      %v6307 = vmul.f32 %v6142, %v6305
      %v6308 = vmul.f32 %v6147, %v6305
      %v6309 = vmul.f32 %v6152, %v6305
      %v6310 = vmul.f32 %v6157, %v6305
      %v6311 = vmul.f32 %v6162, %v6305
      %v6312 = vmul.f32 %v6167, %v6305
      %v6313 = vmul.f32 %v6172, %v6305
      %v6314 = vmul.f32 %v6177, %v6305
      %v6315 = vmul.f32 %v6182, %v6305
      %v6316 = vmul.f32 %v6187, %v6305
      %v6317 = vmul.f32 %v6192, %v6305
      %v6318 = vmul.f32 %v6197, %v6305
      %v6319 = vmul.f32 %v6202, %v6305
      %v6320 = vmul.f32 %v6207, %v6305
      %v6321 = vmul.f32 %v6212, %v6305
      %v6322 = vmul.f32 %v6217, %v6305
      %v6323 = vmul.f32 %v6222, %v6305
      %v6324 = vmul.f32 %v6227, %v6305
      %v6325 = vmul.f32 %v6232, %v6305
      %v6326 = vmul.f32 %v6237, %v6305
      %v6327 = vmul.f32 %v6242, %v6305
      %v6328 = vmul.f32 %v6247, %v6305
      %v6329 = vmul.f32 %v6252, %v6305
      %v6330 = vmul.f32 %v6257, %v6305
      %v6331 = vmul.f32 %v6262, %v6305
      %v6332 = vmul.f32 %v6267, %v6305
      %v6333 = vmul.f32 %v6272, %v6305
      %v6334 = vmul.f32 %v6277, %v6305
      %v6335 = vmul.f32 %v6282, %v6305
      %v6336 = vmul.f32 %v6287, %v6305
      %v6337 = vmul.f32 %v6292, %v6305
      %v6338 = vmul.f32 %v6297, %v6305
      %v6339 = vld [vmem:[%s7] sm:$0x1]
      %v6341 = vlaneseq
      %v6342 = vshrl.u32 %v6341, 7
      %v6343 = vsub.s32 0, %v6342
      %v6344 = vrot.slane %v6339, %v6343
      %v6346 = vadd.f32 %v6307, %v6344
      %v6347 = vadd.f32 %v6308, %v6344
      %v6348 = vadd.f32 %v6309, %v6344
      %v6349 = vadd.f32 %v6310, %v6344
      %v6350 = vadd.f32 %v6311, %v6344
      %v6351 = vadd.f32 %v6312, %v6344
      %v6352 = vadd.f32 %v6313, %v6344
      %v6353 = vadd.f32 %v6314, %v6344
      %v6354 = vadd.f32 %v6315, %v6344
      %v6355 = vadd.f32 %v6316, %v6344
      %v6356 = vadd.f32 %v6317, %v6344
      %v6357 = vadd.f32 %v6318, %v6344
      %v6358 = vadd.f32 %v6319, %v6344
      %v6359 = vadd.f32 %v6320, %v6344
      %v6360 = vadd.f32 %v6321, %v6344
      %v6361 = vadd.f32 %v6322, %v6344
      %v6362 = vadd.f32 %v6323, %v6344
      %v6363 = vadd.f32 %v6324, %v6344
      %v6364 = vadd.f32 %v6325, %v6344
      %v6365 = vadd.f32 %v6326, %v6344
      %v6366 = vadd.f32 %v6327, %v6344
      %v6367 = vadd.f32 %v6328, %v6344
      %v6368 = vadd.f32 %v6329, %v6344
      %v6369 = vadd.f32 %v6330, %v6344
      %v6370 = vadd.f32 %v6331, %v6344
      %v6371 = vadd.f32 %v6332, %v6344
      %v6372 = vadd.f32 %v6333, %v6344
      %v6373 = vadd.f32 %v6334, %v6344
      %v6374 = vadd.f32 %v6335, %v6344
      %v6375 = vadd.f32 %v6336, %v6344
      %v6376 = vadd.f32 %v6337, %v6344
      %v6377 = vadd.f32 %v6338, %v6344
      %v6378 = vld [vmem:[%s8] sm:$0x7]
      %v6380 = vsel %vm353, %v6378, 0
      %v6383 = vsel %vm353, %v6346, 0
      %v6386 = vsel %vm353, %v6347, 0
      %v6389 = vsel %vm353, %v6348, 0
      %v6392 = vsel %vm353, %v6349, 0
      %v6395 = vsel %vm353, %v6350, 0
      %v6398 = vsel %vm353, %v6351, 0
      %v6401 = vsel %vm353, %v6352, 0
      %v6404 = vsel %vm353, %v6353, 0
      %v6407 = vsel %vm353, %v6354, 0
      %v6410 = vsel %vm353, %v6355, 0
      %v6413 = vsel %vm353, %v6356, 0
      %v6416 = vsel %vm353, %v6357, 0
      %v6419 = vsel %vm353, %v6358, 0
      %v6422 = vsel %vm353, %v6359, 0
      %v6425 = vsel %vm353, %v6360, 0
      %v6428 = vsel %vm353, %v6361, 0
      %v6431 = vsel %vm353, %v6362, 0
      %v6434 = vsel %vm353, %v6363, 0
      %v6437 = vsel %vm353, %v6364, 0
      %v6440 = vsel %vm353, %v6365, 0
      %v6443 = vsel %vm353, %v6366, 0
      %v6446 = vsel %vm353, %v6367, 0
      %v6449 = vsel %vm353, %v6368, 0
      %v6452 = vsel %vm353, %v6369, 0
      %v6455 = vsel %vm353, %v6370, 0
      %v6458 = vsel %vm353, %v6371, 0
      %v6461 = vsel %vm353, %v6372, 0
      %v6464 = vsel %vm353, %v6373, 0
      %v6467 = vsel %vm353, %v6374, 0
      %v6470 = vsel %vm353, %v6375, 0
      %v6473 = vsel %vm353, %v6376, 0
      %v6476 = vsel %vm353, %v6377, 0
      %6478 = vmatprep.subr.mxu0 0.0
      %6479 = vmatpush1.xpose.msra.mxu0 %v6428
      %6480 = vmatprep.subr.mxu0 0.0
      %6481 = vmatpush1.xpose.msra.mxu0 %v6425
      %6482 = vmatprep.subr.mxu0 0.0
      %6483 = vmatpush1.xpose.msra.mxu0 %v6422
      %6484 = vmatprep.subr.mxu0 0.0
      %6485 = vmatpush1.xpose.msra.mxu0 %v6419
      %6486 = vmatprep.subr.mxu0 0.0
      %6487 = vmatpush1.xpose.msra.mxu0 %v6416
      %6488 = vmatprep.subr.mxu0 0.0
      %6489 = vmatpush1.xpose.msra.mxu0 %v6413
      %6490 = vmatprep.subr.mxu0 0.0
      %6491 = vmatpush1.xpose.msra.mxu0 %v6410
      %6492 = vmatprep.subr.mxu0 0.0
      %6493 = vmatpush1.xpose.msra.mxu0 %v6407
      %6494 = vmatprep.subr.mxu0 0.0
      %6495 = vmatpush1.xpose.msra.mxu0 %v6404
      %6496 = vmatprep.subr.mxu0 0.0
      %6497 = vmatpush1.xpose.msra.mxu0 %v6401
      %6498 = vmatprep.subr.mxu0 0.0
      %6499 = vmatpush1.xpose.msra.mxu0 %v6398
      %6500 = vmatprep.subr.mxu0 0.0
      %6501 = vmatpush1.xpose.msra.mxu0 %v6395
      %6502 = vmatprep.subr.mxu0 0.0
      %6503 = vmatpush1.xpose.msra.mxu0 %v6392
      %6504 = vmatprep.subr.mxu0 0.0
      %6505 = vmatpush1.xpose.msra.mxu0 %v6389
      %6506 = vmatprep.subr.mxu0 0.0
      %6507 = vmatpush1.xpose.msra.mxu0 %v6386
      %6508 = vmatprep.subr.mxu0 0.0
      %6509 = vmatpush1.xpose.msra.mxu0 %v6383
      %6510 = vmatprep.subr.mxu0 0.0
      %6511 = vmatpush2.xpose.msra.mxu0 %v6476
      %6512 = vmatprep.subr.mxu0 0.0
      %6513 = vmatpush2.xpose.msra.mxu0 %v6473
      %6514 = vmatprep.subr.mxu0 0.0
      %6515 = vmatpush2.xpose.msra.mxu0 %v6470
      %6516 = vmatprep.subr.mxu0 0.0
      %6517 = vmatpush2.xpose.msra.mxu0 %v6467
      %6518 = vmatprep.subr.mxu0 0.0
      %6519 = vmatpush2.xpose.msra.mxu0 %v6464
      %6520 = vmatprep.subr.mxu0 0.0
      %6521 = vmatpush2.xpose.msra.mxu0 %v6461
      %6522 = vmatprep.subr.mxu0 0.0
      %6523 = vmatpush2.xpose.msra.mxu0 %v6458
      %6524 = vmatprep.subr.mxu0 0.0
      %6525 = vmatpush2.xpose.msra.mxu0 %v6455
      %6526 = vmatprep.subr.mxu0 0.0
      %6527 = vmatpush2.xpose.msra.mxu0 %v6452
      %6528 = vmatprep.subr.mxu0 0.0
      %6529 = vmatpush2.xpose.msra.mxu0 %v6449
      %6530 = vmatprep.subr.mxu0 0.0
      %6531 = vmatpush2.xpose.msra.mxu0 %v6446
      %6532 = vmatprep.subr.mxu0 0.0
      %6533 = vmatpush2.xpose.msra.mxu0 %v6443
      %6534 = vmatprep.subr.mxu0 0.0
      %6535 = vmatpush2.xpose.msra.mxu0 %v6440
      %6536 = vmatprep.subr.mxu0 0.0
      %6537 = vmatpush2.xpose.msra.mxu0 %v6437
      %6538 = vmatprep.subr.mxu0 0.0
      %6539 = vmatpush2.xpose.msra.mxu0 %v6434
      %6540 = vmatprep.subr.mxu0 0.0
      %6541 = vmatpush2.xpose.msra.mxu0 %v6431
      %6542 = vmatprep.mubr.f32.mxu0 0.0
      %6543 = vmatmul.mubr.f32.gmra.mxu0 %v6380
      %v6544 = vpop.f32.mrf.mxu0
      %v6545 = vadd.f32 0.0, %v6544
      %v6546 = vpop.f32.mrf.mxu0
      %v6547 = vadd.f32 0.0, %v6546
      %6548 = vdwg.mxu0
      %vm6549 = vcmask 1042432
      %v6550 = vsel %vm6549, %v6545, -inf
      %v6551 = vrot.slane %v6550, 4
      %v6552 = vmax.f32 %v6550, %v6551
      %v6553 = vrot.slane %v6552, 2
      %v6554 = vmax.f32 %v6552, %v6553
      %v6555 = vrot.slane %v6554, 1
      %v6556 = vmax.f32 %v6554, %v6555
      %v6557 = vsel %vm6549, %v6547, -inf
      %v6558 = vrot.slane %v6557, 4
      %v6559 = vmax.f32 %v6557, %v6558
      %v6560 = vrot.slane %v6559, 2
      %v6561 = vmax.f32 %v6559, %v6560
      %v6562 = vrot.slane %v6561, 1
      %v6563 = vmax.f32 %v6561, %v6562
      %v6564 = vsub.f32 %v6545, %v6556
      %v6565 = vsub.f32 %v6547, %v6563
      %v6566 = vmul.f32 %v6564, 1.442695
      %v6567 = vpow.pop %v6566
      %v6568 = vmul.f32 %v6565, 1.442695
      %v6569 = vpow.pop %v6568
      %v6570 = vsel %vm6549, %v6567, 0.0
      %v6571 = vrot.slane %v6570, 4
      %v6572 = vadd.f32 %v6570, %v6571
      %v6573 = vrot.slane %v6572, 2
      %v6574 = vadd.f32 %v6572, %v6573
      %v6575 = vrot.slane %v6574, 1
      %v6576 = vadd.f32 %v6574, %v6575
      %v6577 = vsel %vm6549, %v6569, 0.0
      %v6578 = vrot.slane %v6577, 4
      %v6579 = vadd.f32 %v6577, %v6578
      %v6580 = vrot.slane %v6579, 2
      %v6581 = vadd.f32 %v6579, %v6580
      %v6582 = vrot.slane %v6581, 1
      %v6583 = vadd.f32 %v6581, %v6582
      %v6584 = vrcp.pop %v6576
      %v6585 = vmul.f32 %v6567, %v6584
      %v6586 = vrcp.pop %v6583
      %v6587 = vmul.f32 %v6569, %v6586
      %v6590 = vcombine.low %v6585, %v6587
      %6592 = vst [vmem:[%s352] sm:$0x77] %v6590
      %p6593 = scmp.lt.s32.totalorder %s20, 1
      %s6594 = scalar_select %p6593, %s20, 1
      %s6595 = smul.addr %s6594, 2
      %s6596 = smul.addr %s6595, 4
      %s6597 = scalar_lea.vmem %s9, %s6596
      // Predicated region
      $region57: #{decoder_forward.5} parent=55 // pred_check
        %p6598 = pneg %p237
      $region58: #{decoder_forward.5} parent=55 // pred_check_branch
        %6600 = sbr.rel (%p6598) target = $region60
      $region59: #{decoder_forward.5} parent=55 // pred_region
        _
      $region60: #{decoder_forward.5} parent=55 // pred_fallthru
        _
    $region56: #{decoder_forward.5} parent=5 // pred_fallthru
      _
    %p6601 = scmp.le.s32.totalorder 2, %s15
    // Predicated region
    $region61: #{decoder_forward.5} parent=5 // pred_check
      %p6602 = pneg %p6601
    $region62: #{decoder_forward.5} parent=5 // pred_check_branch
      %6604 = sbr.rel (%p6602) target = $region64
    $region63: #{decoder_forward.5} parent=5 // pred_region
      %s6605 = ssub.s32 %s15, 2
      // Predicated region
      $region65: #{decoder_forward.5} parent=63 // pred_check
        %p6606 = pneg %p243
      $region66: #{decoder_forward.5} parent=63 // pred_check_branch
        %6608 = sbr.rel (%p6606) target = $region68
      $region67: #{decoder_forward.5} parent=63 // pred_region
        %p6609 = scmp.lt.s32.totalorder %s21, 1
        %s6610 = scalar_select %p6609, %s21, 1
        %s6611 = smul.addr %s6610, 2
        %s6612 = smul.addr %s6611, 4
        %s6613 = scalar_lea.vmem %s9, %s6612
      $region68: #{decoder_forward.5} parent=63 // pred_fallthru
        _
    $region64: #{decoder_forward.5} parent=5 // pred_fallthru
      _
  $region6: #{decoder_forward.5} parent=0 // loop_footer
    %s19 = sadd.s32 1, %s15
  $region7: #{decoder_forward.5} parent=0 // loop_footer_branch
    %14 = sbr.rel target = $region3
  $region8: #{decoder_forward.5} parent=0 // loop_exit
    _

</llo_original>
